<compile_context>
chip_gen: v7x
topology: tpu7x:2x2x1
jax: 0.10.0
libtpu: 0.0.40
codegen_flags: <defaults>
</compile_context>

<pallas_src>
import functools

import jax
import jax.numpy as jnp
from jax.experimental import pallas as pl
from jax.experimental.pallas import tpu as pltpu

EPS = 1e-5


# ----------------------------------------------------------------------------
# Fused kernel: norm1+swish -> conv1 -> norm2+swish -> conv2 -> +skip(1x1 conv)
# ----------------------------------------------------------------------------
def _resnet_block_kernel(x_ref, mask_ref, w1_ref, b1_ref, w2_ref, b2_ref,
                         ws_ref, bs_ref, o_ref, xbuf, hbuf,
                         *, D, H, W, margin):
    Hp = H + 2
    Dp = D + 2
    L = Dp * Hp * W                           # flattened padded spatial (lanes)
    inv_cnt = 1.0 / float(D * H * W)          # InstanceNorm valid-element count

    mask = mask_ref[...]                      # (1, L): 1.0 at valid (d,h,w), 0.0 at pad
    x = x_ref[0].astype(jnp.float32)          # (Cin, L), zero at pad positions

    def norm_swish(v):
        # InstanceNorm3d (per-channel, biased variance over valid positions)
        # + swish, then re-zero pad positions so the next conv sees zero padding.
        vm = v * mask
        mean = jnp.sum(vm, axis=1, keepdims=True) * inv_cnt
        msq = jnp.sum(vm * vm, axis=1, keepdims=True) * inv_cnt
        var = jnp.maximum(msq - mean * mean, 0.0)
        vn = (v - mean) * jax.lax.rsqrt(var + EPS)
        return (vn * jax.nn.sigmoid(vn)) * mask

    def conv3x3x1(buf, w_ref, b_ref):
        # buf: (Cin, Lm) zero-padded slab; 9 shifted taps = in-kernel im2col.
        cout = w_ref.shape[1]
        acc = jnp.zeros((cout, L), jnp.float32)
        for kd in range(3):
            for kh in range(3):
                start = margin + (kd - 1) * Hp * W + (kh - 1) * W
                xs = buf[:, start:start + L]          # lane-shifted VMEM view
                wt = w_ref[kd * 3 + kh]               # (cout, cin) tap weights
                acc = acc + jnp.dot(wt, xs, preferred_element_type=jnp.float32)
        return acc + b_ref[...]                       # (cout,1) lane-broadcast bias

    # Zero the scratch slabs so the conv taps read true zero padding.
    xbuf[...] = jnp.zeros(xbuf.shape, jnp.float32)
    hbuf[...] = jnp.zeros(hbuf.shape, jnp.float32)

    # norm1 + swish -> conv1
    xbuf[:, margin:margin + L] = norm_swish(x)
    h = conv3x3x1(xbuf, w1_ref, b1_ref)

    # norm2 + swish; Dropout(p=0.0) is identity -> conv2
    hbuf[:, margin:margin + L] = norm_swish(h)
    h = conv3x3x1(hbuf, w2_ref, b2_ref)

    # 1x1x1 skip conv on the original x (in_channels != out_channels), then add.
    skip = jnp.dot(ws_ref[...], x, preferred_element_type=jnp.float32) + bs_ref[...]
    o_ref[0] = (skip + h).astype(o_ref.dtype)


# ----------------------------------------------------------------------------
# Wrapper: layout plumbing only (one pad/reshape in, one reshape/slice out)
# ----------------------------------------------------------------------------
def resnet_block_h(x, params):
    """x: (N, Cin, D, H, W) float32 -> (N, Cout, D, H, W) float32."""
    N, Cin, D, H, W = x.shape
    w1, b1 = params["w1"], params["b1"]
    w2, b2 = params["w2"], params["b2"]
    ws, bs = params["ws"], params["bs"]
    Cout = w1.shape[0]

    Dp, Hp = D + 2, H + 2
    L = Dp * Hp * W
    margin = ((Hp * W + W + 127) // 128) * 128   # lane-aligned slab offset
    Lm = L + 2 * margin

    # Channels-on-sublane, flattened zero-padded spatial-on-lane layout.
    xp = jnp.pad(x, ((0, 0), (0, 0), (1, 1), (1, 1), (0, 0)))
    xf = xp.reshape(N, Cin, L).astype(jnp.float32)

    dmask = (jnp.arange(Dp) >= 1) & (jnp.arange(Dp) <= D)
    hmask = (jnp.arange(Hp) >= 1) & (jnp.arange(Hp) <= H)
    mask = (dmask[:, None, None] & hmask[None, :, None]
            & jnp.ones((1, 1, W), dtype=bool)).reshape(1, L).astype(jnp.float32)

    # Conv weights -> (tap=kd*3+kh, Cout, Cin); biases -> (Cout, 1).
    w1k = jnp.transpose(w1[:, :, :, :, 0], (2, 3, 0, 1)).reshape(9, Cout, Cin)
    w2k = jnp.transpose(w2[:, :, :, :, 0], (2, 3, 0, 1)).reshape(9, Cout, Cout)
    wsk = ws[:, :, 0, 0, 0]
    b1k, b2k, bsk = b1.reshape(Cout, 1), b2.reshape(Cout, 1), bs.reshape(Cout, 1)

    kernel = functools.partial(_resnet_block_kernel, D=D, H=H, W=W, margin=margin)
    out_flat = pl.pallas_call(
        kernel,
        out_shape=jax.ShapeDtypeStruct((N, Cout, L), jnp.float32),
        grid=(N,),
        in_specs=[
            pl.BlockSpec((1, Cin, L), lambda n: (n, 0, 0)),      # x (per batch)
            pl.BlockSpec((1, L), lambda n: (0, 0)),              # valid mask
            pl.BlockSpec((9, Cout, Cin), lambda n: (0, 0, 0)),   # conv1 weights
            pl.BlockSpec((Cout, 1), lambda n: (0, 0)),           # conv1 bias
            pl.BlockSpec((9, Cout, Cout), lambda n: (0, 0, 0)),  # conv2 weights
            pl.BlockSpec((Cout, 1), lambda n: (0, 0)),           # conv2 bias
            pl.BlockSpec((Cout, Cin), lambda n: (0, 0)),         # skip 1x1 weight
            pl.BlockSpec((Cout, 1), lambda n: (0, 0)),           # skip bias
        ],
        out_specs=pl.BlockSpec((1, Cout, L), lambda n: (n, 0, 0)),
        scratch_shapes=[pltpu.VMEM((Cin, Lm), jnp.float32),
                        pltpu.VMEM((Cout, Lm), jnp.float32)],
        compiler_params=pltpu.CompilerParams(
            dimension_semantics=("parallel",)),                  # 2nd TC on v7x
    )(xf, mask, w1k, b1k, w2k, b2k, wsk, bsk)

    return out_flat.reshape(N, Cout, Dp, Hp, W)[:, :, 1:1 + D, 1:1 + H, :]


# ----------------------------------------------------------------------------
# Pure-JAX reference (for a correctness sanity check)
# ----------------------------------------------------------------------------
def resnet_block_ref(x, p):
    def inorm(v):
        m = jnp.mean(v, axis=(2, 3, 4), keepdims=True)
        var = jnp.mean((v - m) ** 2, axis=(2, 3, 4), keepdims=True)
        return (v - m) * jax.lax.rsqrt(var + EPS)

    def swish(v):
        return v * jax.nn.sigmoid(v)

    def conv(v, w, b, pad):
        y = jax.lax.conv_general_dilated(
            v, w, (1, 1, 1), pad,
            dimension_numbers=("NCDHW", "OIDHW", "NCDHW"),
            precision=jax.lax.Precision.HIGHEST)
        return y + b.reshape(1, -1, 1, 1, 1)

    h = swish(inorm(x))
    h = conv(h, p["w1"], p["b1"], ((1, 1), (1, 1), (0, 0)))
    h = swish(inorm(h))                       # dropout(p=0.0) == identity
    h = conv(h, p["w2"], p["b2"], ((1, 1), (1, 1), (0, 0)))
    xs = conv(x, p["ws"], p["bs"], ((0, 0), (0, 0), (0, 0)))
    return xs + h


# ----------------------------------------------------------------------------
# Deterministic PyTorch-like init
# ----------------------------------------------------------------------------
def _init_conv(key, cout, cin, kd, kh, kw):
    kw_, kb_ = jax.random.split(key)
    bound = 1.0 / ((cin * kd * kh * kw) ** 0.5)
    w = jax.random.uniform(kw_, (cout, cin, kd, kh, kw), jnp.float32, -bound, bound)
    b = jax.random.uniform(kb_, (cout,), jnp.float32, -bound, bound)
    return w, b


def init_params(key, in_ch, out_ch):
    k1, k2, k3 = jax.random.split(key, 3)
    w1, b1 = _init_conv(k1, out_ch, in_ch, 3, 3, 1)
    w2, b2 = _init_conv(k2, out_ch, out_ch, 3, 3, 1)
    ws, bs = _init_conv(k3, out_ch, in_ch, 1, 1, 1)   # conv_skip (in_ch != out_ch)
    return dict(w1=w1, b1=b1, w2=w2, b2=b2, ws=ws, bs=bs)


if __name__ == "__main__":
    key = jax.random.PRNGKey(0)
    k_x, k_p = jax.random.split(key)

    # ResnetBlockH(in_channels=8, out_channels=4, groups=2, dim='3D',
    #              act='swish', dropout=0.0); input NCDHW.
    N, Cin, Cout, D, H, W = 2, 8, 4, 8, 16, 8
    x = jax.random.normal(k_x, (N, Cin, D, H, W), jnp.float32)
    params = init_params(k_p, Cin, Cout)

    out = jax.jit(resnet_block_h)(x, params)
    out = jax.block_until_ready(out)

    assert out.shape == (N, Cout, D, H, W), out.shape
    assert bool(jnp.all(jnp.isfinite(out)))

    ref = resnet_block_ref(x, params)
    max_err = float(jnp.max(jnp.abs(out - ref)))
    assert bool(jnp.allclose(out, ref, atol=1e-2, rtol=1e-2)), max_err
    print("KERNEL_OK")
</pallas_src>

<mosaic_0001>
module attributes {stable_mosaic.version = 11 : i64} {
  func.func @_resnet_block_kernel(%arg0: i32, %arg1: memref<1x8x1440xf32, #tpu.memory_space<vmem>>, %arg2: memref<1x1440xf32, #tpu.memory_space<vmem>>, %arg3: memref<9x4x8xf32, #tpu.memory_space<vmem>>, %arg4: memref<4x1xf32, #tpu.memory_space<vmem>>, %arg5: memref<9x4x4xf32, #tpu.memory_space<vmem>>, %arg6: memref<4x1xf32, #tpu.memory_space<vmem>>, %arg7: memref<4x8xf32, #tpu.memory_space<vmem>>, %arg8: memref<4x1xf32, #tpu.memory_space<vmem>>, %arg9: memref<1x4x1440xf32, #tpu.memory_space<vmem>>, %arg10: memref<8x1952xf32, #tpu.memory_space<vmem>>, %arg11: memref<4x1952xf32, #tpu.memory_space<vmem>>) attributes {dimension_semantics = [#tpu.dimension_semantics<parallel>], iteration_bounds = array<i64: 2>, scalar_prefetch = 0 : i64, scratch_operands = 2 : i64, tpu.core_type = #tpu.core_type<tc>, window_params = [{transform_indices = @transform_0, window_bounds = array<i64: 1, 8, 1440>}, {pipeline_mode = #tpu.pipeline_mode<synchronous>, transform_indices = @transform_1, window_bounds = array<i64: 1, 1440>}, {pipeline_mode = #tpu.pipeline_mode<synchronous>, transform_indices = @transform_2, window_bounds = array<i64: 9, 4, 8>}, {pipeline_mode = #tpu.pipeline_mode<synchronous>, transform_indices = @transform_3, window_bounds = array<i64: 4, 1>}, {pipeline_mode = #tpu.pipeline_mode<synchronous>, transform_indices = @transform_4, window_bounds = array<i64: 9, 4, 4>}, {pipeline_mode = #tpu.pipeline_mode<synchronous>, transform_indices = @transform_5, window_bounds = array<i64: 4, 1>}, {pipeline_mode = #tpu.pipeline_mode<synchronous>, transform_indices = @transform_6, window_bounds = array<i64: 4, 8>}, {pipeline_mode = #tpu.pipeline_mode<synchronous>, transform_indices = @transform_7, window_bounds = array<i64: 4, 1>}, {transform_indices = @transform_8, window_bounds = array<i64: 1, 4, 1440>}]} {
    %c0 = arith.constant 0 : index
    %c0_0 = arith.constant 0 : index
    %0 = vector.load %arg2[%c0, %c0_0] : memref<1x1440xf32, #tpu.memory_space<vmem>>, vector<1x1440xf32>
    %c0_1 = arith.constant 0 : index
    %c0_2 = arith.constant 0 : index
    %c0_3 = arith.constant 0 : index
    %1 = vector.load %arg1[%c0_1, %c0_2, %c0_3] : memref<1x8x1440xf32, #tpu.memory_space<vmem>>, vector<1x8x1440xf32>
    %2 = vector.shape_cast %1 : vector<1x8x1440xf32> to vector<8x1440xf32>
    %cst = arith.constant 0.000000e+00 : f32
    %3 = vector.broadcast %cst : f32 to vector<8x1952xf32>
    %c0_4 = arith.constant 0 : index
    %c0_5 = arith.constant 0 : index
    %4 = vector.load %arg10[%c0_4, %c0_5] : memref<8x1952xf32, #tpu.memory_space<vmem>>, vector<8x1952xf32>
    tpu.vector_store %arg10[%c0_4, %c0_5], %3 {strides = array<i32>} : memref<8x1952xf32, #tpu.memory_space<vmem>>, vector<8x1952xf32>,
    %cst_6 = arith.constant 0.000000e+00 : f32
    %5 = vector.broadcast %cst_6 : f32 to vector<4x1952xf32>
    %c0_7 = arith.constant 0 : index
    %c0_8 = arith.constant 0 : index
    %6 = vector.load %arg11[%c0_7, %c0_8] : memref<4x1952xf32, #tpu.memory_space<vmem>>, vector<4x1952xf32>
    tpu.vector_store %arg11[%c0_7, %c0_8], %5 {strides = array<i32>} : memref<4x1952xf32, #tpu.memory_space<vmem>>, vector<4x1952xf32>,
    %7 = vector.broadcast %0 : vector<1x1440xf32> to vector<8x1440xf32>
    %8 = arith.mulf %2, %7 : vector<8x1440xf32>
    %cst_9 = arith.constant dense<0.000000e+00> : vector<8xf32>
    %9 = vector.multi_reduction <add>, %8, %cst_9 [1] : vector<8x1440xf32> to vector<8xf32>
    %10 = vector.shape_cast %9 : vector<8xf32> to vector<8x1xf32>
    %cst_10 = arith.constant 9.765625E-4 : f32
    %11 = vector.broadcast %cst_10 : f32 to vector<8x1xf32>
    %12 = arith.mulf %10, %11 : vector<8x1xf32>
    %13 = arith.mulf %8, %8 : vector<8x1440xf32>
    %cst_11 = arith.constant dense<0.000000e+00> : vector<8xf32>
    %14 = vector.multi_reduction <add>, %13, %cst_11 [1] : vector<8x1440xf32> to vector<8xf32>
    %15 = vector.shape_cast %14 : vector<8xf32> to vector<8x1xf32>
    %cst_12 = arith.constant 9.765625E-4 : f32
    %16 = vector.broadcast %cst_12 : f32 to vector<8x1xf32>
    %17 = arith.mulf %15, %16 : vector<8x1xf32>
    %18 = arith.mulf %12, %12 : vector<8x1xf32>
    %19 = arith.subf %17, %18 : vector<8x1xf32>
    %cst_13 = arith.constant 0.000000e+00 : f32
    %20 = vector.broadcast %cst_13 : f32 to vector<8x1xf32>
    %21 = arith.maximumf %19, %20 : vector<8x1xf32>
    %22 = vector.broadcast %12 : vector<8x1xf32> to vector<8x1440xf32>
    %23 = arith.subf %2, %22 : vector<8x1440xf32>
    %cst_14 = arith.constant 9.99999974E-6 : f32
    %24 = vector.broadcast %cst_14 : f32 to vector<8x1xf32>
    %25 = arith.addf %21, %24 : vector<8x1xf32>
    %26 = math.rsqrt %25 : vector<8x1xf32>
    %27 = vector.broadcast %26 : vector<8x1xf32> to vector<8x1440xf32>
    %28 = arith.mulf %23, %27 : vector<8x1440xf32>
    %29 = arith.negf %28 : vector<8x1440xf32>
    %30 = math.exp %29 : vector<8x1440xf32>
    %cst_15 = arith.constant 1.000000e+00 : f32
    %31 = vector.broadcast %cst_15 : f32 to vector<8x1440xf32>
    %32 = arith.addf %31, %30 : vector<8x1440xf32>
    %33 = arith.divf %31, %32 : vector<8x1440xf32>
    %34 = arith.mulf %28, %33 : vector<8x1440xf32>
    %35 = vector.broadcast %0 : vector<1x1440xf32> to vector<8x1440xf32>
    %36 = arith.mulf %34, %35 : vector<8x1440xf32>
    %c0_16 = arith.constant 0 : index
    %c256 = arith.constant 256 : index
    %37 = vector.load %arg10[%c0_16, %c256] : memref<8x1952xf32, #tpu.memory_space<vmem>>, vector<8x1440xf32>
    tpu.vector_store %arg10[%c0_16, %c256], %36 {strides = array<i32>} : memref<8x1952xf32, #tpu.memory_space<vmem>>, vector<8x1440xf32>,
    %cst_17 = arith.constant 0.000000e+00 : f32
    %38 = vector.broadcast %cst_17 : f32 to vector<4x1440xf32>
    %c0_18 = arith.constant 0 : index
    %c104 = arith.constant 104 : index
    %39 = vector.load %arg10[%c0_18, %c104] : memref<8x1952xf32, #tpu.memory_space<vmem>>, vector<8x1440xf32>
    %c0_19 = arith.constant 0 : index
    %c0_20 = arith.constant 0 : index
    %c0_21 = arith.constant 0 : index
    %40 = vector.load %arg3[%c0_19, %c0_20, %c0_21] : memref<9x4x8xf32, #tpu.memory_space<vmem>>, vector<1x4x8xf32>
    %41 = vector.shape_cast %40 : vector<1x4x8xf32> to vector<4x8xf32>
    %cst_22 = arith.constant dense<0.000000e+00> : vector<4x1440xf32>
    %42 = tpu.matmul %41, %39, %cst_22 {dimension_numbers = #tpu.dot_dimension_numbers<[1], [0], [0], [1], [0, 0, 1, 1], [], []>} : vector<4x8xf32>, vector<8x1440xf32>, vector<4x1440xf32> -> vector<4x1440xf32>
    %43 = arith.addf %38, %42 : vector<4x1440xf32>
    %c0_23 = arith.constant 0 : index
    %c112 = arith.constant 112 : index
    %44 = vector.load %arg10[%c0_23, %c112] : memref<8x1952xf32, #tpu.memory_space<vmem>>, vector<8x1440xf32>
    %c1 = arith.constant 1 : index
    %c0_24 = arith.constant 0 : index
    %c0_25 = arith.constant 0 : index
    %45 = vector.load %arg3[%c1, %c0_24, %c0_25] : memref<9x4x8xf32, #tpu.memory_space<vmem>>, vector<1x4x8xf32>
    %46 = vector.shape_cast %45 : vector<1x4x8xf32> to vector<4x8xf32>
    %cst_26 = arith.constant dense<0.000000e+00> : vector<4x1440xf32>
    %47 = tpu.matmul %46, %44, %cst_26 {dimension_numbers = #tpu.dot_dimension_numbers<[1], [0], [0], [1], [0, 0, 1, 1], [], []>} : vector<4x8xf32>, vector<8x1440xf32>, vector<4x1440xf32> -> vector<4x1440xf32>
    %48 = arith.addf %43, %47 : vector<4x1440xf32>
    %c0_27 = arith.constant 0 : index
    %c120 = arith.constant 120 : index
    %49 = vector.load %arg10[%c0_27, %c120] : memref<8x1952xf32, #tpu.memory_space<vmem>>, vector<8x1440xf32>
    %c2 = arith.constant 2 : index
    %c0_28 = arith.constant 0 : index
    %c0_29 = arith.constant 0 : index
    %50 = vector.load %arg3[%c2, %c0_28, %c0_29] : memref<9x4x8xf32, #tpu.memory_space<vmem>>, vector<1x4x8xf32>
    %51 = vector.shape_cast %50 : vector<1x4x8xf32> to vector<4x8xf32>
    %cst_30 = arith.constant dense<0.000000e+00> : vector<4x1440xf32>
    %52 = tpu.matmul %51, %49, %cst_30 {dimension_numbers = #tpu.dot_dimension_numbers<[1], [0], [0], [1], [0, 0, 1, 1], [], []>} : vector<4x8xf32>, vector<8x1440xf32>, vector<4x1440xf32> -> vector<4x1440xf32>
    %53 = arith.addf %48, %52 : vector<4x1440xf32>
    %c0_31 = arith.constant 0 : index
    %c248 = arith.constant 248 : index
    %54 = vector.load %arg10[%c0_31, %c248] : memref<8x1952xf32, #tpu.memory_space<vmem>>, vector<8x1440xf32>
    %c3 = arith.constant 3 : index
    %c0_32 = arith.constant 0 : index
    %c0_33 = arith.constant 0 : index
    %55 = vector.load %arg3[%c3, %c0_32, %c0_33] : memref<9x4x8xf32, #tpu.memory_space<vmem>>, vector<1x4x8xf32>
    %56 = vector.shape_cast %55 : vector<1x4x8xf32> to vector<4x8xf32>
    %cst_34 = arith.constant dense<0.000000e+00> : vector<4x1440xf32>
    %57 = tpu.matmul %56, %54, %cst_34 {dimension_numbers = #tpu.dot_dimension_numbers<[1], [0], [0], [1], [0, 0, 1, 1], [], []>} : vector<4x8xf32>, vector<8x1440xf32>, vector<4x1440xf32> -> vector<4x1440xf32>
    %58 = arith.addf %53, %57 : vector<4x1440xf32>
    %c0_35 = arith.constant 0 : index
    %c256_36 = arith.constant 256 : index
    %59 = vector.load %arg10[%c0_35, %c256_36] : memref<8x1952xf32, #tpu.memory_space<vmem>>, vector<8x1440xf32>
    %c4 = arith.constant 4 : index
    %c0_37 = arith.constant 0 : index
    %c0_38 = arith.constant 0 : index
    %60 = vector.load %arg3[%c4, %c0_37, %c0_38] : memref<9x4x8xf32, #tpu.memory_space<vmem>>, vector<1x4x8xf32>
    %61 = vector.shape_cast %60 : vector<1x4x8xf32> to vector<4x8xf32>
    %cst_39 = arith.constant dense<0.000000e+00> : vector<4x1440xf32>
    %62 = tpu.matmul %61, %59, %cst_39 {dimension_numbers = #tpu.dot_dimension_numbers<[1], [0], [0], [1], [0, 0, 1, 1], [], []>} : vector<4x8xf32>, vector<8x1440xf32>, vector<4x1440xf32> -> vector<4x1440xf32>
    %63 = arith.addf %58, %62 : vector<4x1440xf32>
    %c0_40 = arith.constant 0 : index
    %c264 = arith.constant 264 : index
    %64 = vector.load %arg10[%c0_40, %c264] : memref<8x1952xf32, #tpu.memory_space<vmem>>, vector<8x1440xf32>
    %c5 = arith.constant 5 : index
    %c0_41 = arith.constant 0 : index
    %c0_42 = arith.constant 0 : index
    %65 = vector.load %arg3[%c5, %c0_41, %c0_42] : memref<9x4x8xf32, #tpu.memory_space<vmem>>, vector<1x4x8xf32>
    %66 = vector.shape_cast %65 : vector<1x4x8xf32> to vector<4x8xf32>
    %cst_43 = arith.constant dense<0.000000e+00> : vector<4x1440xf32>
    %67 = tpu.matmul %66, %64, %cst_43 {dimension_numbers = #tpu.dot_dimension_numbers<[1], [0], [0], [1], [0, 0, 1, 1], [], []>} : vector<4x8xf32>, vector<8x1440xf32>, vector<4x1440xf32> -> vector<4x1440xf32>
    %68 = arith.addf %63, %67 : vector<4x1440xf32>
    %c0_44 = arith.constant 0 : index
    %c392 = arith.constant 392 : index
    %69 = vector.load %arg10[%c0_44, %c392] : memref<8x1952xf32, #tpu.memory_space<vmem>>, vector<8x1440xf32>
    %c6 = arith.constant 6 : index
    %c0_45 = arith.constant 0 : index
    %c0_46 = arith.constant 0 : index
    %70 = vector.load %arg3[%c6, %c0_45, %c0_46] : memref<9x4x8xf32, #tpu.memory_space<vmem>>, vector<1x4x8xf32>
    %71 = vector.shape_cast %70 : vector<1x4x8xf32> to vector<4x8xf32>
    %cst_47 = arith.constant dense<0.000000e+00> : vector<4x1440xf32>
    %72 = tpu.matmul %71, %69, %cst_47 {dimension_numbers = #tpu.dot_dimension_numbers<[1], [0], [0], [1], [0, 0, 1, 1], [], []>} : vector<4x8xf32>, vector<8x1440xf32>, vector<4x1440xf32> -> vector<4x1440xf32>
    %73 = arith.addf %68, %72 : vector<4x1440xf32>
    %c0_48 = arith.constant 0 : index
    %c400 = arith.constant 400 : index
    %74 = vector.load %arg10[%c0_48, %c400] : memref<8x1952xf32, #tpu.memory_space<vmem>>, vector<8x1440xf32>
    %c7 = arith.constant 7 : index
    %c0_49 = arith.constant 0 : index
    %c0_50 = arith.constant 0 : index
    %75 = vector.load %arg3[%c7, %c0_49, %c0_50] : memref<9x4x8xf32, #tpu.memory_space<vmem>>, vector<1x4x8xf32>
    %76 = vector.shape_cast %75 : vector<1x4x8xf32> to vector<4x8xf32>
    %cst_51 = arith.constant dense<0.000000e+00> : vector<4x1440xf32>
    %77 = tpu.matmul %76, %74, %cst_51 {dimension_numbers = #tpu.dot_dimension_numbers<[1], [0], [0], [1], [0, 0, 1, 1], [], []>} : vector<4x8xf32>, vector<8x1440xf32>, vector<4x1440xf32> -> vector<4x1440xf32>
    %78 = arith.addf %73, %77 : vector<4x1440xf32>
    %c0_52 = arith.constant 0 : index
    %c408 = arith.constant 408 : index
    %79 = vector.load %arg10[%c0_52, %c408] : memref<8x1952xf32, #tpu.memory_space<vmem>>, vector<8x1440xf32>
    %c8 = arith.constant 8 : index
    %c0_53 = arith.constant 0 : index
    %c0_54 = arith.constant 0 : index
    %80 = vector.load %arg3[%c8, %c0_53, %c0_54] : memref<9x4x8xf32, #tpu.memory_space<vmem>>, vector<1x4x8xf32>
    %81 = vector.shape_cast %80 : vector<1x4x8xf32> to vector<4x8xf32>
    %cst_55 = arith.constant dense<0.000000e+00> : vector<4x1440xf32>
    %82 = tpu.matmul %81, %79, %cst_55 {dimension_numbers = #tpu.dot_dimension_numbers<[1], [0], [0], [1], [0, 0, 1, 1], [], []>} : vector<4x8xf32>, vector<8x1440xf32>, vector<4x1440xf32> -> vector<4x1440xf32>
    %83 = arith.addf %78, %82 : vector<4x1440xf32>
    %c0_56 = arith.constant 0 : index
    %c0_57 = arith.constant 0 : index
    %84 = vector.load %arg4[%c0_56, %c0_57] : memref<4x1xf32, #tpu.memory_space<vmem>>, vector<4x1xf32>
    %85 = vector.broadcast %84 : vector<4x1xf32> to vector<4x1440xf32>
    %86 = arith.addf %83, %85 : vector<4x1440xf32>
    %87 = vector.broadcast %0 : vector<1x1440xf32> to vector<4x1440xf32>
    %88 = arith.mulf %86, %87 : vector<4x1440xf32>
    %cst_58 = arith.constant dense<0.000000e+00> : vector<4xf32>
    %89 = vector.multi_reduction <add>, %88, %cst_58 [1] : vector<4x1440xf32> to vector<4xf32>
    %90 = vector.shape_cast %89 : vector<4xf32> to vector<4x1xf32>
    %cst_59 = arith.constant 9.765625E-4 : f32
    %91 = vector.broadcast %cst_59 : f32 to vector<4x1xf32>
    %92 = arith.mulf %90, %91 : vector<4x1xf32>
    %93 = arith.mulf %88, %88 : vector<4x1440xf32>
    %cst_60 = arith.constant dense<0.000000e+00> : vector<4xf32>
    %94 = vector.multi_reduction <add>, %93, %cst_60 [1] : vector<4x1440xf32> to vector<4xf32>
    %95 = vector.shape_cast %94 : vector<4xf32> to vector<4x1xf32>
    %cst_61 = arith.constant 9.765625E-4 : f32
    %96 = vector.broadcast %cst_61 : f32 to vector<4x1xf32>
    %97 = arith.mulf %95, %96 : vector<4x1xf32>
    %98 = arith.mulf %92, %92 : vector<4x1xf32>
    %99 = arith.subf %97, %98 : vector<4x1xf32>
    %cst_62 = arith.constant 0.000000e+00 : f32
    %100 = vector.broadcast %cst_62 : f32 to vector<4x1xf32>
    %101 = arith.maximumf %99, %100 : vector<4x1xf32>
    %102 = vector.broadcast %92 : vector<4x1xf32> to vector<4x1440xf32>
    %103 = arith.subf %86, %102 : vector<4x1440xf32>
    %cst_63 = arith.constant 9.99999974E-6 : f32
    %104 = vector.broadcast %cst_63 : f32 to vector<4x1xf32>
    %105 = arith.addf %101, %104 : vector<4x1xf32>
    %106 = math.rsqrt %105 : vector<4x1xf32>
    %107 = vector.broadcast %106 : vector<4x1xf32> to vector<4x1440xf32>
    %108 = arith.mulf %103, %107 : vector<4x1440xf32>
    %109 = arith.negf %108 : vector<4x1440xf32>
    %110 = math.exp %109 : vector<4x1440xf32>
    %cst_64 = arith.constant 1.000000e+00 : f32
    %111 = vector.broadcast %cst_64 : f32 to vector<4x1440xf32>
    %112 = arith.addf %111, %110 : vector<4x1440xf32>
    %113 = arith.divf %111, %112 : vector<4x1440xf32>
    %114 = arith.mulf %108, %113 : vector<4x1440xf32>
    %115 = vector.broadcast %0 : vector<1x1440xf32> to vector<4x1440xf32>
    %116 = arith.mulf %114, %115 : vector<4x1440xf32>
    %c0_65 = arith.constant 0 : index
    %c256_66 = arith.constant 256 : index
    %117 = vector.load %arg11[%c0_65, %c256_66] : memref<4x1952xf32, #tpu.memory_space<vmem>>, vector<4x1440xf32>
    tpu.vector_store %arg11[%c0_65, %c256_66], %116 {strides = array<i32>} : memref<4x1952xf32, #tpu.memory_space<vmem>>, vector<4x1440xf32>,
    %cst_67 = arith.constant 0.000000e+00 : f32
    %118 = vector.broadcast %cst_67 : f32 to vector<4x1440xf32>
    %c0_68 = arith.constant 0 : index
    %c104_69 = arith.constant 104 : index
    %119 = vector.load %arg11[%c0_68, %c104_69] : memref<4x1952xf32, #tpu.memory_space<vmem>>, vector<4x1440xf32>
    %c0_70 = arith.constant 0 : index
    %c0_71 = arith.constant 0 : index
    %c0_72 = arith.constant 0 : index
    %120 = vector.load %arg5[%c0_70, %c0_71, %c0_72] : memref<9x4x4xf32, #tpu.memory_space<vmem>>, vector<1x4x4xf32>
    %121 = vector.shape_cast %120 : vector<1x4x4xf32> to vector<4x4xf32>
    %cst_73 = arith.constant dense<0.000000e+00> : vector<4x1440xf32>
    %122 = tpu.matmul %121, %119, %cst_73 {dimension_numbers = #tpu.dot_dimension_numbers<[1], [0], [0], [1], [0, 0, 1, 1], [], []>} : vector<4x4xf32>, vector<4x1440xf32>, vector<4x1440xf32> -> vector<4x1440xf32>
    %123 = arith.addf %118, %122 : vector<4x1440xf32>
    %c0_74 = arith.constant 0 : index
    %c112_75 = arith.constant 112 : index
    %124 = vector.load %arg11[%c0_74, %c112_75] : memref<4x1952xf32, #tpu.memory_space<vmem>>, vector<4x1440xf32>
    %c1_76 = arith.constant 1 : index
    %c0_77 = arith.constant 0 : index
    %c0_78 = arith.constant 0 : index
    %125 = vector.load %arg5[%c1_76, %c0_77, %c0_78] : memref<9x4x4xf32, #tpu.memory_space<vmem>>, vector<1x4x4xf32>
    %126 = vector.shape_cast %125 : vector<1x4x4xf32> to vector<4x4xf32>
    %cst_79 = arith.constant dense<0.000000e+00> : vector<4x1440xf32>
    %127 = tpu.matmul %126, %124, %cst_79 {dimension_numbers = #tpu.dot_dimension_numbers<[1], [0], [0], [1], [0, 0, 1, 1], [], []>} : vector<4x4xf32>, vector<4x1440xf32>, vector<4x1440xf32> -> vector<4x1440xf32>
    %128 = arith.addf %123, %127 : vector<4x1440xf32>
    %c0_80 = arith.constant 0 : index
    %c120_81 = arith.constant 120 : index
    %129 = vector.load %arg11[%c0_80, %c120_81] : memref<4x1952xf32, #tpu.memory_space<vmem>>, vector<4x1440xf32>
    %c2_82 = arith.constant 2 : index
    %c0_83 = arith.constant 0 : index
    %c0_84 = arith.constant 0 : index
    %130 = vector.load %arg5[%c2_82, %c0_83, %c0_84] : memref<9x4x4xf32, #tpu.memory_space<vmem>>, vector<1x4x4xf32>
    %131 = vector.shape_cast %130 : vector<1x4x4xf32> to vector<4x4xf32>
    %cst_85 = arith.constant dense<0.000000e+00> : vector<4x1440xf32>
    %132 = tpu.matmul %131, %129, %cst_85 {dimension_numbers = #tpu.dot_dimension_numbers<[1], [0], [0], [1], [0, 0, 1, 1], [], []>} : vector<4x4xf32>, vector<4x1440xf32>, vector<4x1440xf32> -> vector<4x1440xf32>
    %133 = arith.addf %128, %132 : vector<4x1440xf32>
    %c0_86 = arith.constant 0 : index
    %c248_87 = arith.constant 248 : index
    %134 = vector.load %arg11[%c0_86, %c248_87] : memref<4x1952xf32, #tpu.memory_space<vmem>>, vector<4x1440xf32>
    %c3_88 = arith.constant 3 : index
    %c0_89 = arith.constant 0 : index
    %c0_90 = arith.constant 0 : index
    %135 = vector.load %arg5[%c3_88, %c0_89, %c0_90] : memref<9x4x4xf32, #tpu.memory_space<vmem>>, vector<1x4x4xf32>
    %136 = vector.shape_cast %135 : vector<1x4x4xf32> to vector<4x4xf32>
    %cst_91 = arith.constant dense<0.000000e+00> : vector<4x1440xf32>
    %137 = tpu.matmul %136, %134, %cst_91 {dimension_numbers = #tpu.dot_dimension_numbers<[1], [0], [0], [1], [0, 0, 1, 1], [], []>} : vector<4x4xf32>, vector<4x1440xf32>, vector<4x1440xf32> -> vector<4x1440xf32>
    %138 = arith.addf %133, %137 : vector<4x1440xf32>
    %c0_92 = arith.constant 0 : index
    %c256_93 = arith.constant 256 : index
    %139 = vector.load %arg11[%c0_92, %c256_93] : memref<4x1952xf32, #tpu.memory_space<vmem>>, vector<4x1440xf32>
    %c4_94 = arith.constant 4 : index
    %c0_95 = arith.constant 0 : index
    %c0_96 = arith.constant 0 : index
    %140 = vector.load %arg5[%c4_94, %c0_95, %c0_96] : memref<9x4x4xf32, #tpu.memory_space<vmem>>, vector<1x4x4xf32>
    %141 = vector.shape_cast %140 : vector<1x4x4xf32> to vector<4x4xf32>
    %cst_97 = arith.constant dense<0.000000e+00> : vector<4x1440xf32>
    %142 = tpu.matmul %141, %139, %cst_97 {dimension_numbers = #tpu.dot_dimension_numbers<[1], [0], [0], [1], [0, 0, 1, 1], [], []>} : vector<4x4xf32>, vector<4x1440xf32>, vector<4x1440xf32> -> vector<4x1440xf32>
    %143 = arith.addf %138, %142 : vector<4x1440xf32>
    %c0_98 = arith.constant 0 : index
    %c264_99 = arith.constant 264 : index
    %144 = vector.load %arg11[%c0_98, %c264_99] : memref<4x1952xf32, #tpu.memory_space<vmem>>, vector<4x1440xf32>
    %c5_100 = arith.constant 5 : index
    %c0_101 = arith.constant 0 : index
    %c0_102 = arith.constant 0 : index
    %145 = vector.load %arg5[%c5_100, %c0_101, %c0_102] : memref<9x4x4xf32, #tpu.memory_space<vmem>>, vector<1x4x4xf32>
    %146 = vector.shape_cast %145 : vector<1x4x4xf32> to vector<4x4xf32>
    %cst_103 = arith.constant dense<0.000000e+00> : vector<4x1440xf32>
    %147 = tpu.matmul %146, %144, %cst_103 {dimension_numbers = #tpu.dot_dimension_numbers<[1], [0], [0], [1], [0, 0, 1, 1], [], []>} : vector<4x4xf32>, vector<4x1440xf32>, vector<4x1440xf32> -> vector<4x1440xf32>
    %148 = arith.addf %143, %147 : vector<4x1440xf32>
    %c0_104 = arith.constant 0 : index
    %c392_105 = arith.constant 392 : index
    %149 = vector.load %arg11[%c0_104, %c392_105] : memref<4x1952xf32, #tpu.memory_space<vmem>>, vector<4x1440xf32>
    %c6_106 = arith.constant 6 : index
    %c0_107 = arith.constant 0 : index
    %c0_108 = arith.constant 0 : index
    %150 = vector.load %arg5[%c6_106, %c0_107, %c0_108] : memref<9x4x4xf32, #tpu.memory_space<vmem>>, vector<1x4x4xf32>
    %151 = vector.shape_cast %150 : vector<1x4x4xf32> to vector<4x4xf32>
    %cst_109 = arith.constant dense<0.000000e+00> : vector<4x1440xf32>
    %152 = tpu.matmul %151, %149, %cst_109 {dimension_numbers = #tpu.dot_dimension_numbers<[1], [0], [0], [1], [0, 0, 1, 1], [], []>} : vector<4x4xf32>, vector<4x1440xf32>, vector<4x1440xf32> -> vector<4x1440xf32>
    %153 = arith.addf %148, %152 : vector<4x1440xf32>
    %c0_110 = arith.constant 0 : index
    %c400_111 = arith.constant 400 : index
    %154 = vector.load %arg11[%c0_110, %c400_111] : memref<4x1952xf32, #tpu.memory_space<vmem>>, vector<4x1440xf32>
    %c7_112 = arith.constant 7 : index
    %c0_113 = arith.constant 0 : index
    %c0_114 = arith.constant 0 : index
    %155 = vector.load %arg5[%c7_112, %c0_113, %c0_114] : memref<9x4x4xf32, #tpu.memory_space<vmem>>, vector<1x4x4xf32>
    %156 = vector.shape_cast %155 : vector<1x4x4xf32> to vector<4x4xf32>
    %cst_115 = arith.constant dense<0.000000e+00> : vector<4x1440xf32>
    %157 = tpu.matmul %156, %154, %cst_115 {dimension_numbers = #tpu.dot_dimension_numbers<[1], [0], [0], [1], [0, 0, 1, 1], [], []>} : vector<4x4xf32>, vector<4x1440xf32>, vector<4x1440xf32> -> vector<4x1440xf32>
    %158 = arith.addf %153, %157 : vector<4x1440xf32>
    %c0_116 = arith.constant 0 : index
    %c408_117 = arith.constant 408 : index
    %159 = vector.load %arg11[%c0_116, %c408_117] : memref<4x1952xf32, #tpu.memory_space<vmem>>, vector<4x1440xf32>
    %c8_118 = arith.constant 8 : index
    %c0_119 = arith.constant 0 : index
    %c0_120 = arith.constant 0 : index
    %160 = vector.load %arg5[%c8_118, %c0_119, %c0_120] : memref<9x4x4xf32, #tpu.memory_space<vmem>>, vector<1x4x4xf32>
    %161 = vector.shape_cast %160 : vector<1x4x4xf32> to vector<4x4xf32>
    %cst_121 = arith.constant dense<0.000000e+00> : vector<4x1440xf32>
    %162 = tpu.matmul %161, %159, %cst_121 {dimension_numbers = #tpu.dot_dimension_numbers<[1], [0], [0], [1], [0, 0, 1, 1], [], []>} : vector<4x4xf32>, vector<4x1440xf32>, vector<4x1440xf32> -> vector<4x1440xf32>
    %163 = arith.addf %158, %162 : vector<4x1440xf32>
    %c0_122 = arith.constant 0 : index
    %c0_123 = arith.constant 0 : index
    %164 = vector.load %arg6[%c0_122, %c0_123] : memref<4x1xf32, #tpu.memory_space<vmem>>, vector<4x1xf32>
    %165 = vector.broadcast %164 : vector<4x1xf32> to vector<4x1440xf32>
    %166 = arith.addf %163, %165 : vector<4x1440xf32>
    %c0_124 = arith.constant 0 : index
    %c0_125 = arith.constant 0 : index
    %167 = vector.load %arg7[%c0_124, %c0_125] : memref<4x8xf32, #tpu.memory_space<vmem>>, vector<4x8xf32>
    %cst_126 = arith.constant dense<0.000000e+00> : vector<4x1440xf32>
    %168 = tpu.matmul %167, %2, %cst_126 {dimension_numbers = #tpu.dot_dimension_numbers<[1], [0], [0], [1], [0, 0, 1, 1], [], []>} : vector<4x8xf32>, vector<8x1440xf32>, vector<4x1440xf32> -> vector<4x1440xf32>
    %c0_127 = arith.constant 0 : index
    %c0_128 = arith.constant 0 : index
    %169 = vector.load %arg8[%c0_127, %c0_128] : memref<4x1xf32, #tpu.memory_space<vmem>>, vector<4x1xf32>
    %170 = vector.broadcast %169 : vector<4x1xf32> to vector<4x1440xf32>
    %171 = arith.addf %168, %170 : vector<4x1440xf32>
    %172 = arith.addf %171, %166 : vector<4x1440xf32>
    %c0_129 = arith.constant 0 : index
    %c0_130 = arith.constant 0 : index
    %c0_131 = arith.constant 0 : index
    %173 = vector.load %arg9[%c0_129, %c0_130, %c0_131] : memref<1x4x1440xf32, #tpu.memory_space<vmem>>, vector<1x4x1440xf32>
    %174 = vector.shape_cast %173 : vector<1x4x1440xf32> to vector<4x1440xf32>
    %175 = vector.shape_cast %172 : vector<4x1440xf32> to vector<1x4x1440xf32>
    tpu.vector_store %arg9[%c0_129, %c0_130, %c0_131], %175 {strides = array<i32>} : memref<1x4x1440xf32, #tpu.memory_space<vmem>>, vector<1x4x1440xf32>,
    return
  }
  func.func @transform_0(%arg0: i32) -> (i32, i32, i32) {
    %c0_i32 = arith.constant 0 : i32
    %c0_i32_0 = arith.constant 0 : i32
    %c0_i32_1 = arith.constant 0 : i32
    return %arg0, %c0_i32, %c0_i32_0 : i32, i32, i32
  }
  func.func @transform_1(%arg0: i32) -> (i32, i32) {
    %c0_i32 = arith.constant 0 : i32
    %c0_i32_0 = arith.constant 0 : i32
    %c0_i32_1 = arith.constant 0 : i32
    return %c0_i32, %c0_i32_0 : i32, i32
  }
  func.func @transform_2(%arg0: i32) -> (i32, i32, i32) {
    %c0_i32 = arith.constant 0 : i32
    %c0_i32_0 = arith.constant 0 : i32
    %c0_i32_1 = arith.constant 0 : i32
    %c0_i32_2 = arith.constant 0 : i32
    return %c0_i32, %c0_i32_0, %c0_i32_1 : i32, i32, i32
  }
  func.func @transform_3(%arg0: i32) -> (i32, i32) {
    %c0_i32 = arith.constant 0 : i32
    %c0_i32_0 = arith.constant 0 : i32
    %c0_i32_1 = arith.constant 0 : i32
    return %c0_i32, %c0_i32_0 : i32, i32
  }
  func.func @transform_4(%arg0: i32) -> (i32, i32, i32) {
    %c0_i32 = arith.constant 0 : i32
    %c0_i32_0 = arith.constant 0 : i32
    %c0_i32_1 = arith.constant 0 : i32
    %c0_i32_2 = arith.constant 0 : i32
    return %c0_i32, %c0_i32_0, %c0_i32_1 : i32, i32, i32
  }
  func.func @transform_5(%arg0: i32) -> (i32, i32) {
    %c0_i32 = arith.constant 0 : i32
    %c0_i32_0 = arith.constant 0 : i32
    %c0_i32_1 = arith.constant 0 : i32
    return %c0_i32, %c0_i32_0 : i32, i32
  }
  func.func @transform_6(%arg0: i32) -> (i32, i32) {
    %c0_i32 = arith.constant 0 : i32
    %c0_i32_0 = arith.constant 0 : i32
    %c0_i32_1 = arith.constant 0 : i32
    return %c0_i32, %c0_i32_0 : i32, i32
  }
  func.func @transform_7(%arg0: i32) -> (i32, i32) {
    %c0_i32 = arith.constant 0 : i32
    %c0_i32_0 = arith.constant 0 : i32
    %c0_i32_1 = arith.constant 0 : i32
    return %c0_i32, %c0_i32_0 : i32, i32
  }
  func.func @transform_8(%arg0: i32) -> (i32, i32, i32) {
    %c0_i32 = arith.constant 0 : i32
    %c0_i32_0 = arith.constant 0 : i32
    %c0_i32_1 = arith.constant 0 : i32
    return %arg0, %c0_i32, %c0_i32_0 : i32, i32, i32
  }
}

</mosaic_0001>

<llo_original>
// kernel: resnet_block_h.1
$region0: #{resnet_block_h.1}
  #allocation0 [shape = 'u32[]', space=smem, size = 0x4, offset = 0x4, fixed_abs, tag = 'smem constant byte address 0x4 - core index']
  #allocation1 [shape = 'u32[144,128]{1,0:T(1,128)}', space=vmem, size = 0x12000, scoped, tag = 'internal scratch']
  #allocation2 [shape = 'f32[8,1952]{1,0:T(8,128)}', space=vmem, size = 0x10000, scoped, tag = 'scratch operand']
  #allocation3 [shape = 'f32[4,1952]{1,0:T(4,128)}', space=vmem, size = 0x8000, scoped, tag = 'scratch operand']
  %s0 = inlined_call_operand.vmem [shape: f32[2,8,1440], index: 0, kind: input, shape index: {}]
  %s1 = inlined_call_operand.vmem [shape: f32[1,1440], index: 1, kind: input, shape index: {}]
  %s2 = inlined_call_operand.vmem [shape: f32[9,4,8], index: 2, kind: input, shape index: {}]
  %s3 = inlined_call_operand.vmem [shape: f32[4,1], index: 3, kind: input, shape index: {}]
  %s4 = inlined_call_operand.vmem [shape: f32[9,4,4], index: 4, kind: input, shape index: {}]
  %s5 = inlined_call_operand.vmem [shape: f32[4,1], index: 5, kind: input, shape index: {}]
  %s6 = inlined_call_operand.vmem [shape: f32[4,8], index: 6, kind: input, shape index: {}]
  %s7 = inlined_call_operand.vmem [shape: f32[4,1], index: 7, kind: input, shape index: {}]
  %s8 = inlined_call_operand.vmem [shape: f32[2,4,1440], index: 8, kind: output, shape index: {}]
  %s9 = sld [smem:[#allocation0]]
  $region65: #{resnet_block_h.1} parent=0
    _
  %s11 = ssub.s32 1, %s9
  %s12 = scalar_select 0, %s11, %s9
  loop: start=0, step=1, limit=4
  $region2: #{resnet_block_h.1} parent=0 // loop_pre_header
    _
  $region3: #{resnet_block_h.1} parent=0 // loop_header
    %s14 = sphi 0, %s18
    %p15 = scmp.ge.s32.totalorder %s14, 4
    %s24 = sphi 0, %s26
    %s27 = sphi 0, %s24
    %s28 = sphi 0, %s27
    %s44 = sphi 0, %s28
    %s48 = sphi 0, %s48
    %s50 = sphi 0, %s48
    %s51 = sphi 0, %s50
    %s65 = sphi 0, %s51
    %s69 = sphi 0, %s69
    %s71 = sphi 0, %s69
    %s72 = sphi 0, %s71
    %s86 = sphi 0, %s72
    %s90 = sphi 0, %s90
    %s92 = sphi 0, %s90
    %s93 = sphi 0, %s92
    %s107 = sphi 0, %s93
    %s111 = sphi 0, %s111
    %s113 = sphi 0, %s111
    %s114 = sphi 0, %s113
    %s128 = sphi 0, %s114
    %s132 = sphi 0, %s132
    %s134 = sphi 0, %s132
    %s135 = sphi 0, %s134
    %s149 = sphi 0, %s135
    %s153 = sphi 0, %s153
    %s155 = sphi 0, %s153
    %s156 = sphi 0, %s155
    %s170 = sphi 0, %s156
    %s174 = sphi 0, %s174
    %s176 = sphi 0, %s174
    %s177 = sphi 0, %s176
    %s191 = sphi 0, %s177
    %s197 = sphi 0, %s199
    %s200 = sphi 0, %s197
    %s201 = sphi 0, %s200
    %s217 = sphi 0, %s201
  $region4: #{resnet_block_h.1} parent=0 // loop_header_branch
    %17 = sbr.rel (%p15) target = $region8
  $region5: #{resnet_block_h.1} parent=0 // loop_body
    %s19 = ssub.s32 %s14, 1
    %s20 = ssub.s32 %s14, 2
    %s21 = sadd.s32 %s14, 1
    %s22 = ssub.s32 %s14, %s21
    %p23 = scmp.eq.s32.totalorder %s22, 0
    %s25 = sadd.s32 %s24, 1
    %s26 = scalar_select %p23, %s24, %s25
    %p29 = pneg %p23
    %p30 = scmp.eq.s32.totalorder %s14, 1
    %p31 = por %p29, %p30
    %p32 = scmp.ne.s32.totalorder %s24, %s27
    %p33 = scmp.eq.s32.totalorder %s14, 0
    %p34 = por %p32, %p33
    %p35 = scmp.ne.s32.totalorder %s24, %s27
    %p36 = scmp.eq.s32.totalorder %s19, 1
    %p37 = por %p35, %p36
    %p38 = scmp.ne.s32.totalorder %s27, %s28
    %p39 = scmp.eq.s32.totalorder %s19, 0
    %p40 = por %p38, %p39
    %p41 = scmp.ne.s32.totalorder %s27, %s28
    %p42 = scmp.eq.s32.totalorder %s20, 1
    %p43 = por %p41, %p42
    %p45 = scmp.ne.s32.totalorder %s28, %s44
    %p46 = scmp.eq.s32.totalorder %s20, 0
    %p47 = por %p45, %p46
    %s49 = sadd.s32 %s48, 1
    %p52 = scmp.eq.s32.totalorder %s14, 1
    %p53 = scmp.ne.s32.totalorder %s48, %s50
    %p54 = scmp.eq.s32.totalorder %s14, 0
    %p55 = por %p53, %p54
    %p56 = scmp.ne.s32.totalorder %s48, %s50
    %p57 = scmp.eq.s32.totalorder %s19, 1
    %p58 = por %p56, %p57
    %p59 = scmp.ne.s32.totalorder %s50, %s51
    %p60 = scmp.eq.s32.totalorder %s19, 0
    %p61 = por %p59, %p60
    %p62 = scmp.ne.s32.totalorder %s50, %s51
    %p63 = scmp.eq.s32.totalorder %s20, 1
    %p64 = por %p62, %p63
    %p66 = scmp.ne.s32.totalorder %s51, %s65
    %p67 = scmp.eq.s32.totalorder %s20, 0
    %p68 = por %p66, %p67
    %s70 = sadd.s32 %s69, 1
    %p73 = scmp.eq.s32.totalorder %s14, 1
    %p74 = scmp.ne.s32.totalorder %s69, %s71
    %p75 = scmp.eq.s32.totalorder %s14, 0
    %p76 = por %p74, %p75
    %p77 = scmp.ne.s32.totalorder %s69, %s71
    %p78 = scmp.eq.s32.totalorder %s19, 1
    %p79 = por %p77, %p78
    %p80 = scmp.ne.s32.totalorder %s71, %s72
    %p81 = scmp.eq.s32.totalorder %s19, 0
    %p82 = por %p80, %p81
    %p83 = scmp.ne.s32.totalorder %s71, %s72
    %p84 = scmp.eq.s32.totalorder %s20, 1
    %p85 = por %p83, %p84
    %p87 = scmp.ne.s32.totalorder %s72, %s86
    %p88 = scmp.eq.s32.totalorder %s20, 0
    %p89 = por %p87, %p88
    %s91 = sadd.s32 %s90, 1
    %p94 = scmp.eq.s32.totalorder %s14, 1
    %p95 = scmp.ne.s32.totalorder %s90, %s92
    %p96 = scmp.eq.s32.totalorder %s14, 0
    %p97 = por %p95, %p96
    %p98 = scmp.ne.s32.totalorder %s90, %s92
    %p99 = scmp.eq.s32.totalorder %s19, 1
    %p100 = por %p98, %p99
    %p101 = scmp.ne.s32.totalorder %s92, %s93
    %p102 = scmp.eq.s32.totalorder %s19, 0
    %p103 = por %p101, %p102
    %p104 = scmp.ne.s32.totalorder %s92, %s93
    %p105 = scmp.eq.s32.totalorder %s20, 1
    %p106 = por %p104, %p105
    %p108 = scmp.ne.s32.totalorder %s93, %s107
    %p109 = scmp.eq.s32.totalorder %s20, 0
    %p110 = por %p108, %p109
    %s112 = sadd.s32 %s111, 1
    %p115 = scmp.eq.s32.totalorder %s14, 1
    %p116 = scmp.ne.s32.totalorder %s111, %s113
    %p117 = scmp.eq.s32.totalorder %s14, 0
    %p118 = por %p116, %p117
    %p119 = scmp.ne.s32.totalorder %s111, %s113
    %p120 = scmp.eq.s32.totalorder %s19, 1
    %p121 = por %p119, %p120
    %p122 = scmp.ne.s32.totalorder %s113, %s114
    %p123 = scmp.eq.s32.totalorder %s19, 0
    %p124 = por %p122, %p123
    %p125 = scmp.ne.s32.totalorder %s113, %s114
    %p126 = scmp.eq.s32.totalorder %s20, 1
    %p127 = por %p125, %p126
    %p129 = scmp.ne.s32.totalorder %s114, %s128
    %p130 = scmp.eq.s32.totalorder %s20, 0
    %p131 = por %p129, %p130
    %s133 = sadd.s32 %s132, 1
    %p136 = scmp.eq.s32.totalorder %s14, 1
    %p137 = scmp.ne.s32.totalorder %s132, %s134
    %p138 = scmp.eq.s32.totalorder %s14, 0
    %p139 = por %p137, %p138
    %p140 = scmp.ne.s32.totalorder %s132, %s134
    %p141 = scmp.eq.s32.totalorder %s19, 1
    %p142 = por %p140, %p141
    %p143 = scmp.ne.s32.totalorder %s134, %s135
    %p144 = scmp.eq.s32.totalorder %s19, 0
    %p145 = por %p143, %p144
    %p146 = scmp.ne.s32.totalorder %s134, %s135
    %p147 = scmp.eq.s32.totalorder %s20, 1
    %p148 = por %p146, %p147
    %p150 = scmp.ne.s32.totalorder %s135, %s149
    %p151 = scmp.eq.s32.totalorder %s20, 0
    %p152 = por %p150, %p151
    %s154 = sadd.s32 %s153, 1
    %p157 = scmp.eq.s32.totalorder %s14, 1
    %p158 = scmp.ne.s32.totalorder %s153, %s155
    %p159 = scmp.eq.s32.totalorder %s14, 0
    %p160 = por %p158, %p159
    %p161 = scmp.ne.s32.totalorder %s153, %s155
    %p162 = scmp.eq.s32.totalorder %s19, 1
    %p163 = por %p161, %p162
    %p164 = scmp.ne.s32.totalorder %s155, %s156
    %p165 = scmp.eq.s32.totalorder %s19, 0
    %p166 = por %p164, %p165
    %p167 = scmp.ne.s32.totalorder %s155, %s156
    %p168 = scmp.eq.s32.totalorder %s20, 1
    %p169 = por %p167, %p168
    %p171 = scmp.ne.s32.totalorder %s156, %s170
    %p172 = scmp.eq.s32.totalorder %s20, 0
    %p173 = por %p171, %p172
    %s175 = sadd.s32 %s174, 1
    %p178 = scmp.eq.s32.totalorder %s14, 1
    %p179 = scmp.ne.s32.totalorder %s174, %s176
    %p180 = scmp.eq.s32.totalorder %s14, 0
    %p181 = por %p179, %p180
    %p182 = scmp.ne.s32.totalorder %s174, %s176
    %p183 = scmp.eq.s32.totalorder %s19, 1
    %p184 = por %p182, %p183
    %p185 = scmp.ne.s32.totalorder %s176, %s177
    %p186 = scmp.eq.s32.totalorder %s19, 0
    %p187 = por %p185, %p186
    %p188 = scmp.ne.s32.totalorder %s176, %s177
    %p189 = scmp.eq.s32.totalorder %s20, 1
    %p190 = por %p188, %p189
    %p192 = scmp.ne.s32.totalorder %s177, %s191
    %p193 = scmp.eq.s32.totalorder %s20, 0
    %p194 = por %p192, %p193
    %s195 = ssub.s32 %s14, %s21
    %p196 = scmp.eq.s32.totalorder %s195, 0
    %s198 = sadd.s32 %s197, 1
    %s199 = scalar_select %p196, %s197, %s198
    %p202 = pneg %p196
    %p203 = scmp.eq.s32.totalorder %s14, 1
    %p204 = por %p202, %p203
    %p205 = scmp.ne.s32.totalorder %s197, %s200
    %p206 = scmp.eq.s32.totalorder %s14, 0
    %p207 = por %p205, %p206
    %p208 = scmp.ne.s32.totalorder %s197, %s200
    %p209 = scmp.eq.s32.totalorder %s19, 1
    %p210 = por %p208, %p209
    %p211 = scmp.ne.s32.totalorder %s200, %s201
    %p212 = scmp.eq.s32.totalorder %s19, 0
    %p213 = por %p211, %p212
    %p214 = scmp.ne.s32.totalorder %s200, %s201
    %p215 = scmp.eq.s32.totalorder %s20, 1
    %p216 = por %p214, %p215
    %p218 = scmp.ne.s32.totalorder %s201, %s217
    %p219 = scmp.eq.s32.totalorder %s20, 0
    %p220 = por %p218, %p219
    %p221 = scmp.le.s32.totalorder 1, %s14
    %p222 = scmp.lt.s32.totalorder %s14, 3
    %p223 = pnand %p221, %p222
    %p224 = pneg %p223
    // Predicated region
    $region9: #{resnet_block_h.1} parent=5 // pred_check
      _
    $region10: #{resnet_block_h.1} parent=5 // pred_check_branch
      %226 = sbr.rel (%p223) target = $region12
    $region11: #{resnet_block_h.1} parent=5 // pred_region
      %s227 = ssub.s32 %s14, 1
      // Predicated region
      $region13: #{resnet_block_h.1} parent=11 // pred_check
        %p228 = pneg %p61
      $region14: #{resnet_block_h.1} parent=11 // pred_check_branch
        %230 = sbr.rel (%p228) target = $region16
      $region15: #{resnet_block_h.1} parent=11 // pred_region
        _
      $region16: #{resnet_block_h.1} parent=11 // pred_fallthru
        _
      // Predicated region
      $region17: #{resnet_block_h.1} parent=11 // pred_check
        %p231 = pneg %p82
      $region18: #{resnet_block_h.1} parent=11 // pred_check_branch
        %233 = sbr.rel (%p231) target = $region20
      $region19: #{resnet_block_h.1} parent=11 // pred_region
        _
      $region20: #{resnet_block_h.1} parent=11 // pred_fallthru
        _
      // Predicated region
      $region21: #{resnet_block_h.1} parent=11 // pred_check
        %p234 = pneg %p103
      $region22: #{resnet_block_h.1} parent=11 // pred_check_branch
        %236 = sbr.rel (%p234) target = $region24
      $region23: #{resnet_block_h.1} parent=11 // pred_region
        _
      $region24: #{resnet_block_h.1} parent=11 // pred_fallthru
        _
      // Predicated region
      $region25: #{resnet_block_h.1} parent=11 // pred_check
        %p237 = pneg %p124
      $region26: #{resnet_block_h.1} parent=11 // pred_check_branch
        %239 = sbr.rel (%p237) target = $region28
      $region27: #{resnet_block_h.1} parent=11 // pred_region
        _
      $region28: #{resnet_block_h.1} parent=11 // pred_fallthru
        _
      // Predicated region
      $region29: #{resnet_block_h.1} parent=11 // pred_check
        %p240 = pneg %p145
      $region30: #{resnet_block_h.1} parent=11 // pred_check_branch
        %242 = sbr.rel (%p240) target = $region32
      $region31: #{resnet_block_h.1} parent=11 // pred_region
        _
      $region32: #{resnet_block_h.1} parent=11 // pred_fallthru
        _
      // Predicated region
      $region33: #{resnet_block_h.1} parent=11 // pred_check
        %p243 = pneg %p166
      $region34: #{resnet_block_h.1} parent=11 // pred_check_branch
        %245 = sbr.rel (%p243) target = $region36
      $region35: #{resnet_block_h.1} parent=11 // pred_region
        _
      $region36: #{resnet_block_h.1} parent=11 // pred_fallthru
        _
      // Predicated region
      $region37: #{resnet_block_h.1} parent=11 // pred_check
        %p246 = pneg %p187
      $region38: #{resnet_block_h.1} parent=11 // pred_check_branch
        %248 = sbr.rel (%p246) target = $region40
      $region39: #{resnet_block_h.1} parent=11 // pred_region
        _
      $region40: #{resnet_block_h.1} parent=11 // pred_fallthru
        _
    $region12: #{resnet_block_h.1} parent=5 // pred_fallthru
      _
    %p249 = scmp.lt.s32.totalorder %s14, 2
    // Predicated region
    $region41: #{resnet_block_h.1} parent=5 // pred_check
      %p250 = pneg %p249
    $region42: #{resnet_block_h.1} parent=5 // pred_check_branch
      %252 = sbr.rel (%p250) target = $region44
    $region43: #{resnet_block_h.1} parent=5 // pred_region
      // Predicated region
      $region45: #{resnet_block_h.1} parent=43 // pred_check
        %p253 = pneg %p34
      $region46: #{resnet_block_h.1} parent=43 // pred_check_branch
        %255 = sbr.rel (%p253) target = $region48
      $region47: #{resnet_block_h.1} parent=43 // pred_region
        %p256 = scmp.lt.s32.totalorder %s14, 1
        %s257 = scalar_select %p256, %s14, 1
        %s258 = smul.addr %s257, 12
        %s259 = smul.addr %s258, 8
        %s260 = scalar_lea.vmem %s0, %s259
      $region48: #{resnet_block_h.1} parent=43 // pred_fallthru
        _
    $region44: #{resnet_block_h.1} parent=5 // pred_fallthru
      _
    %p261 = scmp.le.s32.totalorder 1, %s14
    %p262 = scmp.lt.s32.totalorder %s14, 3
    %p263 = pnand %p261, %p262
    %p264 = pneg %p263
    // Predicated region
    $region49: #{resnet_block_h.1} parent=5 // pred_check
      _
    $region50: #{resnet_block_h.1} parent=5 // pred_check_branch
      %266 = sbr.rel (%p263) target = $region52
    $region51: #{resnet_block_h.1} parent=5 // pred_region
      %s267 = ssub.s32 %s14, 1
      %p268 = scmp.lt.s32.totalorder %s19, 1
      %s269 = scalar_select %p268, %s19, 1
      %s270 = smul.addr %s269, 12
      %s271 = smul.addr %s270, 8
      %s272 = scalar_lea.vmem %s0, %s271
      %p273 = pneg %p40
      %p274 = pneg %p37
      %p275 = pneg %p61
      %p276 = pneg %p58
      %p277 = pneg %p82
      %p278 = pneg %p79
      %p279 = pneg %p103
      %p280 = pneg %p100
      %p281 = pneg %p124
      %p282 = pneg %p121
      %p283 = pneg %p145
      %p284 = pneg %p142
      %p285 = pneg %p166
      %p286 = pneg %p163
      %p287 = pneg %p187
      %p288 = pneg %p184
      %p289 = pneg %p213
      %p290 = pneg %p210
      %p291 = scmp.lt.s32.totalorder %s19, 1
      %s292 = scalar_select %p291, %s19, 1
      %s293 = smul.addr %s292, 12
      %s294 = smul.addr %s293, 4
      %s295 = scalar_lea.vmem %s8, %s294
      %p296 = scmp.lt.s32.totalorder %s19, 1
      %s297 = scalar_select %p296, %s19, 1
      %s298 = smul.addr %s297, 12
      %s299 = smul.addr %s298, 8
      %s300 = scalar_lea.vmem %s0, %s299
      %p301 = scmp.lt.s32.totalorder %s19, 1
      %s302 = scalar_select %p301, %s19, 1
      %s303 = smul.addr %s302, 12
      %s304 = smul.addr %s303, 4
      %s305 = scalar_lea.vmem %s8, %s304
      %v306 = vld [vmem:[%s1] sm:$0xff]
      %v307 = vld [vmem:[%s1 + $0x8] sm:$0xf]
      %v308 = vld [vmem:[%s300] sm:$0xff]
      %v309 = vld [vmem:[%s300 + $0x8] sm:$0xff]
      %v310 = vld [vmem:[%s300 + $0x10] sm:$0xff]
      %v311 = vld [vmem:[%s300 + $0x18] sm:$0xff]
      %v312 = vld [vmem:[%s300 + $0x20] sm:$0xff]
      %v313 = vld [vmem:[%s300 + $0x28] sm:$0xff]
      %v314 = vld [vmem:[%s300 + $0x30] sm:$0xff]
      %v315 = vld [vmem:[%s300 + $0x38] sm:$0xff]
      %v316 = vld [vmem:[%s300 + $0x40] sm:$0xff]
      %v317 = vld [vmem:[%s300 + $0x48] sm:$0xff]
      %v318 = vld [vmem:[%s300 + $0x50] sm:$0xff]
      %v319 = vld [vmem:[%s300 + $0x58] sm:$0xff]
      %320 = vst [vmem:[#allocation2] sm:$0xff] 0.0
      %321 = vst [vmem:[#allocation2 + $0x8] sm:$0xff] 0.0
      %322 = vst [vmem:[#allocation2 + $0x10] sm:$0xff] 0.0
      %323 = vst [vmem:[#allocation2 + $0x18] sm:$0xff] 0.0
      %324 = vst [vmem:[#allocation2 + $0x20] sm:$0xff] 0.0
      %325 = vst [vmem:[#allocation2 + $0x28] sm:$0xff] 0.0
      %326 = vst [vmem:[#allocation2 + $0x30] sm:$0xff] 0.0
      %327 = vst [vmem:[#allocation2 + $0x38] sm:$0xff] 0.0
      %328 = vst [vmem:[#allocation2 + $0x40] sm:$0xff] 0.0
      %329 = vst [vmem:[#allocation2 + $0x48] sm:$0xff] 0.0
      %330 = vst [vmem:[#allocation2 + $0x50] sm:$0xff] 0.0
      %331 = vst [vmem:[#allocation2 + $0x58] sm:$0xff] 0.0
      %332 = vst [vmem:[#allocation2 + $0x60] sm:$0xff] 0.0
      %333 = vst [vmem:[#allocation2 + $0x68] sm:$0xff] 0.0
      %334 = vst [vmem:[#allocation2 + $0x70] sm:$0xff] 0.0
      %vm335 = vcmask 261120
      %336 = vst.msk [vmem:[#allocation2 + $0x78] sm:$0xff] %vm335, 0.0
      %337 = vst [vmem:[#allocation3] sm:$0xff] 0.0
      %338 = vst [vmem:[#allocation3 + $0x8] sm:$0xff] 0.0
      %339 = vst [vmem:[#allocation3 + $0x10] sm:$0xff] 0.0
      %340 = vst [vmem:[#allocation3 + $0x18] sm:$0xff] 0.0
      %341 = vst [vmem:[#allocation3 + $0x20] sm:$0xff] 0.0
      %342 = vst [vmem:[#allocation3 + $0x28] sm:$0xff] 0.0
      %343 = vst [vmem:[#allocation3 + $0x30] sm:$0xff] 0.0
      %vm344 = vcmask 1043456
      %vm345 = vcmask 261124
      %vm346 = vmor %vm345, %vm344
      %347 = vst.msk [vmem:[#allocation3 + $0x38] sm:$0xff] %vm346, 0.0
      %v350 = vlaneseq
      %v351 = vshrl.u32 %v350, 7
      %v352 = vsub.s32 0, %v351
      %v353 = vrot.slane %v306, %v352
      %v354 = vlaneseq
      %v355 = vshrl.u32 %v354, 7
      %v356 = vsub.s32 1, %v355
      %v357 = vrot.slane %v306, %v356
      %v358 = vlaneseq
      %v359 = vshrl.u32 %v358, 7
      %v360 = vsub.s32 2, %v359
      %v361 = vrot.slane %v306, %v360
      %v362 = vlaneseq
      %v363 = vshrl.u32 %v362, 7
      %v364 = vsub.s32 3, %v363
      %v365 = vrot.slane %v306, %v364
      %v366 = vlaneseq
      %v367 = vshrl.u32 %v366, 7
      %v368 = vsub.s32 4, %v367
      %v369 = vrot.slane %v306, %v368
      %v370 = vlaneseq
      %v371 = vshrl.u32 %v370, 7
      %v372 = vsub.s32 5, %v371
      %v373 = vrot.slane %v306, %v372
      %v374 = vlaneseq
      %v375 = vshrl.u32 %v374, 7
      %v376 = vsub.s32 6, %v375
      %v377 = vrot.slane %v306, %v376
      %v378 = vlaneseq
      %v379 = vshrl.u32 %v378, 7
      %v380 = vsub.s32 7, %v379
      %v381 = vrot.slane %v306, %v380
      %v382 = vlaneseq
      %v383 = vshrl.u32 %v382, 7
      %v384 = vsub.s32 0, %v383
      %v385 = vrot.slane %v307, %v384
      %v386 = vlaneseq
      %v387 = vshrl.u32 %v386, 7
      %v388 = vsub.s32 1, %v387
      %v389 = vrot.slane %v307, %v388
      %v390 = vlaneseq
      %v391 = vshrl.u32 %v390, 7
      %v392 = vsub.s32 2, %v391
      %v393 = vrot.slane %v307, %v392
      %v394 = vlaneseq
      %v395 = vshrl.u32 %v394, 7
      %v396 = vsub.s32 3, %v395
      %v397 = vrot.slane %v307, %v396
      %v410 = vmul.f32 %v308, %v353
      %v411 = vmul.f32 %v309, %v357
      %v412 = vmul.f32 %v310, %v361
      %v413 = vmul.f32 %v311, %v365
      %v414 = vmul.f32 %v312, %v369
      %v415 = vmul.f32 %v313, %v373
      %v416 = vmul.f32 %v314, %v377
      %v417 = vmul.f32 %v315, %v381
      %v418 = vmul.f32 %v316, %v385
      %v419 = vmul.f32 %v317, %v389
      %v420 = vmul.f32 %v318, %v393
      %v421 = vmul.f32 %v319, %v397
      %v422 = vadd.f32 %v410, %v411
      %v423 = vadd.f32 %v422, %v412
      %v424 = vadd.f32 %v423, %v413
      %v425 = vadd.f32 %v424, %v414
      %v426 = vadd.f32 %v425, %v415
      %v427 = vadd.f32 %v426, %v416
      %v428 = vadd.f32 %v427, %v417
      %v429 = vadd.f32 %v428, %v418
      %v430 = vadd.f32 %v429, %v419
      %v431 = vadd.f32 %v430, %v420
      %v432 = vsel %vm335, %v421, 0.0
      %v433 = vadd.f32 %v431, %v432
      %434 = vadd.xlane.f32.xlu0 %v433
      %v435 = vpop.xlane.xlu0 %434
      %v436 = vmul.f32 %v435, 0.0009765625
      %v437 = vmul.f32 %v410, %v410
      %v438 = vmul.f32 %v411, %v411
      %v439 = vmul.f32 %v412, %v412
      %v440 = vmul.f32 %v413, %v413
      %v441 = vmul.f32 %v414, %v414
      %v442 = vmul.f32 %v415, %v415
      %v443 = vmul.f32 %v416, %v416
      %v444 = vmul.f32 %v417, %v417
      %v445 = vmul.f32 %v418, %v418
      %v446 = vmul.f32 %v419, %v419
      %v447 = vmul.f32 %v420, %v420
      %v448 = vmul.f32 %v421, %v421
      %v449 = vadd.f32 %v437, %v438
      %v450 = vadd.f32 %v449, %v439
      %v451 = vadd.f32 %v450, %v440
      %v452 = vadd.f32 %v451, %v441
      %v453 = vadd.f32 %v452, %v442
      %v454 = vadd.f32 %v453, %v443
      %v455 = vadd.f32 %v454, %v444
      %v456 = vadd.f32 %v455, %v445
      %v457 = vadd.f32 %v456, %v446
      %v458 = vadd.f32 %v457, %v447
      %v459 = vsel %vm335, %v448, 0.0
      %v460 = vadd.f32 %v458, %v459
      %461 = vadd.xlane.f32.xlu0 %v460
      %v462 = vpop.xlane.xlu0 %461
      %v463 = vmul.f32 %v462, 0.0009765625
      %v464 = vmul.f32 %v436, %v436
      %v465 = vsub.f32 %v463, %v464
      %v466 = vmax.f32 %v465, 0.0
      %v467 = vsub.f32 %v308, %v436
      %v468 = vsub.f32 %v309, %v436
      %v469 = vsub.f32 %v310, %v436
      %v470 = vsub.f32 %v311, %v436
      %v471 = vsub.f32 %v312, %v436
      %v472 = vsub.f32 %v313, %v436
      %v473 = vsub.f32 %v314, %v436
      %v474 = vsub.f32 %v315, %v436
      %v475 = vsub.f32 %v316, %v436
      %v476 = vsub.f32 %v317, %v436
      %v477 = vsub.f32 %v318, %v436
      %v478 = vsub.f32 %v319, %v436
      %v479 = vadd.f32 %v466, 1e-05
      %v480 = vrsqrt.pop %v479
      %v481 = vmul.f32 %v467, %v480
      %v482 = vmul.f32 %v468, %v480
      %v483 = vmul.f32 %v469, %v480
      %v484 = vmul.f32 %v470, %v480
      %v485 = vmul.f32 %v471, %v480
      %v486 = vmul.f32 %v472, %v480
      %v487 = vmul.f32 %v473, %v480
      %v488 = vmul.f32 %v474, %v480
      %v489 = vmul.f32 %v475, %v480
      %v490 = vmul.f32 %v476, %v480
      %v491 = vmul.f32 %v477, %v480
      %v492 = vmul.f32 %v478, %v480
      %v493 = vxor.u32 %v481, 2147483648
      %v494 = vxor.u32 %v482, 2147483648
      %v495 = vxor.u32 %v483, 2147483648
      %v496 = vxor.u32 %v484, 2147483648
      %v497 = vxor.u32 %v485, 2147483648
      %v498 = vxor.u32 %v486, 2147483648
      %v499 = vxor.u32 %v487, 2147483648
      %v500 = vxor.u32 %v488, 2147483648
      %v501 = vxor.u32 %v489, 2147483648
      %v502 = vxor.u32 %v490, 2147483648
      %v503 = vxor.u32 %v491, 2147483648
      %v504 = vxor.u32 %v492, 2147483648
      %v505 = vmul.f32 %v493, 1.442695
      %v506 = vpow.pop %v505
      %v507 = vmul.f32 %v494, 1.442695
      %v508 = vpow.pop %v507
      %v509 = vmul.f32 %v495, 1.442695
      %v510 = vpow.pop %v509
      %v511 = vmul.f32 %v496, 1.442695
      %v512 = vpow.pop %v511
      %v513 = vmul.f32 %v497, 1.442695
      %v514 = vpow.pop %v513
      %v515 = vmul.f32 %v498, 1.442695
      %v516 = vpow.pop %v515
      %v517 = vmul.f32 %v499, 1.442695
      %v518 = vpow.pop %v517
      %v519 = vmul.f32 %v500, 1.442695
      %v520 = vpow.pop %v519
      %v521 = vmul.f32 %v501, 1.442695
      %v522 = vpow.pop %v521
      %v523 = vmul.f32 %v502, 1.442695
      %v524 = vpow.pop %v523
      %v525 = vmul.f32 %v503, 1.442695
      %v526 = vpow.pop %v525
      %v527 = vmul.f32 %v504, 1.442695
      %v528 = vpow.pop %v527
      %v529 = vadd.f32 %v506, 1.0
      %v530 = vadd.f32 %v508, 1.0
      %v531 = vadd.f32 %v510, 1.0
      %v532 = vadd.f32 %v512, 1.0
      %v533 = vadd.f32 %v514, 1.0
      %v534 = vadd.f32 %v516, 1.0
      %v535 = vadd.f32 %v518, 1.0
      %v536 = vadd.f32 %v520, 1.0
      %v537 = vadd.f32 %v522, 1.0
      %v538 = vadd.f32 %v524, 1.0
      %v539 = vadd.f32 %v526, 1.0
      %v540 = vadd.f32 %v528, 1.0
      %v541 = vrcp.pop %v529
      %v542 = vmul.f32 1.0, %v541
      %v543 = vrcp.pop %v530
      %v544 = vmul.f32 1.0, %v543
      %v545 = vrcp.pop %v531
      %v546 = vmul.f32 1.0, %v545
      %v547 = vrcp.pop %v532
      %v548 = vmul.f32 1.0, %v547
      %v549 = vrcp.pop %v533
      %v550 = vmul.f32 1.0, %v549
      %v551 = vrcp.pop %v534
      %v552 = vmul.f32 1.0, %v551
      %v553 = vrcp.pop %v535
      %v554 = vmul.f32 1.0, %v553
      %v555 = vrcp.pop %v536
      %v556 = vmul.f32 1.0, %v555
      %v557 = vrcp.pop %v537
      %v558 = vmul.f32 1.0, %v557
      %v559 = vrcp.pop %v538
      %v560 = vmul.f32 1.0, %v559
      %v561 = vrcp.pop %v539
      %v562 = vmul.f32 1.0, %v561
      %v563 = vrcp.pop %v540
      %v564 = vmul.f32 1.0, %v563
      %v565 = vmul.f32 %v481, %v542
      %v566 = vmul.f32 %v482, %v544
      %v567 = vmul.f32 %v483, %v546
      %v568 = vmul.f32 %v484, %v548
      %v569 = vmul.f32 %v485, %v550
      %v570 = vmul.f32 %v486, %v552
      %v571 = vmul.f32 %v487, %v554
      %v572 = vmul.f32 %v488, %v556
      %v573 = vmul.f32 %v489, %v558
      %v574 = vmul.f32 %v490, %v560
      %v575 = vmul.f32 %v491, %v562
      %v576 = vmul.f32 %v492, %v564
      %v577 = vmul.f32 %v565, %v353
      %v578 = vmul.f32 %v566, %v357
      %v579 = vmul.f32 %v567, %v361
      %v580 = vmul.f32 %v568, %v365
      %v581 = vmul.f32 %v569, %v369
      %v582 = vmul.f32 %v570, %v373
      %v583 = vmul.f32 %v571, %v377
      %v584 = vmul.f32 %v572, %v381
      %v585 = vmul.f32 %v573, %v385
      %v586 = vmul.f32 %v574, %v389
      %v587 = vmul.f32 %v575, %v393
      %v588 = vmul.f32 %v576, %v397
      %589 = vst [vmem:[#allocation2 + $0x10] sm:$0xff] %v577
      %590 = vst [vmem:[#allocation2 + $0x18] sm:$0xff] %v578
      %591 = vst [vmem:[#allocation2 + $0x20] sm:$0xff] %v579
      %592 = vst [vmem:[#allocation2 + $0x28] sm:$0xff] %v580
      %593 = vst [vmem:[#allocation2 + $0x30] sm:$0xff] %v581
      %594 = vst [vmem:[#allocation2 + $0x38] sm:$0xff] %v582
      %595 = vst [vmem:[#allocation2 + $0x40] sm:$0xff] %v583
      %596 = vst [vmem:[#allocation2 + $0x48] sm:$0xff] %v584
      %597 = vst [vmem:[#allocation2 + $0x50] sm:$0xff] %v585
      %598 = vst [vmem:[#allocation2 + $0x58] sm:$0xff] %v586
      %599 = vst [vmem:[#allocation2 + $0x60] sm:$0xff] %v587
      %600 = vst.msk [vmem:[#allocation2 + $0x68] sm:$0xff] %vm335, %v588
      %v601 = vld [vmem:[#allocation2] sm:$0xff]
      %v602 = vld [vmem:[#allocation2 + $0x8] sm:$0xff]
      %v603 = vld [vmem:[#allocation2 + $0x10] sm:$0xff]
      %v604 = vld [vmem:[#allocation2 + $0x18] sm:$0xff]
      %v605 = vld [vmem:[#allocation2 + $0x20] sm:$0xff]
      %v606 = vld [vmem:[#allocation2 + $0x28] sm:$0xff]
      %v607 = vld [vmem:[#allocation2 + $0x30] sm:$0xff]
      %v608 = vld [vmem:[#allocation2 + $0x38] sm:$0xff]
      %v609 = vld [vmem:[#allocation2 + $0x40] sm:$0xff]
      %v610 = vld [vmem:[#allocation2 + $0x48] sm:$0xff]
      %v611 = vld [vmem:[#allocation2 + $0x50] sm:$0xff]
      %v612 = vld [vmem:[#allocation2 + $0x58] sm:$0xff]
      %v613 = vld [vmem:[#allocation2 + $0x60] sm:$0xff]
      %v614 = vld [vmem:[%s2] sm:$0xf]
      %s615 = scalar_lea.vmem %s2, 4
      %v616 = vld [vmem:[%s615] sm:$0xf]
      %630 = vrot.lane.b32.xlu0 %v601, 16
      %v631 = vpop.permute.xlu0 %630
      %632 = vrot.lane.b32.xlu0 %v602, 16
      %v633 = vpop.permute.xlu0 %632
      %634 = vrot.lane.b32.xlu0 %v603, 16
      %v635 = vpop.permute.xlu0 %634
      %636 = vrot.lane.b32.xlu0 %v604, 16
      %v637 = vpop.permute.xlu0 %636
      %638 = vrot.lane.b32.xlu0 %v605, 16
      %v639 = vpop.permute.xlu0 %638
      %640 = vrot.lane.b32.xlu0 %v606, 16
      %v641 = vpop.permute.xlu0 %640
      %642 = vrot.lane.b32.xlu0 %v607, 16
      %v643 = vpop.permute.xlu0 %642
      %644 = vrot.lane.b32.xlu0 %v608, 16
      %v645 = vpop.permute.xlu0 %644
      %646 = vrot.lane.b32.xlu0 %v609, 16
      %v647 = vpop.permute.xlu0 %646
      %648 = vrot.lane.b32.xlu0 %v610, 16
      %v649 = vpop.permute.xlu0 %648
      %650 = vrot.lane.b32.xlu0 %v611, 16
      %v651 = vpop.permute.xlu0 %650
      %652 = vrot.lane.b32.xlu0 %v612, 16
      %v653 = vpop.permute.xlu0 %652
      %654 = vrot.lane.b32.xlu0 %v613, 16
      %v655 = vpop.permute.xlu0 %654
      %vm656 = vcmask 130048
      %v657 = vsel %vm656, %v631, %v633
      %v658 = vsel %vm656, %v633, %v635
      %v659 = vsel %vm656, %v635, %v637
      %v660 = vsel %vm656, %v637, %v639
      %v661 = vsel %vm656, %v639, %v641
      %v662 = vsel %vm656, %v641, %v643
      %v663 = vsel %vm656, %v643, %v645
      %v664 = vsel %vm656, %v645, %v647
      %v665 = vsel %vm656, %v647, %v649
      %v666 = vsel %vm656, %v649, %v651
      %v667 = vsel %vm656, %v651, %v653
      %v668 = vsel %vm656, %v653, %v655
      %vm681 = vcmask 64512
      %v683 = vsel %vm681, %v616, 0
      %685 = vmatprep.subr.mxu0 %v658
      %686 = vmatpush1.msra.mxu0 %v657
      %687 = vmatprep.subr.mxu0 0.0
      %688 = vmatpush1.msra.mxu0 0.0
      %689 = vmatprep.subr.mxu0 0.0
      %690 = vmatpush1.msra.mxu0 0.0
      %691 = vmatprep.subr.mxu0 0.0
      %692 = vmatpush1.msra.mxu0 0.0
      %693 = vmatprep.subr.mxu0 0.0
      %694 = vmatpush1.msra.mxu0 0.0
      %695 = vmatprep.subr.mxu0 0.0
      %696 = vmatpush1.msra.mxu0 0.0
      %697 = vmatprep.subr.mxu0 0.0
      %698 = vmatpush1.msra.mxu0 0.0
      %699 = vmatprep.subr.mxu0 0.0
      %700 = vmatpush1.msra.mxu0 0.0
      %701 = vmatprep.subr.mxu0 0.0
      %702 = vmatpush1.msra.mxu0 0.0
      %703 = vmatprep.subr.mxu0 0.0
      %704 = vmatpush1.msra.mxu0 0.0
      %705 = vmatprep.subr.mxu0 0.0
      %706 = vmatpush1.msra.mxu0 0.0
      %707 = vmatprep.subr.mxu0 0.0
      %708 = vmatpush1.msra.mxu0 0.0
      %709 = vmatprep.subr.mxu0 0.0
      %710 = vmatpush1.msra.mxu0 0.0
      %711 = vmatprep.subr.mxu0 0.0
      %712 = vmatpush1.msra.mxu0 0.0
      %713 = vmatprep.subr.mxu0 0.0
      %714 = vmatpush1.msra.mxu0 0.0
      %715 = vmatprep.subr.mxu0 0.0
      %716 = vmatpush1.msra.mxu0 0.0
      %717 = vmatprep.subr.mxu0 0.0
      %718 = vmatpush1.msra.mxu0 0.0
      %719 = vmatprep.subr.mxu0 0.0
      %720 = vmatpush1.msra.mxu0 0.0
      %721 = vmatprep.subr.mxu0 0.0
      %722 = vmatpush1.msra.mxu0 0.0
      %723 = vmatprep.subr.mxu0 0.0
      %724 = vmatpush1.msra.mxu0 0.0
      %725 = vmatprep.subr.mxu0 0.0
      %726 = vmatpush1.msra.mxu0 0.0
      %727 = vmatprep.subr.mxu0 0.0
      %728 = vmatpush1.msra.mxu0 0.0
      %729 = vmatprep.subr.mxu0 0.0
      %730 = vmatpush1.msra.mxu0 0.0
      %731 = vmatprep.subr.mxu0 0.0
      %732 = vmatpush1.msra.mxu0 0.0
      %733 = vmatprep.subr.mxu0 0.0
      %734 = vmatpush1.msra.mxu0 0.0
      %735 = vmatprep.subr.mxu0 0.0
      %736 = vmatpush1.msra.mxu0 0.0
      %737 = vmatprep.subr.mxu0 0.0
      %738 = vmatpush1.msra.mxu0 0.0
      %739 = vmatprep.subr.mxu0 0.0
      %740 = vmatpush1.msra.mxu0 0.0
      %741 = vmatprep.subr.mxu0 0.0
      %742 = vmatpush1.msra.mxu0 0.0
      %743 = vmatprep.subr.mxu0 0.0
      %744 = vmatpush1.msra.mxu0 0.0
      %745 = vmatprep.subr.mxu0 0.0
      %746 = vmatpush1.msra.mxu0 0.0
      %747 = vmatprep.subr.mxu0 0.0
      %748 = vmatpush1.msra.mxu0 0.0
      %749 = vmatprep.mubr.f32.mxu0 0.0
      %750 = vmatmul.mubr.f32.gmra.mrb[0].mxu0 %v683
      %v751 = vpop.f32.mrb[0].mxu0
      %v752 = vadd.f32 0.0, %v751
      %v753 = vpop.f32.mrb[0].mxu0
      %v754 = vadd.f32 0.0, %v753
      %755 = vdwg.mxu0
      %756 = vmatprep.subr.mxu0 %v660
      %757 = vmatpush1.msra.mxu0 %v659
      %758 = vmatprep.subr.mxu0 0.0
      %759 = vmatpush1.msra.mxu0 0.0
      %760 = vmatprep.subr.mxu0 0.0
      %761 = vmatpush1.msra.mxu0 0.0
      %762 = vmatprep.subr.mxu0 0.0
      %763 = vmatpush1.msra.mxu0 0.0
      %764 = vmatprep.subr.mxu0 0.0
      %765 = vmatpush1.msra.mxu0 0.0
      %766 = vmatprep.subr.mxu0 0.0
      %767 = vmatpush1.msra.mxu0 0.0
      %768 = vmatprep.subr.mxu0 0.0
      %769 = vmatpush1.msra.mxu0 0.0
      %770 = vmatprep.subr.mxu0 0.0
      %771 = vmatpush1.msra.mxu0 0.0
      %772 = vmatprep.subr.mxu0 0.0
      %773 = vmatpush1.msra.mxu0 0.0
      %774 = vmatprep.subr.mxu0 0.0
      %775 = vmatpush1.msra.mxu0 0.0
      %776 = vmatprep.subr.mxu0 0.0
      %777 = vmatpush1.msra.mxu0 0.0
      %778 = vmatprep.subr.mxu0 0.0
      %779 = vmatpush1.msra.mxu0 0.0
      %780 = vmatprep.subr.mxu0 0.0
      %781 = vmatpush1.msra.mxu0 0.0
      %782 = vmatprep.subr.mxu0 0.0
      %783 = vmatpush1.msra.mxu0 0.0
      %784 = vmatprep.subr.mxu0 0.0
      %785 = vmatpush1.msra.mxu0 0.0
      %786 = vmatprep.subr.mxu0 0.0
      %787 = vmatpush1.msra.mxu0 0.0
      %788 = vmatprep.subr.mxu0 0.0
      %789 = vmatpush1.msra.mxu0 0.0
      %790 = vmatprep.subr.mxu0 0.0
      %791 = vmatpush1.msra.mxu0 0.0
      %792 = vmatprep.subr.mxu0 0.0
      %793 = vmatpush1.msra.mxu0 0.0
      %794 = vmatprep.subr.mxu0 0.0
      %795 = vmatpush1.msra.mxu0 0.0
      %796 = vmatprep.subr.mxu0 0.0
      %797 = vmatpush1.msra.mxu0 0.0
      %798 = vmatprep.subr.mxu0 0.0
      %799 = vmatpush1.msra.mxu0 0.0
      %800 = vmatprep.subr.mxu0 0.0
      %801 = vmatpush1.msra.mxu0 0.0
      %802 = vmatprep.subr.mxu0 0.0
      %803 = vmatpush1.msra.mxu0 0.0
      %804 = vmatprep.subr.mxu0 0.0
      %805 = vmatpush1.msra.mxu0 0.0
      %806 = vmatprep.subr.mxu0 0.0
      %807 = vmatpush1.msra.mxu0 0.0
      %808 = vmatprep.subr.mxu0 0.0
      %809 = vmatpush1.msra.mxu0 0.0
      %810 = vmatprep.subr.mxu0 0.0
      %811 = vmatpush1.msra.mxu0 0.0
      %812 = vmatprep.subr.mxu0 0.0
      %813 = vmatpush1.msra.mxu0 0.0
      %814 = vmatprep.subr.mxu0 0.0
      %815 = vmatpush1.msra.mxu0 0.0
      %816 = vmatprep.subr.mxu0 0.0
      %817 = vmatpush1.msra.mxu0 0.0
      %818 = vmatprep.subr.mxu0 0.0
      %819 = vmatpush1.msra.mxu0 0.0
      %820 = vmatprep.mubr.f32.mxu0 0.0
      %821 = vmatmul.mubr.f32.gmra.mrb[0].mxu0 %v683
      %v822 = vpop.f32.mrb[0].mxu0
      %v823 = vadd.f32 0.0, %v822
      %v824 = vpop.f32.mrb[0].mxu0
      %v825 = vadd.f32 0.0, %v824
      %826 = vdwg.mxu0
      %827 = vmatprep.subr.mxu0 %v662
      %828 = vmatpush1.msra.mxu0 %v661
      %829 = vmatprep.subr.mxu0 0.0
      %830 = vmatpush1.msra.mxu0 0.0
      %831 = vmatprep.subr.mxu0 0.0
      %832 = vmatpush1.msra.mxu0 0.0
      %833 = vmatprep.subr.mxu0 0.0
      %834 = vmatpush1.msra.mxu0 0.0
      %835 = vmatprep.subr.mxu0 0.0
      %836 = vmatpush1.msra.mxu0 0.0
      %837 = vmatprep.subr.mxu0 0.0
      %838 = vmatpush1.msra.mxu0 0.0
      %839 = vmatprep.subr.mxu0 0.0
      %840 = vmatpush1.msra.mxu0 0.0
      %841 = vmatprep.subr.mxu0 0.0
      %842 = vmatpush1.msra.mxu0 0.0
      %843 = vmatprep.subr.mxu0 0.0
      %844 = vmatpush1.msra.mxu0 0.0
      %845 = vmatprep.subr.mxu0 0.0
      %846 = vmatpush1.msra.mxu0 0.0
      %847 = vmatprep.subr.mxu0 0.0
      %848 = vmatpush1.msra.mxu0 0.0
      %849 = vmatprep.subr.mxu0 0.0
      %850 = vmatpush1.msra.mxu0 0.0
      %851 = vmatprep.subr.mxu0 0.0
      %852 = vmatpush1.msra.mxu0 0.0
      %853 = vmatprep.subr.mxu0 0.0
      %854 = vmatpush1.msra.mxu0 0.0
      %855 = vmatprep.subr.mxu0 0.0
      %856 = vmatpush1.msra.mxu0 0.0
      %857 = vmatprep.subr.mxu0 0.0
      %858 = vmatpush1.msra.mxu0 0.0
      %859 = vmatprep.subr.mxu0 0.0
      %860 = vmatpush1.msra.mxu0 0.0
      %861 = vmatprep.subr.mxu0 0.0
      %862 = vmatpush1.msra.mxu0 0.0
      %863 = vmatprep.subr.mxu0 0.0
      %864 = vmatpush1.msra.mxu0 0.0
      %865 = vmatprep.subr.mxu0 0.0
      %866 = vmatpush1.msra.mxu0 0.0
      %867 = vmatprep.subr.mxu0 0.0
      %868 = vmatpush1.msra.mxu0 0.0
      %869 = vmatprep.subr.mxu0 0.0
      %870 = vmatpush1.msra.mxu0 0.0
      %871 = vmatprep.subr.mxu0 0.0
      %872 = vmatpush1.msra.mxu0 0.0
      %873 = vmatprep.subr.mxu0 0.0
      %874 = vmatpush1.msra.mxu0 0.0
      %875 = vmatprep.subr.mxu0 0.0
      %876 = vmatpush1.msra.mxu0 0.0
      %877 = vmatprep.subr.mxu0 0.0
      %878 = vmatpush1.msra.mxu0 0.0
      %879 = vmatprep.subr.mxu0 0.0
      %880 = vmatpush1.msra.mxu0 0.0
      %881 = vmatprep.subr.mxu0 0.0
      %882 = vmatpush1.msra.mxu0 0.0
      %883 = vmatprep.subr.mxu0 0.0
      %884 = vmatpush1.msra.mxu0 0.0
      %885 = vmatprep.subr.mxu0 0.0
      %886 = vmatpush1.msra.mxu0 0.0
      %887 = vmatprep.subr.mxu0 0.0
      %888 = vmatpush1.msra.mxu0 0.0
      %889 = vmatprep.subr.mxu0 0.0
      %890 = vmatpush1.msra.mxu0 0.0
      %891 = vmatprep.mubr.f32.mxu0 0.0
      %892 = vmatmul.mubr.f32.gmra.mrb[0].mxu0 %v683
      %v893 = vpop.f32.mrb[0].mxu0
      %v894 = vadd.f32 0.0, %v893
      %v895 = vpop.f32.mrb[0].mxu0
      %v896 = vadd.f32 0.0, %v895
      %897 = vdwg.mxu0
      %898 = vmatprep.subr.mxu0 %v664
      %899 = vmatpush1.msra.mxu0 %v663
      %900 = vmatprep.subr.mxu0 0.0
      %901 = vmatpush1.msra.mxu0 0.0
      %902 = vmatprep.subr.mxu0 0.0
      %903 = vmatpush1.msra.mxu0 0.0
      %904 = vmatprep.subr.mxu0 0.0
      %905 = vmatpush1.msra.mxu0 0.0
      %906 = vmatprep.subr.mxu0 0.0
      %907 = vmatpush1.msra.mxu0 0.0
      %908 = vmatprep.subr.mxu0 0.0
      %909 = vmatpush1.msra.mxu0 0.0
      %910 = vmatprep.subr.mxu0 0.0
      %911 = vmatpush1.msra.mxu0 0.0
      %912 = vmatprep.subr.mxu0 0.0
      %913 = vmatpush1.msra.mxu0 0.0
      %914 = vmatprep.subr.mxu0 0.0
      %915 = vmatpush1.msra.mxu0 0.0
      %916 = vmatprep.subr.mxu0 0.0
      %917 = vmatpush1.msra.mxu0 0.0
      %918 = vmatprep.subr.mxu0 0.0
      %919 = vmatpush1.msra.mxu0 0.0
      %920 = vmatprep.subr.mxu0 0.0
      %921 = vmatpush1.msra.mxu0 0.0
      %922 = vmatprep.subr.mxu0 0.0
      %923 = vmatpush1.msra.mxu0 0.0
      %924 = vmatprep.subr.mxu0 0.0
      %925 = vmatpush1.msra.mxu0 0.0
      %926 = vmatprep.subr.mxu0 0.0
      %927 = vmatpush1.msra.mxu0 0.0
      %928 = vmatprep.subr.mxu0 0.0
      %929 = vmatpush1.msra.mxu0 0.0
      %930 = vmatprep.subr.mxu0 0.0
      %931 = vmatpush1.msra.mxu0 0.0
      %932 = vmatprep.subr.mxu0 0.0
      %933 = vmatpush1.msra.mxu0 0.0
      %934 = vmatprep.subr.mxu0 0.0
      %935 = vmatpush1.msra.mxu0 0.0
      %936 = vmatprep.subr.mxu0 0.0
      %937 = vmatpush1.msra.mxu0 0.0
      %938 = vmatprep.subr.mxu0 0.0
      %939 = vmatpush1.msra.mxu0 0.0
      %940 = vmatprep.subr.mxu0 0.0
      %941 = vmatpush1.msra.mxu0 0.0
      %942 = vmatprep.subr.mxu0 0.0
      %943 = vmatpush1.msra.mxu0 0.0
      %944 = vmatprep.subr.mxu0 0.0
      %945 = vmatpush1.msra.mxu0 0.0
      %946 = vmatprep.subr.mxu0 0.0
      %947 = vmatpush1.msra.mxu0 0.0
      %948 = vmatprep.subr.mxu0 0.0
      %949 = vmatpush1.msra.mxu0 0.0
      %950 = vmatprep.subr.mxu0 0.0
      %951 = vmatpush1.msra.mxu0 0.0
      %952 = vmatprep.subr.mxu0 0.0
      %953 = vmatpush1.msra.mxu0 0.0
      %954 = vmatprep.subr.mxu0 0.0
      %955 = vmatpush1.msra.mxu0 0.0
      %956 = vmatprep.subr.mxu0 0.0
      %957 = vmatpush1.msra.mxu0 0.0
      %958 = vmatprep.subr.mxu0 0.0
      %959 = vmatpush1.msra.mxu0 0.0
      %960 = vmatprep.subr.mxu0 0.0
      %961 = vmatpush1.msra.mxu0 0.0
      %962 = vmatprep.mubr.f32.mxu0 0.0
      %963 = vmatmul.mubr.f32.gmra.mrb[0].mxu0 %v683
      %v964 = vpop.f32.mrb[0].mxu0
      %v965 = vadd.f32 0.0, %v964
      %v966 = vpop.f32.mrb[0].mxu0
      %v967 = vadd.f32 0.0, %v966
      %968 = vdwg.mxu0
      %969 = vmatprep.subr.mxu0 %v666
      %970 = vmatpush1.msra.mxu0 %v665
      %971 = vmatprep.subr.mxu0 0.0
      %972 = vmatpush1.msra.mxu0 0.0
      %973 = vmatprep.subr.mxu0 0.0
      %974 = vmatpush1.msra.mxu0 0.0
      %975 = vmatprep.subr.mxu0 0.0
      %976 = vmatpush1.msra.mxu0 0.0
      %977 = vmatprep.subr.mxu0 0.0
      %978 = vmatpush1.msra.mxu0 0.0
      %979 = vmatprep.subr.mxu0 0.0
      %980 = vmatpush1.msra.mxu0 0.0
      %981 = vmatprep.subr.mxu0 0.0
      %982 = vmatpush1.msra.mxu0 0.0
      %983 = vmatprep.subr.mxu0 0.0
      %984 = vmatpush1.msra.mxu0 0.0
      %985 = vmatprep.subr.mxu0 0.0
      %986 = vmatpush1.msra.mxu0 0.0
      %987 = vmatprep.subr.mxu0 0.0
      %988 = vmatpush1.msra.mxu0 0.0
      %989 = vmatprep.subr.mxu0 0.0
      %990 = vmatpush1.msra.mxu0 0.0
      %991 = vmatprep.subr.mxu0 0.0
      %992 = vmatpush1.msra.mxu0 0.0
      %993 = vmatprep.subr.mxu0 0.0
      %994 = vmatpush1.msra.mxu0 0.0
      %995 = vmatprep.subr.mxu0 0.0
      %996 = vmatpush1.msra.mxu0 0.0
      %997 = vmatprep.subr.mxu0 0.0
      %998 = vmatpush1.msra.mxu0 0.0
      %999 = vmatprep.subr.mxu0 0.0
      %1000 = vmatpush1.msra.mxu0 0.0
      %1001 = vmatprep.subr.mxu0 0.0
      %1002 = vmatpush1.msra.mxu0 0.0
      %1003 = vmatprep.subr.mxu0 0.0
      %1004 = vmatpush1.msra.mxu0 0.0
      %1005 = vmatprep.subr.mxu0 0.0
      %1006 = vmatpush1.msra.mxu0 0.0
      %1007 = vmatprep.subr.mxu0 0.0
      %1008 = vmatpush1.msra.mxu0 0.0
      %1009 = vmatprep.subr.mxu0 0.0
      %1010 = vmatpush1.msra.mxu0 0.0
      %1011 = vmatprep.subr.mxu0 0.0
      %1012 = vmatpush1.msra.mxu0 0.0
      %1013 = vmatprep.subr.mxu0 0.0
      %1014 = vmatpush1.msra.mxu0 0.0
      %1015 = vmatprep.subr.mxu0 0.0
      %1016 = vmatpush1.msra.mxu0 0.0
      %1017 = vmatprep.subr.mxu0 0.0
      %1018 = vmatpush1.msra.mxu0 0.0
      %1019 = vmatprep.subr.mxu0 0.0
      %1020 = vmatpush1.msra.mxu0 0.0
      %1021 = vmatprep.subr.mxu0 0.0
      %1022 = vmatpush1.msra.mxu0 0.0
      %1023 = vmatprep.subr.mxu0 0.0
      %1024 = vmatpush1.msra.mxu0 0.0
      %1025 = vmatprep.subr.mxu0 0.0
      %1026 = vmatpush1.msra.mxu0 0.0
      %1027 = vmatprep.subr.mxu0 0.0
      %1028 = vmatpush1.msra.mxu0 0.0
      %1029 = vmatprep.subr.mxu0 0.0
      %1030 = vmatpush1.msra.mxu0 0.0
      %1031 = vmatprep.subr.mxu0 0.0
      %1032 = vmatpush1.msra.mxu0 0.0
      %1033 = vmatprep.mubr.f32.mxu0 0.0
      %1034 = vmatmul.mubr.f32.gmra.mrb[0].mxu0 %v683
      %v1035 = vpop.f32.mrb[0].mxu0
      %v1036 = vadd.f32 0.0, %v1035
      %v1037 = vpop.f32.mrb[0].mxu0
      %v1038 = vadd.f32 0.0, %v1037
      %1039 = vdwg.mxu0
      %1040 = vmatprep.subr.mxu0 %v668
      %1041 = vmatpush1.msra.mxu0 %v667
      %1042 = vmatprep.subr.mxu0 0.0
      %1043 = vmatpush1.msra.mxu0 0.0
      %1044 = vmatprep.subr.mxu0 0.0
      %1045 = vmatpush1.msra.mxu0 0.0
      %1046 = vmatprep.subr.mxu0 0.0
      %1047 = vmatpush1.msra.mxu0 0.0
      %1048 = vmatprep.subr.mxu0 0.0
      %1049 = vmatpush1.msra.mxu0 0.0
      %1050 = vmatprep.subr.mxu0 0.0
      %1051 = vmatpush1.msra.mxu0 0.0
      %1052 = vmatprep.subr.mxu0 0.0
      %1053 = vmatpush1.msra.mxu0 0.0
      %1054 = vmatprep.subr.mxu0 0.0
      %1055 = vmatpush1.msra.mxu0 0.0
      %1056 = vmatprep.subr.mxu0 0.0
      %1057 = vmatpush1.msra.mxu0 0.0
      %1058 = vmatprep.subr.mxu0 0.0
      %1059 = vmatpush1.msra.mxu0 0.0
      %1060 = vmatprep.subr.mxu0 0.0
      %1061 = vmatpush1.msra.mxu0 0.0
      %1062 = vmatprep.subr.mxu0 0.0
      %1063 = vmatpush1.msra.mxu0 0.0
      %1064 = vmatprep.subr.mxu0 0.0
      %1065 = vmatpush1.msra.mxu0 0.0
      %1066 = vmatprep.subr.mxu0 0.0
      %1067 = vmatpush1.msra.mxu0 0.0
      %1068 = vmatprep.subr.mxu0 0.0
      %1069 = vmatpush1.msra.mxu0 0.0
      %1070 = vmatprep.subr.mxu0 0.0
      %1071 = vmatpush1.msra.mxu0 0.0
      %1072 = vmatprep.subr.mxu0 0.0
      %1073 = vmatpush1.msra.mxu0 0.0
      %1074 = vmatprep.subr.mxu0 0.0
      %1075 = vmatpush1.msra.mxu0 0.0
      %1076 = vmatprep.subr.mxu0 0.0
      %1077 = vmatpush1.msra.mxu0 0.0
      %1078 = vmatprep.subr.mxu0 0.0
      %1079 = vmatpush1.msra.mxu0 0.0
      %1080 = vmatprep.subr.mxu0 0.0
      %1081 = vmatpush1.msra.mxu0 0.0
      %1082 = vmatprep.subr.mxu0 0.0
      %1083 = vmatpush1.msra.mxu0 0.0
      %1084 = vmatprep.subr.mxu0 0.0
      %1085 = vmatpush1.msra.mxu0 0.0
      %1086 = vmatprep.subr.mxu0 0.0
      %1087 = vmatpush1.msra.mxu0 0.0
      %1088 = vmatprep.subr.mxu0 0.0
      %1089 = vmatpush1.msra.mxu0 0.0
      %1090 = vmatprep.subr.mxu0 0.0
      %1091 = vmatpush1.msra.mxu0 0.0
      %1092 = vmatprep.subr.mxu0 0.0
      %1093 = vmatpush1.msra.mxu0 0.0
      %1094 = vmatprep.subr.mxu0 0.0
      %1095 = vmatpush1.msra.mxu0 0.0
      %1096 = vmatprep.subr.mxu0 0.0
      %1097 = vmatpush1.msra.mxu0 0.0
      %1098 = vmatprep.subr.mxu0 0.0
      %1099 = vmatpush1.msra.mxu0 0.0
      %1100 = vmatprep.subr.mxu0 0.0
      %1101 = vmatpush1.msra.mxu0 0.0
      %1102 = vmatprep.subr.mxu0 0.0
      %1103 = vmatpush1.msra.mxu0 0.0
      %1104 = vmatprep.mubr.f32.mxu0 0.0
      %1105 = vmatmul.mubr.f32.gmra.mrb[0].mxu0 %v683
      %v1106 = vpop.f32.mrb[0].mxu0
      %v1107 = vadd.f32 0.0, %v1106
      %v1108 = vpop.f32.mrb[0].mxu0
      %v1109 = vadd.f32 0.0, %v1108
      %1110 = vdwg.mxu0
      %1111 = vrot.lane.b32.xlu0 %v601, 24
      %v1112 = vpop.permute.xlu0 %1111
      %1113 = vrot.lane.b32.xlu0 %v602, 24
      %v1114 = vpop.permute.xlu0 %1113
      %1115 = vrot.lane.b32.xlu0 %v603, 24
      %v1116 = vpop.permute.xlu0 %1115
      %1117 = vrot.lane.b32.xlu0 %v604, 24
      %v1118 = vpop.permute.xlu0 %1117
      %1119 = vrot.lane.b32.xlu0 %v605, 24
      %v1120 = vpop.permute.xlu0 %1119
      %1121 = vrot.lane.b32.xlu0 %v606, 24
      %v1122 = vpop.permute.xlu0 %1121
      %1123 = vrot.lane.b32.xlu0 %v607, 24
      %v1124 = vpop.permute.xlu0 %1123
      %1125 = vrot.lane.b32.xlu0 %v608, 24
      %v1126 = vpop.permute.xlu0 %1125
      %1127 = vrot.lane.b32.xlu0 %v609, 24
      %v1128 = vpop.permute.xlu0 %1127
      %1129 = vrot.lane.b32.xlu0 %v610, 24
      %v1130 = vpop.permute.xlu0 %1129
      %1131 = vrot.lane.b32.xlu0 %v611, 24
      %v1132 = vpop.permute.xlu0 %1131
      %1133 = vrot.lane.b32.xlu0 %v612, 24
      %v1134 = vpop.permute.xlu0 %1133
      %1135 = vrot.lane.b32.xlu0 %v613, 24
      %v1136 = vpop.permute.xlu0 %1135
      %vm1137 = vcmask 195584
      %v1138 = vsel %vm1137, %v1112, %v1114
      %v1139 = vsel %vm1137, %v1114, %v1116
      %v1140 = vsel %vm1137, %v1116, %v1118
      %v1141 = vsel %vm1137, %v1118, %v1120
      %v1142 = vsel %vm1137, %v1120, %v1122
      %v1143 = vsel %vm1137, %v1122, %v1124
      %v1144 = vsel %vm1137, %v1124, %v1126
      %v1145 = vsel %vm1137, %v1126, %v1128
      %v1146 = vsel %vm1137, %v1128, %v1130
      %v1147 = vsel %vm1137, %v1130, %v1132
      %v1148 = vsel %vm1137, %v1132, %v1134
      %v1149 = vsel %vm1137, %v1134, %v1136
      %v1163 = vsel %vm681, %v614, 0
      %1165 = vmatprep.subr.mxu0 %v1139
      %1166 = vmatpush1.msra.mxu0 %v1138
      %1167 = vmatprep.subr.mxu0 0.0
      %1168 = vmatpush1.msra.mxu0 0.0
      %1169 = vmatprep.subr.mxu0 0.0
      %1170 = vmatpush1.msra.mxu0 0.0
      %1171 = vmatprep.subr.mxu0 0.0
      %1172 = vmatpush1.msra.mxu0 0.0
      %1173 = vmatprep.subr.mxu0 0.0
      %1174 = vmatpush1.msra.mxu0 0.0
      %1175 = vmatprep.subr.mxu0 0.0
      %1176 = vmatpush1.msra.mxu0 0.0
      %1177 = vmatprep.subr.mxu0 0.0
      %1178 = vmatpush1.msra.mxu0 0.0
      %1179 = vmatprep.subr.mxu0 0.0
      %1180 = vmatpush1.msra.mxu0 0.0
      %1181 = vmatprep.subr.mxu0 0.0
      %1182 = vmatpush1.msra.mxu0 0.0
      %1183 = vmatprep.subr.mxu0 0.0
      %1184 = vmatpush1.msra.mxu0 0.0
      %1185 = vmatprep.subr.mxu0 0.0
      %1186 = vmatpush1.msra.mxu0 0.0
      %1187 = vmatprep.subr.mxu0 0.0
      %1188 = vmatpush1.msra.mxu0 0.0
      %1189 = vmatprep.subr.mxu0 0.0
      %1190 = vmatpush1.msra.mxu0 0.0
      %1191 = vmatprep.subr.mxu0 0.0
      %1192 = vmatpush1.msra.mxu0 0.0
      %1193 = vmatprep.subr.mxu0 0.0
      %1194 = vmatpush1.msra.mxu0 0.0
      %1195 = vmatprep.subr.mxu0 0.0
      %1196 = vmatpush1.msra.mxu0 0.0
      %1197 = vmatprep.subr.mxu0 0.0
      %1198 = vmatpush1.msra.mxu0 0.0
      %1199 = vmatprep.subr.mxu0 0.0
      %1200 = vmatpush1.msra.mxu0 0.0
      %1201 = vmatprep.subr.mxu0 0.0
      %1202 = vmatpush1.msra.mxu0 0.0
      %1203 = vmatprep.subr.mxu0 0.0
      %1204 = vmatpush1.msra.mxu0 0.0
      %1205 = vmatprep.subr.mxu0 0.0
      %1206 = vmatpush1.msra.mxu0 0.0
      %1207 = vmatprep.subr.mxu0 0.0
      %1208 = vmatpush1.msra.mxu0 0.0
      %1209 = vmatprep.subr.mxu0 0.0
      %1210 = vmatpush1.msra.mxu0 0.0
      %1211 = vmatprep.subr.mxu0 0.0
      %1212 = vmatpush1.msra.mxu0 0.0
      %1213 = vmatprep.subr.mxu0 0.0
      %1214 = vmatpush1.msra.mxu0 0.0
      %1215 = vmatprep.subr.mxu0 0.0
      %1216 = vmatpush1.msra.mxu0 0.0
      %1217 = vmatprep.subr.mxu0 0.0
      %1218 = vmatpush1.msra.mxu0 0.0
      %1219 = vmatprep.subr.mxu0 0.0
      %1220 = vmatpush1.msra.mxu0 0.0
      %1221 = vmatprep.subr.mxu0 0.0
      %1222 = vmatpush1.msra.mxu0 0.0
      %1223 = vmatprep.subr.mxu0 0.0
      %1224 = vmatpush1.msra.mxu0 0.0
      %1225 = vmatprep.subr.mxu0 0.0
      %1226 = vmatpush1.msra.mxu0 0.0
      %1227 = vmatprep.subr.mxu0 0.0
      %1228 = vmatpush1.msra.mxu0 0.0
      %1229 = vmatprep.mubr.f32.mxu0 0.0
      %1230 = vmatmul.mubr.f32.gmra.mrb[0].mxu0 %v1163
      %v1231 = vpop.f32.mrb[0].mxu0
      %v1232 = vadd.f32 %v752, %v1231
      %v1233 = vpop.f32.mrb[0].mxu0
      %v1234 = vadd.f32 %v754, %v1233
      %1235 = vdwg.mxu0
      %1236 = vmatprep.subr.mxu0 %v1141
      %1237 = vmatpush1.msra.mxu0 %v1140
      %1238 = vmatprep.subr.mxu0 0.0
      %1239 = vmatpush1.msra.mxu0 0.0
      %1240 = vmatprep.subr.mxu0 0.0
      %1241 = vmatpush1.msra.mxu0 0.0
      %1242 = vmatprep.subr.mxu0 0.0
      %1243 = vmatpush1.msra.mxu0 0.0
      %1244 = vmatprep.subr.mxu0 0.0
      %1245 = vmatpush1.msra.mxu0 0.0
      %1246 = vmatprep.subr.mxu0 0.0
      %1247 = vmatpush1.msra.mxu0 0.0
      %1248 = vmatprep.subr.mxu0 0.0
      %1249 = vmatpush1.msra.mxu0 0.0
      %1250 = vmatprep.subr.mxu0 0.0
      %1251 = vmatpush1.msra.mxu0 0.0
      %1252 = vmatprep.subr.mxu0 0.0
      %1253 = vmatpush1.msra.mxu0 0.0
      %1254 = vmatprep.subr.mxu0 0.0
      %1255 = vmatpush1.msra.mxu0 0.0
      %1256 = vmatprep.subr.mxu0 0.0
      %1257 = vmatpush1.msra.mxu0 0.0
      %1258 = vmatprep.subr.mxu0 0.0
      %1259 = vmatpush1.msra.mxu0 0.0
      %1260 = vmatprep.subr.mxu0 0.0
      %1261 = vmatpush1.msra.mxu0 0.0
      %1262 = vmatprep.subr.mxu0 0.0
      %1263 = vmatpush1.msra.mxu0 0.0
      %1264 = vmatprep.subr.mxu0 0.0
      %1265 = vmatpush1.msra.mxu0 0.0
      %1266 = vmatprep.subr.mxu0 0.0
      %1267 = vmatpush1.msra.mxu0 0.0
      %1268 = vmatprep.subr.mxu0 0.0
      %1269 = vmatpush1.msra.mxu0 0.0
      %1270 = vmatprep.subr.mxu0 0.0
      %1271 = vmatpush1.msra.mxu0 0.0
      %1272 = vmatprep.subr.mxu0 0.0
      %1273 = vmatpush1.msra.mxu0 0.0
      %1274 = vmatprep.subr.mxu0 0.0
      %1275 = vmatpush1.msra.mxu0 0.0
      %1276 = vmatprep.subr.mxu0 0.0
      %1277 = vmatpush1.msra.mxu0 0.0
      %1278 = vmatprep.subr.mxu0 0.0
      %1279 = vmatpush1.msra.mxu0 0.0
      %1280 = vmatprep.subr.mxu0 0.0
      %1281 = vmatpush1.msra.mxu0 0.0
      %1282 = vmatprep.subr.mxu0 0.0
      %1283 = vmatpush1.msra.mxu0 0.0
      %1284 = vmatprep.subr.mxu0 0.0
      %1285 = vmatpush1.msra.mxu0 0.0
      %1286 = vmatprep.subr.mxu0 0.0
      %1287 = vmatpush1.msra.mxu0 0.0
      %1288 = vmatprep.subr.mxu0 0.0
      %1289 = vmatpush1.msra.mxu0 0.0
      %1290 = vmatprep.subr.mxu0 0.0
      %1291 = vmatpush1.msra.mxu0 0.0
      %1292 = vmatprep.subr.mxu0 0.0
      %1293 = vmatpush1.msra.mxu0 0.0
      %1294 = vmatprep.subr.mxu0 0.0
      %1295 = vmatpush1.msra.mxu0 0.0
      %1296 = vmatprep.subr.mxu0 0.0
      %1297 = vmatpush1.msra.mxu0 0.0
      %1298 = vmatprep.subr.mxu0 0.0
      %1299 = vmatpush1.msra.mxu0 0.0
      %1300 = vmatprep.mubr.f32.mxu0 0.0
      %1301 = vmatmul.mubr.f32.gmra.mrb[0].mxu0 %v1163
      %v1302 = vpop.f32.mrb[0].mxu0
      %v1303 = vadd.f32 %v823, %v1302
      %v1304 = vpop.f32.mrb[0].mxu0
      %v1305 = vadd.f32 %v825, %v1304
      %1306 = vdwg.mxu0
      %1307 = vmatprep.subr.mxu0 %v1143
      %1308 = vmatpush1.msra.mxu0 %v1142
      %1309 = vmatprep.subr.mxu0 0.0
      %1310 = vmatpush1.msra.mxu0 0.0
      %1311 = vmatprep.subr.mxu0 0.0
      %1312 = vmatpush1.msra.mxu0 0.0
      %1313 = vmatprep.subr.mxu0 0.0
      %1314 = vmatpush1.msra.mxu0 0.0
      %1315 = vmatprep.subr.mxu0 0.0
      %1316 = vmatpush1.msra.mxu0 0.0
      %1317 = vmatprep.subr.mxu0 0.0
      %1318 = vmatpush1.msra.mxu0 0.0
      %1319 = vmatprep.subr.mxu0 0.0
      %1320 = vmatpush1.msra.mxu0 0.0
      %1321 = vmatprep.subr.mxu0 0.0
      %1322 = vmatpush1.msra.mxu0 0.0
      %1323 = vmatprep.subr.mxu0 0.0
      %1324 = vmatpush1.msra.mxu0 0.0
      %1325 = vmatprep.subr.mxu0 0.0
      %1326 = vmatpush1.msra.mxu0 0.0
      %1327 = vmatprep.subr.mxu0 0.0
      %1328 = vmatpush1.msra.mxu0 0.0
      %1329 = vmatprep.subr.mxu0 0.0
      %1330 = vmatpush1.msra.mxu0 0.0
      %1331 = vmatprep.subr.mxu0 0.0
      %1332 = vmatpush1.msra.mxu0 0.0
      %1333 = vmatprep.subr.mxu0 0.0
      %1334 = vmatpush1.msra.mxu0 0.0
      %1335 = vmatprep.subr.mxu0 0.0
      %1336 = vmatpush1.msra.mxu0 0.0
      %1337 = vmatprep.subr.mxu0 0.0
      %1338 = vmatpush1.msra.mxu0 0.0
      %1339 = vmatprep.subr.mxu0 0.0
      %1340 = vmatpush1.msra.mxu0 0.0
      %1341 = vmatprep.subr.mxu0 0.0
      %1342 = vmatpush1.msra.mxu0 0.0
      %1343 = vmatprep.subr.mxu0 0.0
      %1344 = vmatpush1.msra.mxu0 0.0
      %1345 = vmatprep.subr.mxu0 0.0
      %1346 = vmatpush1.msra.mxu0 0.0
      %1347 = vmatprep.subr.mxu0 0.0
      %1348 = vmatpush1.msra.mxu0 0.0
      %1349 = vmatprep.subr.mxu0 0.0
      %1350 = vmatpush1.msra.mxu0 0.0
      %1351 = vmatprep.subr.mxu0 0.0
      %1352 = vmatpush1.msra.mxu0 0.0
      %1353 = vmatprep.subr.mxu0 0.0
      %1354 = vmatpush1.msra.mxu0 0.0
      %1355 = vmatprep.subr.mxu0 0.0
      %1356 = vmatpush1.msra.mxu0 0.0
      %1357 = vmatprep.subr.mxu0 0.0
      %1358 = vmatpush1.msra.mxu0 0.0
      %1359 = vmatprep.subr.mxu0 0.0
      %1360 = vmatpush1.msra.mxu0 0.0
      %1361 = vmatprep.subr.mxu0 0.0
      %1362 = vmatpush1.msra.mxu0 0.0
      %1363 = vmatprep.subr.mxu0 0.0
      %1364 = vmatpush1.msra.mxu0 0.0
      %1365 = vmatprep.subr.mxu0 0.0
      %1366 = vmatpush1.msra.mxu0 0.0
      %1367 = vmatprep.subr.mxu0 0.0
      %1368 = vmatpush1.msra.mxu0 0.0
      %1369 = vmatprep.subr.mxu0 0.0
      %1370 = vmatpush1.msra.mxu0 0.0
      %1371 = vmatprep.mubr.f32.mxu0 0.0
      %1372 = vmatmul.mubr.f32.gmra.mrb[0].mxu0 %v1163
      %v1373 = vpop.f32.mrb[0].mxu0
      %v1374 = vadd.f32 %v894, %v1373
      %v1375 = vpop.f32.mrb[0].mxu0
      %v1376 = vadd.f32 %v896, %v1375
      %1377 = vdwg.mxu0
      %1378 = vmatprep.subr.mxu0 %v1145
      %1379 = vmatpush1.msra.mxu0 %v1144
      %1380 = vmatprep.subr.mxu0 0.0
      %1381 = vmatpush1.msra.mxu0 0.0
      %1382 = vmatprep.subr.mxu0 0.0
      %1383 = vmatpush1.msra.mxu0 0.0
      %1384 = vmatprep.subr.mxu0 0.0
      %1385 = vmatpush1.msra.mxu0 0.0
      %1386 = vmatprep.subr.mxu0 0.0
      %1387 = vmatpush1.msra.mxu0 0.0
      %1388 = vmatprep.subr.mxu0 0.0
      %1389 = vmatpush1.msra.mxu0 0.0
      %1390 = vmatprep.subr.mxu0 0.0
      %1391 = vmatpush1.msra.mxu0 0.0
      %1392 = vmatprep.subr.mxu0 0.0
      %1393 = vmatpush1.msra.mxu0 0.0
      %1394 = vmatprep.subr.mxu0 0.0
      %1395 = vmatpush1.msra.mxu0 0.0
      %1396 = vmatprep.subr.mxu0 0.0
      %1397 = vmatpush1.msra.mxu0 0.0
      %1398 = vmatprep.subr.mxu0 0.0
      %1399 = vmatpush1.msra.mxu0 0.0
      %1400 = vmatprep.subr.mxu0 0.0
      %1401 = vmatpush1.msra.mxu0 0.0
      %1402 = vmatprep.subr.mxu0 0.0
      %1403 = vmatpush1.msra.mxu0 0.0
      %1404 = vmatprep.subr.mxu0 0.0
      %1405 = vmatpush1.msra.mxu0 0.0
      %1406 = vmatprep.subr.mxu0 0.0
      %1407 = vmatpush1.msra.mxu0 0.0
      %1408 = vmatprep.subr.mxu0 0.0
      %1409 = vmatpush1.msra.mxu0 0.0
      %1410 = vmatprep.subr.mxu0 0.0
      %1411 = vmatpush1.msra.mxu0 0.0
      %1412 = vmatprep.subr.mxu0 0.0
      %1413 = vmatpush1.msra.mxu0 0.0
      %1414 = vmatprep.subr.mxu0 0.0
      %1415 = vmatpush1.msra.mxu0 0.0
      %1416 = vmatprep.subr.mxu0 0.0
      %1417 = vmatpush1.msra.mxu0 0.0
      %1418 = vmatprep.subr.mxu0 0.0
      %1419 = vmatpush1.msra.mxu0 0.0
      %1420 = vmatprep.subr.mxu0 0.0
      %1421 = vmatpush1.msra.mxu0 0.0
      %1422 = vmatprep.subr.mxu0 0.0
      %1423 = vmatpush1.msra.mxu0 0.0
      %1424 = vmatprep.subr.mxu0 0.0
      %1425 = vmatpush1.msra.mxu0 0.0
      %1426 = vmatprep.subr.mxu0 0.0
      %1427 = vmatpush1.msra.mxu0 0.0
      %1428 = vmatprep.subr.mxu0 0.0
      %1429 = vmatpush1.msra.mxu0 0.0
      %1430 = vmatprep.subr.mxu0 0.0
      %1431 = vmatpush1.msra.mxu0 0.0
      %1432 = vmatprep.subr.mxu0 0.0
      %1433 = vmatpush1.msra.mxu0 0.0
      %1434 = vmatprep.subr.mxu0 0.0
      %1435 = vmatpush1.msra.mxu0 0.0
      %1436 = vmatprep.subr.mxu0 0.0
      %1437 = vmatpush1.msra.mxu0 0.0
      %1438 = vmatprep.subr.mxu0 0.0
      %1439 = vmatpush1.msra.mxu0 0.0
      %1440 = vmatprep.subr.mxu0 0.0
      %1441 = vmatpush1.msra.mxu0 0.0
      %1442 = vmatprep.mubr.f32.mxu0 0.0
      %1443 = vmatmul.mubr.f32.gmra.mrb[0].mxu0 %v1163
      %v1444 = vpop.f32.mrb[0].mxu0
      %v1445 = vadd.f32 %v965, %v1444
      %v1446 = vpop.f32.mrb[0].mxu0
      %v1447 = vadd.f32 %v967, %v1446
      %1448 = vdwg.mxu0
      %1449 = vmatprep.subr.mxu0 %v1147
      %1450 = vmatpush1.msra.mxu0 %v1146
      %1451 = vmatprep.subr.mxu0 0.0
      %1452 = vmatpush1.msra.mxu0 0.0
      %1453 = vmatprep.subr.mxu0 0.0
      %1454 = vmatpush1.msra.mxu0 0.0
      %1455 = vmatprep.subr.mxu0 0.0
      %1456 = vmatpush1.msra.mxu0 0.0
      %1457 = vmatprep.subr.mxu0 0.0
      %1458 = vmatpush1.msra.mxu0 0.0
      %1459 = vmatprep.subr.mxu0 0.0
      %1460 = vmatpush1.msra.mxu0 0.0
      %1461 = vmatprep.subr.mxu0 0.0
      %1462 = vmatpush1.msra.mxu0 0.0
      %1463 = vmatprep.subr.mxu0 0.0
      %1464 = vmatpush1.msra.mxu0 0.0
      %1465 = vmatprep.subr.mxu0 0.0
      %1466 = vmatpush1.msra.mxu0 0.0
      %1467 = vmatprep.subr.mxu0 0.0
      %1468 = vmatpush1.msra.mxu0 0.0
      %1469 = vmatprep.subr.mxu0 0.0
      %1470 = vmatpush1.msra.mxu0 0.0
      %1471 = vmatprep.subr.mxu0 0.0
      %1472 = vmatpush1.msra.mxu0 0.0
      %1473 = vmatprep.subr.mxu0 0.0
      %1474 = vmatpush1.msra.mxu0 0.0
      %1475 = vmatprep.subr.mxu0 0.0
      %1476 = vmatpush1.msra.mxu0 0.0
      %1477 = vmatprep.subr.mxu0 0.0
      %1478 = vmatpush1.msra.mxu0 0.0
      %1479 = vmatprep.subr.mxu0 0.0
      %1480 = vmatpush1.msra.mxu0 0.0
      %1481 = vmatprep.subr.mxu0 0.0
      %1482 = vmatpush1.msra.mxu0 0.0
      %1483 = vmatprep.subr.mxu0 0.0
      %1484 = vmatpush1.msra.mxu0 0.0
      %1485 = vmatprep.subr.mxu0 0.0
      %1486 = vmatpush1.msra.mxu0 0.0
      %1487 = vmatprep.subr.mxu0 0.0
      %1488 = vmatpush1.msra.mxu0 0.0
      %1489 = vmatprep.subr.mxu0 0.0
      %1490 = vmatpush1.msra.mxu0 0.0
      %1491 = vmatprep.subr.mxu0 0.0
      %1492 = vmatpush1.msra.mxu0 0.0
      %1493 = vmatprep.subr.mxu0 0.0
      %1494 = vmatpush1.msra.mxu0 0.0
      %1495 = vmatprep.subr.mxu0 0.0
      %1496 = vmatpush1.msra.mxu0 0.0
      %1497 = vmatprep.subr.mxu0 0.0
      %1498 = vmatpush1.msra.mxu0 0.0
      %1499 = vmatprep.subr.mxu0 0.0
      %1500 = vmatpush1.msra.mxu0 0.0
      %1501 = vmatprep.subr.mxu0 0.0
      %1502 = vmatpush1.msra.mxu0 0.0
      %1503 = vmatprep.subr.mxu0 0.0
      %1504 = vmatpush1.msra.mxu0 0.0
      %1505 = vmatprep.subr.mxu0 0.0
      %1506 = vmatpush1.msra.mxu0 0.0
      %1507 = vmatprep.subr.mxu0 0.0
      %1508 = vmatpush1.msra.mxu0 0.0
      %1509 = vmatprep.subr.mxu0 0.0
      %1510 = vmatpush1.msra.mxu0 0.0
      %1511 = vmatprep.subr.mxu0 0.0
      %1512 = vmatpush1.msra.mxu0 0.0
      %1513 = vmatprep.mubr.f32.mxu0 0.0
      %1514 = vmatmul.mubr.f32.gmra.mrb[0].mxu0 %v1163
      %v1515 = vpop.f32.mrb[0].mxu0
      %v1516 = vadd.f32 %v1036, %v1515
      %v1517 = vpop.f32.mrb[0].mxu0
      %v1518 = vadd.f32 %v1038, %v1517
      %1519 = vdwg.mxu0
      %1520 = vmatprep.subr.mxu0 %v1149
      %1521 = vmatpush1.msra.mxu0 %v1148
      %1522 = vmatprep.subr.mxu0 0.0
      %1523 = vmatpush1.msra.mxu0 0.0
      %1524 = vmatprep.subr.mxu0 0.0
      %1525 = vmatpush1.msra.mxu0 0.0
      %1526 = vmatprep.subr.mxu0 0.0
      %1527 = vmatpush1.msra.mxu0 0.0
      %1528 = vmatprep.subr.mxu0 0.0
      %1529 = vmatpush1.msra.mxu0 0.0
      %1530 = vmatprep.subr.mxu0 0.0
      %1531 = vmatpush1.msra.mxu0 0.0
      %1532 = vmatprep.subr.mxu0 0.0
      %1533 = vmatpush1.msra.mxu0 0.0
      %1534 = vmatprep.subr.mxu0 0.0
      %1535 = vmatpush1.msra.mxu0 0.0
      %1536 = vmatprep.subr.mxu0 0.0
      %1537 = vmatpush1.msra.mxu0 0.0
      %1538 = vmatprep.subr.mxu0 0.0
      %1539 = vmatpush1.msra.mxu0 0.0
      %1540 = vmatprep.subr.mxu0 0.0
      %1541 = vmatpush1.msra.mxu0 0.0
      %1542 = vmatprep.subr.mxu0 0.0
      %1543 = vmatpush1.msra.mxu0 0.0
      %1544 = vmatprep.subr.mxu0 0.0
      %1545 = vmatpush1.msra.mxu0 0.0
      %1546 = vmatprep.subr.mxu0 0.0
      %1547 = vmatpush1.msra.mxu0 0.0
      %1548 = vmatprep.subr.mxu0 0.0
      %1549 = vmatpush1.msra.mxu0 0.0
      %1550 = vmatprep.subr.mxu0 0.0
      %1551 = vmatpush1.msra.mxu0 0.0
      %1552 = vmatprep.subr.mxu0 0.0
      %1553 = vmatpush1.msra.mxu0 0.0
      %1554 = vmatprep.subr.mxu0 0.0
      %1555 = vmatpush1.msra.mxu0 0.0
      %1556 = vmatprep.subr.mxu0 0.0
      %1557 = vmatpush1.msra.mxu0 0.0
      %1558 = vmatprep.subr.mxu0 0.0
      %1559 = vmatpush1.msra.mxu0 0.0
      %1560 = vmatprep.subr.mxu0 0.0
      %1561 = vmatpush1.msra.mxu0 0.0
      %1562 = vmatprep.subr.mxu0 0.0
      %1563 = vmatpush1.msra.mxu0 0.0
      %1564 = vmatprep.subr.mxu0 0.0
      %1565 = vmatpush1.msra.mxu0 0.0
      %1566 = vmatprep.subr.mxu0 0.0
      %1567 = vmatpush1.msra.mxu0 0.0
      %1568 = vmatprep.subr.mxu0 0.0
      %1569 = vmatpush1.msra.mxu0 0.0
      %1570 = vmatprep.subr.mxu0 0.0
      %1571 = vmatpush1.msra.mxu0 0.0
      %1572 = vmatprep.subr.mxu0 0.0
      %1573 = vmatpush1.msra.mxu0 0.0
      %1574 = vmatprep.subr.mxu0 0.0
      %1575 = vmatpush1.msra.mxu0 0.0
      %1576 = vmatprep.subr.mxu0 0.0
      %1577 = vmatpush1.msra.mxu0 0.0
      %1578 = vmatprep.subr.mxu0 0.0
      %1579 = vmatpush1.msra.mxu0 0.0
      %1580 = vmatprep.subr.mxu0 0.0
      %1581 = vmatpush1.msra.mxu0 0.0
      %1582 = vmatprep.subr.mxu0 0.0
      %1583 = vmatpush1.msra.mxu0 0.0
      %1584 = vmatprep.mubr.f32.mxu0 0.0
      %1585 = vmatmul.mubr.f32.gmra.mrb[0].mxu0 %v1163
      %v1586 = vpop.f32.mrb[0].mxu0
      %v1587 = vadd.f32 %v1107, %v1586
      %v1588 = vpop.f32.mrb[0].mxu0
      %v1589 = vadd.f32 %v1109, %v1588
      %1590 = vdwg.mxu0
      %s1591 = scalar_lea.vmem %s2, 8
      %v1592 = vld [vmem:[%s1591] sm:$0xf]
      %1593 = vrot.lane.b32.xlu0 %v601, 8
      %v1594 = vpop.permute.xlu0 %1593
      %1595 = vrot.lane.b32.xlu0 %v602, 8
      %v1596 = vpop.permute.xlu0 %1595
      %1597 = vrot.lane.b32.xlu0 %v603, 8
      %v1598 = vpop.permute.xlu0 %1597
      %1599 = vrot.lane.b32.xlu0 %v604, 8
      %v1600 = vpop.permute.xlu0 %1599
      %1601 = vrot.lane.b32.xlu0 %v605, 8
      %v1602 = vpop.permute.xlu0 %1601
      %1603 = vrot.lane.b32.xlu0 %v606, 8
      %v1604 = vpop.permute.xlu0 %1603
      %1605 = vrot.lane.b32.xlu0 %v607, 8
      %v1606 = vpop.permute.xlu0 %1605
      %1607 = vrot.lane.b32.xlu0 %v608, 8
      %v1608 = vpop.permute.xlu0 %1607
      %1609 = vrot.lane.b32.xlu0 %v609, 8
      %v1610 = vpop.permute.xlu0 %1609
      %1611 = vrot.lane.b32.xlu0 %v610, 8
      %v1612 = vpop.permute.xlu0 %1611
      %1613 = vrot.lane.b32.xlu0 %v611, 8
      %v1614 = vpop.permute.xlu0 %1613
      %1615 = vrot.lane.b32.xlu0 %v612, 8
      %v1616 = vpop.permute.xlu0 %1615
      %1617 = vrot.lane.b32.xlu0 %v613, 8
      %v1618 = vpop.permute.xlu0 %1617
      %v1619 = vsel %vm681, %v1594, %v1596
      %v1620 = vsel %vm681, %v1596, %v1598
      %v1621 = vsel %vm681, %v1598, %v1600
      %v1622 = vsel %vm681, %v1600, %v1602
      %v1623 = vsel %vm681, %v1602, %v1604
      %v1624 = vsel %vm681, %v1604, %v1606
      %v1625 = vsel %vm681, %v1606, %v1608
      %v1626 = vsel %vm681, %v1608, %v1610
      %v1627 = vsel %vm681, %v1610, %v1612
      %v1628 = vsel %vm681, %v1612, %v1614
      %v1629 = vsel %vm681, %v1614, %v1616
      %v1630 = vsel %vm681, %v1616, %v1618
      %v1644 = vsel %vm681, %v1592, 0
      %1646 = vmatprep.subr.mxu0 %v1620
      %1647 = vmatpush1.msra.mxu0 %v1619
      %1648 = vmatprep.subr.mxu0 0.0
      %1649 = vmatpush1.msra.mxu0 0.0
      %1650 = vmatprep.subr.mxu0 0.0
      %1651 = vmatpush1.msra.mxu0 0.0
      %1652 = vmatprep.subr.mxu0 0.0
      %1653 = vmatpush1.msra.mxu0 0.0
      %1654 = vmatprep.subr.mxu0 0.0
      %1655 = vmatpush1.msra.mxu0 0.0
      %1656 = vmatprep.subr.mxu0 0.0
      %1657 = vmatpush1.msra.mxu0 0.0
      %1658 = vmatprep.subr.mxu0 0.0
      %1659 = vmatpush1.msra.mxu0 0.0
      %1660 = vmatprep.subr.mxu0 0.0
      %1661 = vmatpush1.msra.mxu0 0.0
      %1662 = vmatprep.subr.mxu0 0.0
      %1663 = vmatpush1.msra.mxu0 0.0
      %1664 = vmatprep.subr.mxu0 0.0
      %1665 = vmatpush1.msra.mxu0 0.0
      %1666 = vmatprep.subr.mxu0 0.0
      %1667 = vmatpush1.msra.mxu0 0.0
      %1668 = vmatprep.subr.mxu0 0.0
      %1669 = vmatpush1.msra.mxu0 0.0
      %1670 = vmatprep.subr.mxu0 0.0
      %1671 = vmatpush1.msra.mxu0 0.0
      %1672 = vmatprep.subr.mxu0 0.0
      %1673 = vmatpush1.msra.mxu0 0.0
      %1674 = vmatprep.subr.mxu0 0.0
      %1675 = vmatpush1.msra.mxu0 0.0
      %1676 = vmatprep.subr.mxu0 0.0
      %1677 = vmatpush1.msra.mxu0 0.0
      %1678 = vmatprep.subr.mxu0 0.0
      %1679 = vmatpush1.msra.mxu0 0.0
      %1680 = vmatprep.subr.mxu0 0.0
      %1681 = vmatpush1.msra.mxu0 0.0
      %1682 = vmatprep.subr.mxu0 0.0
      %1683 = vmatpush1.msra.mxu0 0.0
      %1684 = vmatprep.subr.mxu0 0.0
      %1685 = vmatpush1.msra.mxu0 0.0
      %1686 = vmatprep.subr.mxu0 0.0
      %1687 = vmatpush1.msra.mxu0 0.0
      %1688 = vmatprep.subr.mxu0 0.0
      %1689 = vmatpush1.msra.mxu0 0.0
      %1690 = vmatprep.subr.mxu0 0.0
      %1691 = vmatpush1.msra.mxu0 0.0
      %1692 = vmatprep.subr.mxu0 0.0
      %1693 = vmatpush1.msra.mxu0 0.0
      %1694 = vmatprep.subr.mxu0 0.0
      %1695 = vmatpush1.msra.mxu0 0.0
      %1696 = vmatprep.subr.mxu0 0.0
      %1697 = vmatpush1.msra.mxu0 0.0
      %1698 = vmatprep.subr.mxu0 0.0
      %1699 = vmatpush1.msra.mxu0 0.0
      %1700 = vmatprep.subr.mxu0 0.0
      %1701 = vmatpush1.msra.mxu0 0.0
      %1702 = vmatprep.subr.mxu0 0.0
      %1703 = vmatpush1.msra.mxu0 0.0
      %1704 = vmatprep.subr.mxu0 0.0
      %1705 = vmatpush1.msra.mxu0 0.0
      %1706 = vmatprep.subr.mxu0 0.0
      %1707 = vmatpush1.msra.mxu0 0.0
      %1708 = vmatprep.subr.mxu0 0.0
      %1709 = vmatpush1.msra.mxu0 0.0
      %1710 = vmatprep.mubr.f32.mxu0 0.0
      %1711 = vmatmul.mubr.f32.gmra.mrb[0].mxu0 %v1644
      %v1712 = vpop.f32.mrb[0].mxu0
      %v1713 = vadd.f32 0.0, %v1712
      %v1714 = vpop.f32.mrb[0].mxu0
      %v1715 = vadd.f32 0.0, %v1714
      %1716 = vdwg.mxu0
      %1717 = vmatprep.subr.mxu0 %v1622
      %1718 = vmatpush1.msra.mxu0 %v1621
      %1719 = vmatprep.subr.mxu0 0.0
      %1720 = vmatpush1.msra.mxu0 0.0
      %1721 = vmatprep.subr.mxu0 0.0
      %1722 = vmatpush1.msra.mxu0 0.0
      %1723 = vmatprep.subr.mxu0 0.0
      %1724 = vmatpush1.msra.mxu0 0.0
      %1725 = vmatprep.subr.mxu0 0.0
      %1726 = vmatpush1.msra.mxu0 0.0
      %1727 = vmatprep.subr.mxu0 0.0
      %1728 = vmatpush1.msra.mxu0 0.0
      %1729 = vmatprep.subr.mxu0 0.0
      %1730 = vmatpush1.msra.mxu0 0.0
      %1731 = vmatprep.subr.mxu0 0.0
      %1732 = vmatpush1.msra.mxu0 0.0
      %1733 = vmatprep.subr.mxu0 0.0
      %1734 = vmatpush1.msra.mxu0 0.0
      %1735 = vmatprep.subr.mxu0 0.0
      %1736 = vmatpush1.msra.mxu0 0.0
      %1737 = vmatprep.subr.mxu0 0.0
      %1738 = vmatpush1.msra.mxu0 0.0
      %1739 = vmatprep.subr.mxu0 0.0
      %1740 = vmatpush1.msra.mxu0 0.0
      %1741 = vmatprep.subr.mxu0 0.0
      %1742 = vmatpush1.msra.mxu0 0.0
      %1743 = vmatprep.subr.mxu0 0.0
      %1744 = vmatpush1.msra.mxu0 0.0
      %1745 = vmatprep.subr.mxu0 0.0
      %1746 = vmatpush1.msra.mxu0 0.0
      %1747 = vmatprep.subr.mxu0 0.0
      %1748 = vmatpush1.msra.mxu0 0.0
      %1749 = vmatprep.subr.mxu0 0.0
      %1750 = vmatpush1.msra.mxu0 0.0
      %1751 = vmatprep.subr.mxu0 0.0
      %1752 = vmatpush1.msra.mxu0 0.0
      %1753 = vmatprep.subr.mxu0 0.0
      %1754 = vmatpush1.msra.mxu0 0.0
      %1755 = vmatprep.subr.mxu0 0.0
      %1756 = vmatpush1.msra.mxu0 0.0
      %1757 = vmatprep.subr.mxu0 0.0
      %1758 = vmatpush1.msra.mxu0 0.0
      %1759 = vmatprep.subr.mxu0 0.0
      %1760 = vmatpush1.msra.mxu0 0.0
      %1761 = vmatprep.subr.mxu0 0.0
      %1762 = vmatpush1.msra.mxu0 0.0
      %1763 = vmatprep.subr.mxu0 0.0
      %1764 = vmatpush1.msra.mxu0 0.0
      %1765 = vmatprep.subr.mxu0 0.0
      %1766 = vmatpush1.msra.mxu0 0.0
      %1767 = vmatprep.subr.mxu0 0.0
      %1768 = vmatpush1.msra.mxu0 0.0
      %1769 = vmatprep.subr.mxu0 0.0
      %1770 = vmatpush1.msra.mxu0 0.0
      %1771 = vmatprep.subr.mxu0 0.0
      %1772 = vmatpush1.msra.mxu0 0.0
      %1773 = vmatprep.subr.mxu0 0.0
      %1774 = vmatpush1.msra.mxu0 0.0
      %1775 = vmatprep.subr.mxu0 0.0
      %1776 = vmatpush1.msra.mxu0 0.0
      %1777 = vmatprep.subr.mxu0 0.0
      %1778 = vmatpush1.msra.mxu0 0.0
      %1779 = vmatprep.subr.mxu0 0.0
      %1780 = vmatpush1.msra.mxu0 0.0
      %1781 = vmatprep.mubr.f32.mxu0 0.0
      %1782 = vmatmul.mubr.f32.gmra.mrb[0].mxu0 %v1644
      %v1783 = vpop.f32.mrb[0].mxu0
      %v1784 = vadd.f32 0.0, %v1783
      %v1785 = vpop.f32.mrb[0].mxu0
      %v1786 = vadd.f32 0.0, %v1785
      %1787 = vdwg.mxu0
      %1788 = vmatprep.subr.mxu0 %v1624
      %1789 = vmatpush1.msra.mxu0 %v1623
      %1790 = vmatprep.subr.mxu0 0.0
      %1791 = vmatpush1.msra.mxu0 0.0
      %1792 = vmatprep.subr.mxu0 0.0
      %1793 = vmatpush1.msra.mxu0 0.0
      %1794 = vmatprep.subr.mxu0 0.0
      %1795 = vmatpush1.msra.mxu0 0.0
      %1796 = vmatprep.subr.mxu0 0.0
      %1797 = vmatpush1.msra.mxu0 0.0
      %1798 = vmatprep.subr.mxu0 0.0
      %1799 = vmatpush1.msra.mxu0 0.0
      %1800 = vmatprep.subr.mxu0 0.0
      %1801 = vmatpush1.msra.mxu0 0.0
      %1802 = vmatprep.subr.mxu0 0.0
      %1803 = vmatpush1.msra.mxu0 0.0
      %1804 = vmatprep.subr.mxu0 0.0
      %1805 = vmatpush1.msra.mxu0 0.0
      %1806 = vmatprep.subr.mxu0 0.0
      %1807 = vmatpush1.msra.mxu0 0.0
      %1808 = vmatprep.subr.mxu0 0.0
      %1809 = vmatpush1.msra.mxu0 0.0
      %1810 = vmatprep.subr.mxu0 0.0
      %1811 = vmatpush1.msra.mxu0 0.0
      %1812 = vmatprep.subr.mxu0 0.0
      %1813 = vmatpush1.msra.mxu0 0.0
      %1814 = vmatprep.subr.mxu0 0.0
      %1815 = vmatpush1.msra.mxu0 0.0
      %1816 = vmatprep.subr.mxu0 0.0
      %1817 = vmatpush1.msra.mxu0 0.0
      %1818 = vmatprep.subr.mxu0 0.0
      %1819 = vmatpush1.msra.mxu0 0.0
      %1820 = vmatprep.subr.mxu0 0.0
      %1821 = vmatpush1.msra.mxu0 0.0
      %1822 = vmatprep.subr.mxu0 0.0
      %1823 = vmatpush1.msra.mxu0 0.0
      %1824 = vmatprep.subr.mxu0 0.0
      %1825 = vmatpush1.msra.mxu0 0.0
      %1826 = vmatprep.subr.mxu0 0.0
      %1827 = vmatpush1.msra.mxu0 0.0
      %1828 = vmatprep.subr.mxu0 0.0
      %1829 = vmatpush1.msra.mxu0 0.0
      %1830 = vmatprep.subr.mxu0 0.0
      %1831 = vmatpush1.msra.mxu0 0.0
      %1832 = vmatprep.subr.mxu0 0.0
      %1833 = vmatpush1.msra.mxu0 0.0
      %1834 = vmatprep.subr.mxu0 0.0
      %1835 = vmatpush1.msra.mxu0 0.0
      %1836 = vmatprep.subr.mxu0 0.0
      %1837 = vmatpush1.msra.mxu0 0.0
      %1838 = vmatprep.subr.mxu0 0.0
      %1839 = vmatpush1.msra.mxu0 0.0
      %1840 = vmatprep.subr.mxu0 0.0
      %1841 = vmatpush1.msra.mxu0 0.0
      %1842 = vmatprep.subr.mxu0 0.0
      %1843 = vmatpush1.msra.mxu0 0.0
      %1844 = vmatprep.subr.mxu0 0.0
      %1845 = vmatpush1.msra.mxu0 0.0
      %1846 = vmatprep.subr.mxu0 0.0
      %1847 = vmatpush1.msra.mxu0 0.0
      %1848 = vmatprep.subr.mxu0 0.0
      %1849 = vmatpush1.msra.mxu0 0.0
      %1850 = vmatprep.subr.mxu0 0.0
      %1851 = vmatpush1.msra.mxu0 0.0
      %1852 = vmatprep.mubr.f32.mxu0 0.0
      %1853 = vmatmul.mubr.f32.gmra.mrb[0].mxu0 %v1644
      %v1854 = vpop.f32.mrb[0].mxu0
      %v1855 = vadd.f32 0.0, %v1854
      %v1856 = vpop.f32.mrb[0].mxu0
      %v1857 = vadd.f32 0.0, %v1856
      %1858 = vdwg.mxu0
      %1859 = vmatprep.subr.mxu0 %v1626
      %1860 = vmatpush1.msra.mxu0 %v1625
      %1861 = vmatprep.subr.mxu0 0.0
      %1862 = vmatpush1.msra.mxu0 0.0
      %1863 = vmatprep.subr.mxu0 0.0
      %1864 = vmatpush1.msra.mxu0 0.0
      %1865 = vmatprep.subr.mxu0 0.0
      %1866 = vmatpush1.msra.mxu0 0.0
      %1867 = vmatprep.subr.mxu0 0.0
      %1868 = vmatpush1.msra.mxu0 0.0
      %1869 = vmatprep.subr.mxu0 0.0
      %1870 = vmatpush1.msra.mxu0 0.0
      %1871 = vmatprep.subr.mxu0 0.0
      %1872 = vmatpush1.msra.mxu0 0.0
      %1873 = vmatprep.subr.mxu0 0.0
      %1874 = vmatpush1.msra.mxu0 0.0
      %1875 = vmatprep.subr.mxu0 0.0
      %1876 = vmatpush1.msra.mxu0 0.0
      %1877 = vmatprep.subr.mxu0 0.0
      %1878 = vmatpush1.msra.mxu0 0.0
      %1879 = vmatprep.subr.mxu0 0.0
      %1880 = vmatpush1.msra.mxu0 0.0
      %1881 = vmatprep.subr.mxu0 0.0
      %1882 = vmatpush1.msra.mxu0 0.0
      %1883 = vmatprep.subr.mxu0 0.0
      %1884 = vmatpush1.msra.mxu0 0.0
      %1885 = vmatprep.subr.mxu0 0.0
      %1886 = vmatpush1.msra.mxu0 0.0
      %1887 = vmatprep.subr.mxu0 0.0
      %1888 = vmatpush1.msra.mxu0 0.0
      %1889 = vmatprep.subr.mxu0 0.0
      %1890 = vmatpush1.msra.mxu0 0.0
      %1891 = vmatprep.subr.mxu0 0.0
      %1892 = vmatpush1.msra.mxu0 0.0
      %1893 = vmatprep.subr.mxu0 0.0
      %1894 = vmatpush1.msra.mxu0 0.0
      %1895 = vmatprep.subr.mxu0 0.0
      %1896 = vmatpush1.msra.mxu0 0.0
      %1897 = vmatprep.subr.mxu0 0.0
      %1898 = vmatpush1.msra.mxu0 0.0
      %1899 = vmatprep.subr.mxu0 0.0
      %1900 = vmatpush1.msra.mxu0 0.0
      %1901 = vmatprep.subr.mxu0 0.0
      %1902 = vmatpush1.msra.mxu0 0.0
      %1903 = vmatprep.subr.mxu0 0.0
      %1904 = vmatpush1.msra.mxu0 0.0
      %1905 = vmatprep.subr.mxu0 0.0
      %1906 = vmatpush1.msra.mxu0 0.0
      %1907 = vmatprep.subr.mxu0 0.0
      %1908 = vmatpush1.msra.mxu0 0.0
      %1909 = vmatprep.subr.mxu0 0.0
      %1910 = vmatpush1.msra.mxu0 0.0
      %1911 = vmatprep.subr.mxu0 0.0
      %1912 = vmatpush1.msra.mxu0 0.0
      %1913 = vmatprep.subr.mxu0 0.0
      %1914 = vmatpush1.msra.mxu0 0.0
      %1915 = vmatprep.subr.mxu0 0.0
      %1916 = vmatpush1.msra.mxu0 0.0
      %1917 = vmatprep.subr.mxu0 0.0
      %1918 = vmatpush1.msra.mxu0 0.0
      %1919 = vmatprep.subr.mxu0 0.0
      %1920 = vmatpush1.msra.mxu0 0.0
      %1921 = vmatprep.subr.mxu0 0.0
      %1922 = vmatpush1.msra.mxu0 0.0
      %1923 = vmatprep.mubr.f32.mxu0 0.0
      %1924 = vmatmul.mubr.f32.gmra.mrb[0].mxu0 %v1644
      %v1925 = vpop.f32.mrb[0].mxu0
      %v1926 = vadd.f32 0.0, %v1925
      %v1927 = vpop.f32.mrb[0].mxu0
      %v1928 = vadd.f32 0.0, %v1927
      %1929 = vdwg.mxu0
      %1930 = vmatprep.subr.mxu0 %v1628
      %1931 = vmatpush1.msra.mxu0 %v1627
      %1932 = vmatprep.subr.mxu0 0.0
      %1933 = vmatpush1.msra.mxu0 0.0
      %1934 = vmatprep.subr.mxu0 0.0
      %1935 = vmatpush1.msra.mxu0 0.0
      %1936 = vmatprep.subr.mxu0 0.0
      %1937 = vmatpush1.msra.mxu0 0.0
      %1938 = vmatprep.subr.mxu0 0.0
      %1939 = vmatpush1.msra.mxu0 0.0
      %1940 = vmatprep.subr.mxu0 0.0
      %1941 = vmatpush1.msra.mxu0 0.0
      %1942 = vmatprep.subr.mxu0 0.0
      %1943 = vmatpush1.msra.mxu0 0.0
      %1944 = vmatprep.subr.mxu0 0.0
      %1945 = vmatpush1.msra.mxu0 0.0
      %1946 = vmatprep.subr.mxu0 0.0
      %1947 = vmatpush1.msra.mxu0 0.0
      %1948 = vmatprep.subr.mxu0 0.0
      %1949 = vmatpush1.msra.mxu0 0.0
      %1950 = vmatprep.subr.mxu0 0.0
      %1951 = vmatpush1.msra.mxu0 0.0
      %1952 = vmatprep.subr.mxu0 0.0
      %1953 = vmatpush1.msra.mxu0 0.0
      %1954 = vmatprep.subr.mxu0 0.0
      %1955 = vmatpush1.msra.mxu0 0.0
      %1956 = vmatprep.subr.mxu0 0.0
      %1957 = vmatpush1.msra.mxu0 0.0
      %1958 = vmatprep.subr.mxu0 0.0
      %1959 = vmatpush1.msra.mxu0 0.0
      %1960 = vmatprep.subr.mxu0 0.0
      %1961 = vmatpush1.msra.mxu0 0.0
      %1962 = vmatprep.subr.mxu0 0.0
      %1963 = vmatpush1.msra.mxu0 0.0
      %1964 = vmatprep.subr.mxu0 0.0
      %1965 = vmatpush1.msra.mxu0 0.0
      %1966 = vmatprep.subr.mxu0 0.0
      %1967 = vmatpush1.msra.mxu0 0.0
      %1968 = vmatprep.subr.mxu0 0.0
      %1969 = vmatpush1.msra.mxu0 0.0
      %1970 = vmatprep.subr.mxu0 0.0
      %1971 = vmatpush1.msra.mxu0 0.0
      %1972 = vmatprep.subr.mxu0 0.0
      %1973 = vmatpush1.msra.mxu0 0.0
      %1974 = vmatprep.subr.mxu0 0.0
      %1975 = vmatpush1.msra.mxu0 0.0
      %1976 = vmatprep.subr.mxu0 0.0
      %1977 = vmatpush1.msra.mxu0 0.0
      %1978 = vmatprep.subr.mxu0 0.0
      %1979 = vmatpush1.msra.mxu0 0.0
      %1980 = vmatprep.subr.mxu0 0.0
      %1981 = vmatpush1.msra.mxu0 0.0
      %1982 = vmatprep.subr.mxu0 0.0
      %1983 = vmatpush1.msra.mxu0 0.0
      %1984 = vmatprep.subr.mxu0 0.0
      %1985 = vmatpush1.msra.mxu0 0.0
      %1986 = vmatprep.subr.mxu0 0.0
      %1987 = vmatpush1.msra.mxu0 0.0
      %1988 = vmatprep.subr.mxu0 0.0
      %1989 = vmatpush1.msra.mxu0 0.0
      %1990 = vmatprep.subr.mxu0 0.0
      %1991 = vmatpush1.msra.mxu0 0.0
      %1992 = vmatprep.subr.mxu0 0.0
      %1993 = vmatpush1.msra.mxu0 0.0
      %1994 = vmatprep.mubr.f32.mxu0 0.0
      %1995 = vmatmul.mubr.f32.gmra.mrb[0].mxu0 %v1644
      %v1996 = vpop.f32.mrb[0].mxu0
      %v1997 = vadd.f32 0.0, %v1996
      %v1998 = vpop.f32.mrb[0].mxu0
      %v1999 = vadd.f32 0.0, %v1998
      %2000 = vdwg.mxu0
      %2001 = vmatprep.subr.mxu0 %v1630
      %2002 = vmatpush1.msra.mxu0 %v1629
      %2003 = vmatprep.subr.mxu0 0.0
      %2004 = vmatpush1.msra.mxu0 0.0
      %2005 = vmatprep.subr.mxu0 0.0
      %2006 = vmatpush1.msra.mxu0 0.0
      %2007 = vmatprep.subr.mxu0 0.0
      %2008 = vmatpush1.msra.mxu0 0.0
      %2009 = vmatprep.subr.mxu0 0.0
      %2010 = vmatpush1.msra.mxu0 0.0
      %2011 = vmatprep.subr.mxu0 0.0
      %2012 = vmatpush1.msra.mxu0 0.0
      %2013 = vmatprep.subr.mxu0 0.0
      %2014 = vmatpush1.msra.mxu0 0.0
      %2015 = vmatprep.subr.mxu0 0.0
      %2016 = vmatpush1.msra.mxu0 0.0
      %2017 = vmatprep.subr.mxu0 0.0
      %2018 = vmatpush1.msra.mxu0 0.0
      %2019 = vmatprep.subr.mxu0 0.0
      %2020 = vmatpush1.msra.mxu0 0.0
      %2021 = vmatprep.subr.mxu0 0.0
      %2022 = vmatpush1.msra.mxu0 0.0
      %2023 = vmatprep.subr.mxu0 0.0
      %2024 = vmatpush1.msra.mxu0 0.0
      %2025 = vmatprep.subr.mxu0 0.0
      %2026 = vmatpush1.msra.mxu0 0.0
      %2027 = vmatprep.subr.mxu0 0.0
      %2028 = vmatpush1.msra.mxu0 0.0
      %2029 = vmatprep.subr.mxu0 0.0
      %2030 = vmatpush1.msra.mxu0 0.0
      %2031 = vmatprep.subr.mxu0 0.0
      %2032 = vmatpush1.msra.mxu0 0.0
      %2033 = vmatprep.subr.mxu0 0.0
      %2034 = vmatpush1.msra.mxu0 0.0
      %2035 = vmatprep.subr.mxu0 0.0
      %2036 = vmatpush1.msra.mxu0 0.0
      %2037 = vmatprep.subr.mxu0 0.0
      %2038 = vmatpush1.msra.mxu0 0.0
      %2039 = vmatprep.subr.mxu0 0.0
      %2040 = vmatpush1.msra.mxu0 0.0
      %2041 = vmatprep.subr.mxu0 0.0
      %2042 = vmatpush1.msra.mxu0 0.0
      %2043 = vmatprep.subr.mxu0 0.0
      %2044 = vmatpush1.msra.mxu0 0.0
      %2045 = vmatprep.subr.mxu0 0.0
      %2046 = vmatpush1.msra.mxu0 0.0
      %2047 = vmatprep.subr.mxu0 0.0
      %2048 = vmatpush1.msra.mxu0 0.0
      %2049 = vmatprep.subr.mxu0 0.0
      %2050 = vmatpush1.msra.mxu0 0.0
      %2051 = vmatprep.subr.mxu0 0.0
      %2052 = vmatpush1.msra.mxu0 0.0
      %2053 = vmatprep.subr.mxu0 0.0
      %2054 = vmatpush1.msra.mxu0 0.0
      %2055 = vmatprep.subr.mxu0 0.0
      %2056 = vmatpush1.msra.mxu0 0.0
      %2057 = vmatprep.subr.mxu0 0.0
      %2058 = vmatpush1.msra.mxu0 0.0
      %2059 = vmatprep.subr.mxu0 0.0
      %2060 = vmatpush1.msra.mxu0 0.0
      %2061 = vmatprep.subr.mxu0 0.0
      %2062 = vmatpush1.msra.mxu0 0.0
      %2063 = vmatprep.subr.mxu0 0.0
      %2064 = vmatpush1.msra.mxu0 0.0
      %2065 = vmatprep.mubr.f32.mxu0 0.0
      %2066 = vmatmul.mubr.f32.gmra.mrb[0].mxu0 %v1644
      %v2067 = vpop.f32.mrb[0].mxu0
      %v2068 = vadd.f32 0.0, %v2067
      %v2069 = vpop.f32.mrb[0].mxu0
      %v2070 = vadd.f32 0.0, %v2069
      %2071 = vdwg.mxu0
      %v2072 = vadd.f32 %v1232, %v1713
      %v2073 = vadd.f32 %v1234, %v1715
      %v2074 = vadd.f32 %v1303, %v1784
      %v2075 = vadd.f32 %v1305, %v1786
      %v2076 = vadd.f32 %v1374, %v1855
      %v2077 = vadd.f32 %v1376, %v1857
      %v2078 = vadd.f32 %v1445, %v1926
      %v2079 = vadd.f32 %v1447, %v1928
      %v2080 = vadd.f32 %v1516, %v1997
      %v2081 = vadd.f32 %v1518, %v1999
      %v2082 = vadd.f32 %v1587, %v2068
      %v2083 = vadd.f32 %v1589, %v2070
      %v2084 = vld [vmem:[#allocation2 + $0x8] sm:$0xff]
      %v2085 = vld [vmem:[#allocation2 + $0x10] sm:$0xff]
      %v2086 = vld [vmem:[#allocation2 + $0x18] sm:$0xff]
      %v2087 = vld [vmem:[#allocation2 + $0x20] sm:$0xff]
      %v2088 = vld [vmem:[#allocation2 + $0x28] sm:$0xff]
      %v2089 = vld [vmem:[#allocation2 + $0x30] sm:$0xff]
      %v2090 = vld [vmem:[#allocation2 + $0x38] sm:$0xff]
      %v2091 = vld [vmem:[#allocation2 + $0x40] sm:$0xff]
      %v2092 = vld [vmem:[#allocation2 + $0x48] sm:$0xff]
      %v2093 = vld [vmem:[#allocation2 + $0x50] sm:$0xff]
      %v2094 = vld [vmem:[#allocation2 + $0x58] sm:$0xff]
      %v2095 = vld [vmem:[#allocation2 + $0x60] sm:$0xff]
      %v2096 = vld [vmem:[#allocation2 + $0x68] sm:$0xff]
      %s2097 = scalar_lea.vmem %s2, 12
      %v2098 = vld [vmem:[%s2097] sm:$0xf]
      %2112 = vrot.lane.b32.xlu0 %v2084, 8
      %v2113 = vpop.permute.xlu0 %2112
      %2114 = vrot.lane.b32.xlu0 %v2085, 8
      %v2115 = vpop.permute.xlu0 %2114
      %2116 = vrot.lane.b32.xlu0 %v2086, 8
      %v2117 = vpop.permute.xlu0 %2116
      %2118 = vrot.lane.b32.xlu0 %v2087, 8
      %v2119 = vpop.permute.xlu0 %2118
      %2120 = vrot.lane.b32.xlu0 %v2088, 8
      %v2121 = vpop.permute.xlu0 %2120
      %2122 = vrot.lane.b32.xlu0 %v2089, 8
      %v2123 = vpop.permute.xlu0 %2122
      %2124 = vrot.lane.b32.xlu0 %v2090, 8
      %v2125 = vpop.permute.xlu0 %2124
      %2126 = vrot.lane.b32.xlu0 %v2091, 8
      %v2127 = vpop.permute.xlu0 %2126
      %2128 = vrot.lane.b32.xlu0 %v2092, 8
      %v2129 = vpop.permute.xlu0 %2128
      %2130 = vrot.lane.b32.xlu0 %v2093, 8
      %v2131 = vpop.permute.xlu0 %2130
      %2132 = vrot.lane.b32.xlu0 %v2094, 8
      %v2133 = vpop.permute.xlu0 %2132
      %2134 = vrot.lane.b32.xlu0 %v2095, 8
      %v2135 = vpop.permute.xlu0 %2134
      %2136 = vrot.lane.b32.xlu0 %v2096, 8
      %v2137 = vpop.permute.xlu0 %2136
      %v2138 = vsel %vm681, %v2113, %v2115
      %v2139 = vsel %vm681, %v2115, %v2117
      %v2140 = vsel %vm681, %v2117, %v2119
      %v2141 = vsel %vm681, %v2119, %v2121
      %v2142 = vsel %vm681, %v2121, %v2123
      %v2143 = vsel %vm681, %v2123, %v2125
      %v2144 = vsel %vm681, %v2125, %v2127
      %v2145 = vsel %vm681, %v2127, %v2129
      %v2146 = vsel %vm681, %v2129, %v2131
      %v2147 = vsel %vm681, %v2131, %v2133
      %v2148 = vsel %vm681, %v2133, %v2135
      %v2149 = vsel %vm681, %v2135, %v2137
      %v2163 = vsel %vm681, %v2098, 0
      %2165 = vmatprep.subr.mxu0 %v2139
      %2166 = vmatpush1.msra.mxu0 %v2138
      %2167 = vmatprep.subr.mxu0 0.0
      %2168 = vmatpush1.msra.mxu0 0.0
      %2169 = vmatprep.subr.mxu0 0.0
      %2170 = vmatpush1.msra.mxu0 0.0
      %2171 = vmatprep.subr.mxu0 0.0
      %2172 = vmatpush1.msra.mxu0 0.0
      %2173 = vmatprep.subr.mxu0 0.0
      %2174 = vmatpush1.msra.mxu0 0.0
      %2175 = vmatprep.subr.mxu0 0.0
      %2176 = vmatpush1.msra.mxu0 0.0
      %2177 = vmatprep.subr.mxu0 0.0
      %2178 = vmatpush1.msra.mxu0 0.0
      %2179 = vmatprep.subr.mxu0 0.0
      %2180 = vmatpush1.msra.mxu0 0.0
      %2181 = vmatprep.subr.mxu0 0.0
      %2182 = vmatpush1.msra.mxu0 0.0
      %2183 = vmatprep.subr.mxu0 0.0
      %2184 = vmatpush1.msra.mxu0 0.0
      %2185 = vmatprep.subr.mxu0 0.0
      %2186 = vmatpush1.msra.mxu0 0.0
      %2187 = vmatprep.subr.mxu0 0.0
      %2188 = vmatpush1.msra.mxu0 0.0
      %2189 = vmatprep.subr.mxu0 0.0
      %2190 = vmatpush1.msra.mxu0 0.0
      %2191 = vmatprep.subr.mxu0 0.0
      %2192 = vmatpush1.msra.mxu0 0.0
      %2193 = vmatprep.subr.mxu0 0.0
      %2194 = vmatpush1.msra.mxu0 0.0
      %2195 = vmatprep.subr.mxu0 0.0
      %2196 = vmatpush1.msra.mxu0 0.0
      %2197 = vmatprep.subr.mxu0 0.0
      %2198 = vmatpush1.msra.mxu0 0.0
      %2199 = vmatprep.subr.mxu0 0.0
      %2200 = vmatpush1.msra.mxu0 0.0
      %2201 = vmatprep.subr.mxu0 0.0
      %2202 = vmatpush1.msra.mxu0 0.0
      %2203 = vmatprep.subr.mxu0 0.0
      %2204 = vmatpush1.msra.mxu0 0.0
      %2205 = vmatprep.subr.mxu0 0.0
      %2206 = vmatpush1.msra.mxu0 0.0
      %2207 = vmatprep.subr.mxu0 0.0
      %2208 = vmatpush1.msra.mxu0 0.0
      %2209 = vmatprep.subr.mxu0 0.0
      %2210 = vmatpush1.msra.mxu0 0.0
      %2211 = vmatprep.subr.mxu0 0.0
      %2212 = vmatpush1.msra.mxu0 0.0
      %2213 = vmatprep.subr.mxu0 0.0
      %2214 = vmatpush1.msra.mxu0 0.0
      %2215 = vmatprep.subr.mxu0 0.0
      %2216 = vmatpush1.msra.mxu0 0.0
      %2217 = vmatprep.subr.mxu0 0.0
      %2218 = vmatpush1.msra.mxu0 0.0
      %2219 = vmatprep.subr.mxu0 0.0
      %2220 = vmatpush1.msra.mxu0 0.0
      %2221 = vmatprep.subr.mxu0 0.0
      %2222 = vmatpush1.msra.mxu0 0.0
      %2223 = vmatprep.subr.mxu0 0.0
      %2224 = vmatpush1.msra.mxu0 0.0
      %2225 = vmatprep.subr.mxu0 0.0
      %2226 = vmatpush1.msra.mxu0 0.0
      %2227 = vmatprep.subr.mxu0 0.0
      %2228 = vmatpush1.msra.mxu0 0.0
      %2229 = vmatprep.mubr.f32.mxu0 0.0
      %2230 = vmatmul.mubr.f32.gmra.mrb[0].mxu0 %v2163
      %v2231 = vpop.f32.mrb[0].mxu0
      %v2232 = vadd.f32 0.0, %v2231
      %v2233 = vpop.f32.mrb[0].mxu0
      %v2234 = vadd.f32 0.0, %v2233
      %2235 = vdwg.mxu0
      %2236 = vmatprep.subr.mxu0 %v2141
      %2237 = vmatpush1.msra.mxu0 %v2140
      %2238 = vmatprep.subr.mxu0 0.0
      %2239 = vmatpush1.msra.mxu0 0.0
      %2240 = vmatprep.subr.mxu0 0.0
      %2241 = vmatpush1.msra.mxu0 0.0
      %2242 = vmatprep.subr.mxu0 0.0
      %2243 = vmatpush1.msra.mxu0 0.0
      %2244 = vmatprep.subr.mxu0 0.0
      %2245 = vmatpush1.msra.mxu0 0.0
      %2246 = vmatprep.subr.mxu0 0.0
      %2247 = vmatpush1.msra.mxu0 0.0
      %2248 = vmatprep.subr.mxu0 0.0
      %2249 = vmatpush1.msra.mxu0 0.0
      %2250 = vmatprep.subr.mxu0 0.0
      %2251 = vmatpush1.msra.mxu0 0.0
      %2252 = vmatprep.subr.mxu0 0.0
      %2253 = vmatpush1.msra.mxu0 0.0
      %2254 = vmatprep.subr.mxu0 0.0
      %2255 = vmatpush1.msra.mxu0 0.0
      %2256 = vmatprep.subr.mxu0 0.0
      %2257 = vmatpush1.msra.mxu0 0.0
      %2258 = vmatprep.subr.mxu0 0.0
      %2259 = vmatpush1.msra.mxu0 0.0
      %2260 = vmatprep.subr.mxu0 0.0
      %2261 = vmatpush1.msra.mxu0 0.0
      %2262 = vmatprep.subr.mxu0 0.0
      %2263 = vmatpush1.msra.mxu0 0.0
      %2264 = vmatprep.subr.mxu0 0.0
      %2265 = vmatpush1.msra.mxu0 0.0
      %2266 = vmatprep.subr.mxu0 0.0
      %2267 = vmatpush1.msra.mxu0 0.0
      %2268 = vmatprep.subr.mxu0 0.0
      %2269 = vmatpush1.msra.mxu0 0.0
      %2270 = vmatprep.subr.mxu0 0.0
      %2271 = vmatpush1.msra.mxu0 0.0
      %2272 = vmatprep.subr.mxu0 0.0
      %2273 = vmatpush1.msra.mxu0 0.0
      %2274 = vmatprep.subr.mxu0 0.0
      %2275 = vmatpush1.msra.mxu0 0.0
      %2276 = vmatprep.subr.mxu0 0.0
      %2277 = vmatpush1.msra.mxu0 0.0
      %2278 = vmatprep.subr.mxu0 0.0
      %2279 = vmatpush1.msra.mxu0 0.0
      %2280 = vmatprep.subr.mxu0 0.0
      %2281 = vmatpush1.msra.mxu0 0.0
      %2282 = vmatprep.subr.mxu0 0.0
      %2283 = vmatpush1.msra.mxu0 0.0
      %2284 = vmatprep.subr.mxu0 0.0
      %2285 = vmatpush1.msra.mxu0 0.0
      %2286 = vmatprep.subr.mxu0 0.0
      %2287 = vmatpush1.msra.mxu0 0.0
      %2288 = vmatprep.subr.mxu0 0.0
      %2289 = vmatpush1.msra.mxu0 0.0
      %2290 = vmatprep.subr.mxu0 0.0
      %2291 = vmatpush1.msra.mxu0 0.0
      %2292 = vmatprep.subr.mxu0 0.0
      %2293 = vmatpush1.msra.mxu0 0.0
      %2294 = vmatprep.subr.mxu0 0.0
      %2295 = vmatpush1.msra.mxu0 0.0
      %2296 = vmatprep.subr.mxu0 0.0
      %2297 = vmatpush1.msra.mxu0 0.0
      %2298 = vmatprep.subr.mxu0 0.0
      %2299 = vmatpush1.msra.mxu0 0.0
      %2300 = vmatprep.mubr.f32.mxu0 0.0
      %2301 = vmatmul.mubr.f32.gmra.mrb[0].mxu0 %v2163
      %v2302 = vpop.f32.mrb[0].mxu0
      %v2303 = vadd.f32 0.0, %v2302
      %v2304 = vpop.f32.mrb[0].mxu0
      %v2305 = vadd.f32 0.0, %v2304
      %2306 = vdwg.mxu0
      %2307 = vmatprep.subr.mxu0 %v2143
      %2308 = vmatpush1.msra.mxu0 %v2142
      %2309 = vmatprep.subr.mxu0 0.0
      %2310 = vmatpush1.msra.mxu0 0.0
      %2311 = vmatprep.subr.mxu0 0.0
      %2312 = vmatpush1.msra.mxu0 0.0
      %2313 = vmatprep.subr.mxu0 0.0
      %2314 = vmatpush1.msra.mxu0 0.0
      %2315 = vmatprep.subr.mxu0 0.0
      %2316 = vmatpush1.msra.mxu0 0.0
      %2317 = vmatprep.subr.mxu0 0.0
      %2318 = vmatpush1.msra.mxu0 0.0
      %2319 = vmatprep.subr.mxu0 0.0
      %2320 = vmatpush1.msra.mxu0 0.0
      %2321 = vmatprep.subr.mxu0 0.0
      %2322 = vmatpush1.msra.mxu0 0.0
      %2323 = vmatprep.subr.mxu0 0.0
      %2324 = vmatpush1.msra.mxu0 0.0
      %2325 = vmatprep.subr.mxu0 0.0
      %2326 = vmatpush1.msra.mxu0 0.0
      %2327 = vmatprep.subr.mxu0 0.0
      %2328 = vmatpush1.msra.mxu0 0.0
      %2329 = vmatprep.subr.mxu0 0.0
      %2330 = vmatpush1.msra.mxu0 0.0
      %2331 = vmatprep.subr.mxu0 0.0
      %2332 = vmatpush1.msra.mxu0 0.0
      %2333 = vmatprep.subr.mxu0 0.0
      %2334 = vmatpush1.msra.mxu0 0.0
      %2335 = vmatprep.subr.mxu0 0.0
      %2336 = vmatpush1.msra.mxu0 0.0
      %2337 = vmatprep.subr.mxu0 0.0
      %2338 = vmatpush1.msra.mxu0 0.0
      %2339 = vmatprep.subr.mxu0 0.0
      %2340 = vmatpush1.msra.mxu0 0.0
      %2341 = vmatprep.subr.mxu0 0.0
      %2342 = vmatpush1.msra.mxu0 0.0
      %2343 = vmatprep.subr.mxu0 0.0
      %2344 = vmatpush1.msra.mxu0 0.0
      %2345 = vmatprep.subr.mxu0 0.0
      %2346 = vmatpush1.msra.mxu0 0.0
      %2347 = vmatprep.subr.mxu0 0.0
      %2348 = vmatpush1.msra.mxu0 0.0
      %2349 = vmatprep.subr.mxu0 0.0
      %2350 = vmatpush1.msra.mxu0 0.0
      %2351 = vmatprep.subr.mxu0 0.0
      %2352 = vmatpush1.msra.mxu0 0.0
      %2353 = vmatprep.subr.mxu0 0.0
      %2354 = vmatpush1.msra.mxu0 0.0
      %2355 = vmatprep.subr.mxu0 0.0
      %2356 = vmatpush1.msra.mxu0 0.0
      %2357 = vmatprep.subr.mxu0 0.0
      %2358 = vmatpush1.msra.mxu0 0.0
      %2359 = vmatprep.subr.mxu0 0.0
      %2360 = vmatpush1.msra.mxu0 0.0
      %2361 = vmatprep.subr.mxu0 0.0
      %2362 = vmatpush1.msra.mxu0 0.0
      %2363 = vmatprep.subr.mxu0 0.0
      %2364 = vmatpush1.msra.mxu0 0.0
      %2365 = vmatprep.subr.mxu0 0.0
      %2366 = vmatpush1.msra.mxu0 0.0
      %2367 = vmatprep.subr.mxu0 0.0
      %2368 = vmatpush1.msra.mxu0 0.0
      %2369 = vmatprep.subr.mxu0 0.0
      %2370 = vmatpush1.msra.mxu0 0.0
      %2371 = vmatprep.mubr.f32.mxu0 0.0
      %2372 = vmatmul.mubr.f32.gmra.mrb[0].mxu0 %v2163
      %v2373 = vpop.f32.mrb[0].mxu0
      %v2374 = vadd.f32 0.0, %v2373
      %v2375 = vpop.f32.mrb[0].mxu0
      %v2376 = vadd.f32 0.0, %v2375
      %2377 = vdwg.mxu0
      %2378 = vmatprep.subr.mxu0 %v2145
      %2379 = vmatpush1.msra.mxu0 %v2144
      %2380 = vmatprep.subr.mxu0 0.0
      %2381 = vmatpush1.msra.mxu0 0.0
      %2382 = vmatprep.subr.mxu0 0.0
      %2383 = vmatpush1.msra.mxu0 0.0
      %2384 = vmatprep.subr.mxu0 0.0
      %2385 = vmatpush1.msra.mxu0 0.0
      %2386 = vmatprep.subr.mxu0 0.0
      %2387 = vmatpush1.msra.mxu0 0.0
      %2388 = vmatprep.subr.mxu0 0.0
      %2389 = vmatpush1.msra.mxu0 0.0
      %2390 = vmatprep.subr.mxu0 0.0
      %2391 = vmatpush1.msra.mxu0 0.0
      %2392 = vmatprep.subr.mxu0 0.0
      %2393 = vmatpush1.msra.mxu0 0.0
      %2394 = vmatprep.subr.mxu0 0.0
      %2395 = vmatpush1.msra.mxu0 0.0
      %2396 = vmatprep.subr.mxu0 0.0
      %2397 = vmatpush1.msra.mxu0 0.0
      %2398 = vmatprep.subr.mxu0 0.0
      %2399 = vmatpush1.msra.mxu0 0.0
      %2400 = vmatprep.subr.mxu0 0.0
      %2401 = vmatpush1.msra.mxu0 0.0
      %2402 = vmatprep.subr.mxu0 0.0
      %2403 = vmatpush1.msra.mxu0 0.0
      %2404 = vmatprep.subr.mxu0 0.0
      %2405 = vmatpush1.msra.mxu0 0.0
      %2406 = vmatprep.subr.mxu0 0.0
      %2407 = vmatpush1.msra.mxu0 0.0
      %2408 = vmatprep.subr.mxu0 0.0
      %2409 = vmatpush1.msra.mxu0 0.0
      %2410 = vmatprep.subr.mxu0 0.0
      %2411 = vmatpush1.msra.mxu0 0.0
      %2412 = vmatprep.subr.mxu0 0.0
      %2413 = vmatpush1.msra.mxu0 0.0
      %2414 = vmatprep.subr.mxu0 0.0
      %2415 = vmatpush1.msra.mxu0 0.0
      %2416 = vmatprep.subr.mxu0 0.0
      %2417 = vmatpush1.msra.mxu0 0.0
      %2418 = vmatprep.subr.mxu0 0.0
      %2419 = vmatpush1.msra.mxu0 0.0
      %2420 = vmatprep.subr.mxu0 0.0
      %2421 = vmatpush1.msra.mxu0 0.0
      %2422 = vmatprep.subr.mxu0 0.0
      %2423 = vmatpush1.msra.mxu0 0.0
      %2424 = vmatprep.subr.mxu0 0.0
      %2425 = vmatpush1.msra.mxu0 0.0
      %2426 = vmatprep.subr.mxu0 0.0
      %2427 = vmatpush1.msra.mxu0 0.0
      %2428 = vmatprep.subr.mxu0 0.0
      %2429 = vmatpush1.msra.mxu0 0.0
      %2430 = vmatprep.subr.mxu0 0.0
      %2431 = vmatpush1.msra.mxu0 0.0
      %2432 = vmatprep.subr.mxu0 0.0
      %2433 = vmatpush1.msra.mxu0 0.0
      %2434 = vmatprep.subr.mxu0 0.0
      %2435 = vmatpush1.msra.mxu0 0.0
      %2436 = vmatprep.subr.mxu0 0.0
      %2437 = vmatpush1.msra.mxu0 0.0
      %2438 = vmatprep.subr.mxu0 0.0
      %2439 = vmatpush1.msra.mxu0 0.0
      %2440 = vmatprep.subr.mxu0 0.0
      %2441 = vmatpush1.msra.mxu0 0.0
      %2442 = vmatprep.mubr.f32.mxu0 0.0
      %2443 = vmatmul.mubr.f32.gmra.mrb[0].mxu0 %v2163
      %v2444 = vpop.f32.mrb[0].mxu0
      %v2445 = vadd.f32 0.0, %v2444
      %v2446 = vpop.f32.mrb[0].mxu0
      %v2447 = vadd.f32 0.0, %v2446
      %2448 = vdwg.mxu0
      %2449 = vmatprep.subr.mxu0 %v2147
      %2450 = vmatpush1.msra.mxu0 %v2146
      %2451 = vmatprep.subr.mxu0 0.0
      %2452 = vmatpush1.msra.mxu0 0.0
      %2453 = vmatprep.subr.mxu0 0.0
      %2454 = vmatpush1.msra.mxu0 0.0
      %2455 = vmatprep.subr.mxu0 0.0
      %2456 = vmatpush1.msra.mxu0 0.0
      %2457 = vmatprep.subr.mxu0 0.0
      %2458 = vmatpush1.msra.mxu0 0.0
      %2459 = vmatprep.subr.mxu0 0.0
      %2460 = vmatpush1.msra.mxu0 0.0
      %2461 = vmatprep.subr.mxu0 0.0
      %2462 = vmatpush1.msra.mxu0 0.0
      %2463 = vmatprep.subr.mxu0 0.0
      %2464 = vmatpush1.msra.mxu0 0.0
      %2465 = vmatprep.subr.mxu0 0.0
      %2466 = vmatpush1.msra.mxu0 0.0
      %2467 = vmatprep.subr.mxu0 0.0
      %2468 = vmatpush1.msra.mxu0 0.0
      %2469 = vmatprep.subr.mxu0 0.0
      %2470 = vmatpush1.msra.mxu0 0.0
      %2471 = vmatprep.subr.mxu0 0.0
      %2472 = vmatpush1.msra.mxu0 0.0
      %2473 = vmatprep.subr.mxu0 0.0
      %2474 = vmatpush1.msra.mxu0 0.0
      %2475 = vmatprep.subr.mxu0 0.0
      %2476 = vmatpush1.msra.mxu0 0.0
      %2477 = vmatprep.subr.mxu0 0.0
      %2478 = vmatpush1.msra.mxu0 0.0
      %2479 = vmatprep.subr.mxu0 0.0
      %2480 = vmatpush1.msra.mxu0 0.0
      %2481 = vmatprep.subr.mxu0 0.0
      %2482 = vmatpush1.msra.mxu0 0.0
      %2483 = vmatprep.subr.mxu0 0.0
      %2484 = vmatpush1.msra.mxu0 0.0
      %2485 = vmatprep.subr.mxu0 0.0
      %2486 = vmatpush1.msra.mxu0 0.0
      %2487 = vmatprep.subr.mxu0 0.0
      %2488 = vmatpush1.msra.mxu0 0.0
      %2489 = vmatprep.subr.mxu0 0.0
      %2490 = vmatpush1.msra.mxu0 0.0
      %2491 = vmatprep.subr.mxu0 0.0
      %2492 = vmatpush1.msra.mxu0 0.0
      %2493 = vmatprep.subr.mxu0 0.0
      %2494 = vmatpush1.msra.mxu0 0.0
      %2495 = vmatprep.subr.mxu0 0.0
      %2496 = vmatpush1.msra.mxu0 0.0
      %2497 = vmatprep.subr.mxu0 0.0
      %2498 = vmatpush1.msra.mxu0 0.0
      %2499 = vmatprep.subr.mxu0 0.0
      %2500 = vmatpush1.msra.mxu0 0.0
      %2501 = vmatprep.subr.mxu0 0.0
      %2502 = vmatpush1.msra.mxu0 0.0
      %2503 = vmatprep.subr.mxu0 0.0
      %2504 = vmatpush1.msra.mxu0 0.0
      %2505 = vmatprep.subr.mxu0 0.0
      %2506 = vmatpush1.msra.mxu0 0.0
      %2507 = vmatprep.subr.mxu0 0.0
      %2508 = vmatpush1.msra.mxu0 0.0
      %2509 = vmatprep.subr.mxu0 0.0
      %2510 = vmatpush1.msra.mxu0 0.0
      %2511 = vmatprep.subr.mxu0 0.0
      %2512 = vmatpush1.msra.mxu0 0.0
      %2513 = vmatprep.mubr.f32.mxu0 0.0
      %2514 = vmatmul.mubr.f32.gmra.mrb[0].mxu0 %v2163
      %v2515 = vpop.f32.mrb[0].mxu0
      %v2516 = vadd.f32 0.0, %v2515
      %v2517 = vpop.f32.mrb[0].mxu0
      %v2518 = vadd.f32 0.0, %v2517
      %2519 = vdwg.mxu0
      %2520 = vmatprep.subr.mxu0 %v2149
      %2521 = vmatpush1.msra.mxu0 %v2148
      %2522 = vmatprep.subr.mxu0 0.0
      %2523 = vmatpush1.msra.mxu0 0.0
      %2524 = vmatprep.subr.mxu0 0.0
      %2525 = vmatpush1.msra.mxu0 0.0
      %2526 = vmatprep.subr.mxu0 0.0
      %2527 = vmatpush1.msra.mxu0 0.0
      %2528 = vmatprep.subr.mxu0 0.0
      %2529 = vmatpush1.msra.mxu0 0.0
      %2530 = vmatprep.subr.mxu0 0.0
      %2531 = vmatpush1.msra.mxu0 0.0
      %2532 = vmatprep.subr.mxu0 0.0
      %2533 = vmatpush1.msra.mxu0 0.0
      %2534 = vmatprep.subr.mxu0 0.0
      %2535 = vmatpush1.msra.mxu0 0.0
      %2536 = vmatprep.subr.mxu0 0.0
      %2537 = vmatpush1.msra.mxu0 0.0
      %2538 = vmatprep.subr.mxu0 0.0
      %2539 = vmatpush1.msra.mxu0 0.0
      %2540 = vmatprep.subr.mxu0 0.0
      %2541 = vmatpush1.msra.mxu0 0.0
      %2542 = vmatprep.subr.mxu0 0.0
      %2543 = vmatpush1.msra.mxu0 0.0
      %2544 = vmatprep.subr.mxu0 0.0
      %2545 = vmatpush1.msra.mxu0 0.0
      %2546 = vmatprep.subr.mxu0 0.0
      %2547 = vmatpush1.msra.mxu0 0.0
      %2548 = vmatprep.subr.mxu0 0.0
      %2549 = vmatpush1.msra.mxu0 0.0
      %2550 = vmatprep.subr.mxu0 0.0
      %2551 = vmatpush1.msra.mxu0 0.0
      %2552 = vmatprep.subr.mxu0 0.0
      %2553 = vmatpush1.msra.mxu0 0.0
      %2554 = vmatprep.subr.mxu0 0.0
      %2555 = vmatpush1.msra.mxu0 0.0
      %2556 = vmatprep.subr.mxu0 0.0
      %2557 = vmatpush1.msra.mxu0 0.0
      %2558 = vmatprep.subr.mxu0 0.0
      %2559 = vmatpush1.msra.mxu0 0.0
      %2560 = vmatprep.subr.mxu0 0.0
      %2561 = vmatpush1.msra.mxu0 0.0
      %2562 = vmatprep.subr.mxu0 0.0
      %2563 = vmatpush1.msra.mxu0 0.0
      %2564 = vmatprep.subr.mxu0 0.0
      %2565 = vmatpush1.msra.mxu0 0.0
      %2566 = vmatprep.subr.mxu0 0.0
      %2567 = vmatpush1.msra.mxu0 0.0
      %2568 = vmatprep.subr.mxu0 0.0
      %2569 = vmatpush1.msra.mxu0 0.0
      %2570 = vmatprep.subr.mxu0 0.0
      %2571 = vmatpush1.msra.mxu0 0.0
      %2572 = vmatprep.subr.mxu0 0.0
      %2573 = vmatpush1.msra.mxu0 0.0
      %2574 = vmatprep.subr.mxu0 0.0
      %2575 = vmatpush1.msra.mxu0 0.0
      %2576 = vmatprep.subr.mxu0 0.0
      %2577 = vmatpush1.msra.mxu0 0.0
      %2578 = vmatprep.subr.mxu0 0.0
      %2579 = vmatpush1.msra.mxu0 0.0
      %2580 = vmatprep.subr.mxu0 0.0
      %2581 = vmatpush1.msra.mxu0 0.0
      %2582 = vmatprep.subr.mxu0 0.0
      %2583 = vmatpush1.msra.mxu0 0.0
      %2584 = vmatprep.mubr.f32.mxu0 0.0
      %2585 = vmatmul.mubr.f32.gmra.mrb[0].mxu0 %v2163
      %v2586 = vpop.f32.mrb[0].mxu0
      %v2587 = vadd.f32 0.0, %v2586
      %v2588 = vpop.f32.mrb[0].mxu0
      %v2589 = vadd.f32 0.0, %v2588
      %2590 = vdwg.mxu0
      %v2591 = vadd.f32 %v2072, %v2232
      %v2592 = vadd.f32 %v2073, %v2234
      %v2593 = vadd.f32 %v2074, %v2303
      %v2594 = vadd.f32 %v2075, %v2305
      %v2595 = vadd.f32 %v2076, %v2374
      %v2596 = vadd.f32 %v2077, %v2376
      %v2597 = vadd.f32 %v2078, %v2445
      %v2598 = vadd.f32 %v2079, %v2447
      %v2599 = vadd.f32 %v2080, %v2516
      %v2600 = vadd.f32 %v2081, %v2518
      %v2601 = vadd.f32 %v2082, %v2587
      %v2602 = vadd.f32 %v2083, %v2589
      %s2603 = scalar_lea.vmem %s2, 16
      %v2604 = vld [vmem:[%s2603] sm:$0xf]
      %v2606 = vsel %vm681, %v2604, 0
      %2608 = vmatprep.subr.mxu0 %v2086
      %2609 = vmatpush1.msra.mxu0 %v2085
      %2610 = vmatprep.subr.mxu0 0.0
      %2611 = vmatpush1.msra.mxu0 0.0
      %2612 = vmatprep.subr.mxu0 0.0
      %2613 = vmatpush1.msra.mxu0 0.0
      %2614 = vmatprep.subr.mxu0 0.0
      %2615 = vmatpush1.msra.mxu0 0.0
      %2616 = vmatprep.subr.mxu0 0.0
      %2617 = vmatpush1.msra.mxu0 0.0
      %2618 = vmatprep.subr.mxu0 0.0
      %2619 = vmatpush1.msra.mxu0 0.0
      %2620 = vmatprep.subr.mxu0 0.0
      %2621 = vmatpush1.msra.mxu0 0.0
      %2622 = vmatprep.subr.mxu0 0.0
      %2623 = vmatpush1.msra.mxu0 0.0
      %2624 = vmatprep.subr.mxu0 0.0
      %2625 = vmatpush1.msra.mxu0 0.0
      %2626 = vmatprep.subr.mxu0 0.0
      %2627 = vmatpush1.msra.mxu0 0.0
      %2628 = vmatprep.subr.mxu0 0.0
      %2629 = vmatpush1.msra.mxu0 0.0
      %2630 = vmatprep.subr.mxu0 0.0
      %2631 = vmatpush1.msra.mxu0 0.0
      %2632 = vmatprep.subr.mxu0 0.0
      %2633 = vmatpush1.msra.mxu0 0.0
      %2634 = vmatprep.subr.mxu0 0.0
      %2635 = vmatpush1.msra.mxu0 0.0
      %2636 = vmatprep.subr.mxu0 0.0
      %2637 = vmatpush1.msra.mxu0 0.0
      %2638 = vmatprep.subr.mxu0 0.0
      %2639 = vmatpush1.msra.mxu0 0.0
      %2640 = vmatprep.subr.mxu0 0.0
      %2641 = vmatpush1.msra.mxu0 0.0
      %2642 = vmatprep.subr.mxu0 0.0
      %2643 = vmatpush1.msra.mxu0 0.0
      %2644 = vmatprep.subr.mxu0 0.0
      %2645 = vmatpush1.msra.mxu0 0.0
      %2646 = vmatprep.subr.mxu0 0.0
      %2647 = vmatpush1.msra.mxu0 0.0
      %2648 = vmatprep.subr.mxu0 0.0
      %2649 = vmatpush1.msra.mxu0 0.0
      %2650 = vmatprep.subr.mxu0 0.0
      %2651 = vmatpush1.msra.mxu0 0.0
      %2652 = vmatprep.subr.mxu0 0.0
      %2653 = vmatpush1.msra.mxu0 0.0
      %2654 = vmatprep.subr.mxu0 0.0
      %2655 = vmatpush1.msra.mxu0 0.0
      %2656 = vmatprep.subr.mxu0 0.0
      %2657 = vmatpush1.msra.mxu0 0.0
      %2658 = vmatprep.subr.mxu0 0.0
      %2659 = vmatpush1.msra.mxu0 0.0
      %2660 = vmatprep.subr.mxu0 0.0
      %2661 = vmatpush1.msra.mxu0 0.0
      %2662 = vmatprep.subr.mxu0 0.0
      %2663 = vmatpush1.msra.mxu0 0.0
      %2664 = vmatprep.subr.mxu0 0.0
      %2665 = vmatpush1.msra.mxu0 0.0
      %2666 = vmatprep.subr.mxu0 0.0
      %2667 = vmatpush1.msra.mxu0 0.0
      %2668 = vmatprep.subr.mxu0 0.0
      %2669 = vmatpush1.msra.mxu0 0.0
      %2670 = vmatprep.subr.mxu0 0.0
      %2671 = vmatpush1.msra.mxu0 0.0
      %2672 = vmatprep.mubr.f32.mxu0 0.0
      %2673 = vmatmul.mubr.f32.gmra.mrb[0].mxu0 %v2606
      %v2674 = vpop.f32.mrb[0].mxu0
      %v2675 = vadd.f32 0.0, %v2674
      %v2676 = vpop.f32.mrb[0].mxu0
      %v2677 = vadd.f32 0.0, %v2676
      %2678 = vdwg.mxu0
      %2679 = vmatprep.subr.mxu0 %v2088
      %2680 = vmatpush1.msra.mxu0 %v2087
      %2681 = vmatprep.subr.mxu0 0.0
      %2682 = vmatpush1.msra.mxu0 0.0
      %2683 = vmatprep.subr.mxu0 0.0
      %2684 = vmatpush1.msra.mxu0 0.0
      %2685 = vmatprep.subr.mxu0 0.0
      %2686 = vmatpush1.msra.mxu0 0.0
      %2687 = vmatprep.subr.mxu0 0.0
      %2688 = vmatpush1.msra.mxu0 0.0
      %2689 = vmatprep.subr.mxu0 0.0
      %2690 = vmatpush1.msra.mxu0 0.0
      %2691 = vmatprep.subr.mxu0 0.0
      %2692 = vmatpush1.msra.mxu0 0.0
      %2693 = vmatprep.subr.mxu0 0.0
      %2694 = vmatpush1.msra.mxu0 0.0
      %2695 = vmatprep.subr.mxu0 0.0
      %2696 = vmatpush1.msra.mxu0 0.0
      %2697 = vmatprep.subr.mxu0 0.0
      %2698 = vmatpush1.msra.mxu0 0.0
      %2699 = vmatprep.subr.mxu0 0.0
      %2700 = vmatpush1.msra.mxu0 0.0
      %2701 = vmatprep.subr.mxu0 0.0
      %2702 = vmatpush1.msra.mxu0 0.0
      %2703 = vmatprep.subr.mxu0 0.0
      %2704 = vmatpush1.msra.mxu0 0.0
      %2705 = vmatprep.subr.mxu0 0.0
      %2706 = vmatpush1.msra.mxu0 0.0
      %2707 = vmatprep.subr.mxu0 0.0
      %2708 = vmatpush1.msra.mxu0 0.0
      %2709 = vmatprep.subr.mxu0 0.0
      %2710 = vmatpush1.msra.mxu0 0.0
      %2711 = vmatprep.subr.mxu0 0.0
      %2712 = vmatpush1.msra.mxu0 0.0
      %2713 = vmatprep.subr.mxu0 0.0
      %2714 = vmatpush1.msra.mxu0 0.0
      %2715 = vmatprep.subr.mxu0 0.0
      %2716 = vmatpush1.msra.mxu0 0.0
      %2717 = vmatprep.subr.mxu0 0.0
      %2718 = vmatpush1.msra.mxu0 0.0
      %2719 = vmatprep.subr.mxu0 0.0
      %2720 = vmatpush1.msra.mxu0 0.0
      %2721 = vmatprep.subr.mxu0 0.0
      %2722 = vmatpush1.msra.mxu0 0.0
      %2723 = vmatprep.subr.mxu0 0.0
      %2724 = vmatpush1.msra.mxu0 0.0
      %2725 = vmatprep.subr.mxu0 0.0
      %2726 = vmatpush1.msra.mxu0 0.0
      %2727 = vmatprep.subr.mxu0 0.0
      %2728 = vmatpush1.msra.mxu0 0.0
      %2729 = vmatprep.subr.mxu0 0.0
      %2730 = vmatpush1.msra.mxu0 0.0
      %2731 = vmatprep.subr.mxu0 0.0
      %2732 = vmatpush1.msra.mxu0 0.0
      %2733 = vmatprep.subr.mxu0 0.0
      %2734 = vmatpush1.msra.mxu0 0.0
      %2735 = vmatprep.subr.mxu0 0.0
      %2736 = vmatpush1.msra.mxu0 0.0
      %2737 = vmatprep.subr.mxu0 0.0
      %2738 = vmatpush1.msra.mxu0 0.0
      %2739 = vmatprep.subr.mxu0 0.0
      %2740 = vmatpush1.msra.mxu0 0.0
      %2741 = vmatprep.subr.mxu0 0.0
      %2742 = vmatpush1.msra.mxu0 0.0
      %2743 = vmatprep.mubr.f32.mxu0 0.0
      %2744 = vmatmul.mubr.f32.gmra.mrb[0].mxu0 %v2606
      %v2745 = vpop.f32.mrb[0].mxu0
      %v2746 = vadd.f32 0.0, %v2745
      %v2747 = vpop.f32.mrb[0].mxu0
      %v2748 = vadd.f32 0.0, %v2747
      %2749 = vdwg.mxu0
      %2750 = vmatprep.subr.mxu0 %v2090
      %2751 = vmatpush1.msra.mxu0 %v2089
      %2752 = vmatprep.subr.mxu0 0.0
      %2753 = vmatpush1.msra.mxu0 0.0
      %2754 = vmatprep.subr.mxu0 0.0
      %2755 = vmatpush1.msra.mxu0 0.0
      %2756 = vmatprep.subr.mxu0 0.0
      %2757 = vmatpush1.msra.mxu0 0.0
      %2758 = vmatprep.subr.mxu0 0.0
      %2759 = vmatpush1.msra.mxu0 0.0
      %2760 = vmatprep.subr.mxu0 0.0
      %2761 = vmatpush1.msra.mxu0 0.0
      %2762 = vmatprep.subr.mxu0 0.0
      %2763 = vmatpush1.msra.mxu0 0.0
      %2764 = vmatprep.subr.mxu0 0.0
      %2765 = vmatpush1.msra.mxu0 0.0
      %2766 = vmatprep.subr.mxu0 0.0
      %2767 = vmatpush1.msra.mxu0 0.0
      %2768 = vmatprep.subr.mxu0 0.0
      %2769 = vmatpush1.msra.mxu0 0.0
      %2770 = vmatprep.subr.mxu0 0.0
      %2771 = vmatpush1.msra.mxu0 0.0
      %2772 = vmatprep.subr.mxu0 0.0
      %2773 = vmatpush1.msra.mxu0 0.0
      %2774 = vmatprep.subr.mxu0 0.0
      %2775 = vmatpush1.msra.mxu0 0.0
      %2776 = vmatprep.subr.mxu0 0.0
      %2777 = vmatpush1.msra.mxu0 0.0
      %2778 = vmatprep.subr.mxu0 0.0
      %2779 = vmatpush1.msra.mxu0 0.0
      %2780 = vmatprep.subr.mxu0 0.0
      %2781 = vmatpush1.msra.mxu0 0.0
      %2782 = vmatprep.subr.mxu0 0.0
      %2783 = vmatpush1.msra.mxu0 0.0
      %2784 = vmatprep.subr.mxu0 0.0
      %2785 = vmatpush1.msra.mxu0 0.0
      %2786 = vmatprep.subr.mxu0 0.0
      %2787 = vmatpush1.msra.mxu0 0.0
      %2788 = vmatprep.subr.mxu0 0.0
      %2789 = vmatpush1.msra.mxu0 0.0
      %2790 = vmatprep.subr.mxu0 0.0
      %2791 = vmatpush1.msra.mxu0 0.0
      %2792 = vmatprep.subr.mxu0 0.0
      %2793 = vmatpush1.msra.mxu0 0.0
      %2794 = vmatprep.subr.mxu0 0.0
      %2795 = vmatpush1.msra.mxu0 0.0
      %2796 = vmatprep.subr.mxu0 0.0
      %2797 = vmatpush1.msra.mxu0 0.0
      %2798 = vmatprep.subr.mxu0 0.0
      %2799 = vmatpush1.msra.mxu0 0.0
      %2800 = vmatprep.subr.mxu0 0.0
      %2801 = vmatpush1.msra.mxu0 0.0
      %2802 = vmatprep.subr.mxu0 0.0
      %2803 = vmatpush1.msra.mxu0 0.0
      %2804 = vmatprep.subr.mxu0 0.0
      %2805 = vmatpush1.msra.mxu0 0.0
      %2806 = vmatprep.subr.mxu0 0.0
      %2807 = vmatpush1.msra.mxu0 0.0
      %2808 = vmatprep.subr.mxu0 0.0
      %2809 = vmatpush1.msra.mxu0 0.0
      %2810 = vmatprep.subr.mxu0 0.0
      %2811 = vmatpush1.msra.mxu0 0.0
      %2812 = vmatprep.subr.mxu0 0.0
      %2813 = vmatpush1.msra.mxu0 0.0
      %2814 = vmatprep.mubr.f32.mxu0 0.0
      %2815 = vmatmul.mubr.f32.gmra.mrb[0].mxu0 %v2606
      %v2816 = vpop.f32.mrb[0].mxu0
      %v2817 = vadd.f32 0.0, %v2816
      %v2818 = vpop.f32.mrb[0].mxu0
      %v2819 = vadd.f32 0.0, %v2818
      %2820 = vdwg.mxu0
      %2821 = vmatprep.subr.mxu0 %v2092
      %2822 = vmatpush1.msra.mxu0 %v2091
      %2823 = vmatprep.subr.mxu0 0.0
      %2824 = vmatpush1.msra.mxu0 0.0
      %2825 = vmatprep.subr.mxu0 0.0
      %2826 = vmatpush1.msra.mxu0 0.0
      %2827 = vmatprep.subr.mxu0 0.0
      %2828 = vmatpush1.msra.mxu0 0.0
      %2829 = vmatprep.subr.mxu0 0.0
      %2830 = vmatpush1.msra.mxu0 0.0
      %2831 = vmatprep.subr.mxu0 0.0
      %2832 = vmatpush1.msra.mxu0 0.0
      %2833 = vmatprep.subr.mxu0 0.0
      %2834 = vmatpush1.msra.mxu0 0.0
      %2835 = vmatprep.subr.mxu0 0.0
      %2836 = vmatpush1.msra.mxu0 0.0
      %2837 = vmatprep.subr.mxu0 0.0
      %2838 = vmatpush1.msra.mxu0 0.0
      %2839 = vmatprep.subr.mxu0 0.0
      %2840 = vmatpush1.msra.mxu0 0.0
      %2841 = vmatprep.subr.mxu0 0.0
      %2842 = vmatpush1.msra.mxu0 0.0
      %2843 = vmatprep.subr.mxu0 0.0
      %2844 = vmatpush1.msra.mxu0 0.0
      %2845 = vmatprep.subr.mxu0 0.0
      %2846 = vmatpush1.msra.mxu0 0.0
      %2847 = vmatprep.subr.mxu0 0.0
      %2848 = vmatpush1.msra.mxu0 0.0
      %2849 = vmatprep.subr.mxu0 0.0
      %2850 = vmatpush1.msra.mxu0 0.0
      %2851 = vmatprep.subr.mxu0 0.0
      %2852 = vmatpush1.msra.mxu0 0.0
      %2853 = vmatprep.subr.mxu0 0.0
      %2854 = vmatpush1.msra.mxu0 0.0
      %2855 = vmatprep.subr.mxu0 0.0
      %2856 = vmatpush1.msra.mxu0 0.0
      %2857 = vmatprep.subr.mxu0 0.0
      %2858 = vmatpush1.msra.mxu0 0.0
      %2859 = vmatprep.subr.mxu0 0.0
      %2860 = vmatpush1.msra.mxu0 0.0
      %2861 = vmatprep.subr.mxu0 0.0
      %2862 = vmatpush1.msra.mxu0 0.0
      %2863 = vmatprep.subr.mxu0 0.0
      %2864 = vmatpush1.msra.mxu0 0.0
      %2865 = vmatprep.subr.mxu0 0.0
      %2866 = vmatpush1.msra.mxu0 0.0
      %2867 = vmatprep.subr.mxu0 0.0
      %2868 = vmatpush1.msra.mxu0 0.0
      %2869 = vmatprep.subr.mxu0 0.0
      %2870 = vmatpush1.msra.mxu0 0.0
      %2871 = vmatprep.subr.mxu0 0.0
      %2872 = vmatpush1.msra.mxu0 0.0
      %2873 = vmatprep.subr.mxu0 0.0
      %2874 = vmatpush1.msra.mxu0 0.0
      %2875 = vmatprep.subr.mxu0 0.0
      %2876 = vmatpush1.msra.mxu0 0.0
      %2877 = vmatprep.subr.mxu0 0.0
      %2878 = vmatpush1.msra.mxu0 0.0
      %2879 = vmatprep.subr.mxu0 0.0
      %2880 = vmatpush1.msra.mxu0 0.0
      %2881 = vmatprep.subr.mxu0 0.0
      %2882 = vmatpush1.msra.mxu0 0.0
      %2883 = vmatprep.subr.mxu0 0.0
      %2884 = vmatpush1.msra.mxu0 0.0
      %2885 = vmatprep.mubr.f32.mxu0 0.0
      %2886 = vmatmul.mubr.f32.gmra.mrb[0].mxu0 %v2606
      %v2887 = vpop.f32.mrb[0].mxu0
      %v2888 = vadd.f32 0.0, %v2887
      %v2889 = vpop.f32.mrb[0].mxu0
      %v2890 = vadd.f32 0.0, %v2889
      %2891 = vdwg.mxu0
      %2892 = vmatprep.subr.mxu0 %v2094
      %2893 = vmatpush1.msra.mxu0 %v2093
      %2894 = vmatprep.subr.mxu0 0.0
      %2895 = vmatpush1.msra.mxu0 0.0
      %2896 = vmatprep.subr.mxu0 0.0
      %2897 = vmatpush1.msra.mxu0 0.0
      %2898 = vmatprep.subr.mxu0 0.0
      %2899 = vmatpush1.msra.mxu0 0.0
      %2900 = vmatprep.subr.mxu0 0.0
      %2901 = vmatpush1.msra.mxu0 0.0
      %2902 = vmatprep.subr.mxu0 0.0
      %2903 = vmatpush1.msra.mxu0 0.0
      %2904 = vmatprep.subr.mxu0 0.0
      %2905 = vmatpush1.msra.mxu0 0.0
      %2906 = vmatprep.subr.mxu0 0.0
      %2907 = vmatpush1.msra.mxu0 0.0
      %2908 = vmatprep.subr.mxu0 0.0
      %2909 = vmatpush1.msra.mxu0 0.0
      %2910 = vmatprep.subr.mxu0 0.0
      %2911 = vmatpush1.msra.mxu0 0.0
      %2912 = vmatprep.subr.mxu0 0.0
      %2913 = vmatpush1.msra.mxu0 0.0
      %2914 = vmatprep.subr.mxu0 0.0
      %2915 = vmatpush1.msra.mxu0 0.0
      %2916 = vmatprep.subr.mxu0 0.0
      %2917 = vmatpush1.msra.mxu0 0.0
      %2918 = vmatprep.subr.mxu0 0.0
      %2919 = vmatpush1.msra.mxu0 0.0
      %2920 = vmatprep.subr.mxu0 0.0
      %2921 = vmatpush1.msra.mxu0 0.0
      %2922 = vmatprep.subr.mxu0 0.0
      %2923 = vmatpush1.msra.mxu0 0.0
      %2924 = vmatprep.subr.mxu0 0.0
      %2925 = vmatpush1.msra.mxu0 0.0
      %2926 = vmatprep.subr.mxu0 0.0
      %2927 = vmatpush1.msra.mxu0 0.0
      %2928 = vmatprep.subr.mxu0 0.0
      %2929 = vmatpush1.msra.mxu0 0.0
      %2930 = vmatprep.subr.mxu0 0.0
      %2931 = vmatpush1.msra.mxu0 0.0
      %2932 = vmatprep.subr.mxu0 0.0
      %2933 = vmatpush1.msra.mxu0 0.0
      %2934 = vmatprep.subr.mxu0 0.0
      %2935 = vmatpush1.msra.mxu0 0.0
      %2936 = vmatprep.subr.mxu0 0.0
      %2937 = vmatpush1.msra.mxu0 0.0
      %2938 = vmatprep.subr.mxu0 0.0
      %2939 = vmatpush1.msra.mxu0 0.0
      %2940 = vmatprep.subr.mxu0 0.0
      %2941 = vmatpush1.msra.mxu0 0.0
      %2942 = vmatprep.subr.mxu0 0.0
      %2943 = vmatpush1.msra.mxu0 0.0
      %2944 = vmatprep.subr.mxu0 0.0
      %2945 = vmatpush1.msra.mxu0 0.0
      %2946 = vmatprep.subr.mxu0 0.0
      %2947 = vmatpush1.msra.mxu0 0.0
      %2948 = vmatprep.subr.mxu0 0.0
      %2949 = vmatpush1.msra.mxu0 0.0
      %2950 = vmatprep.subr.mxu0 0.0
      %2951 = vmatpush1.msra.mxu0 0.0
      %2952 = vmatprep.subr.mxu0 0.0
      %2953 = vmatpush1.msra.mxu0 0.0
      %2954 = vmatprep.subr.mxu0 0.0
      %2955 = vmatpush1.msra.mxu0 0.0
      %2956 = vmatprep.mubr.f32.mxu0 0.0
      %2957 = vmatmul.mubr.f32.gmra.mrb[0].mxu0 %v2606
      %v2958 = vpop.f32.mrb[0].mxu0
      %v2959 = vadd.f32 0.0, %v2958
      %v2960 = vpop.f32.mrb[0].mxu0
      %v2961 = vadd.f32 0.0, %v2960
      %2962 = vdwg.mxu0
      %2963 = vmatprep.subr.mxu0 %v2096
      %2964 = vmatpush1.msra.mxu0 %v2095
      %2965 = vmatprep.subr.mxu0 0.0
      %2966 = vmatpush1.msra.mxu0 0.0
      %2967 = vmatprep.subr.mxu0 0.0
      %2968 = vmatpush1.msra.mxu0 0.0
      %2969 = vmatprep.subr.mxu0 0.0
      %2970 = vmatpush1.msra.mxu0 0.0
      %2971 = vmatprep.subr.mxu0 0.0
      %2972 = vmatpush1.msra.mxu0 0.0
      %2973 = vmatprep.subr.mxu0 0.0
      %2974 = vmatpush1.msra.mxu0 0.0
      %2975 = vmatprep.subr.mxu0 0.0
      %2976 = vmatpush1.msra.mxu0 0.0
      %2977 = vmatprep.subr.mxu0 0.0
      %2978 = vmatpush1.msra.mxu0 0.0
      %2979 = vmatprep.subr.mxu0 0.0
      %2980 = vmatpush1.msra.mxu0 0.0
      %2981 = vmatprep.subr.mxu0 0.0
      %2982 = vmatpush1.msra.mxu0 0.0
      %2983 = vmatprep.subr.mxu0 0.0
      %2984 = vmatpush1.msra.mxu0 0.0
      %2985 = vmatprep.subr.mxu0 0.0
      %2986 = vmatpush1.msra.mxu0 0.0
      %2987 = vmatprep.subr.mxu0 0.0
      %2988 = vmatpush1.msra.mxu0 0.0
      %2989 = vmatprep.subr.mxu0 0.0
      %2990 = vmatpush1.msra.mxu0 0.0
      %2991 = vmatprep.subr.mxu0 0.0
      %2992 = vmatpush1.msra.mxu0 0.0
      %2993 = vmatprep.subr.mxu0 0.0
      %2994 = vmatpush1.msra.mxu0 0.0
      %2995 = vmatprep.subr.mxu0 0.0
      %2996 = vmatpush1.msra.mxu0 0.0
      %2997 = vmatprep.subr.mxu0 0.0
      %2998 = vmatpush1.msra.mxu0 0.0
      %2999 = vmatprep.subr.mxu0 0.0
      %3000 = vmatpush1.msra.mxu0 0.0
      %3001 = vmatprep.subr.mxu0 0.0
      %3002 = vmatpush1.msra.mxu0 0.0
      %3003 = vmatprep.subr.mxu0 0.0
      %3004 = vmatpush1.msra.mxu0 0.0
      %3005 = vmatprep.subr.mxu0 0.0
      %3006 = vmatpush1.msra.mxu0 0.0
      %3007 = vmatprep.subr.mxu0 0.0
      %3008 = vmatpush1.msra.mxu0 0.0
      %3009 = vmatprep.subr.mxu0 0.0
      %3010 = vmatpush1.msra.mxu0 0.0
      %3011 = vmatprep.subr.mxu0 0.0
      %3012 = vmatpush1.msra.mxu0 0.0
      %3013 = vmatprep.subr.mxu0 0.0
      %3014 = vmatpush1.msra.mxu0 0.0
      %3015 = vmatprep.subr.mxu0 0.0
      %3016 = vmatpush1.msra.mxu0 0.0
      %3017 = vmatprep.subr.mxu0 0.0
      %3018 = vmatpush1.msra.mxu0 0.0
      %3019 = vmatprep.subr.mxu0 0.0
      %3020 = vmatpush1.msra.mxu0 0.0
      %3021 = vmatprep.subr.mxu0 0.0
      %3022 = vmatpush1.msra.mxu0 0.0
      %3023 = vmatprep.subr.mxu0 0.0
      %3024 = vmatpush1.msra.mxu0 0.0
      %3025 = vmatprep.subr.mxu0 0.0
      %3026 = vmatpush1.msra.mxu0 0.0
      %3027 = vmatprep.mubr.f32.mxu0 0.0
      %3028 = vmatmul.mubr.f32.gmra.mrb[0].mxu0 %v2606
      %v3029 = vpop.f32.mrb[0].mxu0
      %v3030 = vadd.f32 0.0, %v3029
      %v3031 = vpop.f32.mrb[0].mxu0
      %v3032 = vadd.f32 0.0, %v3031
      %3033 = vdwg.mxu0
      %v3034 = vadd.f32 %v2591, %v2675
      %v3035 = vadd.f32 %v2592, %v2677
      %v3036 = vadd.f32 %v2593, %v2746
      %v3037 = vadd.f32 %v2594, %v2748
      %v3038 = vadd.f32 %v2595, %v2817
      %v3039 = vadd.f32 %v2596, %v2819
      %v3040 = vadd.f32 %v2597, %v2888
      %v3041 = vadd.f32 %v2598, %v2890
      %v3042 = vadd.f32 %v2599, %v2959
      %v3043 = vadd.f32 %v2600, %v2961
      %v3044 = vadd.f32 %v2601, %v3030
      %v3045 = vadd.f32 %v2602, %v3032
      %s3046 = scalar_lea.vmem %s2, 20
      %v3047 = vld [vmem:[%s3046] sm:$0xf]
      %3048 = vrot.lane.b32.xlu0 %v2085, 120
      %v3049 = vpop.permute.xlu0 %3048
      %3050 = vrot.lane.b32.xlu0 %v2086, 120
      %v3051 = vpop.permute.xlu0 %3050
      %3052 = vrot.lane.b32.xlu0 %v2087, 120
      %v3053 = vpop.permute.xlu0 %3052
      %3054 = vrot.lane.b32.xlu0 %v2088, 120
      %v3055 = vpop.permute.xlu0 %3054
      %3056 = vrot.lane.b32.xlu0 %v2089, 120
      %v3057 = vpop.permute.xlu0 %3056
      %3058 = vrot.lane.b32.xlu0 %v2090, 120
      %v3059 = vpop.permute.xlu0 %3058
      %3060 = vrot.lane.b32.xlu0 %v2091, 120
      %v3061 = vpop.permute.xlu0 %3060
      %3062 = vrot.lane.b32.xlu0 %v2092, 120
      %v3063 = vpop.permute.xlu0 %3062
      %3064 = vrot.lane.b32.xlu0 %v2093, 120
      %v3065 = vpop.permute.xlu0 %3064
      %3066 = vrot.lane.b32.xlu0 %v2094, 120
      %v3067 = vpop.permute.xlu0 %3066
      %3068 = vrot.lane.b32.xlu0 %v2095, 120
      %v3069 = vpop.permute.xlu0 %3068
      %3070 = vrot.lane.b32.xlu0 %v2096, 120
      %v3071 = vpop.permute.xlu0 %3070
      %vm3072 = vcmask 982016
      %v3073 = vsel %vm3072, %v3049, %v3051
      %v3074 = vsel %vm3072, %v3051, %v3053
      %v3075 = vsel %vm3072, %v3053, %v3055
      %v3076 = vsel %vm3072, %v3055, %v3057
      %v3077 = vsel %vm3072, %v3057, %v3059
      %v3078 = vsel %vm3072, %v3059, %v3061
      %v3079 = vsel %vm3072, %v3061, %v3063
      %v3080 = vsel %vm3072, %v3063, %v3065
      %v3081 = vsel %vm3072, %v3065, %v3067
      %v3082 = vsel %vm3072, %v3067, %v3069
      %v3083 = vsel %vm3072, %v3069, %v3071
      %v3097 = vsel %vm681, %v3047, 0
      %3099 = vmatprep.subr.mxu0 %v3074
      %3100 = vmatpush1.msra.mxu0 %v3073
      %3101 = vmatprep.subr.mxu0 0.0
      %3102 = vmatpush1.msra.mxu0 0.0
      %3103 = vmatprep.subr.mxu0 0.0
      %3104 = vmatpush1.msra.mxu0 0.0
      %3105 = vmatprep.subr.mxu0 0.0
      %3106 = vmatpush1.msra.mxu0 0.0
      %3107 = vmatprep.subr.mxu0 0.0
      %3108 = vmatpush1.msra.mxu0 0.0
      %3109 = vmatprep.subr.mxu0 0.0
      %3110 = vmatpush1.msra.mxu0 0.0
      %3111 = vmatprep.subr.mxu0 0.0
      %3112 = vmatpush1.msra.mxu0 0.0
      %3113 = vmatprep.subr.mxu0 0.0
      %3114 = vmatpush1.msra.mxu0 0.0
      %3115 = vmatprep.subr.mxu0 0.0
      %3116 = vmatpush1.msra.mxu0 0.0
      %3117 = vmatprep.subr.mxu0 0.0
      %3118 = vmatpush1.msra.mxu0 0.0
      %3119 = vmatprep.subr.mxu0 0.0
      %3120 = vmatpush1.msra.mxu0 0.0
      %3121 = vmatprep.subr.mxu0 0.0
      %3122 = vmatpush1.msra.mxu0 0.0
      %3123 = vmatprep.subr.mxu0 0.0
      %3124 = vmatpush1.msra.mxu0 0.0
      %3125 = vmatprep.subr.mxu0 0.0
      %3126 = vmatpush1.msra.mxu0 0.0
      %3127 = vmatprep.subr.mxu0 0.0
      %3128 = vmatpush1.msra.mxu0 0.0
      %3129 = vmatprep.subr.mxu0 0.0
      %3130 = vmatpush1.msra.mxu0 0.0
      %3131 = vmatprep.subr.mxu0 0.0
      %3132 = vmatpush1.msra.mxu0 0.0
      %3133 = vmatprep.subr.mxu0 0.0
      %3134 = vmatpush1.msra.mxu0 0.0
      %3135 = vmatprep.subr.mxu0 0.0
      %3136 = vmatpush1.msra.mxu0 0.0
      %3137 = vmatprep.subr.mxu0 0.0
      %3138 = vmatpush1.msra.mxu0 0.0
      %3139 = vmatprep.subr.mxu0 0.0
      %3140 = vmatpush1.msra.mxu0 0.0
      %3141 = vmatprep.subr.mxu0 0.0
      %3142 = vmatpush1.msra.mxu0 0.0
      %3143 = vmatprep.subr.mxu0 0.0
      %3144 = vmatpush1.msra.mxu0 0.0
      %3145 = vmatprep.subr.mxu0 0.0
      %3146 = vmatpush1.msra.mxu0 0.0
      %3147 = vmatprep.subr.mxu0 0.0
      %3148 = vmatpush1.msra.mxu0 0.0
      %3149 = vmatprep.subr.mxu0 0.0
      %3150 = vmatpush1.msra.mxu0 0.0
      %3151 = vmatprep.subr.mxu0 0.0
      %3152 = vmatpush1.msra.mxu0 0.0
      %3153 = vmatprep.subr.mxu0 0.0
      %3154 = vmatpush1.msra.mxu0 0.0
      %3155 = vmatprep.subr.mxu0 0.0
      %3156 = vmatpush1.msra.mxu0 0.0
      %3157 = vmatprep.subr.mxu0 0.0
      %3158 = vmatpush1.msra.mxu0 0.0
      %3159 = vmatprep.subr.mxu0 0.0
      %3160 = vmatpush1.msra.mxu0 0.0
      %3161 = vmatprep.subr.mxu0 0.0
      %3162 = vmatpush1.msra.mxu0 0.0
      %3163 = vmatprep.mubr.f32.mxu0 0.0
      %3164 = vmatmul.mubr.f32.gmra.mrb[0].mxu0 %v3097
      %v3165 = vpop.f32.mrb[0].mxu0
      %v3166 = vadd.f32 0.0, %v3165
      %v3167 = vpop.f32.mrb[0].mxu0
      %v3168 = vadd.f32 0.0, %v3167
      %3169 = vdwg.mxu0
      %3170 = vmatprep.subr.mxu0 %v3076
      %3171 = vmatpush1.msra.mxu0 %v3075
      %3172 = vmatprep.subr.mxu0 0.0
      %3173 = vmatpush1.msra.mxu0 0.0
      %3174 = vmatprep.subr.mxu0 0.0
      %3175 = vmatpush1.msra.mxu0 0.0
      %3176 = vmatprep.subr.mxu0 0.0
      %3177 = vmatpush1.msra.mxu0 0.0
      %3178 = vmatprep.subr.mxu0 0.0
      %3179 = vmatpush1.msra.mxu0 0.0
      %3180 = vmatprep.subr.mxu0 0.0
      %3181 = vmatpush1.msra.mxu0 0.0
      %3182 = vmatprep.subr.mxu0 0.0
      %3183 = vmatpush1.msra.mxu0 0.0
      %3184 = vmatprep.subr.mxu0 0.0
      %3185 = vmatpush1.msra.mxu0 0.0
      %3186 = vmatprep.subr.mxu0 0.0
      %3187 = vmatpush1.msra.mxu0 0.0
      %3188 = vmatprep.subr.mxu0 0.0
      %3189 = vmatpush1.msra.mxu0 0.0
      %3190 = vmatprep.subr.mxu0 0.0
      %3191 = vmatpush1.msra.mxu0 0.0
      %3192 = vmatprep.subr.mxu0 0.0
      %3193 = vmatpush1.msra.mxu0 0.0
      %3194 = vmatprep.subr.mxu0 0.0
      %3195 = vmatpush1.msra.mxu0 0.0
      %3196 = vmatprep.subr.mxu0 0.0
      %3197 = vmatpush1.msra.mxu0 0.0
      %3198 = vmatprep.subr.mxu0 0.0
      %3199 = vmatpush1.msra.mxu0 0.0
      %3200 = vmatprep.subr.mxu0 0.0
      %3201 = vmatpush1.msra.mxu0 0.0
      %3202 = vmatprep.subr.mxu0 0.0
      %3203 = vmatpush1.msra.mxu0 0.0
      %3204 = vmatprep.subr.mxu0 0.0
      %3205 = vmatpush1.msra.mxu0 0.0
      %3206 = vmatprep.subr.mxu0 0.0
      %3207 = vmatpush1.msra.mxu0 0.0
      %3208 = vmatprep.subr.mxu0 0.0
      %3209 = vmatpush1.msra.mxu0 0.0
      %3210 = vmatprep.subr.mxu0 0.0
      %3211 = vmatpush1.msra.mxu0 0.0
      %3212 = vmatprep.subr.mxu0 0.0
      %3213 = vmatpush1.msra.mxu0 0.0
      %3214 = vmatprep.subr.mxu0 0.0
      %3215 = vmatpush1.msra.mxu0 0.0
      %3216 = vmatprep.subr.mxu0 0.0
      %3217 = vmatpush1.msra.mxu0 0.0
      %3218 = vmatprep.subr.mxu0 0.0
      %3219 = vmatpush1.msra.mxu0 0.0
      %3220 = vmatprep.subr.mxu0 0.0
      %3221 = vmatpush1.msra.mxu0 0.0
      %3222 = vmatprep.subr.mxu0 0.0
      %3223 = vmatpush1.msra.mxu0 0.0
      %3224 = vmatprep.subr.mxu0 0.0
      %3225 = vmatpush1.msra.mxu0 0.0
      %3226 = vmatprep.subr.mxu0 0.0
      %3227 = vmatpush1.msra.mxu0 0.0
      %3228 = vmatprep.subr.mxu0 0.0
      %3229 = vmatpush1.msra.mxu0 0.0
      %3230 = vmatprep.subr.mxu0 0.0
      %3231 = vmatpush1.msra.mxu0 0.0
      %3232 = vmatprep.subr.mxu0 0.0
      %3233 = vmatpush1.msra.mxu0 0.0
      %3234 = vmatprep.mubr.f32.mxu0 0.0
      %3235 = vmatmul.mubr.f32.gmra.mrb[0].mxu0 %v3097
      %v3236 = vpop.f32.mrb[0].mxu0
      %v3237 = vadd.f32 0.0, %v3236
      %v3238 = vpop.f32.mrb[0].mxu0
      %v3239 = vadd.f32 0.0, %v3238
      %3240 = vdwg.mxu0
      %3241 = vmatprep.subr.mxu0 %v3078
      %3242 = vmatpush1.msra.mxu0 %v3077
      %3243 = vmatprep.subr.mxu0 0.0
      %3244 = vmatpush1.msra.mxu0 0.0
      %3245 = vmatprep.subr.mxu0 0.0
      %3246 = vmatpush1.msra.mxu0 0.0
      %3247 = vmatprep.subr.mxu0 0.0
      %3248 = vmatpush1.msra.mxu0 0.0
      %3249 = vmatprep.subr.mxu0 0.0
      %3250 = vmatpush1.msra.mxu0 0.0
      %3251 = vmatprep.subr.mxu0 0.0
      %3252 = vmatpush1.msra.mxu0 0.0
      %3253 = vmatprep.subr.mxu0 0.0
      %3254 = vmatpush1.msra.mxu0 0.0
      %3255 = vmatprep.subr.mxu0 0.0
      %3256 = vmatpush1.msra.mxu0 0.0
      %3257 = vmatprep.subr.mxu0 0.0
      %3258 = vmatpush1.msra.mxu0 0.0
      %3259 = vmatprep.subr.mxu0 0.0
      %3260 = vmatpush1.msra.mxu0 0.0
      %3261 = vmatprep.subr.mxu0 0.0
      %3262 = vmatpush1.msra.mxu0 0.0
      %3263 = vmatprep.subr.mxu0 0.0
      %3264 = vmatpush1.msra.mxu0 0.0
      %3265 = vmatprep.subr.mxu0 0.0
      %3266 = vmatpush1.msra.mxu0 0.0
      %3267 = vmatprep.subr.mxu0 0.0
      %3268 = vmatpush1.msra.mxu0 0.0
      %3269 = vmatprep.subr.mxu0 0.0
      %3270 = vmatpush1.msra.mxu0 0.0
      %3271 = vmatprep.subr.mxu0 0.0
      %3272 = vmatpush1.msra.mxu0 0.0
      %3273 = vmatprep.subr.mxu0 0.0
      %3274 = vmatpush1.msra.mxu0 0.0
      %3275 = vmatprep.subr.mxu0 0.0
      %3276 = vmatpush1.msra.mxu0 0.0
      %3277 = vmatprep.subr.mxu0 0.0
      %3278 = vmatpush1.msra.mxu0 0.0
      %3279 = vmatprep.subr.mxu0 0.0
      %3280 = vmatpush1.msra.mxu0 0.0
      %3281 = vmatprep.subr.mxu0 0.0
      %3282 = vmatpush1.msra.mxu0 0.0
      %3283 = vmatprep.subr.mxu0 0.0
      %3284 = vmatpush1.msra.mxu0 0.0
      %3285 = vmatprep.subr.mxu0 0.0
      %3286 = vmatpush1.msra.mxu0 0.0
      %3287 = vmatprep.subr.mxu0 0.0
      %3288 = vmatpush1.msra.mxu0 0.0
      %3289 = vmatprep.subr.mxu0 0.0
      %3290 = vmatpush1.msra.mxu0 0.0
      %3291 = vmatprep.subr.mxu0 0.0
      %3292 = vmatpush1.msra.mxu0 0.0
      %3293 = vmatprep.subr.mxu0 0.0
      %3294 = vmatpush1.msra.mxu0 0.0
      %3295 = vmatprep.subr.mxu0 0.0
      %3296 = vmatpush1.msra.mxu0 0.0
      %3297 = vmatprep.subr.mxu0 0.0
      %3298 = vmatpush1.msra.mxu0 0.0
      %3299 = vmatprep.subr.mxu0 0.0
      %3300 = vmatpush1.msra.mxu0 0.0
      %3301 = vmatprep.subr.mxu0 0.0
      %3302 = vmatpush1.msra.mxu0 0.0
      %3303 = vmatprep.subr.mxu0 0.0
      %3304 = vmatpush1.msra.mxu0 0.0
      %3305 = vmatprep.mubr.f32.mxu0 0.0
      %3306 = vmatmul.mubr.f32.gmra.mrb[0].mxu0 %v3097
      %v3307 = vpop.f32.mrb[0].mxu0
      %v3308 = vadd.f32 0.0, %v3307
      %v3309 = vpop.f32.mrb[0].mxu0
      %v3310 = vadd.f32 0.0, %v3309
      %3311 = vdwg.mxu0
      %3312 = vmatprep.subr.mxu0 %v3080
      %3313 = vmatpush1.msra.mxu0 %v3079
      %3314 = vmatprep.subr.mxu0 0.0
      %3315 = vmatpush1.msra.mxu0 0.0
      %3316 = vmatprep.subr.mxu0 0.0
      %3317 = vmatpush1.msra.mxu0 0.0
      %3318 = vmatprep.subr.mxu0 0.0
      %3319 = vmatpush1.msra.mxu0 0.0
      %3320 = vmatprep.subr.mxu0 0.0
      %3321 = vmatpush1.msra.mxu0 0.0
      %3322 = vmatprep.subr.mxu0 0.0
      %3323 = vmatpush1.msra.mxu0 0.0
      %3324 = vmatprep.subr.mxu0 0.0
      %3325 = vmatpush1.msra.mxu0 0.0
      %3326 = vmatprep.subr.mxu0 0.0
      %3327 = vmatpush1.msra.mxu0 0.0
      %3328 = vmatprep.subr.mxu0 0.0
      %3329 = vmatpush1.msra.mxu0 0.0
      %3330 = vmatprep.subr.mxu0 0.0
      %3331 = vmatpush1.msra.mxu0 0.0
      %3332 = vmatprep.subr.mxu0 0.0
      %3333 = vmatpush1.msra.mxu0 0.0
      %3334 = vmatprep.subr.mxu0 0.0
      %3335 = vmatpush1.msra.mxu0 0.0
      %3336 = vmatprep.subr.mxu0 0.0
      %3337 = vmatpush1.msra.mxu0 0.0
      %3338 = vmatprep.subr.mxu0 0.0
      %3339 = vmatpush1.msra.mxu0 0.0
      %3340 = vmatprep.subr.mxu0 0.0
      %3341 = vmatpush1.msra.mxu0 0.0
      %3342 = vmatprep.subr.mxu0 0.0
      %3343 = vmatpush1.msra.mxu0 0.0
      %3344 = vmatprep.subr.mxu0 0.0
      %3345 = vmatpush1.msra.mxu0 0.0
      %3346 = vmatprep.subr.mxu0 0.0
      %3347 = vmatpush1.msra.mxu0 0.0
      %3348 = vmatprep.subr.mxu0 0.0
      %3349 = vmatpush1.msra.mxu0 0.0
      %3350 = vmatprep.subr.mxu0 0.0
      %3351 = vmatpush1.msra.mxu0 0.0
      %3352 = vmatprep.subr.mxu0 0.0
      %3353 = vmatpush1.msra.mxu0 0.0
      %3354 = vmatprep.subr.mxu0 0.0
      %3355 = vmatpush1.msra.mxu0 0.0
      %3356 = vmatprep.subr.mxu0 0.0
      %3357 = vmatpush1.msra.mxu0 0.0
      %3358 = vmatprep.subr.mxu0 0.0
      %3359 = vmatpush1.msra.mxu0 0.0
      %3360 = vmatprep.subr.mxu0 0.0
      %3361 = vmatpush1.msra.mxu0 0.0
      %3362 = vmatprep.subr.mxu0 0.0
      %3363 = vmatpush1.msra.mxu0 0.0
      %3364 = vmatprep.subr.mxu0 0.0
      %3365 = vmatpush1.msra.mxu0 0.0
      %3366 = vmatprep.subr.mxu0 0.0
      %3367 = vmatpush1.msra.mxu0 0.0
      %3368 = vmatprep.subr.mxu0 0.0
      %3369 = vmatpush1.msra.mxu0 0.0
      %3370 = vmatprep.subr.mxu0 0.0
      %3371 = vmatpush1.msra.mxu0 0.0
      %3372 = vmatprep.subr.mxu0 0.0
      %3373 = vmatpush1.msra.mxu0 0.0
      %3374 = vmatprep.subr.mxu0 0.0
      %3375 = vmatpush1.msra.mxu0 0.0
      %3376 = vmatprep.mubr.f32.mxu0 0.0
      %3377 = vmatmul.mubr.f32.gmra.mrb[0].mxu0 %v3097
      %v3378 = vpop.f32.mrb[0].mxu0
      %v3379 = vadd.f32 0.0, %v3378
      %v3380 = vpop.f32.mrb[0].mxu0
      %v3381 = vadd.f32 0.0, %v3380
      %3382 = vdwg.mxu0
      %3383 = vmatprep.subr.mxu0 %v3082
      %3384 = vmatpush1.msra.mxu0 %v3081
      %3385 = vmatprep.subr.mxu0 0.0
      %3386 = vmatpush1.msra.mxu0 0.0
      %3387 = vmatprep.subr.mxu0 0.0
      %3388 = vmatpush1.msra.mxu0 0.0
      %3389 = vmatprep.subr.mxu0 0.0
      %3390 = vmatpush1.msra.mxu0 0.0
      %3391 = vmatprep.subr.mxu0 0.0
      %3392 = vmatpush1.msra.mxu0 0.0
      %3393 = vmatprep.subr.mxu0 0.0
      %3394 = vmatpush1.msra.mxu0 0.0
      %3395 = vmatprep.subr.mxu0 0.0
      %3396 = vmatpush1.msra.mxu0 0.0
      %3397 = vmatprep.subr.mxu0 0.0
      %3398 = vmatpush1.msra.mxu0 0.0
      %3399 = vmatprep.subr.mxu0 0.0
      %3400 = vmatpush1.msra.mxu0 0.0
      %3401 = vmatprep.subr.mxu0 0.0
      %3402 = vmatpush1.msra.mxu0 0.0
      %3403 = vmatprep.subr.mxu0 0.0
      %3404 = vmatpush1.msra.mxu0 0.0
      %3405 = vmatprep.subr.mxu0 0.0
      %3406 = vmatpush1.msra.mxu0 0.0
      %3407 = vmatprep.subr.mxu0 0.0
      %3408 = vmatpush1.msra.mxu0 0.0
      %3409 = vmatprep.subr.mxu0 0.0
      %3410 = vmatpush1.msra.mxu0 0.0
      %3411 = vmatprep.subr.mxu0 0.0
      %3412 = vmatpush1.msra.mxu0 0.0
      %3413 = vmatprep.subr.mxu0 0.0
      %3414 = vmatpush1.msra.mxu0 0.0
      %3415 = vmatprep.subr.mxu0 0.0
      %3416 = vmatpush1.msra.mxu0 0.0
      %3417 = vmatprep.subr.mxu0 0.0
      %3418 = vmatpush1.msra.mxu0 0.0
      %3419 = vmatprep.subr.mxu0 0.0
      %3420 = vmatpush1.msra.mxu0 0.0
      %3421 = vmatprep.subr.mxu0 0.0
      %3422 = vmatpush1.msra.mxu0 0.0
      %3423 = vmatprep.subr.mxu0 0.0
      %3424 = vmatpush1.msra.mxu0 0.0
      %3425 = vmatprep.subr.mxu0 0.0
      %3426 = vmatpush1.msra.mxu0 0.0
      %3427 = vmatprep.subr.mxu0 0.0
      %3428 = vmatpush1.msra.mxu0 0.0
      %3429 = vmatprep.subr.mxu0 0.0
      %3430 = vmatpush1.msra.mxu0 0.0
      %3431 = vmatprep.subr.mxu0 0.0
      %3432 = vmatpush1.msra.mxu0 0.0
      %3433 = vmatprep.subr.mxu0 0.0
      %3434 = vmatpush1.msra.mxu0 0.0
      %3435 = vmatprep.subr.mxu0 0.0
      %3436 = vmatpush1.msra.mxu0 0.0
      %3437 = vmatprep.subr.mxu0 0.0
      %3438 = vmatpush1.msra.mxu0 0.0
      %3439 = vmatprep.subr.mxu0 0.0
      %3440 = vmatpush1.msra.mxu0 0.0
      %3441 = vmatprep.subr.mxu0 0.0
      %3442 = vmatpush1.msra.mxu0 0.0
      %3443 = vmatprep.subr.mxu0 0.0
      %3444 = vmatpush1.msra.mxu0 0.0
      %3445 = vmatprep.subr.mxu0 0.0
      %3446 = vmatpush1.msra.mxu0 0.0
      %3447 = vmatprep.mubr.f32.mxu0 0.0
      %3448 = vmatmul.mubr.f32.gmra.mrb[0].mxu0 %v3097
      %v3449 = vpop.f32.mrb[0].mxu0
      %v3450 = vadd.f32 0.0, %v3449
      %v3451 = vpop.f32.mrb[0].mxu0
      %v3452 = vadd.f32 0.0, %v3451
      %3453 = vdwg.mxu0
      %3454 = vmatprep.subr.mxu0 %v3071
      %3455 = vmatpush1.msra.mxu0 %v3083
      %3456 = vmatprep.subr.mxu0 0.0
      %3457 = vmatpush1.msra.mxu0 0.0
      %3458 = vmatprep.subr.mxu0 0.0
      %3459 = vmatpush1.msra.mxu0 0.0
      %3460 = vmatprep.subr.mxu0 0.0
      %3461 = vmatpush1.msra.mxu0 0.0
      %3462 = vmatprep.subr.mxu0 0.0
      %3463 = vmatpush1.msra.mxu0 0.0
      %3464 = vmatprep.subr.mxu0 0.0
      %3465 = vmatpush1.msra.mxu0 0.0
      %3466 = vmatprep.subr.mxu0 0.0
      %3467 = vmatpush1.msra.mxu0 0.0
      %3468 = vmatprep.subr.mxu0 0.0
      %3469 = vmatpush1.msra.mxu0 0.0
      %3470 = vmatprep.subr.mxu0 0.0
      %3471 = vmatpush1.msra.mxu0 0.0
      %3472 = vmatprep.subr.mxu0 0.0
      %3473 = vmatpush1.msra.mxu0 0.0
      %3474 = vmatprep.subr.mxu0 0.0
      %3475 = vmatpush1.msra.mxu0 0.0
      %3476 = vmatprep.subr.mxu0 0.0
      %3477 = vmatpush1.msra.mxu0 0.0
      %3478 = vmatprep.subr.mxu0 0.0
      %3479 = vmatpush1.msra.mxu0 0.0
      %3480 = vmatprep.subr.mxu0 0.0
      %3481 = vmatpush1.msra.mxu0 0.0
      %3482 = vmatprep.subr.mxu0 0.0
      %3483 = vmatpush1.msra.mxu0 0.0
      %3484 = vmatprep.subr.mxu0 0.0
      %3485 = vmatpush1.msra.mxu0 0.0
      %3486 = vmatprep.subr.mxu0 0.0
      %3487 = vmatpush1.msra.mxu0 0.0
      %3488 = vmatprep.subr.mxu0 0.0
      %3489 = vmatpush1.msra.mxu0 0.0
      %3490 = vmatprep.subr.mxu0 0.0
      %3491 = vmatpush1.msra.mxu0 0.0
      %3492 = vmatprep.subr.mxu0 0.0
      %3493 = vmatpush1.msra.mxu0 0.0
      %3494 = vmatprep.subr.mxu0 0.0
      %3495 = vmatpush1.msra.mxu0 0.0
      %3496 = vmatprep.subr.mxu0 0.0
      %3497 = vmatpush1.msra.mxu0 0.0
      %3498 = vmatprep.subr.mxu0 0.0
      %3499 = vmatpush1.msra.mxu0 0.0
      %3500 = vmatprep.subr.mxu0 0.0
      %3501 = vmatpush1.msra.mxu0 0.0
      %3502 = vmatprep.subr.mxu0 0.0
      %3503 = vmatpush1.msra.mxu0 0.0
      %3504 = vmatprep.subr.mxu0 0.0
      %3505 = vmatpush1.msra.mxu0 0.0
      %3506 = vmatprep.subr.mxu0 0.0
      %3507 = vmatpush1.msra.mxu0 0.0
      %3508 = vmatprep.subr.mxu0 0.0
      %3509 = vmatpush1.msra.mxu0 0.0
      %3510 = vmatprep.subr.mxu0 0.0
      %3511 = vmatpush1.msra.mxu0 0.0
      %3512 = vmatprep.subr.mxu0 0.0
      %3513 = vmatpush1.msra.mxu0 0.0
      %3514 = vmatprep.subr.mxu0 0.0
      %3515 = vmatpush1.msra.mxu0 0.0
      %3516 = vmatprep.subr.mxu0 0.0
      %3517 = vmatpush1.msra.mxu0 0.0
      %3518 = vmatprep.mubr.f32.mxu0 0.0
      %3519 = vmatmul.mubr.f32.gmra.mrb[0].mxu0 %v3097
      %v3520 = vpop.f32.mrb[0].mxu0
      %v3521 = vadd.f32 0.0, %v3520
      %v3522 = vpop.f32.mrb[0].mxu0
      %v3523 = vadd.f32 0.0, %v3522
      %3524 = vdwg.mxu0
      %v3525 = vadd.f32 %v3034, %v3166
      %v3526 = vadd.f32 %v3035, %v3168
      %v3527 = vadd.f32 %v3036, %v3237
      %v3528 = vadd.f32 %v3037, %v3239
      %v3529 = vadd.f32 %v3038, %v3308
      %v3530 = vadd.f32 %v3039, %v3310
      %v3531 = vadd.f32 %v3040, %v3379
      %v3532 = vadd.f32 %v3041, %v3381
      %v3533 = vadd.f32 %v3042, %v3450
      %v3534 = vadd.f32 %v3043, %v3452
      %v3535 = vadd.f32 %v3044, %v3521
      %v3536 = vadd.f32 %v3045, %v3523
      %v3537 = vld [vmem:[#allocation2 + $0x18] sm:$0xff]
      %v3538 = vld [vmem:[#allocation2 + $0x20] sm:$0xff]
      %v3539 = vld [vmem:[#allocation2 + $0x28] sm:$0xff]
      %v3540 = vld [vmem:[#allocation2 + $0x30] sm:$0xff]
      %v3541 = vld [vmem:[#allocation2 + $0x38] sm:$0xff]
      %v3542 = vld [vmem:[#allocation2 + $0x40] sm:$0xff]
      %v3543 = vld [vmem:[#allocation2 + $0x48] sm:$0xff]
      %v3544 = vld [vmem:[#allocation2 + $0x50] sm:$0xff]
      %v3545 = vld [vmem:[#allocation2 + $0x58] sm:$0xff]
      %v3546 = vld [vmem:[#allocation2 + $0x60] sm:$0xff]
      %v3547 = vld [vmem:[#allocation2 + $0x68] sm:$0xff]
      %v3548 = vld [vmem:[#allocation2 + $0x70] sm:$0xff]
      %s3549 = scalar_lea.vmem %s2, 24
      %v3550 = vld [vmem:[%s3549] sm:$0xf]
      %3563 = vrot.lane.b32.xlu0 %v3537, 120
      %v3564 = vpop.permute.xlu0 %3563
      %3565 = vrot.lane.b32.xlu0 %v3538, 120
      %v3566 = vpop.permute.xlu0 %3565
      %3567 = vrot.lane.b32.xlu0 %v3539, 120
      %v3568 = vpop.permute.xlu0 %3567
      %3569 = vrot.lane.b32.xlu0 %v3540, 120
      %v3570 = vpop.permute.xlu0 %3569
      %3571 = vrot.lane.b32.xlu0 %v3541, 120
      %v3572 = vpop.permute.xlu0 %3571
      %3573 = vrot.lane.b32.xlu0 %v3542, 120
      %v3574 = vpop.permute.xlu0 %3573
      %3575 = vrot.lane.b32.xlu0 %v3543, 120
      %v3576 = vpop.permute.xlu0 %3575
      %3577 = vrot.lane.b32.xlu0 %v3544, 120
      %v3578 = vpop.permute.xlu0 %3577
      %3579 = vrot.lane.b32.xlu0 %v3545, 120
      %v3580 = vpop.permute.xlu0 %3579
      %3581 = vrot.lane.b32.xlu0 %v3546, 120
      %v3582 = vpop.permute.xlu0 %3581
      %3583 = vrot.lane.b32.xlu0 %v3547, 120
      %v3584 = vpop.permute.xlu0 %3583
      %3585 = vrot.lane.b32.xlu0 %v3548, 120
      %v3586 = vpop.permute.xlu0 %3585
      %v3587 = vsel %vm3072, %v3564, %v3566
      %v3588 = vsel %vm3072, %v3566, %v3568
      %v3589 = vsel %vm3072, %v3568, %v3570
      %v3590 = vsel %vm3072, %v3570, %v3572
      %v3591 = vsel %vm3072, %v3572, %v3574
      %v3592 = vsel %vm3072, %v3574, %v3576
      %v3593 = vsel %vm3072, %v3576, %v3578
      %v3594 = vsel %vm3072, %v3578, %v3580
      %v3595 = vsel %vm3072, %v3580, %v3582
      %v3596 = vsel %vm3072, %v3582, %v3584
      %v3597 = vsel %vm3072, %v3584, %v3586
      %v3611 = vsel %vm681, %v3550, 0
      %3613 = vmatprep.subr.mxu0 %v3588
      %3614 = vmatpush1.msra.mxu0 %v3587
      %3615 = vmatprep.subr.mxu0 0.0
      %3616 = vmatpush1.msra.mxu0 0.0
      %3617 = vmatprep.subr.mxu0 0.0
      %3618 = vmatpush1.msra.mxu0 0.0
      %3619 = vmatprep.subr.mxu0 0.0
      %3620 = vmatpush1.msra.mxu0 0.0
      %3621 = vmatprep.subr.mxu0 0.0
      %3622 = vmatpush1.msra.mxu0 0.0
      %3623 = vmatprep.subr.mxu0 0.0
      %3624 = vmatpush1.msra.mxu0 0.0
      %3625 = vmatprep.subr.mxu0 0.0
      %3626 = vmatpush1.msra.mxu0 0.0
      %3627 = vmatprep.subr.mxu0 0.0
      %3628 = vmatpush1.msra.mxu0 0.0
      %3629 = vmatprep.subr.mxu0 0.0
      %3630 = vmatpush1.msra.mxu0 0.0
      %3631 = vmatprep.subr.mxu0 0.0
      %3632 = vmatpush1.msra.mxu0 0.0
      %3633 = vmatprep.subr.mxu0 0.0
      %3634 = vmatpush1.msra.mxu0 0.0
      %3635 = vmatprep.subr.mxu0 0.0
      %3636 = vmatpush1.msra.mxu0 0.0
      %3637 = vmatprep.subr.mxu0 0.0
      %3638 = vmatpush1.msra.mxu0 0.0
      %3639 = vmatprep.subr.mxu0 0.0
      %3640 = vmatpush1.msra.mxu0 0.0
      %3641 = vmatprep.subr.mxu0 0.0
      %3642 = vmatpush1.msra.mxu0 0.0
      %3643 = vmatprep.subr.mxu0 0.0
      %3644 = vmatpush1.msra.mxu0 0.0
      %3645 = vmatprep.subr.mxu0 0.0
      %3646 = vmatpush1.msra.mxu0 0.0
      %3647 = vmatprep.subr.mxu0 0.0
      %3648 = vmatpush1.msra.mxu0 0.0
      %3649 = vmatprep.subr.mxu0 0.0
      %3650 = vmatpush1.msra.mxu0 0.0
      %3651 = vmatprep.subr.mxu0 0.0
      %3652 = vmatpush1.msra.mxu0 0.0
      %3653 = vmatprep.subr.mxu0 0.0
      %3654 = vmatpush1.msra.mxu0 0.0
      %3655 = vmatprep.subr.mxu0 0.0
      %3656 = vmatpush1.msra.mxu0 0.0
      %3657 = vmatprep.subr.mxu0 0.0
      %3658 = vmatpush1.msra.mxu0 0.0
      %3659 = vmatprep.subr.mxu0 0.0
      %3660 = vmatpush1.msra.mxu0 0.0
      %3661 = vmatprep.subr.mxu0 0.0
      %3662 = vmatpush1.msra.mxu0 0.0
      %3663 = vmatprep.subr.mxu0 0.0
      %3664 = vmatpush1.msra.mxu0 0.0
      %3665 = vmatprep.subr.mxu0 0.0
      %3666 = vmatpush1.msra.mxu0 0.0
      %3667 = vmatprep.subr.mxu0 0.0
      %3668 = vmatpush1.msra.mxu0 0.0
      %3669 = vmatprep.subr.mxu0 0.0
      %3670 = vmatpush1.msra.mxu0 0.0
      %3671 = vmatprep.subr.mxu0 0.0
      %3672 = vmatpush1.msra.mxu0 0.0
      %3673 = vmatprep.subr.mxu0 0.0
      %3674 = vmatpush1.msra.mxu0 0.0
      %3675 = vmatprep.subr.mxu0 0.0
      %3676 = vmatpush1.msra.mxu0 0.0
      %3677 = vmatprep.mubr.f32.mxu0 0.0
      %3678 = vmatmul.mubr.f32.gmra.mrb[0].mxu0 %v3611
      %v3679 = vpop.f32.mrb[0].mxu0
      %v3680 = vadd.f32 0.0, %v3679
      %v3681 = vpop.f32.mrb[0].mxu0
      %v3682 = vadd.f32 0.0, %v3681
      %3683 = vdwg.mxu0
      %3684 = vmatprep.subr.mxu0 %v3590
      %3685 = vmatpush1.msra.mxu0 %v3589
      %3686 = vmatprep.subr.mxu0 0.0
      %3687 = vmatpush1.msra.mxu0 0.0
      %3688 = vmatprep.subr.mxu0 0.0
      %3689 = vmatpush1.msra.mxu0 0.0
      %3690 = vmatprep.subr.mxu0 0.0
      %3691 = vmatpush1.msra.mxu0 0.0
      %3692 = vmatprep.subr.mxu0 0.0
      %3693 = vmatpush1.msra.mxu0 0.0
      %3694 = vmatprep.subr.mxu0 0.0
      %3695 = vmatpush1.msra.mxu0 0.0
      %3696 = vmatprep.subr.mxu0 0.0
      %3697 = vmatpush1.msra.mxu0 0.0
      %3698 = vmatprep.subr.mxu0 0.0
      %3699 = vmatpush1.msra.mxu0 0.0
      %3700 = vmatprep.subr.mxu0 0.0
      %3701 = vmatpush1.msra.mxu0 0.0
      %3702 = vmatprep.subr.mxu0 0.0
      %3703 = vmatpush1.msra.mxu0 0.0
      %3704 = vmatprep.subr.mxu0 0.0
      %3705 = vmatpush1.msra.mxu0 0.0
      %3706 = vmatprep.subr.mxu0 0.0
      %3707 = vmatpush1.msra.mxu0 0.0
      %3708 = vmatprep.subr.mxu0 0.0
      %3709 = vmatpush1.msra.mxu0 0.0
      %3710 = vmatprep.subr.mxu0 0.0
      %3711 = vmatpush1.msra.mxu0 0.0
      %3712 = vmatprep.subr.mxu0 0.0
      %3713 = vmatpush1.msra.mxu0 0.0
      %3714 = vmatprep.subr.mxu0 0.0
      %3715 = vmatpush1.msra.mxu0 0.0
      %3716 = vmatprep.subr.mxu0 0.0
      %3717 = vmatpush1.msra.mxu0 0.0
      %3718 = vmatprep.subr.mxu0 0.0
      %3719 = vmatpush1.msra.mxu0 0.0
      %3720 = vmatprep.subr.mxu0 0.0
      %3721 = vmatpush1.msra.mxu0 0.0
      %3722 = vmatprep.subr.mxu0 0.0
      %3723 = vmatpush1.msra.mxu0 0.0
      %3724 = vmatprep.subr.mxu0 0.0
      %3725 = vmatpush1.msra.mxu0 0.0
      %3726 = vmatprep.subr.mxu0 0.0
      %3727 = vmatpush1.msra.mxu0 0.0
      %3728 = vmatprep.subr.mxu0 0.0
      %3729 = vmatpush1.msra.mxu0 0.0
      %3730 = vmatprep.subr.mxu0 0.0
      %3731 = vmatpush1.msra.mxu0 0.0
      %3732 = vmatprep.subr.mxu0 0.0
      %3733 = vmatpush1.msra.mxu0 0.0
      %3734 = vmatprep.subr.mxu0 0.0
      %3735 = vmatpush1.msra.mxu0 0.0
      %3736 = vmatprep.subr.mxu0 0.0
      %3737 = vmatpush1.msra.mxu0 0.0
      %3738 = vmatprep.subr.mxu0 0.0
      %3739 = vmatpush1.msra.mxu0 0.0
      %3740 = vmatprep.subr.mxu0 0.0
      %3741 = vmatpush1.msra.mxu0 0.0
      %3742 = vmatprep.subr.mxu0 0.0
      %3743 = vmatpush1.msra.mxu0 0.0
      %3744 = vmatprep.subr.mxu0 0.0
      %3745 = vmatpush1.msra.mxu0 0.0
      %3746 = vmatprep.subr.mxu0 0.0
      %3747 = vmatpush1.msra.mxu0 0.0
      %3748 = vmatprep.mubr.f32.mxu0 0.0
      %3749 = vmatmul.mubr.f32.gmra.mrb[0].mxu0 %v3611
      %v3750 = vpop.f32.mrb[0].mxu0
      %v3751 = vadd.f32 0.0, %v3750
      %v3752 = vpop.f32.mrb[0].mxu0
      %v3753 = vadd.f32 0.0, %v3752
      %3754 = vdwg.mxu0
      %3755 = vmatprep.subr.mxu0 %v3592
      %3756 = vmatpush1.msra.mxu0 %v3591
      %3757 = vmatprep.subr.mxu0 0.0
      %3758 = vmatpush1.msra.mxu0 0.0
      %3759 = vmatprep.subr.mxu0 0.0
      %3760 = vmatpush1.msra.mxu0 0.0
      %3761 = vmatprep.subr.mxu0 0.0
      %3762 = vmatpush1.msra.mxu0 0.0
      %3763 = vmatprep.subr.mxu0 0.0
      %3764 = vmatpush1.msra.mxu0 0.0
      %3765 = vmatprep.subr.mxu0 0.0
      %3766 = vmatpush1.msra.mxu0 0.0
      %3767 = vmatprep.subr.mxu0 0.0
      %3768 = vmatpush1.msra.mxu0 0.0
      %3769 = vmatprep.subr.mxu0 0.0
      %3770 = vmatpush1.msra.mxu0 0.0
      %3771 = vmatprep.subr.mxu0 0.0
      %3772 = vmatpush1.msra.mxu0 0.0
      %3773 = vmatprep.subr.mxu0 0.0
      %3774 = vmatpush1.msra.mxu0 0.0
      %3775 = vmatprep.subr.mxu0 0.0
      %3776 = vmatpush1.msra.mxu0 0.0
      %3777 = vmatprep.subr.mxu0 0.0
      %3778 = vmatpush1.msra.mxu0 0.0
      %3779 = vmatprep.subr.mxu0 0.0
      %3780 = vmatpush1.msra.mxu0 0.0
      %3781 = vmatprep.subr.mxu0 0.0
      %3782 = vmatpush1.msra.mxu0 0.0
      %3783 = vmatprep.subr.mxu0 0.0
      %3784 = vmatpush1.msra.mxu0 0.0
      %3785 = vmatprep.subr.mxu0 0.0
      %3786 = vmatpush1.msra.mxu0 0.0
      %3787 = vmatprep.subr.mxu0 0.0
      %3788 = vmatpush1.msra.mxu0 0.0
      %3789 = vmatprep.subr.mxu0 0.0
      %3790 = vmatpush1.msra.mxu0 0.0
      %3791 = vmatprep.subr.mxu0 0.0
      %3792 = vmatpush1.msra.mxu0 0.0
      %3793 = vmatprep.subr.mxu0 0.0
      %3794 = vmatpush1.msra.mxu0 0.0
      %3795 = vmatprep.subr.mxu0 0.0
      %3796 = vmatpush1.msra.mxu0 0.0
      %3797 = vmatprep.subr.mxu0 0.0
      %3798 = vmatpush1.msra.mxu0 0.0
      %3799 = vmatprep.subr.mxu0 0.0
      %3800 = vmatpush1.msra.mxu0 0.0
      %3801 = vmatprep.subr.mxu0 0.0
      %3802 = vmatpush1.msra.mxu0 0.0
      %3803 = vmatprep.subr.mxu0 0.0
      %3804 = vmatpush1.msra.mxu0 0.0
      %3805 = vmatprep.subr.mxu0 0.0
      %3806 = vmatpush1.msra.mxu0 0.0
      %3807 = vmatprep.subr.mxu0 0.0
      %3808 = vmatpush1.msra.mxu0 0.0
      %3809 = vmatprep.subr.mxu0 0.0
      %3810 = vmatpush1.msra.mxu0 0.0
      %3811 = vmatprep.subr.mxu0 0.0
      %3812 = vmatpush1.msra.mxu0 0.0
      %3813 = vmatprep.subr.mxu0 0.0
      %3814 = vmatpush1.msra.mxu0 0.0
      %3815 = vmatprep.subr.mxu0 0.0
      %3816 = vmatpush1.msra.mxu0 0.0
      %3817 = vmatprep.subr.mxu0 0.0
      %3818 = vmatpush1.msra.mxu0 0.0
      %3819 = vmatprep.mubr.f32.mxu0 0.0
      %3820 = vmatmul.mubr.f32.gmra.mrb[0].mxu0 %v3611
      %v3821 = vpop.f32.mrb[0].mxu0
      %v3822 = vadd.f32 0.0, %v3821
      %v3823 = vpop.f32.mrb[0].mxu0
      %v3824 = vadd.f32 0.0, %v3823
      %3825 = vdwg.mxu0
      %3826 = vmatprep.subr.mxu0 %v3594
      %3827 = vmatpush1.msra.mxu0 %v3593
      %3828 = vmatprep.subr.mxu0 0.0
      %3829 = vmatpush1.msra.mxu0 0.0
      %3830 = vmatprep.subr.mxu0 0.0
      %3831 = vmatpush1.msra.mxu0 0.0
      %3832 = vmatprep.subr.mxu0 0.0
      %3833 = vmatpush1.msra.mxu0 0.0
      %3834 = vmatprep.subr.mxu0 0.0
      %3835 = vmatpush1.msra.mxu0 0.0
      %3836 = vmatprep.subr.mxu0 0.0
      %3837 = vmatpush1.msra.mxu0 0.0
      %3838 = vmatprep.subr.mxu0 0.0
      %3839 = vmatpush1.msra.mxu0 0.0
      %3840 = vmatprep.subr.mxu0 0.0
      %3841 = vmatpush1.msra.mxu0 0.0
      %3842 = vmatprep.subr.mxu0 0.0
      %3843 = vmatpush1.msra.mxu0 0.0
      %3844 = vmatprep.subr.mxu0 0.0
      %3845 = vmatpush1.msra.mxu0 0.0
      %3846 = vmatprep.subr.mxu0 0.0
      %3847 = vmatpush1.msra.mxu0 0.0
      %3848 = vmatprep.subr.mxu0 0.0
      %3849 = vmatpush1.msra.mxu0 0.0
      %3850 = vmatprep.subr.mxu0 0.0
      %3851 = vmatpush1.msra.mxu0 0.0
      %3852 = vmatprep.subr.mxu0 0.0
      %3853 = vmatpush1.msra.mxu0 0.0
      %3854 = vmatprep.subr.mxu0 0.0
      %3855 = vmatpush1.msra.mxu0 0.0
      %3856 = vmatprep.subr.mxu0 0.0
      %3857 = vmatpush1.msra.mxu0 0.0
      %3858 = vmatprep.subr.mxu0 0.0
      %3859 = vmatpush1.msra.mxu0 0.0
      %3860 = vmatprep.subr.mxu0 0.0
      %3861 = vmatpush1.msra.mxu0 0.0
      %3862 = vmatprep.subr.mxu0 0.0
      %3863 = vmatpush1.msra.mxu0 0.0
      %3864 = vmatprep.subr.mxu0 0.0
      %3865 = vmatpush1.msra.mxu0 0.0
      %3866 = vmatprep.subr.mxu0 0.0
      %3867 = vmatpush1.msra.mxu0 0.0
      %3868 = vmatprep.subr.mxu0 0.0
      %3869 = vmatpush1.msra.mxu0 0.0
      %3870 = vmatprep.subr.mxu0 0.0
      %3871 = vmatpush1.msra.mxu0 0.0
      %3872 = vmatprep.subr.mxu0 0.0
      %3873 = vmatpush1.msra.mxu0 0.0
      %3874 = vmatprep.subr.mxu0 0.0
      %3875 = vmatpush1.msra.mxu0 0.0
      %3876 = vmatprep.subr.mxu0 0.0
      %3877 = vmatpush1.msra.mxu0 0.0
      %3878 = vmatprep.subr.mxu0 0.0
      %3879 = vmatpush1.msra.mxu0 0.0
      %3880 = vmatprep.subr.mxu0 0.0
      %3881 = vmatpush1.msra.mxu0 0.0
      %3882 = vmatprep.subr.mxu0 0.0
      %3883 = vmatpush1.msra.mxu0 0.0
      %3884 = vmatprep.subr.mxu0 0.0
      %3885 = vmatpush1.msra.mxu0 0.0
      %3886 = vmatprep.subr.mxu0 0.0
      %3887 = vmatpush1.msra.mxu0 0.0
      %3888 = vmatprep.subr.mxu0 0.0
      %3889 = vmatpush1.msra.mxu0 0.0
      %3890 = vmatprep.mubr.f32.mxu0 0.0
      %3891 = vmatmul.mubr.f32.gmra.mrb[0].mxu0 %v3611
      %v3892 = vpop.f32.mrb[0].mxu0
      %v3893 = vadd.f32 0.0, %v3892
      %v3894 = vpop.f32.mrb[0].mxu0
      %v3895 = vadd.f32 0.0, %v3894
      %3896 = vdwg.mxu0
      %3897 = vmatprep.subr.mxu0 %v3596
      %3898 = vmatpush1.msra.mxu0 %v3595
      %3899 = vmatprep.subr.mxu0 0.0
      %3900 = vmatpush1.msra.mxu0 0.0
      %3901 = vmatprep.subr.mxu0 0.0
      %3902 = vmatpush1.msra.mxu0 0.0
      %3903 = vmatprep.subr.mxu0 0.0
      %3904 = vmatpush1.msra.mxu0 0.0
      %3905 = vmatprep.subr.mxu0 0.0
      %3906 = vmatpush1.msra.mxu0 0.0
      %3907 = vmatprep.subr.mxu0 0.0
      %3908 = vmatpush1.msra.mxu0 0.0
      %3909 = vmatprep.subr.mxu0 0.0
      %3910 = vmatpush1.msra.mxu0 0.0
      %3911 = vmatprep.subr.mxu0 0.0
      %3912 = vmatpush1.msra.mxu0 0.0
      %3913 = vmatprep.subr.mxu0 0.0
      %3914 = vmatpush1.msra.mxu0 0.0
      %3915 = vmatprep.subr.mxu0 0.0
      %3916 = vmatpush1.msra.mxu0 0.0
      %3917 = vmatprep.subr.mxu0 0.0
      %3918 = vmatpush1.msra.mxu0 0.0
      %3919 = vmatprep.subr.mxu0 0.0
      %3920 = vmatpush1.msra.mxu0 0.0
      %3921 = vmatprep.subr.mxu0 0.0
      %3922 = vmatpush1.msra.mxu0 0.0
      %3923 = vmatprep.subr.mxu0 0.0
      %3924 = vmatpush1.msra.mxu0 0.0
      %3925 = vmatprep.subr.mxu0 0.0
      %3926 = vmatpush1.msra.mxu0 0.0
      %3927 = vmatprep.subr.mxu0 0.0
      %3928 = vmatpush1.msra.mxu0 0.0
      %3929 = vmatprep.subr.mxu0 0.0
      %3930 = vmatpush1.msra.mxu0 0.0
      %3931 = vmatprep.subr.mxu0 0.0
      %3932 = vmatpush1.msra.mxu0 0.0
      %3933 = vmatprep.subr.mxu0 0.0
      %3934 = vmatpush1.msra.mxu0 0.0
      %3935 = vmatprep.subr.mxu0 0.0
      %3936 = vmatpush1.msra.mxu0 0.0
      %3937 = vmatprep.subr.mxu0 0.0
      %3938 = vmatpush1.msra.mxu0 0.0
      %3939 = vmatprep.subr.mxu0 0.0
      %3940 = vmatpush1.msra.mxu0 0.0
      %3941 = vmatprep.subr.mxu0 0.0
      %3942 = vmatpush1.msra.mxu0 0.0
      %3943 = vmatprep.subr.mxu0 0.0
      %3944 = vmatpush1.msra.mxu0 0.0
      %3945 = vmatprep.subr.mxu0 0.0
      %3946 = vmatpush1.msra.mxu0 0.0
      %3947 = vmatprep.subr.mxu0 0.0
      %3948 = vmatpush1.msra.mxu0 0.0
      %3949 = vmatprep.subr.mxu0 0.0
      %3950 = vmatpush1.msra.mxu0 0.0
      %3951 = vmatprep.subr.mxu0 0.0
      %3952 = vmatpush1.msra.mxu0 0.0
      %3953 = vmatprep.subr.mxu0 0.0
      %3954 = vmatpush1.msra.mxu0 0.0
      %3955 = vmatprep.subr.mxu0 0.0
      %3956 = vmatpush1.msra.mxu0 0.0
      %3957 = vmatprep.subr.mxu0 0.0
      %3958 = vmatpush1.msra.mxu0 0.0
      %3959 = vmatprep.subr.mxu0 0.0
      %3960 = vmatpush1.msra.mxu0 0.0
      %3961 = vmatprep.mubr.f32.mxu0 0.0
      %3962 = vmatmul.mubr.f32.gmra.mrb[0].mxu0 %v3611
      %v3963 = vpop.f32.mrb[0].mxu0
      %v3964 = vadd.f32 0.0, %v3963
      %v3965 = vpop.f32.mrb[0].mxu0
      %v3966 = vadd.f32 0.0, %v3965
      %3967 = vdwg.mxu0
      %3968 = vmatprep.subr.mxu0 %v3586
      %3969 = vmatpush1.msra.mxu0 %v3597
      %3970 = vmatprep.subr.mxu0 0.0
      %3971 = vmatpush1.msra.mxu0 0.0
      %3972 = vmatprep.subr.mxu0 0.0
      %3973 = vmatpush1.msra.mxu0 0.0
      %3974 = vmatprep.subr.mxu0 0.0
      %3975 = vmatpush1.msra.mxu0 0.0
      %3976 = vmatprep.subr.mxu0 0.0
      %3977 = vmatpush1.msra.mxu0 0.0
      %3978 = vmatprep.subr.mxu0 0.0
      %3979 = vmatpush1.msra.mxu0 0.0
      %3980 = vmatprep.subr.mxu0 0.0
      %3981 = vmatpush1.msra.mxu0 0.0
      %3982 = vmatprep.subr.mxu0 0.0
      %3983 = vmatpush1.msra.mxu0 0.0
      %3984 = vmatprep.subr.mxu0 0.0
      %3985 = vmatpush1.msra.mxu0 0.0
      %3986 = vmatprep.subr.mxu0 0.0
      %3987 = vmatpush1.msra.mxu0 0.0
      %3988 = vmatprep.subr.mxu0 0.0
      %3989 = vmatpush1.msra.mxu0 0.0
      %3990 = vmatprep.subr.mxu0 0.0
      %3991 = vmatpush1.msra.mxu0 0.0
      %3992 = vmatprep.subr.mxu0 0.0
      %3993 = vmatpush1.msra.mxu0 0.0
      %3994 = vmatprep.subr.mxu0 0.0
      %3995 = vmatpush1.msra.mxu0 0.0
      %3996 = vmatprep.subr.mxu0 0.0
      %3997 = vmatpush1.msra.mxu0 0.0
      %3998 = vmatprep.subr.mxu0 0.0
      %3999 = vmatpush1.msra.mxu0 0.0
      %4000 = vmatprep.subr.mxu0 0.0
      %4001 = vmatpush1.msra.mxu0 0.0
      %4002 = vmatprep.subr.mxu0 0.0
      %4003 = vmatpush1.msra.mxu0 0.0
      %4004 = vmatprep.subr.mxu0 0.0
      %4005 = vmatpush1.msra.mxu0 0.0
      %4006 = vmatprep.subr.mxu0 0.0
      %4007 = vmatpush1.msra.mxu0 0.0
      %4008 = vmatprep.subr.mxu0 0.0
      %4009 = vmatpush1.msra.mxu0 0.0
      %4010 = vmatprep.subr.mxu0 0.0
      %4011 = vmatpush1.msra.mxu0 0.0
      %4012 = vmatprep.subr.mxu0 0.0
      %4013 = vmatpush1.msra.mxu0 0.0
      %4014 = vmatprep.subr.mxu0 0.0
      %4015 = vmatpush1.msra.mxu0 0.0
      %4016 = vmatprep.subr.mxu0 0.0
      %4017 = vmatpush1.msra.mxu0 0.0
      %4018 = vmatprep.subr.mxu0 0.0
      %4019 = vmatpush1.msra.mxu0 0.0
      %4020 = vmatprep.subr.mxu0 0.0
      %4021 = vmatpush1.msra.mxu0 0.0
      %4022 = vmatprep.subr.mxu0 0.0
      %4023 = vmatpush1.msra.mxu0 0.0
      %4024 = vmatprep.subr.mxu0 0.0
      %4025 = vmatpush1.msra.mxu0 0.0
      %4026 = vmatprep.subr.mxu0 0.0
      %4027 = vmatpush1.msra.mxu0 0.0
      %4028 = vmatprep.subr.mxu0 0.0
      %4029 = vmatpush1.msra.mxu0 0.0
      %4030 = vmatprep.subr.mxu0 0.0
      %4031 = vmatpush1.msra.mxu0 0.0
      %4032 = vmatprep.mubr.f32.mxu0 0.0
      %4033 = vmatmul.mubr.f32.gmra.mrb[0].mxu0 %v3611
      %v4034 = vpop.f32.mrb[0].mxu0
      %v4035 = vadd.f32 0.0, %v4034
      %v4036 = vpop.f32.mrb[0].mxu0
      %v4037 = vadd.f32 0.0, %v4036
      %4038 = vdwg.mxu0
      %v4039 = vadd.f32 %v3525, %v3680
      %v4040 = vadd.f32 %v3526, %v3682
      %v4041 = vadd.f32 %v3527, %v3751
      %v4042 = vadd.f32 %v3528, %v3753
      %v4043 = vadd.f32 %v3529, %v3822
      %v4044 = vadd.f32 %v3530, %v3824
      %v4045 = vadd.f32 %v3531, %v3893
      %v4046 = vadd.f32 %v3532, %v3895
      %v4047 = vadd.f32 %v3533, %v3964
      %v4048 = vadd.f32 %v3534, %v3966
      %v4049 = vadd.f32 %v3535, %v4035
      %v4050 = vadd.f32 %v3536, %v4037
      %s4051 = scalar_lea.vmem %s2, 28
      %v4052 = vld [vmem:[%s4051] sm:$0xf]
      %4053 = vrot.lane.b32.xlu0 %v3537, 112
      %v4054 = vpop.permute.xlu0 %4053
      %4055 = vrot.lane.b32.xlu0 %v3538, 112
      %v4056 = vpop.permute.xlu0 %4055
      %4057 = vrot.lane.b32.xlu0 %v3539, 112
      %v4058 = vpop.permute.xlu0 %4057
      %4059 = vrot.lane.b32.xlu0 %v3540, 112
      %v4060 = vpop.permute.xlu0 %4059
      %4061 = vrot.lane.b32.xlu0 %v3541, 112
      %v4062 = vpop.permute.xlu0 %4061
      %4063 = vrot.lane.b32.xlu0 %v3542, 112
      %v4064 = vpop.permute.xlu0 %4063
      %4065 = vrot.lane.b32.xlu0 %v3543, 112
      %v4066 = vpop.permute.xlu0 %4065
      %4067 = vrot.lane.b32.xlu0 %v3544, 112
      %v4068 = vpop.permute.xlu0 %4067
      %4069 = vrot.lane.b32.xlu0 %v3545, 112
      %v4070 = vpop.permute.xlu0 %4069
      %4071 = vrot.lane.b32.xlu0 %v3546, 112
      %v4072 = vpop.permute.xlu0 %4071
      %4073 = vrot.lane.b32.xlu0 %v3547, 112
      %v4074 = vpop.permute.xlu0 %4073
      %4075 = vrot.lane.b32.xlu0 %v3548, 112
      %v4076 = vpop.permute.xlu0 %4075
      %vm4077 = vcmask 916480
      %v4078 = vsel %vm4077, %v4054, %v4056
      %v4079 = vsel %vm4077, %v4056, %v4058
      %v4080 = vsel %vm4077, %v4058, %v4060
      %v4081 = vsel %vm4077, %v4060, %v4062
      %v4082 = vsel %vm4077, %v4062, %v4064
      %v4083 = vsel %vm4077, %v4064, %v4066
      %v4084 = vsel %vm4077, %v4066, %v4068
      %v4085 = vsel %vm4077, %v4068, %v4070
      %v4086 = vsel %vm4077, %v4070, %v4072
      %v4087 = vsel %vm4077, %v4072, %v4074
      %v4088 = vsel %vm4077, %v4074, %v4076
      %v4102 = vsel %vm681, %v4052, 0
      %4104 = vmatprep.subr.mxu0 %v4079
      %4105 = vmatpush1.msra.mxu0 %v4078
      %4106 = vmatprep.subr.mxu0 0.0
      %4107 = vmatpush1.msra.mxu0 0.0
      %4108 = vmatprep.subr.mxu0 0.0
      %4109 = vmatpush1.msra.mxu0 0.0
      %4110 = vmatprep.subr.mxu0 0.0
      %4111 = vmatpush1.msra.mxu0 0.0
      %4112 = vmatprep.subr.mxu0 0.0
      %4113 = vmatpush1.msra.mxu0 0.0
      %4114 = vmatprep.subr.mxu0 0.0
      %4115 = vmatpush1.msra.mxu0 0.0
      %4116 = vmatprep.subr.mxu0 0.0
      %4117 = vmatpush1.msra.mxu0 0.0
      %4118 = vmatprep.subr.mxu0 0.0
      %4119 = vmatpush1.msra.mxu0 0.0
      %4120 = vmatprep.subr.mxu0 0.0
      %4121 = vmatpush1.msra.mxu0 0.0
      %4122 = vmatprep.subr.mxu0 0.0
      %4123 = vmatpush1.msra.mxu0 0.0
      %4124 = vmatprep.subr.mxu0 0.0
      %4125 = vmatpush1.msra.mxu0 0.0
      %4126 = vmatprep.subr.mxu0 0.0
      %4127 = vmatpush1.msra.mxu0 0.0
      %4128 = vmatprep.subr.mxu0 0.0
      %4129 = vmatpush1.msra.mxu0 0.0
      %4130 = vmatprep.subr.mxu0 0.0
      %4131 = vmatpush1.msra.mxu0 0.0
      %4132 = vmatprep.subr.mxu0 0.0
      %4133 = vmatpush1.msra.mxu0 0.0
      %4134 = vmatprep.subr.mxu0 0.0
      %4135 = vmatpush1.msra.mxu0 0.0
      %4136 = vmatprep.subr.mxu0 0.0
      %4137 = vmatpush1.msra.mxu0 0.0
      %4138 = vmatprep.subr.mxu0 0.0
      %4139 = vmatpush1.msra.mxu0 0.0
      %4140 = vmatprep.subr.mxu0 0.0
      %4141 = vmatpush1.msra.mxu0 0.0
      %4142 = vmatprep.subr.mxu0 0.0
      %4143 = vmatpush1.msra.mxu0 0.0
      %4144 = vmatprep.subr.mxu0 0.0
      %4145 = vmatpush1.msra.mxu0 0.0
      %4146 = vmatprep.subr.mxu0 0.0
      %4147 = vmatpush1.msra.mxu0 0.0
      %4148 = vmatprep.subr.mxu0 0.0
      %4149 = vmatpush1.msra.mxu0 0.0
      %4150 = vmatprep.subr.mxu0 0.0
      %4151 = vmatpush1.msra.mxu0 0.0
      %4152 = vmatprep.subr.mxu0 0.0
      %4153 = vmatpush1.msra.mxu0 0.0
      %4154 = vmatprep.subr.mxu0 0.0
      %4155 = vmatpush1.msra.mxu0 0.0
      %4156 = vmatprep.subr.mxu0 0.0
      %4157 = vmatpush1.msra.mxu0 0.0
      %4158 = vmatprep.subr.mxu0 0.0
      %4159 = vmatpush1.msra.mxu0 0.0
      %4160 = vmatprep.subr.mxu0 0.0
      %4161 = vmatpush1.msra.mxu0 0.0
      %4162 = vmatprep.subr.mxu0 0.0
      %4163 = vmatpush1.msra.mxu0 0.0
      %4164 = vmatprep.subr.mxu0 0.0
      %4165 = vmatpush1.msra.mxu0 0.0
      %4166 = vmatprep.subr.mxu0 0.0
      %4167 = vmatpush1.msra.mxu0 0.0
      %4168 = vmatprep.mubr.f32.mxu0 0.0
      %4169 = vmatmul.mubr.f32.gmra.mrb[0].mxu0 %v4102
      %v4170 = vpop.f32.mrb[0].mxu0
      %v4171 = vadd.f32 0.0, %v4170
      %v4172 = vpop.f32.mrb[0].mxu0
      %v4173 = vadd.f32 0.0, %v4172
      %4174 = vdwg.mxu0
      %4175 = vmatprep.subr.mxu0 %v4081
      %4176 = vmatpush1.msra.mxu0 %v4080
      %4177 = vmatprep.subr.mxu0 0.0
      %4178 = vmatpush1.msra.mxu0 0.0
      %4179 = vmatprep.subr.mxu0 0.0
      %4180 = vmatpush1.msra.mxu0 0.0
      %4181 = vmatprep.subr.mxu0 0.0
      %4182 = vmatpush1.msra.mxu0 0.0
      %4183 = vmatprep.subr.mxu0 0.0
      %4184 = vmatpush1.msra.mxu0 0.0
      %4185 = vmatprep.subr.mxu0 0.0
      %4186 = vmatpush1.msra.mxu0 0.0
      %4187 = vmatprep.subr.mxu0 0.0
      %4188 = vmatpush1.msra.mxu0 0.0
      %4189 = vmatprep.subr.mxu0 0.0
      %4190 = vmatpush1.msra.mxu0 0.0
      %4191 = vmatprep.subr.mxu0 0.0
      %4192 = vmatpush1.msra.mxu0 0.0
      %4193 = vmatprep.subr.mxu0 0.0
      %4194 = vmatpush1.msra.mxu0 0.0
      %4195 = vmatprep.subr.mxu0 0.0
      %4196 = vmatpush1.msra.mxu0 0.0
      %4197 = vmatprep.subr.mxu0 0.0
      %4198 = vmatpush1.msra.mxu0 0.0
      %4199 = vmatprep.subr.mxu0 0.0
      %4200 = vmatpush1.msra.mxu0 0.0
      %4201 = vmatprep.subr.mxu0 0.0
      %4202 = vmatpush1.msra.mxu0 0.0
      %4203 = vmatprep.subr.mxu0 0.0
      %4204 = vmatpush1.msra.mxu0 0.0
      %4205 = vmatprep.subr.mxu0 0.0
      %4206 = vmatpush1.msra.mxu0 0.0
      %4207 = vmatprep.subr.mxu0 0.0
      %4208 = vmatpush1.msra.mxu0 0.0
      %4209 = vmatprep.subr.mxu0 0.0
      %4210 = vmatpush1.msra.mxu0 0.0
      %4211 = vmatprep.subr.mxu0 0.0
      %4212 = vmatpush1.msra.mxu0 0.0
      %4213 = vmatprep.subr.mxu0 0.0
      %4214 = vmatpush1.msra.mxu0 0.0
      %4215 = vmatprep.subr.mxu0 0.0
      %4216 = vmatpush1.msra.mxu0 0.0
      %4217 = vmatprep.subr.mxu0 0.0
      %4218 = vmatpush1.msra.mxu0 0.0
      %4219 = vmatprep.subr.mxu0 0.0
      %4220 = vmatpush1.msra.mxu0 0.0
      %4221 = vmatprep.subr.mxu0 0.0
      %4222 = vmatpush1.msra.mxu0 0.0
      %4223 = vmatprep.subr.mxu0 0.0
      %4224 = vmatpush1.msra.mxu0 0.0
      %4225 = vmatprep.subr.mxu0 0.0
      %4226 = vmatpush1.msra.mxu0 0.0
      %4227 = vmatprep.subr.mxu0 0.0
      %4228 = vmatpush1.msra.mxu0 0.0
      %4229 = vmatprep.subr.mxu0 0.0
      %4230 = vmatpush1.msra.mxu0 0.0
      %4231 = vmatprep.subr.mxu0 0.0
      %4232 = vmatpush1.msra.mxu0 0.0
      %4233 = vmatprep.subr.mxu0 0.0
      %4234 = vmatpush1.msra.mxu0 0.0
      %4235 = vmatprep.subr.mxu0 0.0
      %4236 = vmatpush1.msra.mxu0 0.0
      %4237 = vmatprep.subr.mxu0 0.0
      %4238 = vmatpush1.msra.mxu0 0.0
      %4239 = vmatprep.mubr.f32.mxu0 0.0
      %4240 = vmatmul.mubr.f32.gmra.mrb[0].mxu0 %v4102
      %v4241 = vpop.f32.mrb[0].mxu0
      %v4242 = vadd.f32 0.0, %v4241
      %v4243 = vpop.f32.mrb[0].mxu0
      %v4244 = vadd.f32 0.0, %v4243
      %4245 = vdwg.mxu0
      %4246 = vmatprep.subr.mxu0 %v4083
      %4247 = vmatpush1.msra.mxu0 %v4082
      %4248 = vmatprep.subr.mxu0 0.0
      %4249 = vmatpush1.msra.mxu0 0.0
      %4250 = vmatprep.subr.mxu0 0.0
      %4251 = vmatpush1.msra.mxu0 0.0
      %4252 = vmatprep.subr.mxu0 0.0
      %4253 = vmatpush1.msra.mxu0 0.0
      %4254 = vmatprep.subr.mxu0 0.0
      %4255 = vmatpush1.msra.mxu0 0.0
      %4256 = vmatprep.subr.mxu0 0.0
      %4257 = vmatpush1.msra.mxu0 0.0
      %4258 = vmatprep.subr.mxu0 0.0
      %4259 = vmatpush1.msra.mxu0 0.0
      %4260 = vmatprep.subr.mxu0 0.0
      %4261 = vmatpush1.msra.mxu0 0.0
      %4262 = vmatprep.subr.mxu0 0.0
      %4263 = vmatpush1.msra.mxu0 0.0
      %4264 = vmatprep.subr.mxu0 0.0
      %4265 = vmatpush1.msra.mxu0 0.0
      %4266 = vmatprep.subr.mxu0 0.0
      %4267 = vmatpush1.msra.mxu0 0.0
      %4268 = vmatprep.subr.mxu0 0.0
      %4269 = vmatpush1.msra.mxu0 0.0
      %4270 = vmatprep.subr.mxu0 0.0
      %4271 = vmatpush1.msra.mxu0 0.0
      %4272 = vmatprep.subr.mxu0 0.0
      %4273 = vmatpush1.msra.mxu0 0.0
      %4274 = vmatprep.subr.mxu0 0.0
      %4275 = vmatpush1.msra.mxu0 0.0
      %4276 = vmatprep.subr.mxu0 0.0
      %4277 = vmatpush1.msra.mxu0 0.0
      %4278 = vmatprep.subr.mxu0 0.0
      %4279 = vmatpush1.msra.mxu0 0.0
      %4280 = vmatprep.subr.mxu0 0.0
      %4281 = vmatpush1.msra.mxu0 0.0
      %4282 = vmatprep.subr.mxu0 0.0
      %4283 = vmatpush1.msra.mxu0 0.0
      %4284 = vmatprep.subr.mxu0 0.0
      %4285 = vmatpush1.msra.mxu0 0.0
      %4286 = vmatprep.subr.mxu0 0.0
      %4287 = vmatpush1.msra.mxu0 0.0
      %4288 = vmatprep.subr.mxu0 0.0
      %4289 = vmatpush1.msra.mxu0 0.0
      %4290 = vmatprep.subr.mxu0 0.0
      %4291 = vmatpush1.msra.mxu0 0.0
      %4292 = vmatprep.subr.mxu0 0.0
      %4293 = vmatpush1.msra.mxu0 0.0
      %4294 = vmatprep.subr.mxu0 0.0
      %4295 = vmatpush1.msra.mxu0 0.0
      %4296 = vmatprep.subr.mxu0 0.0
      %4297 = vmatpush1.msra.mxu0 0.0
      %4298 = vmatprep.subr.mxu0 0.0
      %4299 = vmatpush1.msra.mxu0 0.0
      %4300 = vmatprep.subr.mxu0 0.0
      %4301 = vmatpush1.msra.mxu0 0.0
      %4302 = vmatprep.subr.mxu0 0.0
      %4303 = vmatpush1.msra.mxu0 0.0
      %4304 = vmatprep.subr.mxu0 0.0
      %4305 = vmatpush1.msra.mxu0 0.0
      %4306 = vmatprep.subr.mxu0 0.0
      %4307 = vmatpush1.msra.mxu0 0.0
      %4308 = vmatprep.subr.mxu0 0.0
      %4309 = vmatpush1.msra.mxu0 0.0
      %4310 = vmatprep.mubr.f32.mxu0 0.0
      %4311 = vmatmul.mubr.f32.gmra.mrb[0].mxu0 %v4102
      %v4312 = vpop.f32.mrb[0].mxu0
      %v4313 = vadd.f32 0.0, %v4312
      %v4314 = vpop.f32.mrb[0].mxu0
      %v4315 = vadd.f32 0.0, %v4314
      %4316 = vdwg.mxu0
      %4317 = vmatprep.subr.mxu0 %v4085
      %4318 = vmatpush1.msra.mxu0 %v4084
      %4319 = vmatprep.subr.mxu0 0.0
      %4320 = vmatpush1.msra.mxu0 0.0
      %4321 = vmatprep.subr.mxu0 0.0
      %4322 = vmatpush1.msra.mxu0 0.0
      %4323 = vmatprep.subr.mxu0 0.0
      %4324 = vmatpush1.msra.mxu0 0.0
      %4325 = vmatprep.subr.mxu0 0.0
      %4326 = vmatpush1.msra.mxu0 0.0
      %4327 = vmatprep.subr.mxu0 0.0
      %4328 = vmatpush1.msra.mxu0 0.0
      %4329 = vmatprep.subr.mxu0 0.0
      %4330 = vmatpush1.msra.mxu0 0.0
      %4331 = vmatprep.subr.mxu0 0.0
      %4332 = vmatpush1.msra.mxu0 0.0
      %4333 = vmatprep.subr.mxu0 0.0
      %4334 = vmatpush1.msra.mxu0 0.0
      %4335 = vmatprep.subr.mxu0 0.0
      %4336 = vmatpush1.msra.mxu0 0.0
      %4337 = vmatprep.subr.mxu0 0.0
      %4338 = vmatpush1.msra.mxu0 0.0
      %4339 = vmatprep.subr.mxu0 0.0
      %4340 = vmatpush1.msra.mxu0 0.0
      %4341 = vmatprep.subr.mxu0 0.0
      %4342 = vmatpush1.msra.mxu0 0.0
      %4343 = vmatprep.subr.mxu0 0.0
      %4344 = vmatpush1.msra.mxu0 0.0
      %4345 = vmatprep.subr.mxu0 0.0
      %4346 = vmatpush1.msra.mxu0 0.0
      %4347 = vmatprep.subr.mxu0 0.0
      %4348 = vmatpush1.msra.mxu0 0.0
      %4349 = vmatprep.subr.mxu0 0.0
      %4350 = vmatpush1.msra.mxu0 0.0
      %4351 = vmatprep.subr.mxu0 0.0
      %4352 = vmatpush1.msra.mxu0 0.0
      %4353 = vmatprep.subr.mxu0 0.0
      %4354 = vmatpush1.msra.mxu0 0.0
      %4355 = vmatprep.subr.mxu0 0.0
      %4356 = vmatpush1.msra.mxu0 0.0
      %4357 = vmatprep.subr.mxu0 0.0
      %4358 = vmatpush1.msra.mxu0 0.0
      %4359 = vmatprep.subr.mxu0 0.0
      %4360 = vmatpush1.msra.mxu0 0.0
      %4361 = vmatprep.subr.mxu0 0.0
      %4362 = vmatpush1.msra.mxu0 0.0
      %4363 = vmatprep.subr.mxu0 0.0
      %4364 = vmatpush1.msra.mxu0 0.0
      %4365 = vmatprep.subr.mxu0 0.0
      %4366 = vmatpush1.msra.mxu0 0.0
      %4367 = vmatprep.subr.mxu0 0.0
      %4368 = vmatpush1.msra.mxu0 0.0
      %4369 = vmatprep.subr.mxu0 0.0
      %4370 = vmatpush1.msra.mxu0 0.0
      %4371 = vmatprep.subr.mxu0 0.0
      %4372 = vmatpush1.msra.mxu0 0.0
      %4373 = vmatprep.subr.mxu0 0.0
      %4374 = vmatpush1.msra.mxu0 0.0
      %4375 = vmatprep.subr.mxu0 0.0
      %4376 = vmatpush1.msra.mxu0 0.0
      %4377 = vmatprep.subr.mxu0 0.0
      %4378 = vmatpush1.msra.mxu0 0.0
      %4379 = vmatprep.subr.mxu0 0.0
      %4380 = vmatpush1.msra.mxu0 0.0
      %4381 = vmatprep.mubr.f32.mxu0 0.0
      %4382 = vmatmul.mubr.f32.gmra.mrb[0].mxu0 %v4102
      %v4383 = vpop.f32.mrb[0].mxu0
      %v4384 = vadd.f32 0.0, %v4383
      %v4385 = vpop.f32.mrb[0].mxu0
      %v4386 = vadd.f32 0.0, %v4385
      %4387 = vdwg.mxu0
      %4388 = vmatprep.subr.mxu0 %v4087
      %4389 = vmatpush1.msra.mxu0 %v4086
      %4390 = vmatprep.subr.mxu0 0.0
      %4391 = vmatpush1.msra.mxu0 0.0
      %4392 = vmatprep.subr.mxu0 0.0
      %4393 = vmatpush1.msra.mxu0 0.0
      %4394 = vmatprep.subr.mxu0 0.0
      %4395 = vmatpush1.msra.mxu0 0.0
      %4396 = vmatprep.subr.mxu0 0.0
      %4397 = vmatpush1.msra.mxu0 0.0
      %4398 = vmatprep.subr.mxu0 0.0
      %4399 = vmatpush1.msra.mxu0 0.0
      %4400 = vmatprep.subr.mxu0 0.0
      %4401 = vmatpush1.msra.mxu0 0.0
      %4402 = vmatprep.subr.mxu0 0.0
      %4403 = vmatpush1.msra.mxu0 0.0
      %4404 = vmatprep.subr.mxu0 0.0
      %4405 = vmatpush1.msra.mxu0 0.0
      %4406 = vmatprep.subr.mxu0 0.0
      %4407 = vmatpush1.msra.mxu0 0.0
      %4408 = vmatprep.subr.mxu0 0.0
      %4409 = vmatpush1.msra.mxu0 0.0
      %4410 = vmatprep.subr.mxu0 0.0
      %4411 = vmatpush1.msra.mxu0 0.0
      %4412 = vmatprep.subr.mxu0 0.0
      %4413 = vmatpush1.msra.mxu0 0.0
      %4414 = vmatprep.subr.mxu0 0.0
      %4415 = vmatpush1.msra.mxu0 0.0
      %4416 = vmatprep.subr.mxu0 0.0
      %4417 = vmatpush1.msra.mxu0 0.0
      %4418 = vmatprep.subr.mxu0 0.0
      %4419 = vmatpush1.msra.mxu0 0.0
      %4420 = vmatprep.subr.mxu0 0.0
      %4421 = vmatpush1.msra.mxu0 0.0
      %4422 = vmatprep.subr.mxu0 0.0
      %4423 = vmatpush1.msra.mxu0 0.0
      %4424 = vmatprep.subr.mxu0 0.0
      %4425 = vmatpush1.msra.mxu0 0.0
      %4426 = vmatprep.subr.mxu0 0.0
      %4427 = vmatpush1.msra.mxu0 0.0
      %4428 = vmatprep.subr.mxu0 0.0
      %4429 = vmatpush1.msra.mxu0 0.0
      %4430 = vmatprep.subr.mxu0 0.0
      %4431 = vmatpush1.msra.mxu0 0.0
      %4432 = vmatprep.subr.mxu0 0.0
      %4433 = vmatpush1.msra.mxu0 0.0
      %4434 = vmatprep.subr.mxu0 0.0
      %4435 = vmatpush1.msra.mxu0 0.0
      %4436 = vmatprep.subr.mxu0 0.0
      %4437 = vmatpush1.msra.mxu0 0.0
      %4438 = vmatprep.subr.mxu0 0.0
      %4439 = vmatpush1.msra.mxu0 0.0
      %4440 = vmatprep.subr.mxu0 0.0
      %4441 = vmatpush1.msra.mxu0 0.0
      %4442 = vmatprep.subr.mxu0 0.0
      %4443 = vmatpush1.msra.mxu0 0.0
      %4444 = vmatprep.subr.mxu0 0.0
      %4445 = vmatpush1.msra.mxu0 0.0
      %4446 = vmatprep.subr.mxu0 0.0
      %4447 = vmatpush1.msra.mxu0 0.0
      %4448 = vmatprep.subr.mxu0 0.0
      %4449 = vmatpush1.msra.mxu0 0.0
      %4450 = vmatprep.subr.mxu0 0.0
      %4451 = vmatpush1.msra.mxu0 0.0
      %4452 = vmatprep.mubr.f32.mxu0 0.0
      %4453 = vmatmul.mubr.f32.gmra.mrb[0].mxu0 %v4102
      %v4454 = vpop.f32.mrb[0].mxu0
      %v4455 = vadd.f32 0.0, %v4454
      %v4456 = vpop.f32.mrb[0].mxu0
      %v4457 = vadd.f32 0.0, %v4456
      %4458 = vdwg.mxu0
      %4459 = vmatprep.subr.mxu0 %v4076
      %4460 = vmatpush1.msra.mxu0 %v4088
      %4461 = vmatprep.subr.mxu0 0.0
      %4462 = vmatpush1.msra.mxu0 0.0
      %4463 = vmatprep.subr.mxu0 0.0
      %4464 = vmatpush1.msra.mxu0 0.0
      %4465 = vmatprep.subr.mxu0 0.0
      %4466 = vmatpush1.msra.mxu0 0.0
      %4467 = vmatprep.subr.mxu0 0.0
      %4468 = vmatpush1.msra.mxu0 0.0
      %4469 = vmatprep.subr.mxu0 0.0
      %4470 = vmatpush1.msra.mxu0 0.0
      %4471 = vmatprep.subr.mxu0 0.0
      %4472 = vmatpush1.msra.mxu0 0.0
      %4473 = vmatprep.subr.mxu0 0.0
      %4474 = vmatpush1.msra.mxu0 0.0
      %4475 = vmatprep.subr.mxu0 0.0
      %4476 = vmatpush1.msra.mxu0 0.0
      %4477 = vmatprep.subr.mxu0 0.0
      %4478 = vmatpush1.msra.mxu0 0.0
      %4479 = vmatprep.subr.mxu0 0.0
      %4480 = vmatpush1.msra.mxu0 0.0
      %4481 = vmatprep.subr.mxu0 0.0
      %4482 = vmatpush1.msra.mxu0 0.0
      %4483 = vmatprep.subr.mxu0 0.0
      %4484 = vmatpush1.msra.mxu0 0.0
      %4485 = vmatprep.subr.mxu0 0.0
      %4486 = vmatpush1.msra.mxu0 0.0
      %4487 = vmatprep.subr.mxu0 0.0
      %4488 = vmatpush1.msra.mxu0 0.0
      %4489 = vmatprep.subr.mxu0 0.0
      %4490 = vmatpush1.msra.mxu0 0.0
      %4491 = vmatprep.subr.mxu0 0.0
      %4492 = vmatpush1.msra.mxu0 0.0
      %4493 = vmatprep.subr.mxu0 0.0
      %4494 = vmatpush1.msra.mxu0 0.0
      %4495 = vmatprep.subr.mxu0 0.0
      %4496 = vmatpush1.msra.mxu0 0.0
      %4497 = vmatprep.subr.mxu0 0.0
      %4498 = vmatpush1.msra.mxu0 0.0
      %4499 = vmatprep.subr.mxu0 0.0
      %4500 = vmatpush1.msra.mxu0 0.0
      %4501 = vmatprep.subr.mxu0 0.0
      %4502 = vmatpush1.msra.mxu0 0.0
      %4503 = vmatprep.subr.mxu0 0.0
      %4504 = vmatpush1.msra.mxu0 0.0
      %4505 = vmatprep.subr.mxu0 0.0
      %4506 = vmatpush1.msra.mxu0 0.0
      %4507 = vmatprep.subr.mxu0 0.0
      %4508 = vmatpush1.msra.mxu0 0.0
      %4509 = vmatprep.subr.mxu0 0.0
      %4510 = vmatpush1.msra.mxu0 0.0
      %4511 = vmatprep.subr.mxu0 0.0
      %4512 = vmatpush1.msra.mxu0 0.0
      %4513 = vmatprep.subr.mxu0 0.0
      %4514 = vmatpush1.msra.mxu0 0.0
      %4515 = vmatprep.subr.mxu0 0.0
      %4516 = vmatpush1.msra.mxu0 0.0
      %4517 = vmatprep.subr.mxu0 0.0
      %4518 = vmatpush1.msra.mxu0 0.0
      %4519 = vmatprep.subr.mxu0 0.0
      %4520 = vmatpush1.msra.mxu0 0.0
      %4521 = vmatprep.subr.mxu0 0.0
      %4522 = vmatpush1.msra.mxu0 0.0
      %4523 = vmatprep.mubr.f32.mxu0 0.0
      %4524 = vmatmul.mubr.f32.gmra.mrb[0].mxu0 %v4102
      %v4525 = vpop.f32.mrb[0].mxu0
      %v4526 = vadd.f32 0.0, %v4525
      %v4527 = vpop.f32.mrb[0].mxu0
      %v4528 = vadd.f32 0.0, %v4527
      %4529 = vdwg.mxu0
      %v4530 = vadd.f32 %v4039, %v4171
      %v4531 = vadd.f32 %v4040, %v4173
      %v4532 = vadd.f32 %v4041, %v4242
      %v4533 = vadd.f32 %v4042, %v4244
      %v4534 = vadd.f32 %v4043, %v4313
      %v4535 = vadd.f32 %v4044, %v4315
      %v4536 = vadd.f32 %v4045, %v4384
      %v4537 = vadd.f32 %v4046, %v4386
      %v4538 = vadd.f32 %v4047, %v4455
      %v4539 = vadd.f32 %v4048, %v4457
      %v4540 = vadd.f32 %v4049, %v4526
      %v4541 = vadd.f32 %v4050, %v4528
      %s4542 = scalar_lea.vmem %s2, 32
      %v4543 = vld [vmem:[%s4542] sm:$0xf]
      %4544 = vrot.lane.b32.xlu0 %v3537, 104
      %v4545 = vpop.permute.xlu0 %4544
      %4546 = vrot.lane.b32.xlu0 %v3538, 104
      %v4547 = vpop.permute.xlu0 %4546
      %4548 = vrot.lane.b32.xlu0 %v3539, 104
      %v4549 = vpop.permute.xlu0 %4548
      %4550 = vrot.lane.b32.xlu0 %v3540, 104
      %v4551 = vpop.permute.xlu0 %4550
      %4552 = vrot.lane.b32.xlu0 %v3541, 104
      %v4553 = vpop.permute.xlu0 %4552
      %4554 = vrot.lane.b32.xlu0 %v3542, 104
      %v4555 = vpop.permute.xlu0 %4554
      %4556 = vrot.lane.b32.xlu0 %v3543, 104
      %v4557 = vpop.permute.xlu0 %4556
      %4558 = vrot.lane.b32.xlu0 %v3544, 104
      %v4559 = vpop.permute.xlu0 %4558
      %4560 = vrot.lane.b32.xlu0 %v3545, 104
      %v4561 = vpop.permute.xlu0 %4560
      %4562 = vrot.lane.b32.xlu0 %v3546, 104
      %v4563 = vpop.permute.xlu0 %4562
      %4564 = vrot.lane.b32.xlu0 %v3547, 104
      %v4565 = vpop.permute.xlu0 %4564
      %4566 = vrot.lane.b32.xlu0 %v3548, 104
      %v4567 = vpop.permute.xlu0 %4566
      %vm4568 = vcmask 850944
      %v4569 = vsel %vm4568, %v4545, %v4547
      %v4570 = vsel %vm4568, %v4547, %v4549
      %v4571 = vsel %vm4568, %v4549, %v4551
      %v4572 = vsel %vm4568, %v4551, %v4553
      %v4573 = vsel %vm4568, %v4553, %v4555
      %v4574 = vsel %vm4568, %v4555, %v4557
      %v4575 = vsel %vm4568, %v4557, %v4559
      %v4576 = vsel %vm4568, %v4559, %v4561
      %v4577 = vsel %vm4568, %v4561, %v4563
      %v4578 = vsel %vm4568, %v4563, %v4565
      %v4579 = vsel %vm4568, %v4565, %v4567
      %v4593 = vsel %vm681, %v4543, 0
      %4595 = vmatprep.subr.mxu0 %v4570
      %4596 = vmatpush1.msra.mxu0 %v4569
      %4597 = vmatprep.subr.mxu0 0.0
      %4598 = vmatpush1.msra.mxu0 0.0
      %4599 = vmatprep.subr.mxu0 0.0
      %4600 = vmatpush1.msra.mxu0 0.0
      %4601 = vmatprep.subr.mxu0 0.0
      %4602 = vmatpush1.msra.mxu0 0.0
      %4603 = vmatprep.subr.mxu0 0.0
      %4604 = vmatpush1.msra.mxu0 0.0
      %4605 = vmatprep.subr.mxu0 0.0
      %4606 = vmatpush1.msra.mxu0 0.0
      %4607 = vmatprep.subr.mxu0 0.0
      %4608 = vmatpush1.msra.mxu0 0.0
      %4609 = vmatprep.subr.mxu0 0.0
      %4610 = vmatpush1.msra.mxu0 0.0
      %4611 = vmatprep.subr.mxu0 0.0
      %4612 = vmatpush1.msra.mxu0 0.0
      %4613 = vmatprep.subr.mxu0 0.0
      %4614 = vmatpush1.msra.mxu0 0.0
      %4615 = vmatprep.subr.mxu0 0.0
      %4616 = vmatpush1.msra.mxu0 0.0
      %4617 = vmatprep.subr.mxu0 0.0
      %4618 = vmatpush1.msra.mxu0 0.0
      %4619 = vmatprep.subr.mxu0 0.0
      %4620 = vmatpush1.msra.mxu0 0.0
      %4621 = vmatprep.subr.mxu0 0.0
      %4622 = vmatpush1.msra.mxu0 0.0
      %4623 = vmatprep.subr.mxu0 0.0
      %4624 = vmatpush1.msra.mxu0 0.0
      %4625 = vmatprep.subr.mxu0 0.0
      %4626 = vmatpush1.msra.mxu0 0.0
      %4627 = vmatprep.subr.mxu0 0.0
      %4628 = vmatpush1.msra.mxu0 0.0
      %4629 = vmatprep.subr.mxu0 0.0
      %4630 = vmatpush1.msra.mxu0 0.0
      %4631 = vmatprep.subr.mxu0 0.0
      %4632 = vmatpush1.msra.mxu0 0.0
      %4633 = vmatprep.subr.mxu0 0.0
      %4634 = vmatpush1.msra.mxu0 0.0
      %4635 = vmatprep.subr.mxu0 0.0
      %4636 = vmatpush1.msra.mxu0 0.0
      %4637 = vmatprep.subr.mxu0 0.0
      %4638 = vmatpush1.msra.mxu0 0.0
      %4639 = vmatprep.subr.mxu0 0.0
      %4640 = vmatpush1.msra.mxu0 0.0
      %4641 = vmatprep.subr.mxu0 0.0
      %4642 = vmatpush1.msra.mxu0 0.0
      %4643 = vmatprep.subr.mxu0 0.0
      %4644 = vmatpush1.msra.mxu0 0.0
      %4645 = vmatprep.subr.mxu0 0.0
      %4646 = vmatpush1.msra.mxu0 0.0
      %4647 = vmatprep.subr.mxu0 0.0
      %4648 = vmatpush1.msra.mxu0 0.0
      %4649 = vmatprep.subr.mxu0 0.0
      %4650 = vmatpush1.msra.mxu0 0.0
      %4651 = vmatprep.subr.mxu0 0.0
      %4652 = vmatpush1.msra.mxu0 0.0
      %4653 = vmatprep.subr.mxu0 0.0
      %4654 = vmatpush1.msra.mxu0 0.0
      %4655 = vmatprep.subr.mxu0 0.0
      %4656 = vmatpush1.msra.mxu0 0.0
      %4657 = vmatprep.subr.mxu0 0.0
      %4658 = vmatpush1.msra.mxu0 0.0
      %4659 = vmatprep.mubr.f32.mxu0 0.0
      %4660 = vmatmul.mubr.f32.gmra.mrb[0].mxu0 %v4593
      %v4661 = vpop.f32.mrb[0].mxu0
      %v4662 = vadd.f32 0.0, %v4661
      %v4663 = vpop.f32.mrb[0].mxu0
      %v4664 = vadd.f32 0.0, %v4663
      %4665 = vdwg.mxu0
      %4666 = vmatprep.subr.mxu0 %v4572
      %4667 = vmatpush1.msra.mxu0 %v4571
      %4668 = vmatprep.subr.mxu0 0.0
      %4669 = vmatpush1.msra.mxu0 0.0
      %4670 = vmatprep.subr.mxu0 0.0
      %4671 = vmatpush1.msra.mxu0 0.0
      %4672 = vmatprep.subr.mxu0 0.0
      %4673 = vmatpush1.msra.mxu0 0.0
      %4674 = vmatprep.subr.mxu0 0.0
      %4675 = vmatpush1.msra.mxu0 0.0
      %4676 = vmatprep.subr.mxu0 0.0
      %4677 = vmatpush1.msra.mxu0 0.0
      %4678 = vmatprep.subr.mxu0 0.0
      %4679 = vmatpush1.msra.mxu0 0.0
      %4680 = vmatprep.subr.mxu0 0.0
      %4681 = vmatpush1.msra.mxu0 0.0
      %4682 = vmatprep.subr.mxu0 0.0
      %4683 = vmatpush1.msra.mxu0 0.0
      %4684 = vmatprep.subr.mxu0 0.0
      %4685 = vmatpush1.msra.mxu0 0.0
      %4686 = vmatprep.subr.mxu0 0.0
      %4687 = vmatpush1.msra.mxu0 0.0
      %4688 = vmatprep.subr.mxu0 0.0
      %4689 = vmatpush1.msra.mxu0 0.0
      %4690 = vmatprep.subr.mxu0 0.0
      %4691 = vmatpush1.msra.mxu0 0.0
      %4692 = vmatprep.subr.mxu0 0.0
      %4693 = vmatpush1.msra.mxu0 0.0
      %4694 = vmatprep.subr.mxu0 0.0
      %4695 = vmatpush1.msra.mxu0 0.0
      %4696 = vmatprep.subr.mxu0 0.0
      %4697 = vmatpush1.msra.mxu0 0.0
      %4698 = vmatprep.subr.mxu0 0.0
      %4699 = vmatpush1.msra.mxu0 0.0
      %4700 = vmatprep.subr.mxu0 0.0
      %4701 = vmatpush1.msra.mxu0 0.0
      %4702 = vmatprep.subr.mxu0 0.0
      %4703 = vmatpush1.msra.mxu0 0.0
      %4704 = vmatprep.subr.mxu0 0.0
      %4705 = vmatpush1.msra.mxu0 0.0
      %4706 = vmatprep.subr.mxu0 0.0
      %4707 = vmatpush1.msra.mxu0 0.0
      %4708 = vmatprep.subr.mxu0 0.0
      %4709 = vmatpush1.msra.mxu0 0.0
      %4710 = vmatprep.subr.mxu0 0.0
      %4711 = vmatpush1.msra.mxu0 0.0
      %4712 = vmatprep.subr.mxu0 0.0
      %4713 = vmatpush1.msra.mxu0 0.0
      %4714 = vmatprep.subr.mxu0 0.0
      %4715 = vmatpush1.msra.mxu0 0.0
      %4716 = vmatprep.subr.mxu0 0.0
      %4717 = vmatpush1.msra.mxu0 0.0
      %4718 = vmatprep.subr.mxu0 0.0
      %4719 = vmatpush1.msra.mxu0 0.0
      %4720 = vmatprep.subr.mxu0 0.0
      %4721 = vmatpush1.msra.mxu0 0.0
      %4722 = vmatprep.subr.mxu0 0.0
      %4723 = vmatpush1.msra.mxu0 0.0
      %4724 = vmatprep.subr.mxu0 0.0
      %4725 = vmatpush1.msra.mxu0 0.0
      %4726 = vmatprep.subr.mxu0 0.0
      %4727 = vmatpush1.msra.mxu0 0.0
      %4728 = vmatprep.subr.mxu0 0.0
      %4729 = vmatpush1.msra.mxu0 0.0
      %4730 = vmatprep.mubr.f32.mxu0 0.0
      %4731 = vmatmul.mubr.f32.gmra.mrb[0].mxu0 %v4593
      %v4732 = vpop.f32.mrb[0].mxu0
      %v4733 = vadd.f32 0.0, %v4732
      %v4734 = vpop.f32.mrb[0].mxu0
      %v4735 = vadd.f32 0.0, %v4734
      %4736 = vdwg.mxu0
      %4737 = vmatprep.subr.mxu0 %v4574
      %4738 = vmatpush1.msra.mxu0 %v4573
      %4739 = vmatprep.subr.mxu0 0.0
      %4740 = vmatpush1.msra.mxu0 0.0
      %4741 = vmatprep.subr.mxu0 0.0
      %4742 = vmatpush1.msra.mxu0 0.0
      %4743 = vmatprep.subr.mxu0 0.0
      %4744 = vmatpush1.msra.mxu0 0.0
      %4745 = vmatprep.subr.mxu0 0.0
      %4746 = vmatpush1.msra.mxu0 0.0
      %4747 = vmatprep.subr.mxu0 0.0
      %4748 = vmatpush1.msra.mxu0 0.0
      %4749 = vmatprep.subr.mxu0 0.0
      %4750 = vmatpush1.msra.mxu0 0.0
      %4751 = vmatprep.subr.mxu0 0.0
      %4752 = vmatpush1.msra.mxu0 0.0
      %4753 = vmatprep.subr.mxu0 0.0
      %4754 = vmatpush1.msra.mxu0 0.0
      %4755 = vmatprep.subr.mxu0 0.0
      %4756 = vmatpush1.msra.mxu0 0.0
      %4757 = vmatprep.subr.mxu0 0.0
      %4758 = vmatpush1.msra.mxu0 0.0
      %4759 = vmatprep.subr.mxu0 0.0
      %4760 = vmatpush1.msra.mxu0 0.0
      %4761 = vmatprep.subr.mxu0 0.0
      %4762 = vmatpush1.msra.mxu0 0.0
      %4763 = vmatprep.subr.mxu0 0.0
      %4764 = vmatpush1.msra.mxu0 0.0
      %4765 = vmatprep.subr.mxu0 0.0
      %4766 = vmatpush1.msra.mxu0 0.0
      %4767 = vmatprep.subr.mxu0 0.0
      %4768 = vmatpush1.msra.mxu0 0.0
      %4769 = vmatprep.subr.mxu0 0.0
      %4770 = vmatpush1.msra.mxu0 0.0
      %4771 = vmatprep.subr.mxu0 0.0
      %4772 = vmatpush1.msra.mxu0 0.0
      %4773 = vmatprep.subr.mxu0 0.0
      %4774 = vmatpush1.msra.mxu0 0.0
      %4775 = vmatprep.subr.mxu0 0.0
      %4776 = vmatpush1.msra.mxu0 0.0
      %4777 = vmatprep.subr.mxu0 0.0
      %4778 = vmatpush1.msra.mxu0 0.0
      %4779 = vmatprep.subr.mxu0 0.0
      %4780 = vmatpush1.msra.mxu0 0.0
      %4781 = vmatprep.subr.mxu0 0.0
      %4782 = vmatpush1.msra.mxu0 0.0
      %4783 = vmatprep.subr.mxu0 0.0
      %4784 = vmatpush1.msra.mxu0 0.0
      %4785 = vmatprep.subr.mxu0 0.0
      %4786 = vmatpush1.msra.mxu0 0.0
      %4787 = vmatprep.subr.mxu0 0.0
      %4788 = vmatpush1.msra.mxu0 0.0
      %4789 = vmatprep.subr.mxu0 0.0
      %4790 = vmatpush1.msra.mxu0 0.0
      %4791 = vmatprep.subr.mxu0 0.0
      %4792 = vmatpush1.msra.mxu0 0.0
      %4793 = vmatprep.subr.mxu0 0.0
      %4794 = vmatpush1.msra.mxu0 0.0
      %4795 = vmatprep.subr.mxu0 0.0
      %4796 = vmatpush1.msra.mxu0 0.0
      %4797 = vmatprep.subr.mxu0 0.0
      %4798 = vmatpush1.msra.mxu0 0.0
      %4799 = vmatprep.subr.mxu0 0.0
      %4800 = vmatpush1.msra.mxu0 0.0
      %4801 = vmatprep.mubr.f32.mxu0 0.0
      %4802 = vmatmul.mubr.f32.gmra.mrb[0].mxu0 %v4593
      %v4803 = vpop.f32.mrb[0].mxu0
      %v4804 = vadd.f32 0.0, %v4803
      %v4805 = vpop.f32.mrb[0].mxu0
      %v4806 = vadd.f32 0.0, %v4805
      %4807 = vdwg.mxu0
      %4808 = vmatprep.subr.mxu0 %v4576
      %4809 = vmatpush1.msra.mxu0 %v4575
      %4810 = vmatprep.subr.mxu0 0.0
      %4811 = vmatpush1.msra.mxu0 0.0
      %4812 = vmatprep.subr.mxu0 0.0
      %4813 = vmatpush1.msra.mxu0 0.0
      %4814 = vmatprep.subr.mxu0 0.0
      %4815 = vmatpush1.msra.mxu0 0.0
      %4816 = vmatprep.subr.mxu0 0.0
      %4817 = vmatpush1.msra.mxu0 0.0
      %4818 = vmatprep.subr.mxu0 0.0
      %4819 = vmatpush1.msra.mxu0 0.0
      %4820 = vmatprep.subr.mxu0 0.0
      %4821 = vmatpush1.msra.mxu0 0.0
      %4822 = vmatprep.subr.mxu0 0.0
      %4823 = vmatpush1.msra.mxu0 0.0
      %4824 = vmatprep.subr.mxu0 0.0
      %4825 = vmatpush1.msra.mxu0 0.0
      %4826 = vmatprep.subr.mxu0 0.0
      %4827 = vmatpush1.msra.mxu0 0.0
      %4828 = vmatprep.subr.mxu0 0.0
      %4829 = vmatpush1.msra.mxu0 0.0
      %4830 = vmatprep.subr.mxu0 0.0
      %4831 = vmatpush1.msra.mxu0 0.0
      %4832 = vmatprep.subr.mxu0 0.0
      %4833 = vmatpush1.msra.mxu0 0.0
      %4834 = vmatprep.subr.mxu0 0.0
      %4835 = vmatpush1.msra.mxu0 0.0
      %4836 = vmatprep.subr.mxu0 0.0
      %4837 = vmatpush1.msra.mxu0 0.0
      %4838 = vmatprep.subr.mxu0 0.0
      %4839 = vmatpush1.msra.mxu0 0.0
      %4840 = vmatprep.subr.mxu0 0.0
      %4841 = vmatpush1.msra.mxu0 0.0
      %4842 = vmatprep.subr.mxu0 0.0
      %4843 = vmatpush1.msra.mxu0 0.0
      %4844 = vmatprep.subr.mxu0 0.0
      %4845 = vmatpush1.msra.mxu0 0.0
      %4846 = vmatprep.subr.mxu0 0.0
      %4847 = vmatpush1.msra.mxu0 0.0
      %4848 = vmatprep.subr.mxu0 0.0
      %4849 = vmatpush1.msra.mxu0 0.0
      %4850 = vmatprep.subr.mxu0 0.0
      %4851 = vmatpush1.msra.mxu0 0.0
      %4852 = vmatprep.subr.mxu0 0.0
      %4853 = vmatpush1.msra.mxu0 0.0
      %4854 = vmatprep.subr.mxu0 0.0
      %4855 = vmatpush1.msra.mxu0 0.0
      %4856 = vmatprep.subr.mxu0 0.0
      %4857 = vmatpush1.msra.mxu0 0.0
      %4858 = vmatprep.subr.mxu0 0.0
      %4859 = vmatpush1.msra.mxu0 0.0
      %4860 = vmatprep.subr.mxu0 0.0
      %4861 = vmatpush1.msra.mxu0 0.0
      %4862 = vmatprep.subr.mxu0 0.0
      %4863 = vmatpush1.msra.mxu0 0.0
      %4864 = vmatprep.subr.mxu0 0.0
      %4865 = vmatpush1.msra.mxu0 0.0
      %4866 = vmatprep.subr.mxu0 0.0
      %4867 = vmatpush1.msra.mxu0 0.0
      %4868 = vmatprep.subr.mxu0 0.0
      %4869 = vmatpush1.msra.mxu0 0.0
      %4870 = vmatprep.subr.mxu0 0.0
      %4871 = vmatpush1.msra.mxu0 0.0
      %4872 = vmatprep.mubr.f32.mxu0 0.0
      %4873 = vmatmul.mubr.f32.gmra.mrb[0].mxu0 %v4593
      %v4874 = vpop.f32.mrb[0].mxu0
      %v4875 = vadd.f32 0.0, %v4874
      %v4876 = vpop.f32.mrb[0].mxu0
      %v4877 = vadd.f32 0.0, %v4876
      %4878 = vdwg.mxu0
      %4879 = vmatprep.subr.mxu0 %v4578
      %4880 = vmatpush1.msra.mxu0 %v4577
      %4881 = vmatprep.subr.mxu0 0.0
      %4882 = vmatpush1.msra.mxu0 0.0
      %4883 = vmatprep.subr.mxu0 0.0
      %4884 = vmatpush1.msra.mxu0 0.0
      %4885 = vmatprep.subr.mxu0 0.0
      %4886 = vmatpush1.msra.mxu0 0.0
      %4887 = vmatprep.subr.mxu0 0.0
      %4888 = vmatpush1.msra.mxu0 0.0
      %4889 = vmatprep.subr.mxu0 0.0
      %4890 = vmatpush1.msra.mxu0 0.0
      %4891 = vmatprep.subr.mxu0 0.0
      %4892 = vmatpush1.msra.mxu0 0.0
      %4893 = vmatprep.subr.mxu0 0.0
      %4894 = vmatpush1.msra.mxu0 0.0
      %4895 = vmatprep.subr.mxu0 0.0
      %4896 = vmatpush1.msra.mxu0 0.0
      %4897 = vmatprep.subr.mxu0 0.0
      %4898 = vmatpush1.msra.mxu0 0.0
      %4899 = vmatprep.subr.mxu0 0.0
      %4900 = vmatpush1.msra.mxu0 0.0
      %4901 = vmatprep.subr.mxu0 0.0
      %4902 = vmatpush1.msra.mxu0 0.0
      %4903 = vmatprep.subr.mxu0 0.0
      %4904 = vmatpush1.msra.mxu0 0.0
      %4905 = vmatprep.subr.mxu0 0.0
      %4906 = vmatpush1.msra.mxu0 0.0
      %4907 = vmatprep.subr.mxu0 0.0
      %4908 = vmatpush1.msra.mxu0 0.0
      %4909 = vmatprep.subr.mxu0 0.0
      %4910 = vmatpush1.msra.mxu0 0.0
      %4911 = vmatprep.subr.mxu0 0.0
      %4912 = vmatpush1.msra.mxu0 0.0
      %4913 = vmatprep.subr.mxu0 0.0
      %4914 = vmatpush1.msra.mxu0 0.0
      %4915 = vmatprep.subr.mxu0 0.0
      %4916 = vmatpush1.msra.mxu0 0.0
      %4917 = vmatprep.subr.mxu0 0.0
      %4918 = vmatpush1.msra.mxu0 0.0
      %4919 = vmatprep.subr.mxu0 0.0
      %4920 = vmatpush1.msra.mxu0 0.0
      %4921 = vmatprep.subr.mxu0 0.0
      %4922 = vmatpush1.msra.mxu0 0.0
      %4923 = vmatprep.subr.mxu0 0.0
      %4924 = vmatpush1.msra.mxu0 0.0
      %4925 = vmatprep.subr.mxu0 0.0
      %4926 = vmatpush1.msra.mxu0 0.0
      %4927 = vmatprep.subr.mxu0 0.0
      %4928 = vmatpush1.msra.mxu0 0.0
      %4929 = vmatprep.subr.mxu0 0.0
      %4930 = vmatpush1.msra.mxu0 0.0
      %4931 = vmatprep.subr.mxu0 0.0
      %4932 = vmatpush1.msra.mxu0 0.0
      %4933 = vmatprep.subr.mxu0 0.0
      %4934 = vmatpush1.msra.mxu0 0.0
      %4935 = vmatprep.subr.mxu0 0.0
      %4936 = vmatpush1.msra.mxu0 0.0
      %4937 = vmatprep.subr.mxu0 0.0
      %4938 = vmatpush1.msra.mxu0 0.0
      %4939 = vmatprep.subr.mxu0 0.0
      %4940 = vmatpush1.msra.mxu0 0.0
      %4941 = vmatprep.subr.mxu0 0.0
      %4942 = vmatpush1.msra.mxu0 0.0
      %4943 = vmatprep.mubr.f32.mxu0 0.0
      %4944 = vmatmul.mubr.f32.gmra.mrb[0].mxu0 %v4593
      %v4945 = vpop.f32.mrb[0].mxu0
      %v4946 = vadd.f32 0.0, %v4945
      %v4947 = vpop.f32.mrb[0].mxu0
      %v4948 = vadd.f32 0.0, %v4947
      %4949 = vdwg.mxu0
      %4950 = vmatprep.subr.mxu0 %v4567
      %4951 = vmatpush1.msra.mxu0 %v4579
      %4952 = vmatprep.subr.mxu0 0.0
      %4953 = vmatpush1.msra.mxu0 0.0
      %4954 = vmatprep.subr.mxu0 0.0
      %4955 = vmatpush1.msra.mxu0 0.0
      %4956 = vmatprep.subr.mxu0 0.0
      %4957 = vmatpush1.msra.mxu0 0.0
      %4958 = vmatprep.subr.mxu0 0.0
      %4959 = vmatpush1.msra.mxu0 0.0
      %4960 = vmatprep.subr.mxu0 0.0
      %4961 = vmatpush1.msra.mxu0 0.0
      %4962 = vmatprep.subr.mxu0 0.0
      %4963 = vmatpush1.msra.mxu0 0.0
      %4964 = vmatprep.subr.mxu0 0.0
      %4965 = vmatpush1.msra.mxu0 0.0
      %4966 = vmatprep.subr.mxu0 0.0
      %4967 = vmatpush1.msra.mxu0 0.0
      %4968 = vmatprep.subr.mxu0 0.0
      %4969 = vmatpush1.msra.mxu0 0.0
      %4970 = vmatprep.subr.mxu0 0.0
      %4971 = vmatpush1.msra.mxu0 0.0
      %4972 = vmatprep.subr.mxu0 0.0
      %4973 = vmatpush1.msra.mxu0 0.0
      %4974 = vmatprep.subr.mxu0 0.0
      %4975 = vmatpush1.msra.mxu0 0.0
      %4976 = vmatprep.subr.mxu0 0.0
      %4977 = vmatpush1.msra.mxu0 0.0
      %4978 = vmatprep.subr.mxu0 0.0
      %4979 = vmatpush1.msra.mxu0 0.0
      %4980 = vmatprep.subr.mxu0 0.0
      %4981 = vmatpush1.msra.mxu0 0.0
      %4982 = vmatprep.subr.mxu0 0.0
      %4983 = vmatpush1.msra.mxu0 0.0
      %4984 = vmatprep.subr.mxu0 0.0
      %4985 = vmatpush1.msra.mxu0 0.0
      %4986 = vmatprep.subr.mxu0 0.0
      %4987 = vmatpush1.msra.mxu0 0.0
      %4988 = vmatprep.subr.mxu0 0.0
      %4989 = vmatpush1.msra.mxu0 0.0
      %4990 = vmatprep.subr.mxu0 0.0
      %4991 = vmatpush1.msra.mxu0 0.0
      %4992 = vmatprep.subr.mxu0 0.0
      %4993 = vmatpush1.msra.mxu0 0.0
      %4994 = vmatprep.subr.mxu0 0.0
      %4995 = vmatpush1.msra.mxu0 0.0
      %4996 = vmatprep.subr.mxu0 0.0
      %4997 = vmatpush1.msra.mxu0 0.0
      %4998 = vmatprep.subr.mxu0 0.0
      %4999 = vmatpush1.msra.mxu0 0.0
      %5000 = vmatprep.subr.mxu0 0.0
      %5001 = vmatpush1.msra.mxu0 0.0
      %5002 = vmatprep.subr.mxu0 0.0
      %5003 = vmatpush1.msra.mxu0 0.0
      %5004 = vmatprep.subr.mxu0 0.0
      %5005 = vmatpush1.msra.mxu0 0.0
      %5006 = vmatprep.subr.mxu0 0.0
      %5007 = vmatpush1.msra.mxu0 0.0
      %5008 = vmatprep.subr.mxu0 0.0
      %5009 = vmatpush1.msra.mxu0 0.0
      %5010 = vmatprep.subr.mxu0 0.0
      %5011 = vmatpush1.msra.mxu0 0.0
      %5012 = vmatprep.subr.mxu0 0.0
      %5013 = vmatpush1.msra.mxu0 0.0
      %5014 = vmatprep.mubr.f32.mxu0 0.0
      %5015 = vmatmul.mubr.f32.gmra.mrb[0].mxu0 %v4593
      %v5016 = vpop.f32.mrb[0].mxu0
      %v5017 = vadd.f32 0.0, %v5016
      %v5018 = vpop.f32.mrb[0].mxu0
      %v5019 = vadd.f32 0.0, %v5018
      %5020 = vdwg.mxu0
      %v5021 = vadd.f32 %v4530, %v4662
      %v5022 = vadd.f32 %v4531, %v4664
      %v5023 = vadd.f32 %v4532, %v4733
      %v5024 = vadd.f32 %v4533, %v4735
      %v5025 = vadd.f32 %v4534, %v4804
      %v5026 = vadd.f32 %v4535, %v4806
      %v5027 = vadd.f32 %v4536, %v4875
      %v5028 = vadd.f32 %v4537, %v4877
      %v5029 = vadd.f32 %v4538, %v4946
      %v5030 = vadd.f32 %v4539, %v4948
      %v5031 = vadd.f32 %v4540, %v5017
      %v5032 = vadd.f32 %v4541, %v5019
      %v5033 = vld [vmem:[%s3] sm:$0xf]
      %5035 = vset.pattern.permute.xlu0 0
      %5036 = vperm.xlu0 %5035, %v5033
      %v5037 = vpop.permute.xlu0 %5036
      %v5039 = vadd.f32 %v5021, %v5037
      %v5040 = vadd.f32 %v5022, %v5037
      %v5041 = vadd.f32 %v5023, %v5037
      %v5042 = vadd.f32 %v5024, %v5037
      %v5043 = vadd.f32 %v5025, %v5037
      %v5044 = vadd.f32 %v5026, %v5037
      %v5045 = vadd.f32 %v5027, %v5037
      %v5046 = vadd.f32 %v5028, %v5037
      %v5047 = vadd.f32 %v5029, %v5037
      %v5048 = vadd.f32 %v5030, %v5037
      %v5049 = vadd.f32 %v5031, %v5037
      %v5050 = vadd.f32 %v5032, %v5037
      %v5051 = vmul.f32 %v5039, %v353
      %v5052 = vmul.f32 %v5040, %v357
      %v5053 = vmul.f32 %v5041, %v361
      %v5054 = vmul.f32 %v5042, %v365
      %v5055 = vmul.f32 %v5043, %v369
      %v5056 = vmul.f32 %v5044, %v373
      %v5057 = vmul.f32 %v5045, %v377
      %v5058 = vmul.f32 %v5046, %v381
      %v5059 = vmul.f32 %v5047, %v385
      %v5060 = vmul.f32 %v5048, %v389
      %v5061 = vmul.f32 %v5049, %v393
      %v5062 = vmul.f32 %v5050, %v397
      %v5063 = vsel %vm344, %v5051, 0.0
      %v5064 = vsel %vm344, %v5052, 0.0
      %v5065 = vadd.f32 %v5063, %v5064
      %v5066 = vsel %vm344, %v5053, 0.0
      %v5067 = vadd.f32 %v5065, %v5066
      %v5068 = vsel %vm344, %v5054, 0.0
      %v5069 = vadd.f32 %v5067, %v5068
      %v5070 = vsel %vm344, %v5055, 0.0
      %v5071 = vadd.f32 %v5069, %v5070
      %v5072 = vsel %vm344, %v5056, 0.0
      %v5073 = vadd.f32 %v5071, %v5072
      %v5074 = vsel %vm344, %v5057, 0.0
      %v5075 = vadd.f32 %v5073, %v5074
      %v5076 = vsel %vm344, %v5058, 0.0
      %v5077 = vadd.f32 %v5075, %v5076
      %v5078 = vsel %vm344, %v5059, 0.0
      %v5079 = vadd.f32 %v5077, %v5078
      %v5080 = vsel %vm344, %v5060, 0.0
      %v5081 = vadd.f32 %v5079, %v5080
      %v5082 = vsel %vm344, %v5061, 0.0
      %v5083 = vadd.f32 %v5081, %v5082
      %vm5084 = vcmask 257024
      %v5085 = vsel %vm5084, %v5062, 0.0
      %v5086 = vadd.f32 %v5083, %v5085
      %5087 = vadd.xlane.f32.xlu0 %v5086
      %v5088 = vpop.xlane.xlu0 %5087
      %v5089 = vmul.f32 %v5088, 0.0009765625
      %v5090 = vmul.f32 %v5051, %v5051
      %v5091 = vmul.f32 %v5052, %v5052
      %v5092 = vmul.f32 %v5053, %v5053
      %v5093 = vmul.f32 %v5054, %v5054
      %v5094 = vmul.f32 %v5055, %v5055
      %v5095 = vmul.f32 %v5056, %v5056
      %v5096 = vmul.f32 %v5057, %v5057
      %v5097 = vmul.f32 %v5058, %v5058
      %v5098 = vmul.f32 %v5059, %v5059
      %v5099 = vmul.f32 %v5060, %v5060
      %v5100 = vmul.f32 %v5061, %v5061
      %v5101 = vmul.f32 %v5062, %v5062
      %v5102 = vsel %vm344, %v5090, 0.0
      %v5103 = vsel %vm344, %v5091, 0.0
      %v5104 = vadd.f32 %v5102, %v5103
      %v5105 = vsel %vm344, %v5092, 0.0
      %v5106 = vadd.f32 %v5104, %v5105
      %v5107 = vsel %vm344, %v5093, 0.0
      %v5108 = vadd.f32 %v5106, %v5107
      %v5109 = vsel %vm344, %v5094, 0.0
      %v5110 = vadd.f32 %v5108, %v5109
      %v5111 = vsel %vm344, %v5095, 0.0
      %v5112 = vadd.f32 %v5110, %v5111
      %v5113 = vsel %vm344, %v5096, 0.0
      %v5114 = vadd.f32 %v5112, %v5113
      %v5115 = vsel %vm344, %v5097, 0.0
      %v5116 = vadd.f32 %v5114, %v5115
      %v5117 = vsel %vm344, %v5098, 0.0
      %v5118 = vadd.f32 %v5116, %v5117
      %v5119 = vsel %vm344, %v5099, 0.0
      %v5120 = vadd.f32 %v5118, %v5119
      %v5121 = vsel %vm344, %v5100, 0.0
      %v5122 = vadd.f32 %v5120, %v5121
      %v5123 = vsel %vm5084, %v5101, 0.0
      %v5124 = vadd.f32 %v5122, %v5123
      %5125 = vadd.xlane.f32.xlu0 %v5124
      %v5126 = vpop.xlane.xlu0 %5125
      %v5127 = vmul.f32 %v5126, 0.0009765625
      %v5128 = vmul.f32 %v5089, %v5089
      %v5129 = vsub.f32 %v5127, %v5128
      %v5130 = vmax.f32 %v5129, 0.0
      %v5131 = vsub.f32 %v5039, %v5089
      %v5132 = vsub.f32 %v5040, %v5089
      %v5133 = vsub.f32 %v5041, %v5089
      %v5134 = vsub.f32 %v5042, %v5089
      %v5135 = vsub.f32 %v5043, %v5089
      %v5136 = vsub.f32 %v5044, %v5089
      %v5137 = vsub.f32 %v5045, %v5089
      %v5138 = vsub.f32 %v5046, %v5089
      %v5139 = vsub.f32 %v5047, %v5089
      %v5140 = vsub.f32 %v5048, %v5089
      %v5141 = vsub.f32 %v5049, %v5089
      %v5142 = vsub.f32 %v5050, %v5089
      %v5143 = vadd.f32 %v5130, 1e-05
      %v5144 = vrsqrt.pop %v5143
      %v5145 = vmul.f32 %v5131, %v5144
      %v5146 = vmul.f32 %v5132, %v5144
      %v5147 = vmul.f32 %v5133, %v5144
      %v5148 = vmul.f32 %v5134, %v5144
      %v5149 = vmul.f32 %v5135, %v5144
      %v5150 = vmul.f32 %v5136, %v5144
      %v5151 = vmul.f32 %v5137, %v5144
      %v5152 = vmul.f32 %v5138, %v5144
      %v5153 = vmul.f32 %v5139, %v5144
      %v5154 = vmul.f32 %v5140, %v5144
      %v5155 = vmul.f32 %v5141, %v5144
      %v5156 = vmul.f32 %v5142, %v5144
      %v5157 = vxor.u32 %v5145, 2147483648
      %v5158 = vxor.u32 %v5146, 2147483648
      %v5159 = vxor.u32 %v5147, 2147483648
      %v5160 = vxor.u32 %v5148, 2147483648
      %v5161 = vxor.u32 %v5149, 2147483648
      %v5162 = vxor.u32 %v5150, 2147483648
      %v5163 = vxor.u32 %v5151, 2147483648
      %v5164 = vxor.u32 %v5152, 2147483648
      %v5165 = vxor.u32 %v5153, 2147483648
      %v5166 = vxor.u32 %v5154, 2147483648
      %v5167 = vxor.u32 %v5155, 2147483648
      %v5168 = vxor.u32 %v5156, 2147483648
      %v5169 = vmul.f32 %v5157, 1.442695
      %v5170 = vpow.pop %v5169
      %v5171 = vmul.f32 %v5158, 1.442695
      %v5172 = vpow.pop %v5171
      %v5173 = vmul.f32 %v5159, 1.442695
      %v5174 = vpow.pop %v5173
      %v5175 = vmul.f32 %v5160, 1.442695
      %v5176 = vpow.pop %v5175
      %v5177 = vmul.f32 %v5161, 1.442695
      %v5178 = vpow.pop %v5177
      %v5179 = vmul.f32 %v5162, 1.442695
      %v5180 = vpow.pop %v5179
      %v5181 = vmul.f32 %v5163, 1.442695
      %v5182 = vpow.pop %v5181
      %v5183 = vmul.f32 %v5164, 1.442695
      %v5184 = vpow.pop %v5183
      %v5185 = vmul.f32 %v5165, 1.442695
      %v5186 = vpow.pop %v5185
      %v5187 = vmul.f32 %v5166, 1.442695
      %v5188 = vpow.pop %v5187
      %v5189 = vmul.f32 %v5167, 1.442695
      %v5190 = vpow.pop %v5189
      %v5191 = vmul.f32 %v5168, 1.442695
      %v5192 = vpow.pop %v5191
      %v5193 = vadd.f32 %v5170, 1.0
      %v5194 = vadd.f32 %v5172, 1.0
      %v5195 = vadd.f32 %v5174, 1.0
      %v5196 = vadd.f32 %v5176, 1.0
      %v5197 = vadd.f32 %v5178, 1.0
      %v5198 = vadd.f32 %v5180, 1.0
      %v5199 = vadd.f32 %v5182, 1.0
      %v5200 = vadd.f32 %v5184, 1.0
      %v5201 = vadd.f32 %v5186, 1.0
      %v5202 = vadd.f32 %v5188, 1.0
      %v5203 = vadd.f32 %v5190, 1.0
      %v5204 = vadd.f32 %v5192, 1.0
      %v5205 = vrcp.pop %v5193
      %v5206 = vmul.f32 1.0, %v5205
      %v5207 = vrcp.pop %v5194
      %v5208 = vmul.f32 1.0, %v5207
      %v5209 = vrcp.pop %v5195
      %v5210 = vmul.f32 1.0, %v5209
      %v5211 = vrcp.pop %v5196
      %v5212 = vmul.f32 1.0, %v5211
      %v5213 = vrcp.pop %v5197
      %v5214 = vmul.f32 1.0, %v5213
      %v5215 = vrcp.pop %v5198
      %v5216 = vmul.f32 1.0, %v5215
      %v5217 = vrcp.pop %v5199
      %v5218 = vmul.f32 1.0, %v5217
      %v5219 = vrcp.pop %v5200
      %v5220 = vmul.f32 1.0, %v5219
      %v5221 = vrcp.pop %v5201
      %v5222 = vmul.f32 1.0, %v5221
      %v5223 = vrcp.pop %v5202
      %v5224 = vmul.f32 1.0, %v5223
      %v5225 = vrcp.pop %v5203
      %v5226 = vmul.f32 1.0, %v5225
      %v5227 = vrcp.pop %v5204
      %v5228 = vmul.f32 1.0, %v5227
      %v5229 = vmul.f32 %v5145, %v5206
      %v5230 = vmul.f32 %v5146, %v5208
      %v5231 = vmul.f32 %v5147, %v5210
      %v5232 = vmul.f32 %v5148, %v5212
      %v5233 = vmul.f32 %v5149, %v5214
      %v5234 = vmul.f32 %v5150, %v5216
      %v5235 = vmul.f32 %v5151, %v5218
      %v5236 = vmul.f32 %v5152, %v5220
      %v5237 = vmul.f32 %v5153, %v5222
      %v5238 = vmul.f32 %v5154, %v5224
      %v5239 = vmul.f32 %v5155, %v5226
      %v5240 = vmul.f32 %v5156, %v5228
      %v5241 = vmul.f32 %v5229, %v353
      %v5242 = vmul.f32 %v5230, %v357
      %v5243 = vmul.f32 %v5231, %v361
      %v5244 = vmul.f32 %v5232, %v365
      %v5245 = vmul.f32 %v5233, %v369
      %v5246 = vmul.f32 %v5234, %v373
      %v5247 = vmul.f32 %v5235, %v377
      %v5248 = vmul.f32 %v5236, %v381
      %v5249 = vmul.f32 %v5237, %v385
      %v5250 = vmul.f32 %v5238, %v389
      %v5251 = vmul.f32 %v5239, %v393
      %v5252 = vmul.f32 %v5240, %v397
      %v5265 = vcombine.low %v5241, %v5242
      %v5266 = vcombine.low %v5243, %v5244
      %v5267 = vcombine.low %v5245, %v5246
      %v5268 = vcombine.low %v5247, %v5248
      %v5269 = vcombine.low %v5249, %v5250
      %v5270 = vcombine.low %v5251, %v5252
      %5277 = vst [vmem:[#allocation3 + $0x8] sm:$0xff] %v5265
      %5278 = vst [vmem:[#allocation3 + $0x10] sm:$0xff] %v5266
      %5279 = vst [vmem:[#allocation3 + $0x18] sm:$0xff] %v5267
      %5280 = vst [vmem:[#allocation3 + $0x20] sm:$0xff] %v5268
      %5281 = vst [vmem:[#allocation3 + $0x28] sm:$0xff] %v5269
      %5282 = vst.msk [vmem:[#allocation3 + $0x30] sm:$0xff] %vm346, %v5270
      %v5283 = vld [vmem:[#allocation3] sm:$0xff]
      %v5284 = vld [vmem:[#allocation3 + $0x8] sm:$0xff]
      %v5285 = vld [vmem:[#allocation3 + $0x10] sm:$0xff]
      %v5286 = vld [vmem:[#allocation3 + $0x18] sm:$0xff]
      %v5287 = vld [vmem:[#allocation3 + $0x20] sm:$0xff]
      %v5288 = vld [vmem:[#allocation3 + $0x28] sm:$0xff]
      %v5289 = vld [vmem:[#allocation3 + $0x30] sm:$0xf]
      %v5290 = vld [vmem:[%s4] sm:$0xf]
      %s5291 = scalar_lea.vmem %s4, 4
      %v5292 = vld [vmem:[%s5291] sm:$0xf]
      %v5300 = vcombine.high %v5283, %v5283
      %v5301 = vcombine.high %v5284, %v5284
      %v5302 = vcombine.high %v5285, %v5285
      %v5303 = vcombine.high %v5286, %v5286
      %v5304 = vcombine.high %v5287, %v5287
      %v5305 = vcombine.high %v5288, %v5288
      %5306 = vrot.lane.b32.xlu0 %v5283, 16
      %v5307 = vpop.permute.xlu0 %5306
      %5308 = vrot.lane.b32.xlu0 %v5300, 16
      %v5309 = vpop.permute.xlu0 %5308
      %5310 = vrot.lane.b32.xlu0 %v5284, 16
      %v5311 = vpop.permute.xlu0 %5310
      %5312 = vrot.lane.b32.xlu0 %v5301, 16
      %v5313 = vpop.permute.xlu0 %5312
      %5314 = vrot.lane.b32.xlu0 %v5285, 16
      %v5315 = vpop.permute.xlu0 %5314
      %5316 = vrot.lane.b32.xlu0 %v5302, 16
      %v5317 = vpop.permute.xlu0 %5316
      %5318 = vrot.lane.b32.xlu0 %v5286, 16
      %v5319 = vpop.permute.xlu0 %5318
      %5320 = vrot.lane.b32.xlu0 %v5303, 16
      %v5321 = vpop.permute.xlu0 %5320
      %5322 = vrot.lane.b32.xlu0 %v5287, 16
      %v5323 = vpop.permute.xlu0 %5322
      %5324 = vrot.lane.b32.xlu0 %v5304, 16
      %v5325 = vpop.permute.xlu0 %5324
      %5326 = vrot.lane.b32.xlu0 %v5288, 16
      %v5327 = vpop.permute.xlu0 %5326
      %5328 = vrot.lane.b32.xlu0 %v5305, 16
      %v5329 = vpop.permute.xlu0 %5328
      %5330 = vrot.lane.b32.xlu0 %v5289, 16
      %v5331 = vpop.permute.xlu0 %5330
      %v5332 = vsel %vm656, %v5307, %v5309
      %v5333 = vsel %vm656, %v5309, %v5311
      %v5334 = vsel %vm656, %v5311, %v5313
      %v5335 = vsel %vm656, %v5313, %v5315
      %v5336 = vsel %vm656, %v5315, %v5317
      %v5337 = vsel %vm656, %v5317, %v5319
      %v5338 = vsel %vm656, %v5319, %v5321
      %v5339 = vsel %vm656, %v5321, %v5323
      %v5340 = vsel %vm656, %v5323, %v5325
      %v5341 = vsel %vm656, %v5325, %v5327
      %v5342 = vsel %vm656, %v5327, %v5329
      %v5343 = vsel %vm656, %v5329, %v5331
      %vm5344 = vcmask 31744
      %v5346 = vsel %vm5344, %v5292, 0
      %v5348 = vsel %vm344, %v5332, 0
      %v5350 = vsel %vm344, %v5333, 0
      %v5352 = vsel %vm344, %v5334, 0
      %v5354 = vsel %vm344, %v5335, 0
      %v5356 = vsel %vm344, %v5336, 0
      %v5358 = vsel %vm344, %v5337, 0
      %v5360 = vsel %vm344, %v5338, 0
      %v5362 = vsel %vm344, %v5339, 0
      %v5364 = vsel %vm344, %v5340, 0
      %v5366 = vsel %vm344, %v5341, 0
      %v5368 = vsel %vm344, %v5342, 0
      %v5370 = vsel %vm344, %v5343, 0
      %5372 = vmatprep.subr.mxu0 %v5350
      %5373 = vmatpush1.msra.mxu0 %v5348
      %5374 = vmatprep.subr.mxu0 0.0
      %5375 = vmatpush1.msra.mxu0 0.0
      %5376 = vmatprep.subr.mxu0 0.0
      %5377 = vmatpush1.msra.mxu0 0.0
      %5378 = vmatprep.subr.mxu0 0.0
      %5379 = vmatpush1.msra.mxu0 0.0
      %5380 = vmatprep.subr.mxu0 0.0
      %5381 = vmatpush1.msra.mxu0 0.0
      %5382 = vmatprep.subr.mxu0 0.0
      %5383 = vmatpush1.msra.mxu0 0.0
      %5384 = vmatprep.subr.mxu0 0.0
      %5385 = vmatpush1.msra.mxu0 0.0
      %5386 = vmatprep.subr.mxu0 0.0
      %5387 = vmatpush1.msra.mxu0 0.0
      %5388 = vmatprep.subr.mxu0 0.0
      %5389 = vmatpush1.msra.mxu0 0.0
      %5390 = vmatprep.subr.mxu0 0.0
      %5391 = vmatpush1.msra.mxu0 0.0
      %5392 = vmatprep.subr.mxu0 0.0
      %5393 = vmatpush1.msra.mxu0 0.0
      %5394 = vmatprep.subr.mxu0 0.0
      %5395 = vmatpush1.msra.mxu0 0.0
      %5396 = vmatprep.subr.mxu0 0.0
      %5397 = vmatpush1.msra.mxu0 0.0
      %5398 = vmatprep.subr.mxu0 0.0
      %5399 = vmatpush1.msra.mxu0 0.0
      %5400 = vmatprep.subr.mxu0 0.0
      %5401 = vmatpush1.msra.mxu0 0.0
      %5402 = vmatprep.subr.mxu0 0.0
      %5403 = vmatpush1.msra.mxu0 0.0
      %5404 = vmatprep.subr.mxu0 0.0
      %5405 = vmatpush1.msra.mxu0 0.0
      %5406 = vmatprep.subr.mxu0 0.0
      %5407 = vmatpush1.msra.mxu0 0.0
      %5408 = vmatprep.subr.mxu0 0.0
      %5409 = vmatpush1.msra.mxu0 0.0
      %5410 = vmatprep.subr.mxu0 0.0
      %5411 = vmatpush1.msra.mxu0 0.0
      %5412 = vmatprep.subr.mxu0 0.0
      %5413 = vmatpush1.msra.mxu0 0.0
      %5414 = vmatprep.subr.mxu0 0.0
      %5415 = vmatpush1.msra.mxu0 0.0
      %5416 = vmatprep.subr.mxu0 0.0
      %5417 = vmatpush1.msra.mxu0 0.0
      %5418 = vmatprep.subr.mxu0 0.0
      %5419 = vmatpush1.msra.mxu0 0.0
      %5420 = vmatprep.subr.mxu0 0.0
      %5421 = vmatpush1.msra.mxu0 0.0
      %5422 = vmatprep.subr.mxu0 0.0
      %5423 = vmatpush1.msra.mxu0 0.0
      %5424 = vmatprep.subr.mxu0 0.0
      %5425 = vmatpush1.msra.mxu0 0.0
      %5426 = vmatprep.subr.mxu0 0.0
      %5427 = vmatpush1.msra.mxu0 0.0
      %5428 = vmatprep.subr.mxu0 0.0
      %5429 = vmatpush1.msra.mxu0 0.0
      %5430 = vmatprep.subr.mxu0 0.0
      %5431 = vmatpush1.msra.mxu0 0.0
      %5432 = vmatprep.subr.mxu0 0.0
      %5433 = vmatpush1.msra.mxu0 0.0
      %5434 = vmatprep.subr.mxu0 0.0
      %5435 = vmatpush1.msra.mxu0 0.0
      %5436 = vmatprep.mubr.f32.mxu0 0.0
      %5437 = vmatmul.mubr.f32.gmra.mrb[0].mxu0 %v5346
      %v5438 = vpop.f32.mrb[0].mxu0
      %v5439 = vadd.f32 0.0, %v5438
      %v5440 = vpop.f32.mrb[0].mxu0
      %v5441 = vadd.f32 0.0, %v5440
      %5442 = vdwg.mxu0
      %5443 = vmatprep.subr.mxu0 %v5354
      %5444 = vmatpush1.msra.mxu0 %v5352
      %5445 = vmatprep.subr.mxu0 0.0
      %5446 = vmatpush1.msra.mxu0 0.0
      %5447 = vmatprep.subr.mxu0 0.0
      %5448 = vmatpush1.msra.mxu0 0.0
      %5449 = vmatprep.subr.mxu0 0.0
      %5450 = vmatpush1.msra.mxu0 0.0
      %5451 = vmatprep.subr.mxu0 0.0
      %5452 = vmatpush1.msra.mxu0 0.0
      %5453 = vmatprep.subr.mxu0 0.0
      %5454 = vmatpush1.msra.mxu0 0.0
      %5455 = vmatprep.subr.mxu0 0.0
      %5456 = vmatpush1.msra.mxu0 0.0
      %5457 = vmatprep.subr.mxu0 0.0
      %5458 = vmatpush1.msra.mxu0 0.0
      %5459 = vmatprep.subr.mxu0 0.0
      %5460 = vmatpush1.msra.mxu0 0.0
      %5461 = vmatprep.subr.mxu0 0.0
      %5462 = vmatpush1.msra.mxu0 0.0
      %5463 = vmatprep.subr.mxu0 0.0
      %5464 = vmatpush1.msra.mxu0 0.0
      %5465 = vmatprep.subr.mxu0 0.0
      %5466 = vmatpush1.msra.mxu0 0.0
      %5467 = vmatprep.subr.mxu0 0.0
      %5468 = vmatpush1.msra.mxu0 0.0
      %5469 = vmatprep.subr.mxu0 0.0
      %5470 = vmatpush1.msra.mxu0 0.0
      %5471 = vmatprep.subr.mxu0 0.0
      %5472 = vmatpush1.msra.mxu0 0.0
      %5473 = vmatprep.subr.mxu0 0.0
      %5474 = vmatpush1.msra.mxu0 0.0
      %5475 = vmatprep.subr.mxu0 0.0
      %5476 = vmatpush1.msra.mxu0 0.0
      %5477 = vmatprep.subr.mxu0 0.0
      %5478 = vmatpush1.msra.mxu0 0.0
      %5479 = vmatprep.subr.mxu0 0.0
      %5480 = vmatpush1.msra.mxu0 0.0
      %5481 = vmatprep.subr.mxu0 0.0
      %5482 = vmatpush1.msra.mxu0 0.0
      %5483 = vmatprep.subr.mxu0 0.0
      %5484 = vmatpush1.msra.mxu0 0.0
      %5485 = vmatprep.subr.mxu0 0.0
      %5486 = vmatpush1.msra.mxu0 0.0
      %5487 = vmatprep.subr.mxu0 0.0
      %5488 = vmatpush1.msra.mxu0 0.0
      %5489 = vmatprep.subr.mxu0 0.0
      %5490 = vmatpush1.msra.mxu0 0.0
      %5491 = vmatprep.subr.mxu0 0.0
      %5492 = vmatpush1.msra.mxu0 0.0
      %5493 = vmatprep.subr.mxu0 0.0
      %5494 = vmatpush1.msra.mxu0 0.0
      %5495 = vmatprep.subr.mxu0 0.0
      %5496 = vmatpush1.msra.mxu0 0.0
      %5497 = vmatprep.subr.mxu0 0.0
      %5498 = vmatpush1.msra.mxu0 0.0
      %5499 = vmatprep.subr.mxu0 0.0
      %5500 = vmatpush1.msra.mxu0 0.0
      %5501 = vmatprep.subr.mxu0 0.0
      %5502 = vmatpush1.msra.mxu0 0.0
      %5503 = vmatprep.subr.mxu0 0.0
      %5504 = vmatpush1.msra.mxu0 0.0
      %5505 = vmatprep.subr.mxu0 0.0
      %5506 = vmatpush1.msra.mxu0 0.0
      %5507 = vmatprep.mubr.f32.mxu0 0.0
      %5508 = vmatmul.mubr.f32.gmra.mrb[0].mxu0 %v5346
      %v5509 = vpop.f32.mrb[0].mxu0
      %v5510 = vadd.f32 0.0, %v5509
      %v5511 = vpop.f32.mrb[0].mxu0
      %v5512 = vadd.f32 0.0, %v5511
      %5513 = vdwg.mxu0
      %5514 = vmatprep.subr.mxu0 %v5358
      %5515 = vmatpush1.msra.mxu0 %v5356
      %5516 = vmatprep.subr.mxu0 0.0
      %5517 = vmatpush1.msra.mxu0 0.0
      %5518 = vmatprep.subr.mxu0 0.0
      %5519 = vmatpush1.msra.mxu0 0.0
      %5520 = vmatprep.subr.mxu0 0.0
      %5521 = vmatpush1.msra.mxu0 0.0
      %5522 = vmatprep.subr.mxu0 0.0
      %5523 = vmatpush1.msra.mxu0 0.0
      %5524 = vmatprep.subr.mxu0 0.0
      %5525 = vmatpush1.msra.mxu0 0.0
      %5526 = vmatprep.subr.mxu0 0.0
      %5527 = vmatpush1.msra.mxu0 0.0
      %5528 = vmatprep.subr.mxu0 0.0
      %5529 = vmatpush1.msra.mxu0 0.0
      %5530 = vmatprep.subr.mxu0 0.0
      %5531 = vmatpush1.msra.mxu0 0.0
      %5532 = vmatprep.subr.mxu0 0.0
      %5533 = vmatpush1.msra.mxu0 0.0
      %5534 = vmatprep.subr.mxu0 0.0
      %5535 = vmatpush1.msra.mxu0 0.0
      %5536 = vmatprep.subr.mxu0 0.0
      %5537 = vmatpush1.msra.mxu0 0.0
      %5538 = vmatprep.subr.mxu0 0.0
      %5539 = vmatpush1.msra.mxu0 0.0
      %5540 = vmatprep.subr.mxu0 0.0
      %5541 = vmatpush1.msra.mxu0 0.0
      %5542 = vmatprep.subr.mxu0 0.0
      %5543 = vmatpush1.msra.mxu0 0.0
      %5544 = vmatprep.subr.mxu0 0.0
      %5545 = vmatpush1.msra.mxu0 0.0
      %5546 = vmatprep.subr.mxu0 0.0
      %5547 = vmatpush1.msra.mxu0 0.0
      %5548 = vmatprep.subr.mxu0 0.0
      %5549 = vmatpush1.msra.mxu0 0.0
      %5550 = vmatprep.subr.mxu0 0.0
      %5551 = vmatpush1.msra.mxu0 0.0
      %5552 = vmatprep.subr.mxu0 0.0
      %5553 = vmatpush1.msra.mxu0 0.0
      %5554 = vmatprep.subr.mxu0 0.0
      %5555 = vmatpush1.msra.mxu0 0.0
      %5556 = vmatprep.subr.mxu0 0.0
      %5557 = vmatpush1.msra.mxu0 0.0
      %5558 = vmatprep.subr.mxu0 0.0
      %5559 = vmatpush1.msra.mxu0 0.0
      %5560 = vmatprep.subr.mxu0 0.0
      %5561 = vmatpush1.msra.mxu0 0.0
      %5562 = vmatprep.subr.mxu0 0.0
      %5563 = vmatpush1.msra.mxu0 0.0
      %5564 = vmatprep.subr.mxu0 0.0
      %5565 = vmatpush1.msra.mxu0 0.0
      %5566 = vmatprep.subr.mxu0 0.0
      %5567 = vmatpush1.msra.mxu0 0.0
      %5568 = vmatprep.subr.mxu0 0.0
      %5569 = vmatpush1.msra.mxu0 0.0
      %5570 = vmatprep.subr.mxu0 0.0
      %5571 = vmatpush1.msra.mxu0 0.0
      %5572 = vmatprep.subr.mxu0 0.0
      %5573 = vmatpush1.msra.mxu0 0.0
      %5574 = vmatprep.subr.mxu0 0.0
      %5575 = vmatpush1.msra.mxu0 0.0
      %5576 = vmatprep.subr.mxu0 0.0
      %5577 = vmatpush1.msra.mxu0 0.0
      %5578 = vmatprep.mubr.f32.mxu0 0.0
      %5579 = vmatmul.mubr.f32.gmra.mrb[0].mxu0 %v5346
      %v5580 = vpop.f32.mrb[0].mxu0
      %v5581 = vadd.f32 0.0, %v5580
      %v5582 = vpop.f32.mrb[0].mxu0
      %v5583 = vadd.f32 0.0, %v5582
      %5584 = vdwg.mxu0
      %5585 = vmatprep.subr.mxu0 %v5362
      %5586 = vmatpush1.msra.mxu0 %v5360
      %5587 = vmatprep.subr.mxu0 0.0
      %5588 = vmatpush1.msra.mxu0 0.0
      %5589 = vmatprep.subr.mxu0 0.0
      %5590 = vmatpush1.msra.mxu0 0.0
      %5591 = vmatprep.subr.mxu0 0.0
      %5592 = vmatpush1.msra.mxu0 0.0
      %5593 = vmatprep.subr.mxu0 0.0
      %5594 = vmatpush1.msra.mxu0 0.0
      %5595 = vmatprep.subr.mxu0 0.0
      %5596 = vmatpush1.msra.mxu0 0.0
      %5597 = vmatprep.subr.mxu0 0.0
      %5598 = vmatpush1.msra.mxu0 0.0
      %5599 = vmatprep.subr.mxu0 0.0
      %5600 = vmatpush1.msra.mxu0 0.0
      %5601 = vmatprep.subr.mxu0 0.0
      %5602 = vmatpush1.msra.mxu0 0.0
      %5603 = vmatprep.subr.mxu0 0.0
      %5604 = vmatpush1.msra.mxu0 0.0
      %5605 = vmatprep.subr.mxu0 0.0
      %5606 = vmatpush1.msra.mxu0 0.0
      %5607 = vmatprep.subr.mxu0 0.0
      %5608 = vmatpush1.msra.mxu0 0.0
      %5609 = vmatprep.subr.mxu0 0.0
      %5610 = vmatpush1.msra.mxu0 0.0
      %5611 = vmatprep.subr.mxu0 0.0
      %5612 = vmatpush1.msra.mxu0 0.0
      %5613 = vmatprep.subr.mxu0 0.0
      %5614 = vmatpush1.msra.mxu0 0.0
      %5615 = vmatprep.subr.mxu0 0.0
      %5616 = vmatpush1.msra.mxu0 0.0
      %5617 = vmatprep.subr.mxu0 0.0
      %5618 = vmatpush1.msra.mxu0 0.0
      %5619 = vmatprep.subr.mxu0 0.0
      %5620 = vmatpush1.msra.mxu0 0.0
      %5621 = vmatprep.subr.mxu0 0.0
      %5622 = vmatpush1.msra.mxu0 0.0
      %5623 = vmatprep.subr.mxu0 0.0
      %5624 = vmatpush1.msra.mxu0 0.0
      %5625 = vmatprep.subr.mxu0 0.0
      %5626 = vmatpush1.msra.mxu0 0.0
      %5627 = vmatprep.subr.mxu0 0.0
      %5628 = vmatpush1.msra.mxu0 0.0
      %5629 = vmatprep.subr.mxu0 0.0
      %5630 = vmatpush1.msra.mxu0 0.0
      %5631 = vmatprep.subr.mxu0 0.0
      %5632 = vmatpush1.msra.mxu0 0.0
      %5633 = vmatprep.subr.mxu0 0.0
      %5634 = vmatpush1.msra.mxu0 0.0
      %5635 = vmatprep.subr.mxu0 0.0
      %5636 = vmatpush1.msra.mxu0 0.0
      %5637 = vmatprep.subr.mxu0 0.0
      %5638 = vmatpush1.msra.mxu0 0.0
      %5639 = vmatprep.subr.mxu0 0.0
      %5640 = vmatpush1.msra.mxu0 0.0
      %5641 = vmatprep.subr.mxu0 0.0
      %5642 = vmatpush1.msra.mxu0 0.0
      %5643 = vmatprep.subr.mxu0 0.0
      %5644 = vmatpush1.msra.mxu0 0.0
      %5645 = vmatprep.subr.mxu0 0.0
      %5646 = vmatpush1.msra.mxu0 0.0
      %5647 = vmatprep.subr.mxu0 0.0
      %5648 = vmatpush1.msra.mxu0 0.0
      %5649 = vmatprep.mubr.f32.mxu0 0.0
      %5650 = vmatmul.mubr.f32.gmra.mrb[0].mxu0 %v5346
      %v5651 = vpop.f32.mrb[0].mxu0
      %v5652 = vadd.f32 0.0, %v5651
      %v5653 = vpop.f32.mrb[0].mxu0
      %v5654 = vadd.f32 0.0, %v5653
      %5655 = vdwg.mxu0
      %5656 = vmatprep.subr.mxu0 %v5366
      %5657 = vmatpush1.msra.mxu0 %v5364
      %5658 = vmatprep.subr.mxu0 0.0
      %5659 = vmatpush1.msra.mxu0 0.0
      %5660 = vmatprep.subr.mxu0 0.0
      %5661 = vmatpush1.msra.mxu0 0.0
      %5662 = vmatprep.subr.mxu0 0.0
      %5663 = vmatpush1.msra.mxu0 0.0
      %5664 = vmatprep.subr.mxu0 0.0
      %5665 = vmatpush1.msra.mxu0 0.0
      %5666 = vmatprep.subr.mxu0 0.0
      %5667 = vmatpush1.msra.mxu0 0.0
      %5668 = vmatprep.subr.mxu0 0.0
      %5669 = vmatpush1.msra.mxu0 0.0
      %5670 = vmatprep.subr.mxu0 0.0
      %5671 = vmatpush1.msra.mxu0 0.0
      %5672 = vmatprep.subr.mxu0 0.0
      %5673 = vmatpush1.msra.mxu0 0.0
      %5674 = vmatprep.subr.mxu0 0.0
      %5675 = vmatpush1.msra.mxu0 0.0
      %5676 = vmatprep.subr.mxu0 0.0
      %5677 = vmatpush1.msra.mxu0 0.0
      %5678 = vmatprep.subr.mxu0 0.0
      %5679 = vmatpush1.msra.mxu0 0.0
      %5680 = vmatprep.subr.mxu0 0.0
      %5681 = vmatpush1.msra.mxu0 0.0
      %5682 = vmatprep.subr.mxu0 0.0
      %5683 = vmatpush1.msra.mxu0 0.0
      %5684 = vmatprep.subr.mxu0 0.0
      %5685 = vmatpush1.msra.mxu0 0.0
      %5686 = vmatprep.subr.mxu0 0.0
      %5687 = vmatpush1.msra.mxu0 0.0
      %5688 = vmatprep.subr.mxu0 0.0
      %5689 = vmatpush1.msra.mxu0 0.0
      %5690 = vmatprep.subr.mxu0 0.0
      %5691 = vmatpush1.msra.mxu0 0.0
      %5692 = vmatprep.subr.mxu0 0.0
      %5693 = vmatpush1.msra.mxu0 0.0
      %5694 = vmatprep.subr.mxu0 0.0
      %5695 = vmatpush1.msra.mxu0 0.0
      %5696 = vmatprep.subr.mxu0 0.0
      %5697 = vmatpush1.msra.mxu0 0.0
      %5698 = vmatprep.subr.mxu0 0.0
      %5699 = vmatpush1.msra.mxu0 0.0
      %5700 = vmatprep.subr.mxu0 0.0
      %5701 = vmatpush1.msra.mxu0 0.0
      %5702 = vmatprep.subr.mxu0 0.0
      %5703 = vmatpush1.msra.mxu0 0.0
      %5704 = vmatprep.subr.mxu0 0.0
      %5705 = vmatpush1.msra.mxu0 0.0
      %5706 = vmatprep.subr.mxu0 0.0
      %5707 = vmatpush1.msra.mxu0 0.0
      %5708 = vmatprep.subr.mxu0 0.0
      %5709 = vmatpush1.msra.mxu0 0.0
      %5710 = vmatprep.subr.mxu0 0.0
      %5711 = vmatpush1.msra.mxu0 0.0
      %5712 = vmatprep.subr.mxu0 0.0
      %5713 = vmatpush1.msra.mxu0 0.0
      %5714 = vmatprep.subr.mxu0 0.0
      %5715 = vmatpush1.msra.mxu0 0.0
      %5716 = vmatprep.subr.mxu0 0.0
      %5717 = vmatpush1.msra.mxu0 0.0
      %5718 = vmatprep.subr.mxu0 0.0
      %5719 = vmatpush1.msra.mxu0 0.0
      %5720 = vmatprep.mubr.f32.mxu0 0.0
      %5721 = vmatmul.mubr.f32.gmra.mrb[0].mxu0 %v5346
      %v5722 = vpop.f32.mrb[0].mxu0
      %v5723 = vadd.f32 0.0, %v5722
      %v5724 = vpop.f32.mrb[0].mxu0
      %v5725 = vadd.f32 0.0, %v5724
      %5726 = vdwg.mxu0
      %5727 = vmatprep.subr.mxu0 %v5370
      %5728 = vmatpush1.msra.mxu0 %v5368
      %5729 = vmatprep.subr.mxu0 0.0
      %5730 = vmatpush1.msra.mxu0 0.0
      %5731 = vmatprep.subr.mxu0 0.0
      %5732 = vmatpush1.msra.mxu0 0.0
      %5733 = vmatprep.subr.mxu0 0.0
      %5734 = vmatpush1.msra.mxu0 0.0
      %5735 = vmatprep.subr.mxu0 0.0
      %5736 = vmatpush1.msra.mxu0 0.0
      %5737 = vmatprep.subr.mxu0 0.0
      %5738 = vmatpush1.msra.mxu0 0.0
      %5739 = vmatprep.subr.mxu0 0.0
      %5740 = vmatpush1.msra.mxu0 0.0
      %5741 = vmatprep.subr.mxu0 0.0
      %5742 = vmatpush1.msra.mxu0 0.0
      %5743 = vmatprep.subr.mxu0 0.0
      %5744 = vmatpush1.msra.mxu0 0.0
      %5745 = vmatprep.subr.mxu0 0.0
      %5746 = vmatpush1.msra.mxu0 0.0
      %5747 = vmatprep.subr.mxu0 0.0
      %5748 = vmatpush1.msra.mxu0 0.0
      %5749 = vmatprep.subr.mxu0 0.0
      %5750 = vmatpush1.msra.mxu0 0.0
      %5751 = vmatprep.subr.mxu0 0.0
      %5752 = vmatpush1.msra.mxu0 0.0
      %5753 = vmatprep.subr.mxu0 0.0
      %5754 = vmatpush1.msra.mxu0 0.0
      %5755 = vmatprep.subr.mxu0 0.0
      %5756 = vmatpush1.msra.mxu0 0.0
      %5757 = vmatprep.subr.mxu0 0.0
      %5758 = vmatpush1.msra.mxu0 0.0
      %5759 = vmatprep.subr.mxu0 0.0
      %5760 = vmatpush1.msra.mxu0 0.0
      %5761 = vmatprep.subr.mxu0 0.0
      %5762 = vmatpush1.msra.mxu0 0.0
      %5763 = vmatprep.subr.mxu0 0.0
      %5764 = vmatpush1.msra.mxu0 0.0
      %5765 = vmatprep.subr.mxu0 0.0
      %5766 = vmatpush1.msra.mxu0 0.0
      %5767 = vmatprep.subr.mxu0 0.0
      %5768 = vmatpush1.msra.mxu0 0.0
      %5769 = vmatprep.subr.mxu0 0.0
      %5770 = vmatpush1.msra.mxu0 0.0
      %5771 = vmatprep.subr.mxu0 0.0
      %5772 = vmatpush1.msra.mxu0 0.0
      %5773 = vmatprep.subr.mxu0 0.0
      %5774 = vmatpush1.msra.mxu0 0.0
      %5775 = vmatprep.subr.mxu0 0.0
      %5776 = vmatpush1.msra.mxu0 0.0
      %5777 = vmatprep.subr.mxu0 0.0
      %5778 = vmatpush1.msra.mxu0 0.0
      %5779 = vmatprep.subr.mxu0 0.0
      %5780 = vmatpush1.msra.mxu0 0.0
      %5781 = vmatprep.subr.mxu0 0.0
      %5782 = vmatpush1.msra.mxu0 0.0
      %5783 = vmatprep.subr.mxu0 0.0
      %5784 = vmatpush1.msra.mxu0 0.0
      %5785 = vmatprep.subr.mxu0 0.0
      %5786 = vmatpush1.msra.mxu0 0.0
      %5787 = vmatprep.subr.mxu0 0.0
      %5788 = vmatpush1.msra.mxu0 0.0
      %5789 = vmatprep.subr.mxu0 0.0
      %5790 = vmatpush1.msra.mxu0 0.0
      %5791 = vmatprep.mubr.f32.mxu0 0.0
      %5792 = vmatmul.mubr.f32.gmra.mrb[0].mxu0 %v5346
      %v5793 = vpop.f32.mrb[0].mxu0
      %v5794 = vadd.f32 0.0, %v5793
      %v5795 = vpop.f32.mrb[0].mxu0
      %v5796 = vadd.f32 0.0, %v5795
      %5797 = vdwg.mxu0
      %5798 = vrot.lane.b32.xlu0 %v5283, 24
      %v5799 = vpop.permute.xlu0 %5798
      %5800 = vrot.lane.b32.xlu0 %v5300, 24
      %v5801 = vpop.permute.xlu0 %5800
      %5802 = vrot.lane.b32.xlu0 %v5284, 24
      %v5803 = vpop.permute.xlu0 %5802
      %5804 = vrot.lane.b32.xlu0 %v5301, 24
      %v5805 = vpop.permute.xlu0 %5804
      %5806 = vrot.lane.b32.xlu0 %v5285, 24
      %v5807 = vpop.permute.xlu0 %5806
      %5808 = vrot.lane.b32.xlu0 %v5302, 24
      %v5809 = vpop.permute.xlu0 %5808
      %5810 = vrot.lane.b32.xlu0 %v5286, 24
      %v5811 = vpop.permute.xlu0 %5810
      %5812 = vrot.lane.b32.xlu0 %v5303, 24
      %v5813 = vpop.permute.xlu0 %5812
      %5814 = vrot.lane.b32.xlu0 %v5287, 24
      %v5815 = vpop.permute.xlu0 %5814
      %5816 = vrot.lane.b32.xlu0 %v5304, 24
      %v5817 = vpop.permute.xlu0 %5816
      %5818 = vrot.lane.b32.xlu0 %v5288, 24
      %v5819 = vpop.permute.xlu0 %5818
      %5820 = vrot.lane.b32.xlu0 %v5305, 24
      %v5821 = vpop.permute.xlu0 %5820
      %5822 = vrot.lane.b32.xlu0 %v5289, 24
      %v5823 = vpop.permute.xlu0 %5822
      %v5824 = vsel %vm1137, %v5799, %v5801
      %v5825 = vsel %vm1137, %v5801, %v5803
      %v5826 = vsel %vm1137, %v5803, %v5805
      %v5827 = vsel %vm1137, %v5805, %v5807
      %v5828 = vsel %vm1137, %v5807, %v5809
      %v5829 = vsel %vm1137, %v5809, %v5811
      %v5830 = vsel %vm1137, %v5811, %v5813
      %v5831 = vsel %vm1137, %v5813, %v5815
      %v5832 = vsel %vm1137, %v5815, %v5817
      %v5833 = vsel %vm1137, %v5817, %v5819
      %v5834 = vsel %vm1137, %v5819, %v5821
      %v5835 = vsel %vm1137, %v5821, %v5823
      %v5837 = vsel %vm5344, %v5290, 0
      %v5839 = vsel %vm344, %v5824, 0
      %v5841 = vsel %vm344, %v5825, 0
      %v5843 = vsel %vm344, %v5826, 0
      %v5845 = vsel %vm344, %v5827, 0
      %v5847 = vsel %vm344, %v5828, 0
      %v5849 = vsel %vm344, %v5829, 0
      %v5851 = vsel %vm344, %v5830, 0
      %v5853 = vsel %vm344, %v5831, 0
      %v5855 = vsel %vm344, %v5832, 0
      %v5857 = vsel %vm344, %v5833, 0
      %v5859 = vsel %vm344, %v5834, 0
      %v5861 = vsel %vm344, %v5835, 0
      %5863 = vmatprep.subr.mxu0 %v5841
      %5864 = vmatpush1.msra.mxu0 %v5839
      %5865 = vmatprep.subr.mxu0 0.0
      %5866 = vmatpush1.msra.mxu0 0.0
      %5867 = vmatprep.subr.mxu0 0.0
      %5868 = vmatpush1.msra.mxu0 0.0
      %5869 = vmatprep.subr.mxu0 0.0
      %5870 = vmatpush1.msra.mxu0 0.0
      %5871 = vmatprep.subr.mxu0 0.0
      %5872 = vmatpush1.msra.mxu0 0.0
      %5873 = vmatprep.subr.mxu0 0.0
      %5874 = vmatpush1.msra.mxu0 0.0
      %5875 = vmatprep.subr.mxu0 0.0
      %5876 = vmatpush1.msra.mxu0 0.0
      %5877 = vmatprep.subr.mxu0 0.0
      %5878 = vmatpush1.msra.mxu0 0.0
      %5879 = vmatprep.subr.mxu0 0.0
      %5880 = vmatpush1.msra.mxu0 0.0
      %5881 = vmatprep.subr.mxu0 0.0
      %5882 = vmatpush1.msra.mxu0 0.0
      %5883 = vmatprep.subr.mxu0 0.0
      %5884 = vmatpush1.msra.mxu0 0.0
      %5885 = vmatprep.subr.mxu0 0.0
      %5886 = vmatpush1.msra.mxu0 0.0
      %5887 = vmatprep.subr.mxu0 0.0
      %5888 = vmatpush1.msra.mxu0 0.0
      %5889 = vmatprep.subr.mxu0 0.0
      %5890 = vmatpush1.msra.mxu0 0.0
      %5891 = vmatprep.subr.mxu0 0.0
      %5892 = vmatpush1.msra.mxu0 0.0
      %5893 = vmatprep.subr.mxu0 0.0
      %5894 = vmatpush1.msra.mxu0 0.0
      %5895 = vmatprep.subr.mxu0 0.0
      %5896 = vmatpush1.msra.mxu0 0.0
      %5897 = vmatprep.subr.mxu0 0.0
      %5898 = vmatpush1.msra.mxu0 0.0
      %5899 = vmatprep.subr.mxu0 0.0
      %5900 = vmatpush1.msra.mxu0 0.0
      %5901 = vmatprep.subr.mxu0 0.0
      %5902 = vmatpush1.msra.mxu0 0.0
      %5903 = vmatprep.subr.mxu0 0.0
      %5904 = vmatpush1.msra.mxu0 0.0
      %5905 = vmatprep.subr.mxu0 0.0
      %5906 = vmatpush1.msra.mxu0 0.0
      %5907 = vmatprep.subr.mxu0 0.0
      %5908 = vmatpush1.msra.mxu0 0.0
      %5909 = vmatprep.subr.mxu0 0.0
      %5910 = vmatpush1.msra.mxu0 0.0
      %5911 = vmatprep.subr.mxu0 0.0
      %5912 = vmatpush1.msra.mxu0 0.0
      %5913 = vmatprep.subr.mxu0 0.0
      %5914 = vmatpush1.msra.mxu0 0.0
      %5915 = vmatprep.subr.mxu0 0.0
      %5916 = vmatpush1.msra.mxu0 0.0
      %5917 = vmatprep.subr.mxu0 0.0
      %5918 = vmatpush1.msra.mxu0 0.0
      %5919 = vmatprep.subr.mxu0 0.0
      %5920 = vmatpush1.msra.mxu0 0.0
      %5921 = vmatprep.subr.mxu0 0.0
      %5922 = vmatpush1.msra.mxu0 0.0
      %5923 = vmatprep.subr.mxu0 0.0
      %5924 = vmatpush1.msra.mxu0 0.0
      %5925 = vmatprep.subr.mxu0 0.0
      %5926 = vmatpush1.msra.mxu0 0.0
      %5927 = vmatprep.mubr.f32.mxu0 0.0
      %5928 = vmatmul.mubr.f32.gmra.mrb[0].mxu0 %v5837
      %v5929 = vpop.f32.mrb[0].mxu0
      %v5930 = vadd.f32 %v5439, %v5929
      %v5931 = vpop.f32.mrb[0].mxu0
      %v5932 = vadd.f32 %v5441, %v5931
      %5933 = vdwg.mxu0
      %5934 = vmatprep.subr.mxu0 %v5845
      %5935 = vmatpush1.msra.mxu0 %v5843
      %5936 = vmatprep.subr.mxu0 0.0
      %5937 = vmatpush1.msra.mxu0 0.0
      %5938 = vmatprep.subr.mxu0 0.0
      %5939 = vmatpush1.msra.mxu0 0.0
      %5940 = vmatprep.subr.mxu0 0.0
      %5941 = vmatpush1.msra.mxu0 0.0
      %5942 = vmatprep.subr.mxu0 0.0
      %5943 = vmatpush1.msra.mxu0 0.0
      %5944 = vmatprep.subr.mxu0 0.0
      %5945 = vmatpush1.msra.mxu0 0.0
      %5946 = vmatprep.subr.mxu0 0.0
      %5947 = vmatpush1.msra.mxu0 0.0
      %5948 = vmatprep.subr.mxu0 0.0
      %5949 = vmatpush1.msra.mxu0 0.0
      %5950 = vmatprep.subr.mxu0 0.0
      %5951 = vmatpush1.msra.mxu0 0.0
      %5952 = vmatprep.subr.mxu0 0.0
      %5953 = vmatpush1.msra.mxu0 0.0
      %5954 = vmatprep.subr.mxu0 0.0
      %5955 = vmatpush1.msra.mxu0 0.0
      %5956 = vmatprep.subr.mxu0 0.0
      %5957 = vmatpush1.msra.mxu0 0.0
      %5958 = vmatprep.subr.mxu0 0.0
      %5959 = vmatpush1.msra.mxu0 0.0
      %5960 = vmatprep.subr.mxu0 0.0
      %5961 = vmatpush1.msra.mxu0 0.0
      %5962 = vmatprep.subr.mxu0 0.0
      %5963 = vmatpush1.msra.mxu0 0.0
      %5964 = vmatprep.subr.mxu0 0.0
      %5965 = vmatpush1.msra.mxu0 0.0
      %5966 = vmatprep.subr.mxu0 0.0
      %5967 = vmatpush1.msra.mxu0 0.0
      %5968 = vmatprep.subr.mxu0 0.0
      %5969 = vmatpush1.msra.mxu0 0.0
      %5970 = vmatprep.subr.mxu0 0.0
      %5971 = vmatpush1.msra.mxu0 0.0
      %5972 = vmatprep.subr.mxu0 0.0
      %5973 = vmatpush1.msra.mxu0 0.0
      %5974 = vmatprep.subr.mxu0 0.0
      %5975 = vmatpush1.msra.mxu0 0.0
      %5976 = vmatprep.subr.mxu0 0.0
      %5977 = vmatpush1.msra.mxu0 0.0
      %5978 = vmatprep.subr.mxu0 0.0
      %5979 = vmatpush1.msra.mxu0 0.0
      %5980 = vmatprep.subr.mxu0 0.0
      %5981 = vmatpush1.msra.mxu0 0.0
      %5982 = vmatprep.subr.mxu0 0.0
      %5983 = vmatpush1.msra.mxu0 0.0
      %5984 = vmatprep.subr.mxu0 0.0
      %5985 = vmatpush1.msra.mxu0 0.0
      %5986 = vmatprep.subr.mxu0 0.0
      %5987 = vmatpush1.msra.mxu0 0.0
      %5988 = vmatprep.subr.mxu0 0.0
      %5989 = vmatpush1.msra.mxu0 0.0
      %5990 = vmatprep.subr.mxu0 0.0
      %5991 = vmatpush1.msra.mxu0 0.0
      %5992 = vmatprep.subr.mxu0 0.0
      %5993 = vmatpush1.msra.mxu0 0.0
      %5994 = vmatprep.subr.mxu0 0.0
      %5995 = vmatpush1.msra.mxu0 0.0
      %5996 = vmatprep.subr.mxu0 0.0
      %5997 = vmatpush1.msra.mxu0 0.0
      %5998 = vmatprep.mubr.f32.mxu0 0.0
      %5999 = vmatmul.mubr.f32.gmra.mrb[0].mxu0 %v5837
      %v6000 = vpop.f32.mrb[0].mxu0
      %v6001 = vadd.f32 %v5510, %v6000
      %v6002 = vpop.f32.mrb[0].mxu0
      %v6003 = vadd.f32 %v5512, %v6002
      %6004 = vdwg.mxu0
      %6005 = vmatprep.subr.mxu0 %v5849
      %6006 = vmatpush1.msra.mxu0 %v5847
      %6007 = vmatprep.subr.mxu0 0.0
      %6008 = vmatpush1.msra.mxu0 0.0
      %6009 = vmatprep.subr.mxu0 0.0
      %6010 = vmatpush1.msra.mxu0 0.0
      %6011 = vmatprep.subr.mxu0 0.0
      %6012 = vmatpush1.msra.mxu0 0.0
      %6013 = vmatprep.subr.mxu0 0.0
      %6014 = vmatpush1.msra.mxu0 0.0
      %6015 = vmatprep.subr.mxu0 0.0
      %6016 = vmatpush1.msra.mxu0 0.0
      %6017 = vmatprep.subr.mxu0 0.0
      %6018 = vmatpush1.msra.mxu0 0.0
      %6019 = vmatprep.subr.mxu0 0.0
      %6020 = vmatpush1.msra.mxu0 0.0
      %6021 = vmatprep.subr.mxu0 0.0
      %6022 = vmatpush1.msra.mxu0 0.0
      %6023 = vmatprep.subr.mxu0 0.0
      %6024 = vmatpush1.msra.mxu0 0.0
      %6025 = vmatprep.subr.mxu0 0.0
      %6026 = vmatpush1.msra.mxu0 0.0
      %6027 = vmatprep.subr.mxu0 0.0
      %6028 = vmatpush1.msra.mxu0 0.0
      %6029 = vmatprep.subr.mxu0 0.0
      %6030 = vmatpush1.msra.mxu0 0.0
      %6031 = vmatprep.subr.mxu0 0.0
      %6032 = vmatpush1.msra.mxu0 0.0
      %6033 = vmatprep.subr.mxu0 0.0
      %6034 = vmatpush1.msra.mxu0 0.0
      %6035 = vmatprep.subr.mxu0 0.0
      %6036 = vmatpush1.msra.mxu0 0.0
      %6037 = vmatprep.subr.mxu0 0.0
      %6038 = vmatpush1.msra.mxu0 0.0
      %6039 = vmatprep.subr.mxu0 0.0
      %6040 = vmatpush1.msra.mxu0 0.0
      %6041 = vmatprep.subr.mxu0 0.0
      %6042 = vmatpush1.msra.mxu0 0.0
      %6043 = vmatprep.subr.mxu0 0.0
      %6044 = vmatpush1.msra.mxu0 0.0
      %6045 = vmatprep.subr.mxu0 0.0
      %6046 = vmatpush1.msra.mxu0 0.0
      %6047 = vmatprep.subr.mxu0 0.0
      %6048 = vmatpush1.msra.mxu0 0.0
      %6049 = vmatprep.subr.mxu0 0.0
      %6050 = vmatpush1.msra.mxu0 0.0
      %6051 = vmatprep.subr.mxu0 0.0
      %6052 = vmatpush1.msra.mxu0 0.0
      %6053 = vmatprep.subr.mxu0 0.0
      %6054 = vmatpush1.msra.mxu0 0.0
      %6055 = vmatprep.subr.mxu0 0.0
      %6056 = vmatpush1.msra.mxu0 0.0
      %6057 = vmatprep.subr.mxu0 0.0
      %6058 = vmatpush1.msra.mxu0 0.0
      %6059 = vmatprep.subr.mxu0 0.0
      %6060 = vmatpush1.msra.mxu0 0.0
      %6061 = vmatprep.subr.mxu0 0.0
      %6062 = vmatpush1.msra.mxu0 0.0
      %6063 = vmatprep.subr.mxu0 0.0
      %6064 = vmatpush1.msra.mxu0 0.0
      %6065 = vmatprep.subr.mxu0 0.0
      %6066 = vmatpush1.msra.mxu0 0.0
      %6067 = vmatprep.subr.mxu0 0.0
      %6068 = vmatpush1.msra.mxu0 0.0
      %6069 = vmatprep.mubr.f32.mxu0 0.0
      %6070 = vmatmul.mubr.f32.gmra.mrb[0].mxu0 %v5837
      %v6071 = vpop.f32.mrb[0].mxu0
      %v6072 = vadd.f32 %v5581, %v6071
      %v6073 = vpop.f32.mrb[0].mxu0
      %v6074 = vadd.f32 %v5583, %v6073
      %6075 = vdwg.mxu0
      %6076 = vmatprep.subr.mxu0 %v5853
      %6077 = vmatpush1.msra.mxu0 %v5851
      %6078 = vmatprep.subr.mxu0 0.0
      %6079 = vmatpush1.msra.mxu0 0.0
      %6080 = vmatprep.subr.mxu0 0.0
      %6081 = vmatpush1.msra.mxu0 0.0
      %6082 = vmatprep.subr.mxu0 0.0
      %6083 = vmatpush1.msra.mxu0 0.0
      %6084 = vmatprep.subr.mxu0 0.0
      %6085 = vmatpush1.msra.mxu0 0.0
      %6086 = vmatprep.subr.mxu0 0.0
      %6087 = vmatpush1.msra.mxu0 0.0
      %6088 = vmatprep.subr.mxu0 0.0
      %6089 = vmatpush1.msra.mxu0 0.0
      %6090 = vmatprep.subr.mxu0 0.0
      %6091 = vmatpush1.msra.mxu0 0.0
      %6092 = vmatprep.subr.mxu0 0.0
      %6093 = vmatpush1.msra.mxu0 0.0
      %6094 = vmatprep.subr.mxu0 0.0
      %6095 = vmatpush1.msra.mxu0 0.0
      %6096 = vmatprep.subr.mxu0 0.0
      %6097 = vmatpush1.msra.mxu0 0.0
      %6098 = vmatprep.subr.mxu0 0.0
      %6099 = vmatpush1.msra.mxu0 0.0
      %6100 = vmatprep.subr.mxu0 0.0
      %6101 = vmatpush1.msra.mxu0 0.0
      %6102 = vmatprep.subr.mxu0 0.0
      %6103 = vmatpush1.msra.mxu0 0.0
      %6104 = vmatprep.subr.mxu0 0.0
      %6105 = vmatpush1.msra.mxu0 0.0
      %6106 = vmatprep.subr.mxu0 0.0
      %6107 = vmatpush1.msra.mxu0 0.0
      %6108 = vmatprep.subr.mxu0 0.0
      %6109 = vmatpush1.msra.mxu0 0.0
      %6110 = vmatprep.subr.mxu0 0.0
      %6111 = vmatpush1.msra.mxu0 0.0
      %6112 = vmatprep.subr.mxu0 0.0
      %6113 = vmatpush1.msra.mxu0 0.0
      %6114 = vmatprep.subr.mxu0 0.0
      %6115 = vmatpush1.msra.mxu0 0.0
      %6116 = vmatprep.subr.mxu0 0.0
      %6117 = vmatpush1.msra.mxu0 0.0
      %6118 = vmatprep.subr.mxu0 0.0
      %6119 = vmatpush1.msra.mxu0 0.0
      %6120 = vmatprep.subr.mxu0 0.0
      %6121 = vmatpush1.msra.mxu0 0.0
      %6122 = vmatprep.subr.mxu0 0.0
      %6123 = vmatpush1.msra.mxu0 0.0
      %6124 = vmatprep.subr.mxu0 0.0
      %6125 = vmatpush1.msra.mxu0 0.0
      %6126 = vmatprep.subr.mxu0 0.0
      %6127 = vmatpush1.msra.mxu0 0.0
      %6128 = vmatprep.subr.mxu0 0.0
      %6129 = vmatpush1.msra.mxu0 0.0
      %6130 = vmatprep.subr.mxu0 0.0
      %6131 = vmatpush1.msra.mxu0 0.0
      %6132 = vmatprep.subr.mxu0 0.0
      %6133 = vmatpush1.msra.mxu0 0.0
      %6134 = vmatprep.subr.mxu0 0.0
      %6135 = vmatpush1.msra.mxu0 0.0
      %6136 = vmatprep.subr.mxu0 0.0
      %6137 = vmatpush1.msra.mxu0 0.0
      %6138 = vmatprep.subr.mxu0 0.0
      %6139 = vmatpush1.msra.mxu0 0.0
      %6140 = vmatprep.mubr.f32.mxu0 0.0
      %6141 = vmatmul.mubr.f32.gmra.mrb[0].mxu0 %v5837
      %v6142 = vpop.f32.mrb[0].mxu0
      %v6143 = vadd.f32 %v5652, %v6142
      %v6144 = vpop.f32.mrb[0].mxu0
      %v6145 = vadd.f32 %v5654, %v6144
      %6146 = vdwg.mxu0
      %6147 = vmatprep.subr.mxu0 %v5857
      %6148 = vmatpush1.msra.mxu0 %v5855
      %6149 = vmatprep.subr.mxu0 0.0
      %6150 = vmatpush1.msra.mxu0 0.0
      %6151 = vmatprep.subr.mxu0 0.0
      %6152 = vmatpush1.msra.mxu0 0.0
      %6153 = vmatprep.subr.mxu0 0.0
      %6154 = vmatpush1.msra.mxu0 0.0
      %6155 = vmatprep.subr.mxu0 0.0
      %6156 = vmatpush1.msra.mxu0 0.0
      %6157 = vmatprep.subr.mxu0 0.0
      %6158 = vmatpush1.msra.mxu0 0.0
      %6159 = vmatprep.subr.mxu0 0.0
      %6160 = vmatpush1.msra.mxu0 0.0
      %6161 = vmatprep.subr.mxu0 0.0
      %6162 = vmatpush1.msra.mxu0 0.0
      %6163 = vmatprep.subr.mxu0 0.0
      %6164 = vmatpush1.msra.mxu0 0.0
      %6165 = vmatprep.subr.mxu0 0.0
      %6166 = vmatpush1.msra.mxu0 0.0
      %6167 = vmatprep.subr.mxu0 0.0
      %6168 = vmatpush1.msra.mxu0 0.0
      %6169 = vmatprep.subr.mxu0 0.0
      %6170 = vmatpush1.msra.mxu0 0.0
      %6171 = vmatprep.subr.mxu0 0.0
      %6172 = vmatpush1.msra.mxu0 0.0
      %6173 = vmatprep.subr.mxu0 0.0
      %6174 = vmatpush1.msra.mxu0 0.0
      %6175 = vmatprep.subr.mxu0 0.0
      %6176 = vmatpush1.msra.mxu0 0.0
      %6177 = vmatprep.subr.mxu0 0.0
      %6178 = vmatpush1.msra.mxu0 0.0
      %6179 = vmatprep.subr.mxu0 0.0
      %6180 = vmatpush1.msra.mxu0 0.0
      %6181 = vmatprep.subr.mxu0 0.0
      %6182 = vmatpush1.msra.mxu0 0.0
      %6183 = vmatprep.subr.mxu0 0.0
      %6184 = vmatpush1.msra.mxu0 0.0
      %6185 = vmatprep.subr.mxu0 0.0
      %6186 = vmatpush1.msra.mxu0 0.0
      %6187 = vmatprep.subr.mxu0 0.0
      %6188 = vmatpush1.msra.mxu0 0.0
      %6189 = vmatprep.subr.mxu0 0.0
      %6190 = vmatpush1.msra.mxu0 0.0
      %6191 = vmatprep.subr.mxu0 0.0
      %6192 = vmatpush1.msra.mxu0 0.0
      %6193 = vmatprep.subr.mxu0 0.0
      %6194 = vmatpush1.msra.mxu0 0.0
      %6195 = vmatprep.subr.mxu0 0.0
      %6196 = vmatpush1.msra.mxu0 0.0
      %6197 = vmatprep.subr.mxu0 0.0
      %6198 = vmatpush1.msra.mxu0 0.0
      %6199 = vmatprep.subr.mxu0 0.0
      %6200 = vmatpush1.msra.mxu0 0.0
      %6201 = vmatprep.subr.mxu0 0.0
      %6202 = vmatpush1.msra.mxu0 0.0
      %6203 = vmatprep.subr.mxu0 0.0
      %6204 = vmatpush1.msra.mxu0 0.0
      %6205 = vmatprep.subr.mxu0 0.0
      %6206 = vmatpush1.msra.mxu0 0.0
      %6207 = vmatprep.subr.mxu0 0.0
      %6208 = vmatpush1.msra.mxu0 0.0
      %6209 = vmatprep.subr.mxu0 0.0
      %6210 = vmatpush1.msra.mxu0 0.0
      %6211 = vmatprep.mubr.f32.mxu0 0.0
      %6212 = vmatmul.mubr.f32.gmra.mrb[0].mxu0 %v5837
      %v6213 = vpop.f32.mrb[0].mxu0
      %v6214 = vadd.f32 %v5723, %v6213
      %v6215 = vpop.f32.mrb[0].mxu0
      %v6216 = vadd.f32 %v5725, %v6215
      %6217 = vdwg.mxu0
      %6218 = vmatprep.subr.mxu0 %v5861
      %6219 = vmatpush1.msra.mxu0 %v5859
      %6220 = vmatprep.subr.mxu0 0.0
      %6221 = vmatpush1.msra.mxu0 0.0
      %6222 = vmatprep.subr.mxu0 0.0
      %6223 = vmatpush1.msra.mxu0 0.0
      %6224 = vmatprep.subr.mxu0 0.0
      %6225 = vmatpush1.msra.mxu0 0.0
      %6226 = vmatprep.subr.mxu0 0.0
      %6227 = vmatpush1.msra.mxu0 0.0
      %6228 = vmatprep.subr.mxu0 0.0
      %6229 = vmatpush1.msra.mxu0 0.0
      %6230 = vmatprep.subr.mxu0 0.0
      %6231 = vmatpush1.msra.mxu0 0.0
      %6232 = vmatprep.subr.mxu0 0.0
      %6233 = vmatpush1.msra.mxu0 0.0
      %6234 = vmatprep.subr.mxu0 0.0
      %6235 = vmatpush1.msra.mxu0 0.0
      %6236 = vmatprep.subr.mxu0 0.0
      %6237 = vmatpush1.msra.mxu0 0.0
      %6238 = vmatprep.subr.mxu0 0.0
      %6239 = vmatpush1.msra.mxu0 0.0
      %6240 = vmatprep.subr.mxu0 0.0
      %6241 = vmatpush1.msra.mxu0 0.0
      %6242 = vmatprep.subr.mxu0 0.0
      %6243 = vmatpush1.msra.mxu0 0.0
      %6244 = vmatprep.subr.mxu0 0.0
      %6245 = vmatpush1.msra.mxu0 0.0
      %6246 = vmatprep.subr.mxu0 0.0
      %6247 = vmatpush1.msra.mxu0 0.0
      %6248 = vmatprep.subr.mxu0 0.0
      %6249 = vmatpush1.msra.mxu0 0.0
      %6250 = vmatprep.subr.mxu0 0.0
      %6251 = vmatpush1.msra.mxu0 0.0
      %6252 = vmatprep.subr.mxu0 0.0
      %6253 = vmatpush1.msra.mxu0 0.0
      %6254 = vmatprep.subr.mxu0 0.0
      %6255 = vmatpush1.msra.mxu0 0.0
      %6256 = vmatprep.subr.mxu0 0.0
      %6257 = vmatpush1.msra.mxu0 0.0
      %6258 = vmatprep.subr.mxu0 0.0
      %6259 = vmatpush1.msra.mxu0 0.0
      %6260 = vmatprep.subr.mxu0 0.0
      %6261 = vmatpush1.msra.mxu0 0.0
      %6262 = vmatprep.subr.mxu0 0.0
      %6263 = vmatpush1.msra.mxu0 0.0
      %6264 = vmatprep.subr.mxu0 0.0
      %6265 = vmatpush1.msra.mxu0 0.0
      %6266 = vmatprep.subr.mxu0 0.0
      %6267 = vmatpush1.msra.mxu0 0.0
      %6268 = vmatprep.subr.mxu0 0.0
      %6269 = vmatpush1.msra.mxu0 0.0
      %6270 = vmatprep.subr.mxu0 0.0
      %6271 = vmatpush1.msra.mxu0 0.0
      %6272 = vmatprep.subr.mxu0 0.0
      %6273 = vmatpush1.msra.mxu0 0.0
      %6274 = vmatprep.subr.mxu0 0.0
      %6275 = vmatpush1.msra.mxu0 0.0
      %6276 = vmatprep.subr.mxu0 0.0
      %6277 = vmatpush1.msra.mxu0 0.0
      %6278 = vmatprep.subr.mxu0 0.0
      %6279 = vmatpush1.msra.mxu0 0.0
      %6280 = vmatprep.subr.mxu0 0.0
      %6281 = vmatpush1.msra.mxu0 0.0
      %6282 = vmatprep.mubr.f32.mxu0 0.0
      %6283 = vmatmul.mubr.f32.gmra.mrb[0].mxu0 %v5837
      %v6284 = vpop.f32.mrb[0].mxu0
      %v6285 = vadd.f32 %v5794, %v6284
      %v6286 = vpop.f32.mrb[0].mxu0
      %v6287 = vadd.f32 %v5796, %v6286
      %6288 = vdwg.mxu0
      %v6289 = vld [vmem:[#allocation3] sm:$0xff]
      %v6290 = vld [vmem:[#allocation3 + $0x8] sm:$0xff]
      %v6291 = vld [vmem:[#allocation3 + $0x10] sm:$0xff]
      %v6292 = vld [vmem:[#allocation3 + $0x18] sm:$0xff]
      %v6293 = vld [vmem:[#allocation3 + $0x20] sm:$0xff]
      %v6294 = vld [vmem:[#allocation3 + $0x28] sm:$0xff]
      %v6295 = vld [vmem:[#allocation3 + $0x30] sm:$0xf]
      %s6296 = scalar_lea.vmem %s4, 8
      %v6297 = vld [vmem:[%s6296] sm:$0xf]
      %v6305 = vcombine.high %v6289, %v6289
      %v6306 = vcombine.high %v6290, %v6290
      %v6307 = vcombine.high %v6291, %v6291
      %v6308 = vcombine.high %v6292, %v6292
      %v6309 = vcombine.high %v6293, %v6293
      %v6310 = vcombine.high %v6294, %v6294
      %6311 = vrot.lane.b32.xlu0 %v6289, 8
      %v6312 = vpop.permute.xlu0 %6311
      %6313 = vrot.lane.b32.xlu0 %v6305, 8
      %v6314 = vpop.permute.xlu0 %6313
      %6315 = vrot.lane.b32.xlu0 %v6290, 8
      %v6316 = vpop.permute.xlu0 %6315
      %6317 = vrot.lane.b32.xlu0 %v6306, 8
      %v6318 = vpop.permute.xlu0 %6317
      %6319 = vrot.lane.b32.xlu0 %v6291, 8
      %v6320 = vpop.permute.xlu0 %6319
      %6321 = vrot.lane.b32.xlu0 %v6307, 8
      %v6322 = vpop.permute.xlu0 %6321
      %6323 = vrot.lane.b32.xlu0 %v6292, 8
      %v6324 = vpop.permute.xlu0 %6323
      %6325 = vrot.lane.b32.xlu0 %v6308, 8
      %v6326 = vpop.permute.xlu0 %6325
      %6327 = vrot.lane.b32.xlu0 %v6293, 8
      %v6328 = vpop.permute.xlu0 %6327
      %6329 = vrot.lane.b32.xlu0 %v6309, 8
      %v6330 = vpop.permute.xlu0 %6329
      %6331 = vrot.lane.b32.xlu0 %v6294, 8
      %v6332 = vpop.permute.xlu0 %6331
      %6333 = vrot.lane.b32.xlu0 %v6310, 8
      %v6334 = vpop.permute.xlu0 %6333
      %6335 = vrot.lane.b32.xlu0 %v6295, 8
      %v6336 = vpop.permute.xlu0 %6335
      %v6337 = vsel %vm681, %v6312, %v6314
      %v6338 = vsel %vm681, %v6314, %v6316
      %v6339 = vsel %vm681, %v6316, %v6318
      %v6340 = vsel %vm681, %v6318, %v6320
      %v6341 = vsel %vm681, %v6320, %v6322
      %v6342 = vsel %vm681, %v6322, %v6324
      %v6343 = vsel %vm681, %v6324, %v6326
      %v6344 = vsel %vm681, %v6326, %v6328
      %v6345 = vsel %vm681, %v6328, %v6330
      %v6346 = vsel %vm681, %v6330, %v6332
      %v6347 = vsel %vm681, %v6332, %v6334
      %v6348 = vsel %vm681, %v6334, %v6336
      %v6350 = vsel %vm5344, %v6297, 0
      %v6352 = vsel %vm344, %v6337, 0
      %v6354 = vsel %vm344, %v6338, 0
      %v6356 = vsel %vm344, %v6339, 0
      %v6358 = vsel %vm344, %v6340, 0
      %v6360 = vsel %vm344, %v6341, 0
      %v6362 = vsel %vm344, %v6342, 0
      %v6364 = vsel %vm344, %v6343, 0
      %v6366 = vsel %vm344, %v6344, 0
      %v6368 = vsel %vm344, %v6345, 0
      %v6370 = vsel %vm344, %v6346, 0
      %v6372 = vsel %vm344, %v6347, 0
      %v6374 = vsel %vm344, %v6348, 0
      %6376 = vmatprep.subr.mxu0 %v6354
      %6377 = vmatpush1.msra.mxu0 %v6352
      %6378 = vmatprep.subr.mxu0 0.0
      %6379 = vmatpush1.msra.mxu0 0.0
      %6380 = vmatprep.subr.mxu0 0.0
      %6381 = vmatpush1.msra.mxu0 0.0
      %6382 = vmatprep.subr.mxu0 0.0
      %6383 = vmatpush1.msra.mxu0 0.0
      %6384 = vmatprep.subr.mxu0 0.0
      %6385 = vmatpush1.msra.mxu0 0.0
      %6386 = vmatprep.subr.mxu0 0.0
      %6387 = vmatpush1.msra.mxu0 0.0
      %6388 = vmatprep.subr.mxu0 0.0
      %6389 = vmatpush1.msra.mxu0 0.0
      %6390 = vmatprep.subr.mxu0 0.0
      %6391 = vmatpush1.msra.mxu0 0.0
      %6392 = vmatprep.subr.mxu0 0.0
      %6393 = vmatpush1.msra.mxu0 0.0
      %6394 = vmatprep.subr.mxu0 0.0
      %6395 = vmatpush1.msra.mxu0 0.0
      %6396 = vmatprep.subr.mxu0 0.0
      %6397 = vmatpush1.msra.mxu0 0.0
      %6398 = vmatprep.subr.mxu0 0.0
      %6399 = vmatpush1.msra.mxu0 0.0
      %6400 = vmatprep.subr.mxu0 0.0
      %6401 = vmatpush1.msra.mxu0 0.0
      %6402 = vmatprep.subr.mxu0 0.0
      %6403 = vmatpush1.msra.mxu0 0.0
      %6404 = vmatprep.subr.mxu0 0.0
      %6405 = vmatpush1.msra.mxu0 0.0
      %6406 = vmatprep.subr.mxu0 0.0
      %6407 = vmatpush1.msra.mxu0 0.0
      %6408 = vmatprep.subr.mxu0 0.0
      %6409 = vmatpush1.msra.mxu0 0.0
      %6410 = vmatprep.subr.mxu0 0.0
      %6411 = vmatpush1.msra.mxu0 0.0
      %6412 = vmatprep.subr.mxu0 0.0
      %6413 = vmatpush1.msra.mxu0 0.0
      %6414 = vmatprep.subr.mxu0 0.0
      %6415 = vmatpush1.msra.mxu0 0.0
      %6416 = vmatprep.subr.mxu0 0.0
      %6417 = vmatpush1.msra.mxu0 0.0
      %6418 = vmatprep.subr.mxu0 0.0
      %6419 = vmatpush1.msra.mxu0 0.0
      %6420 = vmatprep.subr.mxu0 0.0
      %6421 = vmatpush1.msra.mxu0 0.0
      %6422 = vmatprep.subr.mxu0 0.0
      %6423 = vmatpush1.msra.mxu0 0.0
      %6424 = vmatprep.subr.mxu0 0.0
      %6425 = vmatpush1.msra.mxu0 0.0
      %6426 = vmatprep.subr.mxu0 0.0
      %6427 = vmatpush1.msra.mxu0 0.0
      %6428 = vmatprep.subr.mxu0 0.0
      %6429 = vmatpush1.msra.mxu0 0.0
      %6430 = vmatprep.subr.mxu0 0.0
      %6431 = vmatpush1.msra.mxu0 0.0
      %6432 = vmatprep.subr.mxu0 0.0
      %6433 = vmatpush1.msra.mxu0 0.0
      %6434 = vmatprep.subr.mxu0 0.0
      %6435 = vmatpush1.msra.mxu0 0.0
      %6436 = vmatprep.subr.mxu0 0.0
      %6437 = vmatpush1.msra.mxu0 0.0
      %6438 = vmatprep.subr.mxu0 0.0
      %6439 = vmatpush1.msra.mxu0 0.0
      %6440 = vmatprep.mubr.f32.mxu0 0.0
      %6441 = vmatmul.mubr.f32.gmra.mrb[0].mxu0 %v6350
      %v6442 = vpop.f32.mrb[0].mxu0
      %v6443 = vadd.f32 0.0, %v6442
      %v6444 = vpop.f32.mrb[0].mxu0
      %v6445 = vadd.f32 0.0, %v6444
      %6446 = vdwg.mxu0
      %6447 = vmatprep.subr.mxu0 %v6358
      %6448 = vmatpush1.msra.mxu0 %v6356
      %6449 = vmatprep.subr.mxu0 0.0
      %6450 = vmatpush1.msra.mxu0 0.0
      %6451 = vmatprep.subr.mxu0 0.0
      %6452 = vmatpush1.msra.mxu0 0.0
      %6453 = vmatprep.subr.mxu0 0.0
      %6454 = vmatpush1.msra.mxu0 0.0
      %6455 = vmatprep.subr.mxu0 0.0
      %6456 = vmatpush1.msra.mxu0 0.0
      %6457 = vmatprep.subr.mxu0 0.0
      %6458 = vmatpush1.msra.mxu0 0.0
      %6459 = vmatprep.subr.mxu0 0.0
      %6460 = vmatpush1.msra.mxu0 0.0
      %6461 = vmatprep.subr.mxu0 0.0
      %6462 = vmatpush1.msra.mxu0 0.0
      %6463 = vmatprep.subr.mxu0 0.0
      %6464 = vmatpush1.msra.mxu0 0.0
      %6465 = vmatprep.subr.mxu0 0.0
      %6466 = vmatpush1.msra.mxu0 0.0
      %6467 = vmatprep.subr.mxu0 0.0
      %6468 = vmatpush1.msra.mxu0 0.0
      %6469 = vmatprep.subr.mxu0 0.0
      %6470 = vmatpush1.msra.mxu0 0.0
      %6471 = vmatprep.subr.mxu0 0.0
      %6472 = vmatpush1.msra.mxu0 0.0
      %6473 = vmatprep.subr.mxu0 0.0
      %6474 = vmatpush1.msra.mxu0 0.0
      %6475 = vmatprep.subr.mxu0 0.0
      %6476 = vmatpush1.msra.mxu0 0.0
      %6477 = vmatprep.subr.mxu0 0.0
      %6478 = vmatpush1.msra.mxu0 0.0
      %6479 = vmatprep.subr.mxu0 0.0
      %6480 = vmatpush1.msra.mxu0 0.0
      %6481 = vmatprep.subr.mxu0 0.0
      %6482 = vmatpush1.msra.mxu0 0.0
      %6483 = vmatprep.subr.mxu0 0.0
      %6484 = vmatpush1.msra.mxu0 0.0
      %6485 = vmatprep.subr.mxu0 0.0
      %6486 = vmatpush1.msra.mxu0 0.0
      %6487 = vmatprep.subr.mxu0 0.0
      %6488 = vmatpush1.msra.mxu0 0.0
      %6489 = vmatprep.subr.mxu0 0.0
      %6490 = vmatpush1.msra.mxu0 0.0
      %6491 = vmatprep.subr.mxu0 0.0
      %6492 = vmatpush1.msra.mxu0 0.0
      %6493 = vmatprep.subr.mxu0 0.0
      %6494 = vmatpush1.msra.mxu0 0.0
      %6495 = vmatprep.subr.mxu0 0.0
      %6496 = vmatpush1.msra.mxu0 0.0
      %6497 = vmatprep.subr.mxu0 0.0
      %6498 = vmatpush1.msra.mxu0 0.0
      %6499 = vmatprep.subr.mxu0 0.0
      %6500 = vmatpush1.msra.mxu0 0.0
      %6501 = vmatprep.subr.mxu0 0.0
      %6502 = vmatpush1.msra.mxu0 0.0
      %6503 = vmatprep.subr.mxu0 0.0
      %6504 = vmatpush1.msra.mxu0 0.0
      %6505 = vmatprep.subr.mxu0 0.0
      %6506 = vmatpush1.msra.mxu0 0.0
      %6507 = vmatprep.subr.mxu0 0.0
      %6508 = vmatpush1.msra.mxu0 0.0
      %6509 = vmatprep.subr.mxu0 0.0
      %6510 = vmatpush1.msra.mxu0 0.0
      %6511 = vmatprep.mubr.f32.mxu0 0.0
      %6512 = vmatmul.mubr.f32.gmra.mrb[0].mxu0 %v6350
      %v6513 = vpop.f32.mrb[0].mxu0
      %v6514 = vadd.f32 0.0, %v6513
      %v6515 = vpop.f32.mrb[0].mxu0
      %v6516 = vadd.f32 0.0, %v6515
      %6517 = vdwg.mxu0
      %6518 = vmatprep.subr.mxu0 %v6362
      %6519 = vmatpush1.msra.mxu0 %v6360
      %6520 = vmatprep.subr.mxu0 0.0
      %6521 = vmatpush1.msra.mxu0 0.0
      %6522 = vmatprep.subr.mxu0 0.0
      %6523 = vmatpush1.msra.mxu0 0.0
      %6524 = vmatprep.subr.mxu0 0.0
      %6525 = vmatpush1.msra.mxu0 0.0
      %6526 = vmatprep.subr.mxu0 0.0
      %6527 = vmatpush1.msra.mxu0 0.0
      %6528 = vmatprep.subr.mxu0 0.0
      %6529 = vmatpush1.msra.mxu0 0.0
      %6530 = vmatprep.subr.mxu0 0.0
      %6531 = vmatpush1.msra.mxu0 0.0
      %6532 = vmatprep.subr.mxu0 0.0
      %6533 = vmatpush1.msra.mxu0 0.0
      %6534 = vmatprep.subr.mxu0 0.0
      %6535 = vmatpush1.msra.mxu0 0.0
      %6536 = vmatprep.subr.mxu0 0.0
      %6537 = vmatpush1.msra.mxu0 0.0
      %6538 = vmatprep.subr.mxu0 0.0
      %6539 = vmatpush1.msra.mxu0 0.0
      %6540 = vmatprep.subr.mxu0 0.0
      %6541 = vmatpush1.msra.mxu0 0.0
      %6542 = vmatprep.subr.mxu0 0.0
      %6543 = vmatpush1.msra.mxu0 0.0
      %6544 = vmatprep.subr.mxu0 0.0
      %6545 = vmatpush1.msra.mxu0 0.0
      %6546 = vmatprep.subr.mxu0 0.0
      %6547 = vmatpush1.msra.mxu0 0.0
      %6548 = vmatprep.subr.mxu0 0.0
      %6549 = vmatpush1.msra.mxu0 0.0
      %6550 = vmatprep.subr.mxu0 0.0
      %6551 = vmatpush1.msra.mxu0 0.0
      %6552 = vmatprep.subr.mxu0 0.0
      %6553 = vmatpush1.msra.mxu0 0.0
      %6554 = vmatprep.subr.mxu0 0.0
      %6555 = vmatpush1.msra.mxu0 0.0
      %6556 = vmatprep.subr.mxu0 0.0
      %6557 = vmatpush1.msra.mxu0 0.0
      %6558 = vmatprep.subr.mxu0 0.0
      %6559 = vmatpush1.msra.mxu0 0.0
      %6560 = vmatprep.subr.mxu0 0.0
      %6561 = vmatpush1.msra.mxu0 0.0
      %6562 = vmatprep.subr.mxu0 0.0
      %6563 = vmatpush1.msra.mxu0 0.0
      %6564 = vmatprep.subr.mxu0 0.0
      %6565 = vmatpush1.msra.mxu0 0.0
      %6566 = vmatprep.subr.mxu0 0.0
      %6567 = vmatpush1.msra.mxu0 0.0
      %6568 = vmatprep.subr.mxu0 0.0
      %6569 = vmatpush1.msra.mxu0 0.0
      %6570 = vmatprep.subr.mxu0 0.0
      %6571 = vmatpush1.msra.mxu0 0.0
      %6572 = vmatprep.subr.mxu0 0.0
      %6573 = vmatpush1.msra.mxu0 0.0
      %6574 = vmatprep.subr.mxu0 0.0
      %6575 = vmatpush1.msra.mxu0 0.0
      %6576 = vmatprep.subr.mxu0 0.0
      %6577 = vmatpush1.msra.mxu0 0.0
      %6578 = vmatprep.subr.mxu0 0.0
      %6579 = vmatpush1.msra.mxu0 0.0
      %6580 = vmatprep.subr.mxu0 0.0
      %6581 = vmatpush1.msra.mxu0 0.0
      %6582 = vmatprep.mubr.f32.mxu0 0.0
      %6583 = vmatmul.mubr.f32.gmra.mrb[0].mxu0 %v6350
      %v6584 = vpop.f32.mrb[0].mxu0
      %v6585 = vadd.f32 0.0, %v6584
      %v6586 = vpop.f32.mrb[0].mxu0
      %v6587 = vadd.f32 0.0, %v6586
      %6588 = vdwg.mxu0
      %6589 = vmatprep.subr.mxu0 %v6366
      %6590 = vmatpush1.msra.mxu0 %v6364
      %6591 = vmatprep.subr.mxu0 0.0
      %6592 = vmatpush1.msra.mxu0 0.0
      %6593 = vmatprep.subr.mxu0 0.0
      %6594 = vmatpush1.msra.mxu0 0.0
      %6595 = vmatprep.subr.mxu0 0.0
      %6596 = vmatpush1.msra.mxu0 0.0
      %6597 = vmatprep.subr.mxu0 0.0
      %6598 = vmatpush1.msra.mxu0 0.0
      %6599 = vmatprep.subr.mxu0 0.0
      %6600 = vmatpush1.msra.mxu0 0.0
      %6601 = vmatprep.subr.mxu0 0.0
      %6602 = vmatpush1.msra.mxu0 0.0
      %6603 = vmatprep.subr.mxu0 0.0
      %6604 = vmatpush1.msra.mxu0 0.0
      %6605 = vmatprep.subr.mxu0 0.0
      %6606 = vmatpush1.msra.mxu0 0.0
      %6607 = vmatprep.subr.mxu0 0.0
      %6608 = vmatpush1.msra.mxu0 0.0
      %6609 = vmatprep.subr.mxu0 0.0
      %6610 = vmatpush1.msra.mxu0 0.0
      %6611 = vmatprep.subr.mxu0 0.0
      %6612 = vmatpush1.msra.mxu0 0.0
      %6613 = vmatprep.subr.mxu0 0.0
      %6614 = vmatpush1.msra.mxu0 0.0
      %6615 = vmatprep.subr.mxu0 0.0
      %6616 = vmatpush1.msra.mxu0 0.0
      %6617 = vmatprep.subr.mxu0 0.0
      %6618 = vmatpush1.msra.mxu0 0.0
      %6619 = vmatprep.subr.mxu0 0.0
      %6620 = vmatpush1.msra.mxu0 0.0
      %6621 = vmatprep.subr.mxu0 0.0
      %6622 = vmatpush1.msra.mxu0 0.0
      %6623 = vmatprep.subr.mxu0 0.0
      %6624 = vmatpush1.msra.mxu0 0.0
      %6625 = vmatprep.subr.mxu0 0.0
      %6626 = vmatpush1.msra.mxu0 0.0
      %6627 = vmatprep.subr.mxu0 0.0
      %6628 = vmatpush1.msra.mxu0 0.0
      %6629 = vmatprep.subr.mxu0 0.0
      %6630 = vmatpush1.msra.mxu0 0.0
      %6631 = vmatprep.subr.mxu0 0.0
      %6632 = vmatpush1.msra.mxu0 0.0
      %6633 = vmatprep.subr.mxu0 0.0
      %6634 = vmatpush1.msra.mxu0 0.0
      %6635 = vmatprep.subr.mxu0 0.0
      %6636 = vmatpush1.msra.mxu0 0.0
      %6637 = vmatprep.subr.mxu0 0.0
      %6638 = vmatpush1.msra.mxu0 0.0
      %6639 = vmatprep.subr.mxu0 0.0
      %6640 = vmatpush1.msra.mxu0 0.0
      %6641 = vmatprep.subr.mxu0 0.0
      %6642 = vmatpush1.msra.mxu0 0.0
      %6643 = vmatprep.subr.mxu0 0.0
      %6644 = vmatpush1.msra.mxu0 0.0
      %6645 = vmatprep.subr.mxu0 0.0
      %6646 = vmatpush1.msra.mxu0 0.0
      %6647 = vmatprep.subr.mxu0 0.0
      %6648 = vmatpush1.msra.mxu0 0.0
      %6649 = vmatprep.subr.mxu0 0.0
      %6650 = vmatpush1.msra.mxu0 0.0
      %6651 = vmatprep.subr.mxu0 0.0
      %6652 = vmatpush1.msra.mxu0 0.0
      %6653 = vmatprep.mubr.f32.mxu0 0.0
      %6654 = vmatmul.mubr.f32.gmra.mrb[0].mxu0 %v6350
      %v6655 = vpop.f32.mrb[0].mxu0
      %v6656 = vadd.f32 0.0, %v6655
      %v6657 = vpop.f32.mrb[0].mxu0
      %v6658 = vadd.f32 0.0, %v6657
      %6659 = vdwg.mxu0
      %6660 = vmatprep.subr.mxu0 %v6370
      %6661 = vmatpush1.msra.mxu0 %v6368
      %6662 = vmatprep.subr.mxu0 0.0
      %6663 = vmatpush1.msra.mxu0 0.0
      %6664 = vmatprep.subr.mxu0 0.0
      %6665 = vmatpush1.msra.mxu0 0.0
      %6666 = vmatprep.subr.mxu0 0.0
      %6667 = vmatpush1.msra.mxu0 0.0
      %6668 = vmatprep.subr.mxu0 0.0
      %6669 = vmatpush1.msra.mxu0 0.0
      %6670 = vmatprep.subr.mxu0 0.0
      %6671 = vmatpush1.msra.mxu0 0.0
      %6672 = vmatprep.subr.mxu0 0.0
      %6673 = vmatpush1.msra.mxu0 0.0
      %6674 = vmatprep.subr.mxu0 0.0
      %6675 = vmatpush1.msra.mxu0 0.0
      %6676 = vmatprep.subr.mxu0 0.0
      %6677 = vmatpush1.msra.mxu0 0.0
      %6678 = vmatprep.subr.mxu0 0.0
      %6679 = vmatpush1.msra.mxu0 0.0
      %6680 = vmatprep.subr.mxu0 0.0
      %6681 = vmatpush1.msra.mxu0 0.0
      %6682 = vmatprep.subr.mxu0 0.0
      %6683 = vmatpush1.msra.mxu0 0.0
      %6684 = vmatprep.subr.mxu0 0.0
      %6685 = vmatpush1.msra.mxu0 0.0
      %6686 = vmatprep.subr.mxu0 0.0
      %6687 = vmatpush1.msra.mxu0 0.0
      %6688 = vmatprep.subr.mxu0 0.0
      %6689 = vmatpush1.msra.mxu0 0.0
      %6690 = vmatprep.subr.mxu0 0.0
      %6691 = vmatpush1.msra.mxu0 0.0
      %6692 = vmatprep.subr.mxu0 0.0
      %6693 = vmatpush1.msra.mxu0 0.0
      %6694 = vmatprep.subr.mxu0 0.0
      %6695 = vmatpush1.msra.mxu0 0.0
      %6696 = vmatprep.subr.mxu0 0.0
      %6697 = vmatpush1.msra.mxu0 0.0
      %6698 = vmatprep.subr.mxu0 0.0
      %6699 = vmatpush1.msra.mxu0 0.0
      %6700 = vmatprep.subr.mxu0 0.0
      %6701 = vmatpush1.msra.mxu0 0.0
      %6702 = vmatprep.subr.mxu0 0.0
      %6703 = vmatpush1.msra.mxu0 0.0
      %6704 = vmatprep.subr.mxu0 0.0
      %6705 = vmatpush1.msra.mxu0 0.0
      %6706 = vmatprep.subr.mxu0 0.0
      %6707 = vmatpush1.msra.mxu0 0.0
      %6708 = vmatprep.subr.mxu0 0.0
      %6709 = vmatpush1.msra.mxu0 0.0
      %6710 = vmatprep.subr.mxu0 0.0
      %6711 = vmatpush1.msra.mxu0 0.0
      %6712 = vmatprep.subr.mxu0 0.0
      %6713 = vmatpush1.msra.mxu0 0.0
      %6714 = vmatprep.subr.mxu0 0.0
      %6715 = vmatpush1.msra.mxu0 0.0
      %6716 = vmatprep.subr.mxu0 0.0
      %6717 = vmatpush1.msra.mxu0 0.0
      %6718 = vmatprep.subr.mxu0 0.0
      %6719 = vmatpush1.msra.mxu0 0.0
      %6720 = vmatprep.subr.mxu0 0.0
      %6721 = vmatpush1.msra.mxu0 0.0
      %6722 = vmatprep.subr.mxu0 0.0
      %6723 = vmatpush1.msra.mxu0 0.0
      %6724 = vmatprep.mubr.f32.mxu0 0.0
      %6725 = vmatmul.mubr.f32.gmra.mrb[0].mxu0 %v6350
      %v6726 = vpop.f32.mrb[0].mxu0
      %v6727 = vadd.f32 0.0, %v6726
      %v6728 = vpop.f32.mrb[0].mxu0
      %v6729 = vadd.f32 0.0, %v6728
      %6730 = vdwg.mxu0
      %6731 = vmatprep.subr.mxu0 %v6374
      %6732 = vmatpush1.msra.mxu0 %v6372
      %6733 = vmatprep.subr.mxu0 0.0
      %6734 = vmatpush1.msra.mxu0 0.0
      %6735 = vmatprep.subr.mxu0 0.0
      %6736 = vmatpush1.msra.mxu0 0.0
      %6737 = vmatprep.subr.mxu0 0.0
      %6738 = vmatpush1.msra.mxu0 0.0
      %6739 = vmatprep.subr.mxu0 0.0
      %6740 = vmatpush1.msra.mxu0 0.0
      %6741 = vmatprep.subr.mxu0 0.0
      %6742 = vmatpush1.msra.mxu0 0.0
      %6743 = vmatprep.subr.mxu0 0.0
      %6744 = vmatpush1.msra.mxu0 0.0
      %6745 = vmatprep.subr.mxu0 0.0
      %6746 = vmatpush1.msra.mxu0 0.0
      %6747 = vmatprep.subr.mxu0 0.0
      %6748 = vmatpush1.msra.mxu0 0.0
      %6749 = vmatprep.subr.mxu0 0.0
      %6750 = vmatpush1.msra.mxu0 0.0
      %6751 = vmatprep.subr.mxu0 0.0
      %6752 = vmatpush1.msra.mxu0 0.0
      %6753 = vmatprep.subr.mxu0 0.0
      %6754 = vmatpush1.msra.mxu0 0.0
      %6755 = vmatprep.subr.mxu0 0.0
      %6756 = vmatpush1.msra.mxu0 0.0
      %6757 = vmatprep.subr.mxu0 0.0
      %6758 = vmatpush1.msra.mxu0 0.0
      %6759 = vmatprep.subr.mxu0 0.0
      %6760 = vmatpush1.msra.mxu0 0.0
      %6761 = vmatprep.subr.mxu0 0.0
      %6762 = vmatpush1.msra.mxu0 0.0
      %6763 = vmatprep.subr.mxu0 0.0
      %6764 = vmatpush1.msra.mxu0 0.0
      %6765 = vmatprep.subr.mxu0 0.0
      %6766 = vmatpush1.msra.mxu0 0.0
      %6767 = vmatprep.subr.mxu0 0.0
      %6768 = vmatpush1.msra.mxu0 0.0
      %6769 = vmatprep.subr.mxu0 0.0
      %6770 = vmatpush1.msra.mxu0 0.0
      %6771 = vmatprep.subr.mxu0 0.0
      %6772 = vmatpush1.msra.mxu0 0.0
      %6773 = vmatprep.subr.mxu0 0.0
      %6774 = vmatpush1.msra.mxu0 0.0
      %6775 = vmatprep.subr.mxu0 0.0
      %6776 = vmatpush1.msra.mxu0 0.0
      %6777 = vmatprep.subr.mxu0 0.0
      %6778 = vmatpush1.msra.mxu0 0.0
      %6779 = vmatprep.subr.mxu0 0.0
      %6780 = vmatpush1.msra.mxu0 0.0
      %6781 = vmatprep.subr.mxu0 0.0
      %6782 = vmatpush1.msra.mxu0 0.0
      %6783 = vmatprep.subr.mxu0 0.0
      %6784 = vmatpush1.msra.mxu0 0.0
      %6785 = vmatprep.subr.mxu0 0.0
      %6786 = vmatpush1.msra.mxu0 0.0
      %6787 = vmatprep.subr.mxu0 0.0
      %6788 = vmatpush1.msra.mxu0 0.0
      %6789 = vmatprep.subr.mxu0 0.0
      %6790 = vmatpush1.msra.mxu0 0.0
      %6791 = vmatprep.subr.mxu0 0.0
      %6792 = vmatpush1.msra.mxu0 0.0
      %6793 = vmatprep.subr.mxu0 0.0
      %6794 = vmatpush1.msra.mxu0 0.0
      %6795 = vmatprep.mubr.f32.mxu0 0.0
      %6796 = vmatmul.mubr.f32.gmra.mrb[0].mxu0 %v6350
      %v6797 = vpop.f32.mrb[0].mxu0
      %v6798 = vadd.f32 0.0, %v6797
      %v6799 = vpop.f32.mrb[0].mxu0
      %v6800 = vadd.f32 0.0, %v6799
      %6801 = vdwg.mxu0
      %v6802 = vadd.f32 %v5930, %v6443
      %v6803 = vadd.f32 %v5932, %v6445
      %v6804 = vadd.f32 %v6001, %v6514
      %v6805 = vadd.f32 %v6003, %v6516
      %v6806 = vadd.f32 %v6072, %v6585
      %v6807 = vadd.f32 %v6074, %v6587
      %v6808 = vadd.f32 %v6143, %v6656
      %v6809 = vadd.f32 %v6145, %v6658
      %v6810 = vadd.f32 %v6214, %v6727
      %v6811 = vadd.f32 %v6216, %v6729
      %v6812 = vadd.f32 %v6285, %v6798
      %v6813 = vadd.f32 %v6287, %v6800
      %v6814 = vld [vmem:[#allocation3 + $0x4] sm:$0xff]
      %v6815 = vld [vmem:[#allocation3 + $0xc] sm:$0xff]
      %v6816 = vld [vmem:[#allocation3 + $0x14] sm:$0xff]
      %v6817 = vld [vmem:[#allocation3 + $0x1c] sm:$0xff]
      %v6818 = vld [vmem:[#allocation3 + $0x24] sm:$0xff]
      %v6819 = vld [vmem:[#allocation3 + $0x2c] sm:$0xff]
      %v6820 = vld [vmem:[#allocation3 + $0x34] sm:$0xf]
      %s6821 = scalar_lea.vmem %s4, 12
      %v6822 = vld [vmem:[%s6821] sm:$0xf]
      %v6830 = vcombine.high %v6814, %v6814
      %v6831 = vcombine.high %v6815, %v6815
      %v6832 = vcombine.high %v6816, %v6816
      %v6833 = vcombine.high %v6817, %v6817
      %v6834 = vcombine.high %v6818, %v6818
      %v6835 = vcombine.high %v6819, %v6819
      %6836 = vrot.lane.b32.xlu0 %v6814, 8
      %v6837 = vpop.permute.xlu0 %6836
      %6838 = vrot.lane.b32.xlu0 %v6830, 8
      %v6839 = vpop.permute.xlu0 %6838
      %6840 = vrot.lane.b32.xlu0 %v6815, 8
      %v6841 = vpop.permute.xlu0 %6840
      %6842 = vrot.lane.b32.xlu0 %v6831, 8
      %v6843 = vpop.permute.xlu0 %6842
      %6844 = vrot.lane.b32.xlu0 %v6816, 8
      %v6845 = vpop.permute.xlu0 %6844
      %6846 = vrot.lane.b32.xlu0 %v6832, 8
      %v6847 = vpop.permute.xlu0 %6846
      %6848 = vrot.lane.b32.xlu0 %v6817, 8
      %v6849 = vpop.permute.xlu0 %6848
      %6850 = vrot.lane.b32.xlu0 %v6833, 8
      %v6851 = vpop.permute.xlu0 %6850
      %6852 = vrot.lane.b32.xlu0 %v6818, 8
      %v6853 = vpop.permute.xlu0 %6852
      %6854 = vrot.lane.b32.xlu0 %v6834, 8
      %v6855 = vpop.permute.xlu0 %6854
      %6856 = vrot.lane.b32.xlu0 %v6819, 8
      %v6857 = vpop.permute.xlu0 %6856
      %6858 = vrot.lane.b32.xlu0 %v6835, 8
      %v6859 = vpop.permute.xlu0 %6858
      %6860 = vrot.lane.b32.xlu0 %v6820, 8
      %v6861 = vpop.permute.xlu0 %6860
      %v6862 = vsel %vm681, %v6837, %v6839
      %v6863 = vsel %vm681, %v6839, %v6841
      %v6864 = vsel %vm681, %v6841, %v6843
      %v6865 = vsel %vm681, %v6843, %v6845
      %v6866 = vsel %vm681, %v6845, %v6847
      %v6867 = vsel %vm681, %v6847, %v6849
      %v6868 = vsel %vm681, %v6849, %v6851
      %v6869 = vsel %vm681, %v6851, %v6853
      %v6870 = vsel %vm681, %v6853, %v6855
      %v6871 = vsel %vm681, %v6855, %v6857
      %v6872 = vsel %vm681, %v6857, %v6859
      %v6873 = vsel %vm681, %v6859, %v6861
      %v6875 = vsel %vm5344, %v6822, 0
      %v6877 = vsel %vm344, %v6862, 0
      %v6879 = vsel %vm344, %v6863, 0
      %v6881 = vsel %vm344, %v6864, 0
      %v6883 = vsel %vm344, %v6865, 0
      %v6885 = vsel %vm344, %v6866, 0
      %v6887 = vsel %vm344, %v6867, 0
      %v6889 = vsel %vm344, %v6868, 0
      %v6891 = vsel %vm344, %v6869, 0
      %v6893 = vsel %vm344, %v6870, 0
      %v6895 = vsel %vm344, %v6871, 0
      %v6897 = vsel %vm344, %v6872, 0
      %v6899 = vsel %vm344, %v6873, 0
      %6901 = vmatprep.subr.mxu0 %v6879
      %6902 = vmatpush1.msra.mxu0 %v6877
      %6903 = vmatprep.subr.mxu0 0.0
      %6904 = vmatpush1.msra.mxu0 0.0
      %6905 = vmatprep.subr.mxu0 0.0
      %6906 = vmatpush1.msra.mxu0 0.0
      %6907 = vmatprep.subr.mxu0 0.0
      %6908 = vmatpush1.msra.mxu0 0.0
      %6909 = vmatprep.subr.mxu0 0.0
      %6910 = vmatpush1.msra.mxu0 0.0
      %6911 = vmatprep.subr.mxu0 0.0
      %6912 = vmatpush1.msra.mxu0 0.0
      %6913 = vmatprep.subr.mxu0 0.0
      %6914 = vmatpush1.msra.mxu0 0.0
      %6915 = vmatprep.subr.mxu0 0.0
      %6916 = vmatpush1.msra.mxu0 0.0
      %6917 = vmatprep.subr.mxu0 0.0
      %6918 = vmatpush1.msra.mxu0 0.0
      %6919 = vmatprep.subr.mxu0 0.0
      %6920 = vmatpush1.msra.mxu0 0.0
      %6921 = vmatprep.subr.mxu0 0.0
      %6922 = vmatpush1.msra.mxu0 0.0
      %6923 = vmatprep.subr.mxu0 0.0
      %6924 = vmatpush1.msra.mxu0 0.0
      %6925 = vmatprep.subr.mxu0 0.0
      %6926 = vmatpush1.msra.mxu0 0.0
      %6927 = vmatprep.subr.mxu0 0.0
      %6928 = vmatpush1.msra.mxu0 0.0
      %6929 = vmatprep.subr.mxu0 0.0
      %6930 = vmatpush1.msra.mxu0 0.0
      %6931 = vmatprep.subr.mxu0 0.0
      %6932 = vmatpush1.msra.mxu0 0.0
      %6933 = vmatprep.subr.mxu0 0.0
      %6934 = vmatpush1.msra.mxu0 0.0
      %6935 = vmatprep.subr.mxu0 0.0
      %6936 = vmatpush1.msra.mxu0 0.0
      %6937 = vmatprep.subr.mxu0 0.0
      %6938 = vmatpush1.msra.mxu0 0.0
      %6939 = vmatprep.subr.mxu0 0.0
      %6940 = vmatpush1.msra.mxu0 0.0
      %6941 = vmatprep.subr.mxu0 0.0
      %6942 = vmatpush1.msra.mxu0 0.0
      %6943 = vmatprep.subr.mxu0 0.0
      %6944 = vmatpush1.msra.mxu0 0.0
      %6945 = vmatprep.subr.mxu0 0.0
      %6946 = vmatpush1.msra.mxu0 0.0
      %6947 = vmatprep.subr.mxu0 0.0
      %6948 = vmatpush1.msra.mxu0 0.0
      %6949 = vmatprep.subr.mxu0 0.0
      %6950 = vmatpush1.msra.mxu0 0.0
      %6951 = vmatprep.subr.mxu0 0.0
      %6952 = vmatpush1.msra.mxu0 0.0
      %6953 = vmatprep.subr.mxu0 0.0
      %6954 = vmatpush1.msra.mxu0 0.0
      %6955 = vmatprep.subr.mxu0 0.0
      %6956 = vmatpush1.msra.mxu0 0.0
      %6957 = vmatprep.subr.mxu0 0.0
      %6958 = vmatpush1.msra.mxu0 0.0
      %6959 = vmatprep.subr.mxu0 0.0
      %6960 = vmatpush1.msra.mxu0 0.0
      %6961 = vmatprep.subr.mxu0 0.0
      %6962 = vmatpush1.msra.mxu0 0.0
      %6963 = vmatprep.subr.mxu0 0.0
      %6964 = vmatpush1.msra.mxu0 0.0
      %6965 = vmatprep.mubr.f32.mxu0 0.0
      %6966 = vmatmul.mubr.f32.gmra.mrb[0].mxu0 %v6875
      %v6967 = vpop.f32.mrb[0].mxu0
      %v6968 = vadd.f32 0.0, %v6967
      %v6969 = vpop.f32.mrb[0].mxu0
      %v6970 = vadd.f32 0.0, %v6969
      %6971 = vdwg.mxu0
      %6972 = vmatprep.subr.mxu0 %v6883
      %6973 = vmatpush1.msra.mxu0 %v6881
      %6974 = vmatprep.subr.mxu0 0.0
      %6975 = vmatpush1.msra.mxu0 0.0
      %6976 = vmatprep.subr.mxu0 0.0
      %6977 = vmatpush1.msra.mxu0 0.0
      %6978 = vmatprep.subr.mxu0 0.0
      %6979 = vmatpush1.msra.mxu0 0.0
      %6980 = vmatprep.subr.mxu0 0.0
      %6981 = vmatpush1.msra.mxu0 0.0
      %6982 = vmatprep.subr.mxu0 0.0
      %6983 = vmatpush1.msra.mxu0 0.0
      %6984 = vmatprep.subr.mxu0 0.0
      %6985 = vmatpush1.msra.mxu0 0.0
      %6986 = vmatprep.subr.mxu0 0.0
      %6987 = vmatpush1.msra.mxu0 0.0
      %6988 = vmatprep.subr.mxu0 0.0
      %6989 = vmatpush1.msra.mxu0 0.0
      %6990 = vmatprep.subr.mxu0 0.0
      %6991 = vmatpush1.msra.mxu0 0.0
      %6992 = vmatprep.subr.mxu0 0.0
      %6993 = vmatpush1.msra.mxu0 0.0
      %6994 = vmatprep.subr.mxu0 0.0
      %6995 = vmatpush1.msra.mxu0 0.0
      %6996 = vmatprep.subr.mxu0 0.0
      %6997 = vmatpush1.msra.mxu0 0.0
      %6998 = vmatprep.subr.mxu0 0.0
      %6999 = vmatpush1.msra.mxu0 0.0
      %7000 = vmatprep.subr.mxu0 0.0
      %7001 = vmatpush1.msra.mxu0 0.0
      %7002 = vmatprep.subr.mxu0 0.0
      %7003 = vmatpush1.msra.mxu0 0.0
      %7004 = vmatprep.subr.mxu0 0.0
      %7005 = vmatpush1.msra.mxu0 0.0
      %7006 = vmatprep.subr.mxu0 0.0
      %7007 = vmatpush1.msra.mxu0 0.0
      %7008 = vmatprep.subr.mxu0 0.0
      %7009 = vmatpush1.msra.mxu0 0.0
      %7010 = vmatprep.subr.mxu0 0.0
      %7011 = vmatpush1.msra.mxu0 0.0
      %7012 = vmatprep.subr.mxu0 0.0
      %7013 = vmatpush1.msra.mxu0 0.0
      %7014 = vmatprep.subr.mxu0 0.0
      %7015 = vmatpush1.msra.mxu0 0.0
      %7016 = vmatprep.subr.mxu0 0.0
      %7017 = vmatpush1.msra.mxu0 0.0
      %7018 = vmatprep.subr.mxu0 0.0
      %7019 = vmatpush1.msra.mxu0 0.0
      %7020 = vmatprep.subr.mxu0 0.0
      %7021 = vmatpush1.msra.mxu0 0.0
      %7022 = vmatprep.subr.mxu0 0.0
      %7023 = vmatpush1.msra.mxu0 0.0
      %7024 = vmatprep.subr.mxu0 0.0
      %7025 = vmatpush1.msra.mxu0 0.0
      %7026 = vmatprep.subr.mxu0 0.0
      %7027 = vmatpush1.msra.mxu0 0.0
      %7028 = vmatprep.subr.mxu0 0.0
      %7029 = vmatpush1.msra.mxu0 0.0
      %7030 = vmatprep.subr.mxu0 0.0
      %7031 = vmatpush1.msra.mxu0 0.0
      %7032 = vmatprep.subr.mxu0 0.0
      %7033 = vmatpush1.msra.mxu0 0.0
      %7034 = vmatprep.subr.mxu0 0.0
      %7035 = vmatpush1.msra.mxu0 0.0
      %7036 = vmatprep.mubr.f32.mxu0 0.0
      %7037 = vmatmul.mubr.f32.gmra.mrb[0].mxu0 %v6875
      %v7038 = vpop.f32.mrb[0].mxu0
      %v7039 = vadd.f32 0.0, %v7038
      %v7040 = vpop.f32.mrb[0].mxu0
      %v7041 = vadd.f32 0.0, %v7040
      %7042 = vdwg.mxu0
      %7043 = vmatprep.subr.mxu0 %v6887
      %7044 = vmatpush1.msra.mxu0 %v6885
      %7045 = vmatprep.subr.mxu0 0.0
      %7046 = vmatpush1.msra.mxu0 0.0
      %7047 = vmatprep.subr.mxu0 0.0
      %7048 = vmatpush1.msra.mxu0 0.0
      %7049 = vmatprep.subr.mxu0 0.0
      %7050 = vmatpush1.msra.mxu0 0.0
      %7051 = vmatprep.subr.mxu0 0.0
      %7052 = vmatpush1.msra.mxu0 0.0
      %7053 = vmatprep.subr.mxu0 0.0
      %7054 = vmatpush1.msra.mxu0 0.0
      %7055 = vmatprep.subr.mxu0 0.0
      %7056 = vmatpush1.msra.mxu0 0.0
      %7057 = vmatprep.subr.mxu0 0.0
      %7058 = vmatpush1.msra.mxu0 0.0
      %7059 = vmatprep.subr.mxu0 0.0
      %7060 = vmatpush1.msra.mxu0 0.0
      %7061 = vmatprep.subr.mxu0 0.0
      %7062 = vmatpush1.msra.mxu0 0.0
      %7063 = vmatprep.subr.mxu0 0.0
      %7064 = vmatpush1.msra.mxu0 0.0
      %7065 = vmatprep.subr.mxu0 0.0
      %7066 = vmatpush1.msra.mxu0 0.0
      %7067 = vmatprep.subr.mxu0 0.0
      %7068 = vmatpush1.msra.mxu0 0.0
      %7069 = vmatprep.subr.mxu0 0.0
      %7070 = vmatpush1.msra.mxu0 0.0
      %7071 = vmatprep.subr.mxu0 0.0
      %7072 = vmatpush1.msra.mxu0 0.0
      %7073 = vmatprep.subr.mxu0 0.0
      %7074 = vmatpush1.msra.mxu0 0.0
      %7075 = vmatprep.subr.mxu0 0.0
      %7076 = vmatpush1.msra.mxu0 0.0
      %7077 = vmatprep.subr.mxu0 0.0
      %7078 = vmatpush1.msra.mxu0 0.0
      %7079 = vmatprep.subr.mxu0 0.0
      %7080 = vmatpush1.msra.mxu0 0.0
      %7081 = vmatprep.subr.mxu0 0.0
      %7082 = vmatpush1.msra.mxu0 0.0
      %7083 = vmatprep.subr.mxu0 0.0
      %7084 = vmatpush1.msra.mxu0 0.0
      %7085 = vmatprep.subr.mxu0 0.0
      %7086 = vmatpush1.msra.mxu0 0.0
      %7087 = vmatprep.subr.mxu0 0.0
      %7088 = vmatpush1.msra.mxu0 0.0
      %7089 = vmatprep.subr.mxu0 0.0
      %7090 = vmatpush1.msra.mxu0 0.0
      %7091 = vmatprep.subr.mxu0 0.0
      %7092 = vmatpush1.msra.mxu0 0.0
      %7093 = vmatprep.subr.mxu0 0.0
      %7094 = vmatpush1.msra.mxu0 0.0
      %7095 = vmatprep.subr.mxu0 0.0
      %7096 = vmatpush1.msra.mxu0 0.0
      %7097 = vmatprep.subr.mxu0 0.0
      %7098 = vmatpush1.msra.mxu0 0.0
      %7099 = vmatprep.subr.mxu0 0.0
      %7100 = vmatpush1.msra.mxu0 0.0
      %7101 = vmatprep.subr.mxu0 0.0
      %7102 = vmatpush1.msra.mxu0 0.0
      %7103 = vmatprep.subr.mxu0 0.0
      %7104 = vmatpush1.msra.mxu0 0.0
      %7105 = vmatprep.subr.mxu0 0.0
      %7106 = vmatpush1.msra.mxu0 0.0
      %7107 = vmatprep.mubr.f32.mxu0 0.0
      %7108 = vmatmul.mubr.f32.gmra.mrb[0].mxu0 %v6875
      %v7109 = vpop.f32.mrb[0].mxu0
      %v7110 = vadd.f32 0.0, %v7109
      %v7111 = vpop.f32.mrb[0].mxu0
      %v7112 = vadd.f32 0.0, %v7111
      %7113 = vdwg.mxu0
      %7114 = vmatprep.subr.mxu0 %v6891
      %7115 = vmatpush1.msra.mxu0 %v6889
      %7116 = vmatprep.subr.mxu0 0.0
      %7117 = vmatpush1.msra.mxu0 0.0
      %7118 = vmatprep.subr.mxu0 0.0
      %7119 = vmatpush1.msra.mxu0 0.0
      %7120 = vmatprep.subr.mxu0 0.0
      %7121 = vmatpush1.msra.mxu0 0.0
      %7122 = vmatprep.subr.mxu0 0.0
      %7123 = vmatpush1.msra.mxu0 0.0
      %7124 = vmatprep.subr.mxu0 0.0
      %7125 = vmatpush1.msra.mxu0 0.0
      %7126 = vmatprep.subr.mxu0 0.0
      %7127 = vmatpush1.msra.mxu0 0.0
      %7128 = vmatprep.subr.mxu0 0.0
      %7129 = vmatpush1.msra.mxu0 0.0
      %7130 = vmatprep.subr.mxu0 0.0
      %7131 = vmatpush1.msra.mxu0 0.0
      %7132 = vmatprep.subr.mxu0 0.0
      %7133 = vmatpush1.msra.mxu0 0.0
      %7134 = vmatprep.subr.mxu0 0.0
      %7135 = vmatpush1.msra.mxu0 0.0
      %7136 = vmatprep.subr.mxu0 0.0
      %7137 = vmatpush1.msra.mxu0 0.0
      %7138 = vmatprep.subr.mxu0 0.0
      %7139 = vmatpush1.msra.mxu0 0.0
      %7140 = vmatprep.subr.mxu0 0.0
      %7141 = vmatpush1.msra.mxu0 0.0
      %7142 = vmatprep.subr.mxu0 0.0
      %7143 = vmatpush1.msra.mxu0 0.0
      %7144 = vmatprep.subr.mxu0 0.0
      %7145 = vmatpush1.msra.mxu0 0.0
      %7146 = vmatprep.subr.mxu0 0.0
      %7147 = vmatpush1.msra.mxu0 0.0
      %7148 = vmatprep.subr.mxu0 0.0
      %7149 = vmatpush1.msra.mxu0 0.0
      %7150 = vmatprep.subr.mxu0 0.0
      %7151 = vmatpush1.msra.mxu0 0.0
      %7152 = vmatprep.subr.mxu0 0.0
      %7153 = vmatpush1.msra.mxu0 0.0
      %7154 = vmatprep.subr.mxu0 0.0
      %7155 = vmatpush1.msra.mxu0 0.0
      %7156 = vmatprep.subr.mxu0 0.0
      %7157 = vmatpush1.msra.mxu0 0.0
      %7158 = vmatprep.subr.mxu0 0.0
      %7159 = vmatpush1.msra.mxu0 0.0
      %7160 = vmatprep.subr.mxu0 0.0
      %7161 = vmatpush1.msra.mxu0 0.0
      %7162 = vmatprep.subr.mxu0 0.0
      %7163 = vmatpush1.msra.mxu0 0.0
      %7164 = vmatprep.subr.mxu0 0.0
      %7165 = vmatpush1.msra.mxu0 0.0
      %7166 = vmatprep.subr.mxu0 0.0
      %7167 = vmatpush1.msra.mxu0 0.0
      %7168 = vmatprep.subr.mxu0 0.0
      %7169 = vmatpush1.msra.mxu0 0.0
      %7170 = vmatprep.subr.mxu0 0.0
      %7171 = vmatpush1.msra.mxu0 0.0
      %7172 = vmatprep.subr.mxu0 0.0
      %7173 = vmatpush1.msra.mxu0 0.0
      %7174 = vmatprep.subr.mxu0 0.0
      %7175 = vmatpush1.msra.mxu0 0.0
      %7176 = vmatprep.subr.mxu0 0.0
      %7177 = vmatpush1.msra.mxu0 0.0
      %7178 = vmatprep.mubr.f32.mxu0 0.0
      %7179 = vmatmul.mubr.f32.gmra.mrb[0].mxu0 %v6875
      %v7180 = vpop.f32.mrb[0].mxu0
      %v7181 = vadd.f32 0.0, %v7180
      %v7182 = vpop.f32.mrb[0].mxu0
      %v7183 = vadd.f32 0.0, %v7182
      %7184 = vdwg.mxu0
      %7185 = vmatprep.subr.mxu0 %v6895
      %7186 = vmatpush1.msra.mxu0 %v6893
      %7187 = vmatprep.subr.mxu0 0.0
      %7188 = vmatpush1.msra.mxu0 0.0
      %7189 = vmatprep.subr.mxu0 0.0
      %7190 = vmatpush1.msra.mxu0 0.0
      %7191 = vmatprep.subr.mxu0 0.0
      %7192 = vmatpush1.msra.mxu0 0.0
      %7193 = vmatprep.subr.mxu0 0.0
      %7194 = vmatpush1.msra.mxu0 0.0
      %7195 = vmatprep.subr.mxu0 0.0
      %7196 = vmatpush1.msra.mxu0 0.0
      %7197 = vmatprep.subr.mxu0 0.0
      %7198 = vmatpush1.msra.mxu0 0.0
      %7199 = vmatprep.subr.mxu0 0.0
      %7200 = vmatpush1.msra.mxu0 0.0
      %7201 = vmatprep.subr.mxu0 0.0
      %7202 = vmatpush1.msra.mxu0 0.0
      %7203 = vmatprep.subr.mxu0 0.0
      %7204 = vmatpush1.msra.mxu0 0.0
      %7205 = vmatprep.subr.mxu0 0.0
      %7206 = vmatpush1.msra.mxu0 0.0
      %7207 = vmatprep.subr.mxu0 0.0
      %7208 = vmatpush1.msra.mxu0 0.0
      %7209 = vmatprep.subr.mxu0 0.0
      %7210 = vmatpush1.msra.mxu0 0.0
      %7211 = vmatprep.subr.mxu0 0.0
      %7212 = vmatpush1.msra.mxu0 0.0
      %7213 = vmatprep.subr.mxu0 0.0
      %7214 = vmatpush1.msra.mxu0 0.0
      %7215 = vmatprep.subr.mxu0 0.0
      %7216 = vmatpush1.msra.mxu0 0.0
      %7217 = vmatprep.subr.mxu0 0.0
      %7218 = vmatpush1.msra.mxu0 0.0
      %7219 = vmatprep.subr.mxu0 0.0
      %7220 = vmatpush1.msra.mxu0 0.0
      %7221 = vmatprep.subr.mxu0 0.0
      %7222 = vmatpush1.msra.mxu0 0.0
      %7223 = vmatprep.subr.mxu0 0.0
      %7224 = vmatpush1.msra.mxu0 0.0
      %7225 = vmatprep.subr.mxu0 0.0
      %7226 = vmatpush1.msra.mxu0 0.0
      %7227 = vmatprep.subr.mxu0 0.0
      %7228 = vmatpush1.msra.mxu0 0.0
      %7229 = vmatprep.subr.mxu0 0.0
      %7230 = vmatpush1.msra.mxu0 0.0
      %7231 = vmatprep.subr.mxu0 0.0
      %7232 = vmatpush1.msra.mxu0 0.0
      %7233 = vmatprep.subr.mxu0 0.0
      %7234 = vmatpush1.msra.mxu0 0.0
      %7235 = vmatprep.subr.mxu0 0.0
      %7236 = vmatpush1.msra.mxu0 0.0
      %7237 = vmatprep.subr.mxu0 0.0
      %7238 = vmatpush1.msra.mxu0 0.0
      %7239 = vmatprep.subr.mxu0 0.0
      %7240 = vmatpush1.msra.mxu0 0.0
      %7241 = vmatprep.subr.mxu0 0.0
      %7242 = vmatpush1.msra.mxu0 0.0
      %7243 = vmatprep.subr.mxu0 0.0
      %7244 = vmatpush1.msra.mxu0 0.0
      %7245 = vmatprep.subr.mxu0 0.0
      %7246 = vmatpush1.msra.mxu0 0.0
      %7247 = vmatprep.subr.mxu0 0.0
      %7248 = vmatpush1.msra.mxu0 0.0
      %7249 = vmatprep.mubr.f32.mxu0 0.0
      %7250 = vmatmul.mubr.f32.gmra.mrb[0].mxu0 %v6875
      %v7251 = vpop.f32.mrb[0].mxu0
      %v7252 = vadd.f32 0.0, %v7251
      %v7253 = vpop.f32.mrb[0].mxu0
      %v7254 = vadd.f32 0.0, %v7253
      %7255 = vdwg.mxu0
      %7256 = vmatprep.subr.mxu0 %v6899
      %7257 = vmatpush1.msra.mxu0 %v6897
      %7258 = vmatprep.subr.mxu0 0.0
      %7259 = vmatpush1.msra.mxu0 0.0
      %7260 = vmatprep.subr.mxu0 0.0
      %7261 = vmatpush1.msra.mxu0 0.0
      %7262 = vmatprep.subr.mxu0 0.0
      %7263 = vmatpush1.msra.mxu0 0.0
      %7264 = vmatprep.subr.mxu0 0.0
      %7265 = vmatpush1.msra.mxu0 0.0
      %7266 = vmatprep.subr.mxu0 0.0
      %7267 = vmatpush1.msra.mxu0 0.0
      %7268 = vmatprep.subr.mxu0 0.0
      %7269 = vmatpush1.msra.mxu0 0.0
      %7270 = vmatprep.subr.mxu0 0.0
      %7271 = vmatpush1.msra.mxu0 0.0
      %7272 = vmatprep.subr.mxu0 0.0
      %7273 = vmatpush1.msra.mxu0 0.0
      %7274 = vmatprep.subr.mxu0 0.0
      %7275 = vmatpush1.msra.mxu0 0.0
      %7276 = vmatprep.subr.mxu0 0.0
      %7277 = vmatpush1.msra.mxu0 0.0
      %7278 = vmatprep.subr.mxu0 0.0
      %7279 = vmatpush1.msra.mxu0 0.0
      %7280 = vmatprep.subr.mxu0 0.0
      %7281 = vmatpush1.msra.mxu0 0.0
      %7282 = vmatprep.subr.mxu0 0.0
      %7283 = vmatpush1.msra.mxu0 0.0
      %7284 = vmatprep.subr.mxu0 0.0
      %7285 = vmatpush1.msra.mxu0 0.0
      %7286 = vmatprep.subr.mxu0 0.0
      %7287 = vmatpush1.msra.mxu0 0.0
      %7288 = vmatprep.subr.mxu0 0.0
      %7289 = vmatpush1.msra.mxu0 0.0
      %7290 = vmatprep.subr.mxu0 0.0
      %7291 = vmatpush1.msra.mxu0 0.0
      %7292 = vmatprep.subr.mxu0 0.0
      %7293 = vmatpush1.msra.mxu0 0.0
      %7294 = vmatprep.subr.mxu0 0.0
      %7295 = vmatpush1.msra.mxu0 0.0
      %7296 = vmatprep.subr.mxu0 0.0
      %7297 = vmatpush1.msra.mxu0 0.0
      %7298 = vmatprep.subr.mxu0 0.0
      %7299 = vmatpush1.msra.mxu0 0.0
      %7300 = vmatprep.subr.mxu0 0.0
      %7301 = vmatpush1.msra.mxu0 0.0
      %7302 = vmatprep.subr.mxu0 0.0
      %7303 = vmatpush1.msra.mxu0 0.0
      %7304 = vmatprep.subr.mxu0 0.0
      %7305 = vmatpush1.msra.mxu0 0.0
      %7306 = vmatprep.subr.mxu0 0.0
      %7307 = vmatpush1.msra.mxu0 0.0
      %7308 = vmatprep.subr.mxu0 0.0
      %7309 = vmatpush1.msra.mxu0 0.0
      %7310 = vmatprep.subr.mxu0 0.0
      %7311 = vmatpush1.msra.mxu0 0.0
      %7312 = vmatprep.subr.mxu0 0.0
      %7313 = vmatpush1.msra.mxu0 0.0
      %7314 = vmatprep.subr.mxu0 0.0
      %7315 = vmatpush1.msra.mxu0 0.0
      %7316 = vmatprep.subr.mxu0 0.0
      %7317 = vmatpush1.msra.mxu0 0.0
      %7318 = vmatprep.subr.mxu0 0.0
      %7319 = vmatpush1.msra.mxu0 0.0
      %7320 = vmatprep.mubr.f32.mxu0 0.0
      %7321 = vmatmul.mubr.f32.gmra.mrb[0].mxu0 %v6875
      %v7322 = vpop.f32.mrb[0].mxu0
      %v7323 = vadd.f32 0.0, %v7322
      %v7324 = vpop.f32.mrb[0].mxu0
      %v7325 = vadd.f32 0.0, %v7324
      %7326 = vdwg.mxu0
      %v7327 = vadd.f32 %v6802, %v6968
      %v7328 = vadd.f32 %v6803, %v6970
      %v7329 = vadd.f32 %v6804, %v7039
      %v7330 = vadd.f32 %v6805, %v7041
      %v7331 = vadd.f32 %v6806, %v7110
      %v7332 = vadd.f32 %v6807, %v7112
      %v7333 = vadd.f32 %v6808, %v7181
      %v7334 = vadd.f32 %v6809, %v7183
      %v7335 = vadd.f32 %v6810, %v7252
      %v7336 = vadd.f32 %v6811, %v7254
      %v7337 = vadd.f32 %v6812, %v7323
      %v7338 = vadd.f32 %v6813, %v7325
      %v7339 = vld [vmem:[#allocation3 + $0x8] sm:$0xff]
      %v7340 = vld [vmem:[#allocation3 + $0x10] sm:$0xff]
      %v7341 = vld [vmem:[#allocation3 + $0x18] sm:$0xff]
      %v7342 = vld [vmem:[#allocation3 + $0x20] sm:$0xff]
      %v7343 = vld [vmem:[#allocation3 + $0x28] sm:$0xff]
      %v7344 = vld [vmem:[#allocation3 + $0x30] sm:$0xff]
      %s7345 = scalar_lea.vmem %s4, 16
      %v7346 = vld [vmem:[%s7345] sm:$0xf]
      %v7353 = vcombine.high %v7339, %v7339
      %v7354 = vcombine.high %v7340, %v7340
      %v7355 = vcombine.high %v7341, %v7341
      %v7356 = vcombine.high %v7342, %v7342
      %v7357 = vcombine.high %v7343, %v7343
      %v7358 = vcombine.high %v7344, %v7344
      %v7360 = vsel %vm5344, %v7346, 0
      %v7362 = vsel %vm344, %v7339, 0
      %v7364 = vsel %vm344, %v7353, 0
      %v7366 = vsel %vm344, %v7340, 0
      %v7368 = vsel %vm344, %v7354, 0
      %v7370 = vsel %vm344, %v7341, 0
      %v7372 = vsel %vm344, %v7355, 0
      %v7374 = vsel %vm344, %v7342, 0
      %v7376 = vsel %vm344, %v7356, 0
      %v7378 = vsel %vm344, %v7343, 0
      %v7380 = vsel %vm344, %v7357, 0
      %v7382 = vsel %vm344, %v7344, 0
      %v7384 = vsel %vm344, %v7358, 0
      %7386 = vmatprep.subr.mxu0 %v7364
      %7387 = vmatpush1.msra.mxu0 %v7362
      %7388 = vmatprep.subr.mxu0 0.0
      %7389 = vmatpush1.msra.mxu0 0.0
      %7390 = vmatprep.subr.mxu0 0.0
      %7391 = vmatpush1.msra.mxu0 0.0
      %7392 = vmatprep.subr.mxu0 0.0
      %7393 = vmatpush1.msra.mxu0 0.0
      %7394 = vmatprep.subr.mxu0 0.0
      %7395 = vmatpush1.msra.mxu0 0.0
      %7396 = vmatprep.subr.mxu0 0.0
      %7397 = vmatpush1.msra.mxu0 0.0
      %7398 = vmatprep.subr.mxu0 0.0
      %7399 = vmatpush1.msra.mxu0 0.0
      %7400 = vmatprep.subr.mxu0 0.0
      %7401 = vmatpush1.msra.mxu0 0.0
      %7402 = vmatprep.subr.mxu0 0.0
      %7403 = vmatpush1.msra.mxu0 0.0
      %7404 = vmatprep.subr.mxu0 0.0
      %7405 = vmatpush1.msra.mxu0 0.0
      %7406 = vmatprep.subr.mxu0 0.0
      %7407 = vmatpush1.msra.mxu0 0.0
      %7408 = vmatprep.subr.mxu0 0.0
      %7409 = vmatpush1.msra.mxu0 0.0
      %7410 = vmatprep.subr.mxu0 0.0
      %7411 = vmatpush1.msra.mxu0 0.0
      %7412 = vmatprep.subr.mxu0 0.0
      %7413 = vmatpush1.msra.mxu0 0.0
      %7414 = vmatprep.subr.mxu0 0.0
      %7415 = vmatpush1.msra.mxu0 0.0
      %7416 = vmatprep.subr.mxu0 0.0
      %7417 = vmatpush1.msra.mxu0 0.0
      %7418 = vmatprep.subr.mxu0 0.0
      %7419 = vmatpush1.msra.mxu0 0.0
      %7420 = vmatprep.subr.mxu0 0.0
      %7421 = vmatpush1.msra.mxu0 0.0
      %7422 = vmatprep.subr.mxu0 0.0
      %7423 = vmatpush1.msra.mxu0 0.0
      %7424 = vmatprep.subr.mxu0 0.0
      %7425 = vmatpush1.msra.mxu0 0.0
      %7426 = vmatprep.subr.mxu0 0.0
      %7427 = vmatpush1.msra.mxu0 0.0
      %7428 = vmatprep.subr.mxu0 0.0
      %7429 = vmatpush1.msra.mxu0 0.0
      %7430 = vmatprep.subr.mxu0 0.0
      %7431 = vmatpush1.msra.mxu0 0.0
      %7432 = vmatprep.subr.mxu0 0.0
      %7433 = vmatpush1.msra.mxu0 0.0
      %7434 = vmatprep.subr.mxu0 0.0
      %7435 = vmatpush1.msra.mxu0 0.0
      %7436 = vmatprep.subr.mxu0 0.0
      %7437 = vmatpush1.msra.mxu0 0.0
      %7438 = vmatprep.subr.mxu0 0.0
      %7439 = vmatpush1.msra.mxu0 0.0
      %7440 = vmatprep.subr.mxu0 0.0
      %7441 = vmatpush1.msra.mxu0 0.0
      %7442 = vmatprep.subr.mxu0 0.0
      %7443 = vmatpush1.msra.mxu0 0.0
      %7444 = vmatprep.subr.mxu0 0.0
      %7445 = vmatpush1.msra.mxu0 0.0
      %7446 = vmatprep.subr.mxu0 0.0
      %7447 = vmatpush1.msra.mxu0 0.0
      %7448 = vmatprep.subr.mxu0 0.0
      %7449 = vmatpush1.msra.mxu0 0.0
      %7450 = vmatprep.mubr.f32.mxu0 0.0
      %7451 = vmatmul.mubr.f32.gmra.mrb[0].mxu0 %v7360
      %v7452 = vpop.f32.mrb[0].mxu0
      %v7453 = vadd.f32 0.0, %v7452
      %v7454 = vpop.f32.mrb[0].mxu0
      %v7455 = vadd.f32 0.0, %v7454
      %7456 = vdwg.mxu0
      %7457 = vmatprep.subr.mxu0 %v7368
      %7458 = vmatpush1.msra.mxu0 %v7366
      %7459 = vmatprep.subr.mxu0 0.0
      %7460 = vmatpush1.msra.mxu0 0.0
      %7461 = vmatprep.subr.mxu0 0.0
      %7462 = vmatpush1.msra.mxu0 0.0
      %7463 = vmatprep.subr.mxu0 0.0
      %7464 = vmatpush1.msra.mxu0 0.0
      %7465 = vmatprep.subr.mxu0 0.0
      %7466 = vmatpush1.msra.mxu0 0.0
      %7467 = vmatprep.subr.mxu0 0.0
      %7468 = vmatpush1.msra.mxu0 0.0
      %7469 = vmatprep.subr.mxu0 0.0
      %7470 = vmatpush1.msra.mxu0 0.0
      %7471 = vmatprep.subr.mxu0 0.0
      %7472 = vmatpush1.msra.mxu0 0.0
      %7473 = vmatprep.subr.mxu0 0.0
      %7474 = vmatpush1.msra.mxu0 0.0
      %7475 = vmatprep.subr.mxu0 0.0
      %7476 = vmatpush1.msra.mxu0 0.0
      %7477 = vmatprep.subr.mxu0 0.0
      %7478 = vmatpush1.msra.mxu0 0.0
      %7479 = vmatprep.subr.mxu0 0.0
      %7480 = vmatpush1.msra.mxu0 0.0
      %7481 = vmatprep.subr.mxu0 0.0
      %7482 = vmatpush1.msra.mxu0 0.0
      %7483 = vmatprep.subr.mxu0 0.0
      %7484 = vmatpush1.msra.mxu0 0.0
      %7485 = vmatprep.subr.mxu0 0.0
      %7486 = vmatpush1.msra.mxu0 0.0
      %7487 = vmatprep.subr.mxu0 0.0
      %7488 = vmatpush1.msra.mxu0 0.0
      %7489 = vmatprep.subr.mxu0 0.0
      %7490 = vmatpush1.msra.mxu0 0.0
      %7491 = vmatprep.subr.mxu0 0.0
      %7492 = vmatpush1.msra.mxu0 0.0
      %7493 = vmatprep.subr.mxu0 0.0
      %7494 = vmatpush1.msra.mxu0 0.0
      %7495 = vmatprep.subr.mxu0 0.0
      %7496 = vmatpush1.msra.mxu0 0.0
      %7497 = vmatprep.subr.mxu0 0.0
      %7498 = vmatpush1.msra.mxu0 0.0
      %7499 = vmatprep.subr.mxu0 0.0
      %7500 = vmatpush1.msra.mxu0 0.0
      %7501 = vmatprep.subr.mxu0 0.0
      %7502 = vmatpush1.msra.mxu0 0.0
      %7503 = vmatprep.subr.mxu0 0.0
      %7504 = vmatpush1.msra.mxu0 0.0
      %7505 = vmatprep.subr.mxu0 0.0
      %7506 = vmatpush1.msra.mxu0 0.0
      %7507 = vmatprep.subr.mxu0 0.0
      %7508 = vmatpush1.msra.mxu0 0.0
      %7509 = vmatprep.subr.mxu0 0.0
      %7510 = vmatpush1.msra.mxu0 0.0
      %7511 = vmatprep.subr.mxu0 0.0
      %7512 = vmatpush1.msra.mxu0 0.0
      %7513 = vmatprep.subr.mxu0 0.0
      %7514 = vmatpush1.msra.mxu0 0.0
      %7515 = vmatprep.subr.mxu0 0.0
      %7516 = vmatpush1.msra.mxu0 0.0
      %7517 = vmatprep.subr.mxu0 0.0
      %7518 = vmatpush1.msra.mxu0 0.0
      %7519 = vmatprep.subr.mxu0 0.0
      %7520 = vmatpush1.msra.mxu0 0.0
      %7521 = vmatprep.mubr.f32.mxu0 0.0
      %7522 = vmatmul.mubr.f32.gmra.mrb[0].mxu0 %v7360
      %v7523 = vpop.f32.mrb[0].mxu0
      %v7524 = vadd.f32 0.0, %v7523
      %v7525 = vpop.f32.mrb[0].mxu0
      %v7526 = vadd.f32 0.0, %v7525
      %7527 = vdwg.mxu0
      %7528 = vmatprep.subr.mxu0 %v7372
      %7529 = vmatpush1.msra.mxu0 %v7370
      %7530 = vmatprep.subr.mxu0 0.0
      %7531 = vmatpush1.msra.mxu0 0.0
      %7532 = vmatprep.subr.mxu0 0.0
      %7533 = vmatpush1.msra.mxu0 0.0
      %7534 = vmatprep.subr.mxu0 0.0
      %7535 = vmatpush1.msra.mxu0 0.0
      %7536 = vmatprep.subr.mxu0 0.0
      %7537 = vmatpush1.msra.mxu0 0.0
      %7538 = vmatprep.subr.mxu0 0.0
      %7539 = vmatpush1.msra.mxu0 0.0
      %7540 = vmatprep.subr.mxu0 0.0
      %7541 = vmatpush1.msra.mxu0 0.0
      %7542 = vmatprep.subr.mxu0 0.0
      %7543 = vmatpush1.msra.mxu0 0.0
      %7544 = vmatprep.subr.mxu0 0.0
      %7545 = vmatpush1.msra.mxu0 0.0
      %7546 = vmatprep.subr.mxu0 0.0
      %7547 = vmatpush1.msra.mxu0 0.0
      %7548 = vmatprep.subr.mxu0 0.0
      %7549 = vmatpush1.msra.mxu0 0.0
      %7550 = vmatprep.subr.mxu0 0.0
      %7551 = vmatpush1.msra.mxu0 0.0
      %7552 = vmatprep.subr.mxu0 0.0
      %7553 = vmatpush1.msra.mxu0 0.0
      %7554 = vmatprep.subr.mxu0 0.0
      %7555 = vmatpush1.msra.mxu0 0.0
      %7556 = vmatprep.subr.mxu0 0.0
      %7557 = vmatpush1.msra.mxu0 0.0
      %7558 = vmatprep.subr.mxu0 0.0
      %7559 = vmatpush1.msra.mxu0 0.0
      %7560 = vmatprep.subr.mxu0 0.0
      %7561 = vmatpush1.msra.mxu0 0.0
      %7562 = vmatprep.subr.mxu0 0.0
      %7563 = vmatpush1.msra.mxu0 0.0
      %7564 = vmatprep.subr.mxu0 0.0
      %7565 = vmatpush1.msra.mxu0 0.0
      %7566 = vmatprep.subr.mxu0 0.0
      %7567 = vmatpush1.msra.mxu0 0.0
      %7568 = vmatprep.subr.mxu0 0.0
      %7569 = vmatpush1.msra.mxu0 0.0
      %7570 = vmatprep.subr.mxu0 0.0
      %7571 = vmatpush1.msra.mxu0 0.0
      %7572 = vmatprep.subr.mxu0 0.0
      %7573 = vmatpush1.msra.mxu0 0.0
      %7574 = vmatprep.subr.mxu0 0.0
      %7575 = vmatpush1.msra.mxu0 0.0
      %7576 = vmatprep.subr.mxu0 0.0
      %7577 = vmatpush1.msra.mxu0 0.0
      %7578 = vmatprep.subr.mxu0 0.0
      %7579 = vmatpush1.msra.mxu0 0.0
      %7580 = vmatprep.subr.mxu0 0.0
      %7581 = vmatpush1.msra.mxu0 0.0
      %7582 = vmatprep.subr.mxu0 0.0
      %7583 = vmatpush1.msra.mxu0 0.0
      %7584 = vmatprep.subr.mxu0 0.0
      %7585 = vmatpush1.msra.mxu0 0.0
      %7586 = vmatprep.subr.mxu0 0.0
      %7587 = vmatpush1.msra.mxu0 0.0
      %7588 = vmatprep.subr.mxu0 0.0
      %7589 = vmatpush1.msra.mxu0 0.0
      %7590 = vmatprep.subr.mxu0 0.0
      %7591 = vmatpush1.msra.mxu0 0.0
      %7592 = vmatprep.mubr.f32.mxu0 0.0
      %7593 = vmatmul.mubr.f32.gmra.mrb[0].mxu0 %v7360
      %v7594 = vpop.f32.mrb[0].mxu0
      %v7595 = vadd.f32 0.0, %v7594
      %v7596 = vpop.f32.mrb[0].mxu0
      %v7597 = vadd.f32 0.0, %v7596
      %7598 = vdwg.mxu0
      %7599 = vmatprep.subr.mxu0 %v7376
      %7600 = vmatpush1.msra.mxu0 %v7374
      %7601 = vmatprep.subr.mxu0 0.0
      %7602 = vmatpush1.msra.mxu0 0.0
      %7603 = vmatprep.subr.mxu0 0.0
      %7604 = vmatpush1.msra.mxu0 0.0
      %7605 = vmatprep.subr.mxu0 0.0
      %7606 = vmatpush1.msra.mxu0 0.0
      %7607 = vmatprep.subr.mxu0 0.0
      %7608 = vmatpush1.msra.mxu0 0.0
      %7609 = vmatprep.subr.mxu0 0.0
      %7610 = vmatpush1.msra.mxu0 0.0
      %7611 = vmatprep.subr.mxu0 0.0
      %7612 = vmatpush1.msra.mxu0 0.0
      %7613 = vmatprep.subr.mxu0 0.0
      %7614 = vmatpush1.msra.mxu0 0.0
      %7615 = vmatprep.subr.mxu0 0.0
      %7616 = vmatpush1.msra.mxu0 0.0
      %7617 = vmatprep.subr.mxu0 0.0
      %7618 = vmatpush1.msra.mxu0 0.0
      %7619 = vmatprep.subr.mxu0 0.0
      %7620 = vmatpush1.msra.mxu0 0.0
      %7621 = vmatprep.subr.mxu0 0.0
      %7622 = vmatpush1.msra.mxu0 0.0
      %7623 = vmatprep.subr.mxu0 0.0
      %7624 = vmatpush1.msra.mxu0 0.0
      %7625 = vmatprep.subr.mxu0 0.0
      %7626 = vmatpush1.msra.mxu0 0.0
      %7627 = vmatprep.subr.mxu0 0.0
      %7628 = vmatpush1.msra.mxu0 0.0
      %7629 = vmatprep.subr.mxu0 0.0
      %7630 = vmatpush1.msra.mxu0 0.0
      %7631 = vmatprep.subr.mxu0 0.0
      %7632 = vmatpush1.msra.mxu0 0.0
      %7633 = vmatprep.subr.mxu0 0.0
      %7634 = vmatpush1.msra.mxu0 0.0
      %7635 = vmatprep.subr.mxu0 0.0
      %7636 = vmatpush1.msra.mxu0 0.0
      %7637 = vmatprep.subr.mxu0 0.0
      %7638 = vmatpush1.msra.mxu0 0.0
      %7639 = vmatprep.subr.mxu0 0.0
      %7640 = vmatpush1.msra.mxu0 0.0
      %7641 = vmatprep.subr.mxu0 0.0
      %7642 = vmatpush1.msra.mxu0 0.0
      %7643 = vmatprep.subr.mxu0 0.0
      %7644 = vmatpush1.msra.mxu0 0.0
      %7645 = vmatprep.subr.mxu0 0.0
      %7646 = vmatpush1.msra.mxu0 0.0
      %7647 = vmatprep.subr.mxu0 0.0
      %7648 = vmatpush1.msra.mxu0 0.0
      %7649 = vmatprep.subr.mxu0 0.0
      %7650 = vmatpush1.msra.mxu0 0.0
      %7651 = vmatprep.subr.mxu0 0.0
      %7652 = vmatpush1.msra.mxu0 0.0
      %7653 = vmatprep.subr.mxu0 0.0
      %7654 = vmatpush1.msra.mxu0 0.0
      %7655 = vmatprep.subr.mxu0 0.0
      %7656 = vmatpush1.msra.mxu0 0.0
      %7657 = vmatprep.subr.mxu0 0.0
      %7658 = vmatpush1.msra.mxu0 0.0
      %7659 = vmatprep.subr.mxu0 0.0
      %7660 = vmatpush1.msra.mxu0 0.0
      %7661 = vmatprep.subr.mxu0 0.0
      %7662 = vmatpush1.msra.mxu0 0.0
      %7663 = vmatprep.mubr.f32.mxu0 0.0
      %7664 = vmatmul.mubr.f32.gmra.mrb[0].mxu0 %v7360
      %v7665 = vpop.f32.mrb[0].mxu0
      %v7666 = vadd.f32 0.0, %v7665
      %v7667 = vpop.f32.mrb[0].mxu0
      %v7668 = vadd.f32 0.0, %v7667
      %7669 = vdwg.mxu0
      %7670 = vmatprep.subr.mxu0 %v7380
      %7671 = vmatpush1.msra.mxu0 %v7378
      %7672 = vmatprep.subr.mxu0 0.0
      %7673 = vmatpush1.msra.mxu0 0.0
      %7674 = vmatprep.subr.mxu0 0.0
      %7675 = vmatpush1.msra.mxu0 0.0
      %7676 = vmatprep.subr.mxu0 0.0
      %7677 = vmatpush1.msra.mxu0 0.0
      %7678 = vmatprep.subr.mxu0 0.0
      %7679 = vmatpush1.msra.mxu0 0.0
      %7680 = vmatprep.subr.mxu0 0.0
      %7681 = vmatpush1.msra.mxu0 0.0
      %7682 = vmatprep.subr.mxu0 0.0
      %7683 = vmatpush1.msra.mxu0 0.0
      %7684 = vmatprep.subr.mxu0 0.0
      %7685 = vmatpush1.msra.mxu0 0.0
      %7686 = vmatprep.subr.mxu0 0.0
      %7687 = vmatpush1.msra.mxu0 0.0
      %7688 = vmatprep.subr.mxu0 0.0
      %7689 = vmatpush1.msra.mxu0 0.0
      %7690 = vmatprep.subr.mxu0 0.0
      %7691 = vmatpush1.msra.mxu0 0.0
      %7692 = vmatprep.subr.mxu0 0.0
      %7693 = vmatpush1.msra.mxu0 0.0
      %7694 = vmatprep.subr.mxu0 0.0
      %7695 = vmatpush1.msra.mxu0 0.0
      %7696 = vmatprep.subr.mxu0 0.0
      %7697 = vmatpush1.msra.mxu0 0.0
      %7698 = vmatprep.subr.mxu0 0.0
      %7699 = vmatpush1.msra.mxu0 0.0
      %7700 = vmatprep.subr.mxu0 0.0
      %7701 = vmatpush1.msra.mxu0 0.0
      %7702 = vmatprep.subr.mxu0 0.0
      %7703 = vmatpush1.msra.mxu0 0.0
      %7704 = vmatprep.subr.mxu0 0.0
      %7705 = vmatpush1.msra.mxu0 0.0
      %7706 = vmatprep.subr.mxu0 0.0
      %7707 = vmatpush1.msra.mxu0 0.0
      %7708 = vmatprep.subr.mxu0 0.0
      %7709 = vmatpush1.msra.mxu0 0.0
      %7710 = vmatprep.subr.mxu0 0.0
      %7711 = vmatpush1.msra.mxu0 0.0
      %7712 = vmatprep.subr.mxu0 0.0
      %7713 = vmatpush1.msra.mxu0 0.0
      %7714 = vmatprep.subr.mxu0 0.0
      %7715 = vmatpush1.msra.mxu0 0.0
      %7716 = vmatprep.subr.mxu0 0.0
      %7717 = vmatpush1.msra.mxu0 0.0
      %7718 = vmatprep.subr.mxu0 0.0
      %7719 = vmatpush1.msra.mxu0 0.0
      %7720 = vmatprep.subr.mxu0 0.0
      %7721 = vmatpush1.msra.mxu0 0.0
      %7722 = vmatprep.subr.mxu0 0.0
      %7723 = vmatpush1.msra.mxu0 0.0
      %7724 = vmatprep.subr.mxu0 0.0
      %7725 = vmatpush1.msra.mxu0 0.0
      %7726 = vmatprep.subr.mxu0 0.0
      %7727 = vmatpush1.msra.mxu0 0.0
      %7728 = vmatprep.subr.mxu0 0.0
      %7729 = vmatpush1.msra.mxu0 0.0
      %7730 = vmatprep.subr.mxu0 0.0
      %7731 = vmatpush1.msra.mxu0 0.0
      %7732 = vmatprep.subr.mxu0 0.0
      %7733 = vmatpush1.msra.mxu0 0.0
      %7734 = vmatprep.mubr.f32.mxu0 0.0
      %7735 = vmatmul.mubr.f32.gmra.mrb[0].mxu0 %v7360
      %v7736 = vpop.f32.mrb[0].mxu0
      %v7737 = vadd.f32 0.0, %v7736
      %v7738 = vpop.f32.mrb[0].mxu0
      %v7739 = vadd.f32 0.0, %v7738
      %7740 = vdwg.mxu0
      %7741 = vmatprep.subr.mxu0 %v7384
      %7742 = vmatpush1.msra.mxu0 %v7382
      %7743 = vmatprep.subr.mxu0 0.0
      %7744 = vmatpush1.msra.mxu0 0.0
      %7745 = vmatprep.subr.mxu0 0.0
      %7746 = vmatpush1.msra.mxu0 0.0
      %7747 = vmatprep.subr.mxu0 0.0
      %7748 = vmatpush1.msra.mxu0 0.0
      %7749 = vmatprep.subr.mxu0 0.0
      %7750 = vmatpush1.msra.mxu0 0.0
      %7751 = vmatprep.subr.mxu0 0.0
      %7752 = vmatpush1.msra.mxu0 0.0
      %7753 = vmatprep.subr.mxu0 0.0
      %7754 = vmatpush1.msra.mxu0 0.0
      %7755 = vmatprep.subr.mxu0 0.0
      %7756 = vmatpush1.msra.mxu0 0.0
      %7757 = vmatprep.subr.mxu0 0.0
      %7758 = vmatpush1.msra.mxu0 0.0
      %7759 = vmatprep.subr.mxu0 0.0
      %7760 = vmatpush1.msra.mxu0 0.0
      %7761 = vmatprep.subr.mxu0 0.0
      %7762 = vmatpush1.msra.mxu0 0.0
      %7763 = vmatprep.subr.mxu0 0.0
      %7764 = vmatpush1.msra.mxu0 0.0
      %7765 = vmatprep.subr.mxu0 0.0
      %7766 = vmatpush1.msra.mxu0 0.0
      %7767 = vmatprep.subr.mxu0 0.0
      %7768 = vmatpush1.msra.mxu0 0.0
      %7769 = vmatprep.subr.mxu0 0.0
      %7770 = vmatpush1.msra.mxu0 0.0
      %7771 = vmatprep.subr.mxu0 0.0
      %7772 = vmatpush1.msra.mxu0 0.0
      %7773 = vmatprep.subr.mxu0 0.0
      %7774 = vmatpush1.msra.mxu0 0.0
      %7775 = vmatprep.subr.mxu0 0.0
      %7776 = vmatpush1.msra.mxu0 0.0
      %7777 = vmatprep.subr.mxu0 0.0
      %7778 = vmatpush1.msra.mxu0 0.0
      %7779 = vmatprep.subr.mxu0 0.0
      %7780 = vmatpush1.msra.mxu0 0.0
      %7781 = vmatprep.subr.mxu0 0.0
      %7782 = vmatpush1.msra.mxu0 0.0
      %7783 = vmatprep.subr.mxu0 0.0
      %7784 = vmatpush1.msra.mxu0 0.0
      %7785 = vmatprep.subr.mxu0 0.0
      %7786 = vmatpush1.msra.mxu0 0.0
      %7787 = vmatprep.subr.mxu0 0.0
      %7788 = vmatpush1.msra.mxu0 0.0
      %7789 = vmatprep.subr.mxu0 0.0
      %7790 = vmatpush1.msra.mxu0 0.0
      %7791 = vmatprep.subr.mxu0 0.0
      %7792 = vmatpush1.msra.mxu0 0.0
      %7793 = vmatprep.subr.mxu0 0.0
      %7794 = vmatpush1.msra.mxu0 0.0
      %7795 = vmatprep.subr.mxu0 0.0
      %7796 = vmatpush1.msra.mxu0 0.0
      %7797 = vmatprep.subr.mxu0 0.0
      %7798 = vmatpush1.msra.mxu0 0.0
      %7799 = vmatprep.subr.mxu0 0.0
      %7800 = vmatpush1.msra.mxu0 0.0
      %7801 = vmatprep.subr.mxu0 0.0
      %7802 = vmatpush1.msra.mxu0 0.0
      %7803 = vmatprep.subr.mxu0 0.0
      %7804 = vmatpush1.msra.mxu0 0.0
      %7805 = vmatprep.mubr.f32.mxu0 0.0
      %7806 = vmatmul.mubr.f32.gmra.mrb[0].mxu0 %v7360
      %v7807 = vpop.f32.mrb[0].mxu0
      %v7808 = vadd.f32 0.0, %v7807
      %v7809 = vpop.f32.mrb[0].mxu0
      %v7810 = vadd.f32 0.0, %v7809
      %7811 = vdwg.mxu0
      %v7812 = vadd.f32 %v7327, %v7453
      %v7813 = vadd.f32 %v7328, %v7455
      %v7814 = vadd.f32 %v7329, %v7524
      %v7815 = vadd.f32 %v7330, %v7526
      %v7816 = vadd.f32 %v7331, %v7595
      %v7817 = vadd.f32 %v7332, %v7597
      %v7818 = vadd.f32 %v7333, %v7666
      %v7819 = vadd.f32 %v7334, %v7668
      %v7820 = vadd.f32 %v7335, %v7737
      %v7821 = vadd.f32 %v7336, %v7739
      %v7822 = vadd.f32 %v7337, %v7808
      %v7823 = vadd.f32 %v7338, %v7810
      %v7824 = vld [vmem:[#allocation3 + $0x8] sm:$0xff]
      %v7825 = vld [vmem:[#allocation3 + $0x10] sm:$0xff]
      %v7826 = vld [vmem:[#allocation3 + $0x18] sm:$0xff]
      %v7827 = vld [vmem:[#allocation3 + $0x20] sm:$0xff]
      %v7828 = vld [vmem:[#allocation3 + $0x28] sm:$0xff]
      %v7829 = vld [vmem:[#allocation3 + $0x30] sm:$0xff]
      %s7830 = scalar_lea.vmem %s4, 20
      %v7831 = vld [vmem:[%s7830] sm:$0xf]
      %v7838 = vcombine.high %v7824, %v7824
      %v7839 = vcombine.high %v7825, %v7825
      %v7840 = vcombine.high %v7826, %v7826
      %v7841 = vcombine.high %v7827, %v7827
      %v7842 = vcombine.high %v7828, %v7828
      %v7843 = vcombine.high %v7829, %v7829
      %7844 = vrot.lane.b32.xlu0 %v7824, 120
      %v7845 = vpop.permute.xlu0 %7844
      %7846 = vrot.lane.b32.xlu0 %v7838, 120
      %v7847 = vpop.permute.xlu0 %7846
      %7848 = vrot.lane.b32.xlu0 %v7825, 120
      %v7849 = vpop.permute.xlu0 %7848
      %7850 = vrot.lane.b32.xlu0 %v7839, 120
      %v7851 = vpop.permute.xlu0 %7850
      %7852 = vrot.lane.b32.xlu0 %v7826, 120
      %v7853 = vpop.permute.xlu0 %7852
      %7854 = vrot.lane.b32.xlu0 %v7840, 120
      %v7855 = vpop.permute.xlu0 %7854
      %7856 = vrot.lane.b32.xlu0 %v7827, 120
      %v7857 = vpop.permute.xlu0 %7856
      %7858 = vrot.lane.b32.xlu0 %v7841, 120
      %v7859 = vpop.permute.xlu0 %7858
      %7860 = vrot.lane.b32.xlu0 %v7828, 120
      %v7861 = vpop.permute.xlu0 %7860
      %7862 = vrot.lane.b32.xlu0 %v7842, 120
      %v7863 = vpop.permute.xlu0 %7862
      %7864 = vrot.lane.b32.xlu0 %v7829, 120
      %v7865 = vpop.permute.xlu0 %7864
      %7866 = vrot.lane.b32.xlu0 %v7843, 120
      %v7867 = vpop.permute.xlu0 %7866
      %v7868 = vsel %vm3072, %v7845, %v7847
      %v7869 = vsel %vm3072, %v7847, %v7849
      %v7870 = vsel %vm3072, %v7849, %v7851
      %v7871 = vsel %vm3072, %v7851, %v7853
      %v7872 = vsel %vm3072, %v7853, %v7855
      %v7873 = vsel %vm3072, %v7855, %v7857
      %v7874 = vsel %vm3072, %v7857, %v7859
      %v7875 = vsel %vm3072, %v7859, %v7861
      %v7876 = vsel %vm3072, %v7861, %v7863
      %v7877 = vsel %vm3072, %v7863, %v7865
      %v7878 = vsel %vm3072, %v7865, %v7867
      %v7880 = vsel %vm5344, %v7831, 0
      %v7882 = vsel %vm344, %v7868, 0
      %v7884 = vsel %vm344, %v7869, 0
      %v7886 = vsel %vm344, %v7870, 0
      %v7888 = vsel %vm344, %v7871, 0
      %v7890 = vsel %vm344, %v7872, 0
      %v7892 = vsel %vm344, %v7873, 0
      %v7894 = vsel %vm344, %v7874, 0
      %v7896 = vsel %vm344, %v7875, 0
      %v7898 = vsel %vm344, %v7876, 0
      %v7900 = vsel %vm344, %v7877, 0
      %v7902 = vsel %vm344, %v7878, 0
      %v7904 = vsel %vm344, %v7867, 0
      %7906 = vmatprep.subr.mxu0 %v7884
      %7907 = vmatpush1.msra.mxu0 %v7882
      %7908 = vmatprep.subr.mxu0 0.0
      %7909 = vmatpush1.msra.mxu0 0.0
      %7910 = vmatprep.subr.mxu0 0.0
      %7911 = vmatpush1.msra.mxu0 0.0
      %7912 = vmatprep.subr.mxu0 0.0
      %7913 = vmatpush1.msra.mxu0 0.0
      %7914 = vmatprep.subr.mxu0 0.0
      %7915 = vmatpush1.msra.mxu0 0.0
      %7916 = vmatprep.subr.mxu0 0.0
      %7917 = vmatpush1.msra.mxu0 0.0
      %7918 = vmatprep.subr.mxu0 0.0
      %7919 = vmatpush1.msra.mxu0 0.0
      %7920 = vmatprep.subr.mxu0 0.0
      %7921 = vmatpush1.msra.mxu0 0.0
      %7922 = vmatprep.subr.mxu0 0.0
      %7923 = vmatpush1.msra.mxu0 0.0
      %7924 = vmatprep.subr.mxu0 0.0
      %7925 = vmatpush1.msra.mxu0 0.0
      %7926 = vmatprep.subr.mxu0 0.0
      %7927 = vmatpush1.msra.mxu0 0.0
      %7928 = vmatprep.subr.mxu0 0.0
      %7929 = vmatpush1.msra.mxu0 0.0
      %7930 = vmatprep.subr.mxu0 0.0
      %7931 = vmatpush1.msra.mxu0 0.0
      %7932 = vmatprep.subr.mxu0 0.0
      %7933 = vmatpush1.msra.mxu0 0.0
      %7934 = vmatprep.subr.mxu0 0.0
      %7935 = vmatpush1.msra.mxu0 0.0
      %7936 = vmatprep.subr.mxu0 0.0
      %7937 = vmatpush1.msra.mxu0 0.0
      %7938 = vmatprep.subr.mxu0 0.0
      %7939 = vmatpush1.msra.mxu0 0.0
      %7940 = vmatprep.subr.mxu0 0.0
      %7941 = vmatpush1.msra.mxu0 0.0
      %7942 = vmatprep.subr.mxu0 0.0
      %7943 = vmatpush1.msra.mxu0 0.0
      %7944 = vmatprep.subr.mxu0 0.0
      %7945 = vmatpush1.msra.mxu0 0.0
      %7946 = vmatprep.subr.mxu0 0.0
      %7947 = vmatpush1.msra.mxu0 0.0
      %7948 = vmatprep.subr.mxu0 0.0
      %7949 = vmatpush1.msra.mxu0 0.0
      %7950 = vmatprep.subr.mxu0 0.0
      %7951 = vmatpush1.msra.mxu0 0.0
      %7952 = vmatprep.subr.mxu0 0.0
      %7953 = vmatpush1.msra.mxu0 0.0
      %7954 = vmatprep.subr.mxu0 0.0
      %7955 = vmatpush1.msra.mxu0 0.0
      %7956 = vmatprep.subr.mxu0 0.0
      %7957 = vmatpush1.msra.mxu0 0.0
      %7958 = vmatprep.subr.mxu0 0.0
      %7959 = vmatpush1.msra.mxu0 0.0
      %7960 = vmatprep.subr.mxu0 0.0
      %7961 = vmatpush1.msra.mxu0 0.0
      %7962 = vmatprep.subr.mxu0 0.0
      %7963 = vmatpush1.msra.mxu0 0.0
      %7964 = vmatprep.subr.mxu0 0.0
      %7965 = vmatpush1.msra.mxu0 0.0
      %7966 = vmatprep.subr.mxu0 0.0
      %7967 = vmatpush1.msra.mxu0 0.0
      %7968 = vmatprep.subr.mxu0 0.0
      %7969 = vmatpush1.msra.mxu0 0.0
      %7970 = vmatprep.mubr.f32.mxu0 0.0
      %7971 = vmatmul.mubr.f32.gmra.mrb[0].mxu0 %v7880
      %v7972 = vpop.f32.mrb[0].mxu0
      %v7973 = vadd.f32 0.0, %v7972
      %v7974 = vpop.f32.mrb[0].mxu0
      %v7975 = vadd.f32 0.0, %v7974
      %7976 = vdwg.mxu0
      %7977 = vmatprep.subr.mxu0 %v7888
      %7978 = vmatpush1.msra.mxu0 %v7886
      %7979 = vmatprep.subr.mxu0 0.0
      %7980 = vmatpush1.msra.mxu0 0.0
      %7981 = vmatprep.subr.mxu0 0.0
      %7982 = vmatpush1.msra.mxu0 0.0
      %7983 = vmatprep.subr.mxu0 0.0
      %7984 = vmatpush1.msra.mxu0 0.0
      %7985 = vmatprep.subr.mxu0 0.0
      %7986 = vmatpush1.msra.mxu0 0.0
      %7987 = vmatprep.subr.mxu0 0.0
      %7988 = vmatpush1.msra.mxu0 0.0
      %7989 = vmatprep.subr.mxu0 0.0
      %7990 = vmatpush1.msra.mxu0 0.0
      %7991 = vmatprep.subr.mxu0 0.0
      %7992 = vmatpush1.msra.mxu0 0.0
      %7993 = vmatprep.subr.mxu0 0.0
      %7994 = vmatpush1.msra.mxu0 0.0
      %7995 = vmatprep.subr.mxu0 0.0
      %7996 = vmatpush1.msra.mxu0 0.0
      %7997 = vmatprep.subr.mxu0 0.0
      %7998 = vmatpush1.msra.mxu0 0.0
      %7999 = vmatprep.subr.mxu0 0.0
      %8000 = vmatpush1.msra.mxu0 0.0
      %8001 = vmatprep.subr.mxu0 0.0
      %8002 = vmatpush1.msra.mxu0 0.0
      %8003 = vmatprep.subr.mxu0 0.0
      %8004 = vmatpush1.msra.mxu0 0.0
      %8005 = vmatprep.subr.mxu0 0.0
      %8006 = vmatpush1.msra.mxu0 0.0
      %8007 = vmatprep.subr.mxu0 0.0
      %8008 = vmatpush1.msra.mxu0 0.0
      %8009 = vmatprep.subr.mxu0 0.0
      %8010 = vmatpush1.msra.mxu0 0.0
      %8011 = vmatprep.subr.mxu0 0.0
      %8012 = vmatpush1.msra.mxu0 0.0
      %8013 = vmatprep.subr.mxu0 0.0
      %8014 = vmatpush1.msra.mxu0 0.0
      %8015 = vmatprep.subr.mxu0 0.0
      %8016 = vmatpush1.msra.mxu0 0.0
      %8017 = vmatprep.subr.mxu0 0.0
      %8018 = vmatpush1.msra.mxu0 0.0
      %8019 = vmatprep.subr.mxu0 0.0
      %8020 = vmatpush1.msra.mxu0 0.0
      %8021 = vmatprep.subr.mxu0 0.0
      %8022 = vmatpush1.msra.mxu0 0.0
      %8023 = vmatprep.subr.mxu0 0.0
      %8024 = vmatpush1.msra.mxu0 0.0
      %8025 = vmatprep.subr.mxu0 0.0
      %8026 = vmatpush1.msra.mxu0 0.0
      %8027 = vmatprep.subr.mxu0 0.0
      %8028 = vmatpush1.msra.mxu0 0.0
      %8029 = vmatprep.subr.mxu0 0.0
      %8030 = vmatpush1.msra.mxu0 0.0
      %8031 = vmatprep.subr.mxu0 0.0
      %8032 = vmatpush1.msra.mxu0 0.0
      %8033 = vmatprep.subr.mxu0 0.0
      %8034 = vmatpush1.msra.mxu0 0.0
      %8035 = vmatprep.subr.mxu0 0.0
      %8036 = vmatpush1.msra.mxu0 0.0
      %8037 = vmatprep.subr.mxu0 0.0
      %8038 = vmatpush1.msra.mxu0 0.0
      %8039 = vmatprep.subr.mxu0 0.0
      %8040 = vmatpush1.msra.mxu0 0.0
      %8041 = vmatprep.mubr.f32.mxu0 0.0
      %8042 = vmatmul.mubr.f32.gmra.mrb[0].mxu0 %v7880
      %v8043 = vpop.f32.mrb[0].mxu0
      %v8044 = vadd.f32 0.0, %v8043
      %v8045 = vpop.f32.mrb[0].mxu0
      %v8046 = vadd.f32 0.0, %v8045
      %8047 = vdwg.mxu0
      %8048 = vmatprep.subr.mxu0 %v7892
      %8049 = vmatpush1.msra.mxu0 %v7890
      %8050 = vmatprep.subr.mxu0 0.0
      %8051 = vmatpush1.msra.mxu0 0.0
      %8052 = vmatprep.subr.mxu0 0.0
      %8053 = vmatpush1.msra.mxu0 0.0
      %8054 = vmatprep.subr.mxu0 0.0
      %8055 = vmatpush1.msra.mxu0 0.0
      %8056 = vmatprep.subr.mxu0 0.0
      %8057 = vmatpush1.msra.mxu0 0.0
      %8058 = vmatprep.subr.mxu0 0.0
      %8059 = vmatpush1.msra.mxu0 0.0
      %8060 = vmatprep.subr.mxu0 0.0
      %8061 = vmatpush1.msra.mxu0 0.0
      %8062 = vmatprep.subr.mxu0 0.0
      %8063 = vmatpush1.msra.mxu0 0.0
      %8064 = vmatprep.subr.mxu0 0.0
      %8065 = vmatpush1.msra.mxu0 0.0
      %8066 = vmatprep.subr.mxu0 0.0
      %8067 = vmatpush1.msra.mxu0 0.0
      %8068 = vmatprep.subr.mxu0 0.0
      %8069 = vmatpush1.msra.mxu0 0.0
      %8070 = vmatprep.subr.mxu0 0.0
      %8071 = vmatpush1.msra.mxu0 0.0
      %8072 = vmatprep.subr.mxu0 0.0
      %8073 = vmatpush1.msra.mxu0 0.0
      %8074 = vmatprep.subr.mxu0 0.0
      %8075 = vmatpush1.msra.mxu0 0.0
      %8076 = vmatprep.subr.mxu0 0.0
      %8077 = vmatpush1.msra.mxu0 0.0
      %8078 = vmatprep.subr.mxu0 0.0
      %8079 = vmatpush1.msra.mxu0 0.0
      %8080 = vmatprep.subr.mxu0 0.0
      %8081 = vmatpush1.msra.mxu0 0.0
      %8082 = vmatprep.subr.mxu0 0.0
      %8083 = vmatpush1.msra.mxu0 0.0
      %8084 = vmatprep.subr.mxu0 0.0
      %8085 = vmatpush1.msra.mxu0 0.0
      %8086 = vmatprep.subr.mxu0 0.0
      %8087 = vmatpush1.msra.mxu0 0.0
      %8088 = vmatprep.subr.mxu0 0.0
      %8089 = vmatpush1.msra.mxu0 0.0
      %8090 = vmatprep.subr.mxu0 0.0
      %8091 = vmatpush1.msra.mxu0 0.0
      %8092 = vmatprep.subr.mxu0 0.0
      %8093 = vmatpush1.msra.mxu0 0.0
      %8094 = vmatprep.subr.mxu0 0.0
      %8095 = vmatpush1.msra.mxu0 0.0
      %8096 = vmatprep.subr.mxu0 0.0
      %8097 = vmatpush1.msra.mxu0 0.0
      %8098 = vmatprep.subr.mxu0 0.0
      %8099 = vmatpush1.msra.mxu0 0.0
      %8100 = vmatprep.subr.mxu0 0.0
      %8101 = vmatpush1.msra.mxu0 0.0
      %8102 = vmatprep.subr.mxu0 0.0
      %8103 = vmatpush1.msra.mxu0 0.0
      %8104 = vmatprep.subr.mxu0 0.0
      %8105 = vmatpush1.msra.mxu0 0.0
      %8106 = vmatprep.subr.mxu0 0.0
      %8107 = vmatpush1.msra.mxu0 0.0
      %8108 = vmatprep.subr.mxu0 0.0
      %8109 = vmatpush1.msra.mxu0 0.0
      %8110 = vmatprep.subr.mxu0 0.0
      %8111 = vmatpush1.msra.mxu0 0.0
      %8112 = vmatprep.mubr.f32.mxu0 0.0
      %8113 = vmatmul.mubr.f32.gmra.mrb[0].mxu0 %v7880
      %v8114 = vpop.f32.mrb[0].mxu0
      %v8115 = vadd.f32 0.0, %v8114
      %v8116 = vpop.f32.mrb[0].mxu0
      %v8117 = vadd.f32 0.0, %v8116
      %8118 = vdwg.mxu0
      %8119 = vmatprep.subr.mxu0 %v7896
      %8120 = vmatpush1.msra.mxu0 %v7894
      %8121 = vmatprep.subr.mxu0 0.0
      %8122 = vmatpush1.msra.mxu0 0.0
      %8123 = vmatprep.subr.mxu0 0.0
      %8124 = vmatpush1.msra.mxu0 0.0
      %8125 = vmatprep.subr.mxu0 0.0
      %8126 = vmatpush1.msra.mxu0 0.0
      %8127 = vmatprep.subr.mxu0 0.0
      %8128 = vmatpush1.msra.mxu0 0.0
      %8129 = vmatprep.subr.mxu0 0.0
      %8130 = vmatpush1.msra.mxu0 0.0
      %8131 = vmatprep.subr.mxu0 0.0
      %8132 = vmatpush1.msra.mxu0 0.0
      %8133 = vmatprep.subr.mxu0 0.0
      %8134 = vmatpush1.msra.mxu0 0.0
      %8135 = vmatprep.subr.mxu0 0.0
      %8136 = vmatpush1.msra.mxu0 0.0
      %8137 = vmatprep.subr.mxu0 0.0
      %8138 = vmatpush1.msra.mxu0 0.0
      %8139 = vmatprep.subr.mxu0 0.0
      %8140 = vmatpush1.msra.mxu0 0.0
      %8141 = vmatprep.subr.mxu0 0.0
      %8142 = vmatpush1.msra.mxu0 0.0
      %8143 = vmatprep.subr.mxu0 0.0
      %8144 = vmatpush1.msra.mxu0 0.0
      %8145 = vmatprep.subr.mxu0 0.0
      %8146 = vmatpush1.msra.mxu0 0.0
      %8147 = vmatprep.subr.mxu0 0.0
      %8148 = vmatpush1.msra.mxu0 0.0
      %8149 = vmatprep.subr.mxu0 0.0
      %8150 = vmatpush1.msra.mxu0 0.0
      %8151 = vmatprep.subr.mxu0 0.0
      %8152 = vmatpush1.msra.mxu0 0.0
      %8153 = vmatprep.subr.mxu0 0.0
      %8154 = vmatpush1.msra.mxu0 0.0
      %8155 = vmatprep.subr.mxu0 0.0
      %8156 = vmatpush1.msra.mxu0 0.0
      %8157 = vmatprep.subr.mxu0 0.0
      %8158 = vmatpush1.msra.mxu0 0.0
      %8159 = vmatprep.subr.mxu0 0.0
      %8160 = vmatpush1.msra.mxu0 0.0
      %8161 = vmatprep.subr.mxu0 0.0
      %8162 = vmatpush1.msra.mxu0 0.0
      %8163 = vmatprep.subr.mxu0 0.0
      %8164 = vmatpush1.msra.mxu0 0.0
      %8165 = vmatprep.subr.mxu0 0.0
      %8166 = vmatpush1.msra.mxu0 0.0
      %8167 = vmatprep.subr.mxu0 0.0
      %8168 = vmatpush1.msra.mxu0 0.0
      %8169 = vmatprep.subr.mxu0 0.0
      %8170 = vmatpush1.msra.mxu0 0.0
      %8171 = vmatprep.subr.mxu0 0.0
      %8172 = vmatpush1.msra.mxu0 0.0
      %8173 = vmatprep.subr.mxu0 0.0
      %8174 = vmatpush1.msra.mxu0 0.0
      %8175 = vmatprep.subr.mxu0 0.0
      %8176 = vmatpush1.msra.mxu0 0.0
      %8177 = vmatprep.subr.mxu0 0.0
      %8178 = vmatpush1.msra.mxu0 0.0
      %8179 = vmatprep.subr.mxu0 0.0
      %8180 = vmatpush1.msra.mxu0 0.0
      %8181 = vmatprep.subr.mxu0 0.0
      %8182 = vmatpush1.msra.mxu0 0.0
      %8183 = vmatprep.mubr.f32.mxu0 0.0
      %8184 = vmatmul.mubr.f32.gmra.mrb[0].mxu0 %v7880
      %v8185 = vpop.f32.mrb[0].mxu0
      %v8186 = vadd.f32 0.0, %v8185
      %v8187 = vpop.f32.mrb[0].mxu0
      %v8188 = vadd.f32 0.0, %v8187
      %8189 = vdwg.mxu0
      %8190 = vmatprep.subr.mxu0 %v7900
      %8191 = vmatpush1.msra.mxu0 %v7898
      %8192 = vmatprep.subr.mxu0 0.0
      %8193 = vmatpush1.msra.mxu0 0.0
      %8194 = vmatprep.subr.mxu0 0.0
      %8195 = vmatpush1.msra.mxu0 0.0
      %8196 = vmatprep.subr.mxu0 0.0
      %8197 = vmatpush1.msra.mxu0 0.0
      %8198 = vmatprep.subr.mxu0 0.0
      %8199 = vmatpush1.msra.mxu0 0.0
      %8200 = vmatprep.subr.mxu0 0.0
      %8201 = vmatpush1.msra.mxu0 0.0
      %8202 = vmatprep.subr.mxu0 0.0
      %8203 = vmatpush1.msra.mxu0 0.0
      %8204 = vmatprep.subr.mxu0 0.0
      %8205 = vmatpush1.msra.mxu0 0.0
      %8206 = vmatprep.subr.mxu0 0.0
      %8207 = vmatpush1.msra.mxu0 0.0
      %8208 = vmatprep.subr.mxu0 0.0
      %8209 = vmatpush1.msra.mxu0 0.0
      %8210 = vmatprep.subr.mxu0 0.0
      %8211 = vmatpush1.msra.mxu0 0.0
      %8212 = vmatprep.subr.mxu0 0.0
      %8213 = vmatpush1.msra.mxu0 0.0
      %8214 = vmatprep.subr.mxu0 0.0
      %8215 = vmatpush1.msra.mxu0 0.0
      %8216 = vmatprep.subr.mxu0 0.0
      %8217 = vmatpush1.msra.mxu0 0.0
      %8218 = vmatprep.subr.mxu0 0.0
      %8219 = vmatpush1.msra.mxu0 0.0
      %8220 = vmatprep.subr.mxu0 0.0
      %8221 = vmatpush1.msra.mxu0 0.0
      %8222 = vmatprep.subr.mxu0 0.0
      %8223 = vmatpush1.msra.mxu0 0.0
      %8224 = vmatprep.subr.mxu0 0.0
      %8225 = vmatpush1.msra.mxu0 0.0
      %8226 = vmatprep.subr.mxu0 0.0
      %8227 = vmatpush1.msra.mxu0 0.0
      %8228 = vmatprep.subr.mxu0 0.0
      %8229 = vmatpush1.msra.mxu0 0.0
      %8230 = vmatprep.subr.mxu0 0.0
      %8231 = vmatpush1.msra.mxu0 0.0
      %8232 = vmatprep.subr.mxu0 0.0
      %8233 = vmatpush1.msra.mxu0 0.0
      %8234 = vmatprep.subr.mxu0 0.0
      %8235 = vmatpush1.msra.mxu0 0.0
      %8236 = vmatprep.subr.mxu0 0.0
      %8237 = vmatpush1.msra.mxu0 0.0
      %8238 = vmatprep.subr.mxu0 0.0
      %8239 = vmatpush1.msra.mxu0 0.0
      %8240 = vmatprep.subr.mxu0 0.0
      %8241 = vmatpush1.msra.mxu0 0.0
      %8242 = vmatprep.subr.mxu0 0.0
      %8243 = vmatpush1.msra.mxu0 0.0
      %8244 = vmatprep.subr.mxu0 0.0
      %8245 = vmatpush1.msra.mxu0 0.0
      %8246 = vmatprep.subr.mxu0 0.0
      %8247 = vmatpush1.msra.mxu0 0.0
      %8248 = vmatprep.subr.mxu0 0.0
      %8249 = vmatpush1.msra.mxu0 0.0
      %8250 = vmatprep.subr.mxu0 0.0
      %8251 = vmatpush1.msra.mxu0 0.0
      %8252 = vmatprep.subr.mxu0 0.0
      %8253 = vmatpush1.msra.mxu0 0.0
      %8254 = vmatprep.mubr.f32.mxu0 0.0
      %8255 = vmatmul.mubr.f32.gmra.mrb[0].mxu0 %v7880
      %v8256 = vpop.f32.mrb[0].mxu0
      %v8257 = vadd.f32 0.0, %v8256
      %v8258 = vpop.f32.mrb[0].mxu0
      %v8259 = vadd.f32 0.0, %v8258
      %8260 = vdwg.mxu0
      %8261 = vmatprep.subr.mxu0 %v7904
      %8262 = vmatpush1.msra.mxu0 %v7902
      %8263 = vmatprep.subr.mxu0 0.0
      %8264 = vmatpush1.msra.mxu0 0.0
      %8265 = vmatprep.subr.mxu0 0.0
      %8266 = vmatpush1.msra.mxu0 0.0
      %8267 = vmatprep.subr.mxu0 0.0
      %8268 = vmatpush1.msra.mxu0 0.0
      %8269 = vmatprep.subr.mxu0 0.0
      %8270 = vmatpush1.msra.mxu0 0.0
      %8271 = vmatprep.subr.mxu0 0.0
      %8272 = vmatpush1.msra.mxu0 0.0
      %8273 = vmatprep.subr.mxu0 0.0
      %8274 = vmatpush1.msra.mxu0 0.0
      %8275 = vmatprep.subr.mxu0 0.0
      %8276 = vmatpush1.msra.mxu0 0.0
      %8277 = vmatprep.subr.mxu0 0.0
      %8278 = vmatpush1.msra.mxu0 0.0
      %8279 = vmatprep.subr.mxu0 0.0
      %8280 = vmatpush1.msra.mxu0 0.0
      %8281 = vmatprep.subr.mxu0 0.0
      %8282 = vmatpush1.msra.mxu0 0.0
      %8283 = vmatprep.subr.mxu0 0.0
      %8284 = vmatpush1.msra.mxu0 0.0
      %8285 = vmatprep.subr.mxu0 0.0
      %8286 = vmatpush1.msra.mxu0 0.0
      %8287 = vmatprep.subr.mxu0 0.0
      %8288 = vmatpush1.msra.mxu0 0.0
      %8289 = vmatprep.subr.mxu0 0.0
      %8290 = vmatpush1.msra.mxu0 0.0
      %8291 = vmatprep.subr.mxu0 0.0
      %8292 = vmatpush1.msra.mxu0 0.0
      %8293 = vmatprep.subr.mxu0 0.0
      %8294 = vmatpush1.msra.mxu0 0.0
      %8295 = vmatprep.subr.mxu0 0.0
      %8296 = vmatpush1.msra.mxu0 0.0
      %8297 = vmatprep.subr.mxu0 0.0
      %8298 = vmatpush1.msra.mxu0 0.0
      %8299 = vmatprep.subr.mxu0 0.0
      %8300 = vmatpush1.msra.mxu0 0.0
      %8301 = vmatprep.subr.mxu0 0.0
      %8302 = vmatpush1.msra.mxu0 0.0
      %8303 = vmatprep.subr.mxu0 0.0
      %8304 = vmatpush1.msra.mxu0 0.0
      %8305 = vmatprep.subr.mxu0 0.0
      %8306 = vmatpush1.msra.mxu0 0.0
      %8307 = vmatprep.subr.mxu0 0.0
      %8308 = vmatpush1.msra.mxu0 0.0
      %8309 = vmatprep.subr.mxu0 0.0
      %8310 = vmatpush1.msra.mxu0 0.0
      %8311 = vmatprep.subr.mxu0 0.0
      %8312 = vmatpush1.msra.mxu0 0.0
      %8313 = vmatprep.subr.mxu0 0.0
      %8314 = vmatpush1.msra.mxu0 0.0
      %8315 = vmatprep.subr.mxu0 0.0
      %8316 = vmatpush1.msra.mxu0 0.0
      %8317 = vmatprep.subr.mxu0 0.0
      %8318 = vmatpush1.msra.mxu0 0.0
      %8319 = vmatprep.subr.mxu0 0.0
      %8320 = vmatpush1.msra.mxu0 0.0
      %8321 = vmatprep.subr.mxu0 0.0
      %8322 = vmatpush1.msra.mxu0 0.0
      %8323 = vmatprep.subr.mxu0 0.0
      %8324 = vmatpush1.msra.mxu0 0.0
      %8325 = vmatprep.mubr.f32.mxu0 0.0
      %8326 = vmatmul.mubr.f32.gmra.mrb[0].mxu0 %v7880
      %v8327 = vpop.f32.mrb[0].mxu0
      %v8328 = vadd.f32 0.0, %v8327
      %v8329 = vpop.f32.mrb[0].mxu0
      %v8330 = vadd.f32 0.0, %v8329
      %8331 = vdwg.mxu0
      %v8332 = vadd.f32 %v7812, %v7973
      %v8333 = vadd.f32 %v7813, %v7975
      %v8334 = vadd.f32 %v7814, %v8044
      %v8335 = vadd.f32 %v7815, %v8046
      %v8336 = vadd.f32 %v7816, %v8115
      %v8337 = vadd.f32 %v7817, %v8117
      %v8338 = vadd.f32 %v7818, %v8186
      %v8339 = vadd.f32 %v7819, %v8188
      %v8340 = vadd.f32 %v7820, %v8257
      %v8341 = vadd.f32 %v7821, %v8259
      %v8342 = vadd.f32 %v7822, %v8328
      %v8343 = vadd.f32 %v7823, %v8330
      %v8344 = vld [vmem:[#allocation3 + $0xc] sm:$0xff]
      %v8345 = vld [vmem:[#allocation3 + $0x14] sm:$0xff]
      %v8346 = vld [vmem:[#allocation3 + $0x1c] sm:$0xff]
      %v8347 = vld [vmem:[#allocation3 + $0x24] sm:$0xff]
      %v8348 = vld [vmem:[#allocation3 + $0x2c] sm:$0xff]
      %v8349 = vld [vmem:[#allocation3 + $0x34] sm:$0xff]
      %s8350 = scalar_lea.vmem %s4, 24
      %v8351 = vld [vmem:[%s8350] sm:$0xf]
      %v8358 = vcombine.high %v8344, %v8344
      %v8359 = vcombine.high %v8345, %v8345
      %v8360 = vcombine.high %v8346, %v8346
      %v8361 = vcombine.high %v8347, %v8347
      %v8362 = vcombine.high %v8348, %v8348
      %v8363 = vcombine.high %v8349, %v8349
      %8364 = vrot.lane.b32.xlu0 %v8344, 120
      %v8365 = vpop.permute.xlu0 %8364
      %8366 = vrot.lane.b32.xlu0 %v8358, 120
      %v8367 = vpop.permute.xlu0 %8366
      %8368 = vrot.lane.b32.xlu0 %v8345, 120
      %v8369 = vpop.permute.xlu0 %8368
      %8370 = vrot.lane.b32.xlu0 %v8359, 120
      %v8371 = vpop.permute.xlu0 %8370
      %8372 = vrot.lane.b32.xlu0 %v8346, 120
      %v8373 = vpop.permute.xlu0 %8372
      %8374 = vrot.lane.b32.xlu0 %v8360, 120
      %v8375 = vpop.permute.xlu0 %8374
      %8376 = vrot.lane.b32.xlu0 %v8347, 120
      %v8377 = vpop.permute.xlu0 %8376
      %8378 = vrot.lane.b32.xlu0 %v8361, 120
      %v8379 = vpop.permute.xlu0 %8378
      %8380 = vrot.lane.b32.xlu0 %v8348, 120
      %v8381 = vpop.permute.xlu0 %8380
      %8382 = vrot.lane.b32.xlu0 %v8362, 120
      %v8383 = vpop.permute.xlu0 %8382
      %8384 = vrot.lane.b32.xlu0 %v8349, 120
      %v8385 = vpop.permute.xlu0 %8384
      %8386 = vrot.lane.b32.xlu0 %v8363, 120
      %v8387 = vpop.permute.xlu0 %8386
      %v8388 = vsel %vm3072, %v8365, %v8367
      %v8389 = vsel %vm3072, %v8367, %v8369
      %v8390 = vsel %vm3072, %v8369, %v8371
      %v8391 = vsel %vm3072, %v8371, %v8373
      %v8392 = vsel %vm3072, %v8373, %v8375
      %v8393 = vsel %vm3072, %v8375, %v8377
      %v8394 = vsel %vm3072, %v8377, %v8379
      %v8395 = vsel %vm3072, %v8379, %v8381
      %v8396 = vsel %vm3072, %v8381, %v8383
      %v8397 = vsel %vm3072, %v8383, %v8385
      %v8398 = vsel %vm3072, %v8385, %v8387
      %v8400 = vsel %vm5344, %v8351, 0
      %v8402 = vsel %vm344, %v8388, 0
      %v8404 = vsel %vm344, %v8389, 0
      %v8406 = vsel %vm344, %v8390, 0
      %v8408 = vsel %vm344, %v8391, 0
      %v8410 = vsel %vm344, %v8392, 0
      %v8412 = vsel %vm344, %v8393, 0
      %v8414 = vsel %vm344, %v8394, 0
      %v8416 = vsel %vm344, %v8395, 0
      %v8418 = vsel %vm344, %v8396, 0
      %v8420 = vsel %vm344, %v8397, 0
      %v8422 = vsel %vm344, %v8398, 0
      %v8424 = vsel %vm344, %v8387, 0
      %8426 = vmatprep.subr.mxu0 %v8404
      %8427 = vmatpush1.msra.mxu0 %v8402
      %8428 = vmatprep.subr.mxu0 0.0
      %8429 = vmatpush1.msra.mxu0 0.0
      %8430 = vmatprep.subr.mxu0 0.0
      %8431 = vmatpush1.msra.mxu0 0.0
      %8432 = vmatprep.subr.mxu0 0.0
      %8433 = vmatpush1.msra.mxu0 0.0
      %8434 = vmatprep.subr.mxu0 0.0
      %8435 = vmatpush1.msra.mxu0 0.0
      %8436 = vmatprep.subr.mxu0 0.0
      %8437 = vmatpush1.msra.mxu0 0.0
      %8438 = vmatprep.subr.mxu0 0.0
      %8439 = vmatpush1.msra.mxu0 0.0
      %8440 = vmatprep.subr.mxu0 0.0
      %8441 = vmatpush1.msra.mxu0 0.0
      %8442 = vmatprep.subr.mxu0 0.0
      %8443 = vmatpush1.msra.mxu0 0.0
      %8444 = vmatprep.subr.mxu0 0.0
      %8445 = vmatpush1.msra.mxu0 0.0
      %8446 = vmatprep.subr.mxu0 0.0
      %8447 = vmatpush1.msra.mxu0 0.0
      %8448 = vmatprep.subr.mxu0 0.0
      %8449 = vmatpush1.msra.mxu0 0.0
      %8450 = vmatprep.subr.mxu0 0.0
      %8451 = vmatpush1.msra.mxu0 0.0
      %8452 = vmatprep.subr.mxu0 0.0
      %8453 = vmatpush1.msra.mxu0 0.0
      %8454 = vmatprep.subr.mxu0 0.0
      %8455 = vmatpush1.msra.mxu0 0.0
      %8456 = vmatprep.subr.mxu0 0.0
      %8457 = vmatpush1.msra.mxu0 0.0
      %8458 = vmatprep.subr.mxu0 0.0
      %8459 = vmatpush1.msra.mxu0 0.0
      %8460 = vmatprep.subr.mxu0 0.0
      %8461 = vmatpush1.msra.mxu0 0.0
      %8462 = vmatprep.subr.mxu0 0.0
      %8463 = vmatpush1.msra.mxu0 0.0
      %8464 = vmatprep.subr.mxu0 0.0
      %8465 = vmatpush1.msra.mxu0 0.0
      %8466 = vmatprep.subr.mxu0 0.0
      %8467 = vmatpush1.msra.mxu0 0.0
      %8468 = vmatprep.subr.mxu0 0.0
      %8469 = vmatpush1.msra.mxu0 0.0
      %8470 = vmatprep.subr.mxu0 0.0
      %8471 = vmatpush1.msra.mxu0 0.0
      %8472 = vmatprep.subr.mxu0 0.0
      %8473 = vmatpush1.msra.mxu0 0.0
      %8474 = vmatprep.subr.mxu0 0.0
      %8475 = vmatpush1.msra.mxu0 0.0
      %8476 = vmatprep.subr.mxu0 0.0
      %8477 = vmatpush1.msra.mxu0 0.0
      %8478 = vmatprep.subr.mxu0 0.0
      %8479 = vmatpush1.msra.mxu0 0.0
      %8480 = vmatprep.subr.mxu0 0.0
      %8481 = vmatpush1.msra.mxu0 0.0
      %8482 = vmatprep.subr.mxu0 0.0
      %8483 = vmatpush1.msra.mxu0 0.0
      %8484 = vmatprep.subr.mxu0 0.0
      %8485 = vmatpush1.msra.mxu0 0.0
      %8486 = vmatprep.subr.mxu0 0.0
      %8487 = vmatpush1.msra.mxu0 0.0
      %8488 = vmatprep.subr.mxu0 0.0
      %8489 = vmatpush1.msra.mxu0 0.0
      %8490 = vmatprep.mubr.f32.mxu0 0.0
      %8491 = vmatmul.mubr.f32.gmra.mrb[0].mxu0 %v8400
      %v8492 = vpop.f32.mrb[0].mxu0
      %v8493 = vadd.f32 0.0, %v8492
      %v8494 = vpop.f32.mrb[0].mxu0
      %v8495 = vadd.f32 0.0, %v8494
      %8496 = vdwg.mxu0
      %8497 = vmatprep.subr.mxu0 %v8408
      %8498 = vmatpush1.msra.mxu0 %v8406
      %8499 = vmatprep.subr.mxu0 0.0
      %8500 = vmatpush1.msra.mxu0 0.0
      %8501 = vmatprep.subr.mxu0 0.0
      %8502 = vmatpush1.msra.mxu0 0.0
      %8503 = vmatprep.subr.mxu0 0.0
      %8504 = vmatpush1.msra.mxu0 0.0
      %8505 = vmatprep.subr.mxu0 0.0
      %8506 = vmatpush1.msra.mxu0 0.0
      %8507 = vmatprep.subr.mxu0 0.0
      %8508 = vmatpush1.msra.mxu0 0.0
      %8509 = vmatprep.subr.mxu0 0.0
      %8510 = vmatpush1.msra.mxu0 0.0
      %8511 = vmatprep.subr.mxu0 0.0
      %8512 = vmatpush1.msra.mxu0 0.0
      %8513 = vmatprep.subr.mxu0 0.0
      %8514 = vmatpush1.msra.mxu0 0.0
      %8515 = vmatprep.subr.mxu0 0.0
      %8516 = vmatpush1.msra.mxu0 0.0
      %8517 = vmatprep.subr.mxu0 0.0
      %8518 = vmatpush1.msra.mxu0 0.0
      %8519 = vmatprep.subr.mxu0 0.0
      %8520 = vmatpush1.msra.mxu0 0.0
      %8521 = vmatprep.subr.mxu0 0.0
      %8522 = vmatpush1.msra.mxu0 0.0
      %8523 = vmatprep.subr.mxu0 0.0
      %8524 = vmatpush1.msra.mxu0 0.0
      %8525 = vmatprep.subr.mxu0 0.0
      %8526 = vmatpush1.msra.mxu0 0.0
      %8527 = vmatprep.subr.mxu0 0.0
      %8528 = vmatpush1.msra.mxu0 0.0
      %8529 = vmatprep.subr.mxu0 0.0
      %8530 = vmatpush1.msra.mxu0 0.0
      %8531 = vmatprep.subr.mxu0 0.0
      %8532 = vmatpush1.msra.mxu0 0.0
      %8533 = vmatprep.subr.mxu0 0.0
      %8534 = vmatpush1.msra.mxu0 0.0
      %8535 = vmatprep.subr.mxu0 0.0
      %8536 = vmatpush1.msra.mxu0 0.0
      %8537 = vmatprep.subr.mxu0 0.0
      %8538 = vmatpush1.msra.mxu0 0.0
      %8539 = vmatprep.subr.mxu0 0.0
      %8540 = vmatpush1.msra.mxu0 0.0
      %8541 = vmatprep.subr.mxu0 0.0
      %8542 = vmatpush1.msra.mxu0 0.0
      %8543 = vmatprep.subr.mxu0 0.0
      %8544 = vmatpush1.msra.mxu0 0.0
      %8545 = vmatprep.subr.mxu0 0.0
      %8546 = vmatpush1.msra.mxu0 0.0
      %8547 = vmatprep.subr.mxu0 0.0
      %8548 = vmatpush1.msra.mxu0 0.0
      %8549 = vmatprep.subr.mxu0 0.0
      %8550 = vmatpush1.msra.mxu0 0.0
      %8551 = vmatprep.subr.mxu0 0.0
      %8552 = vmatpush1.msra.mxu0 0.0
      %8553 = vmatprep.subr.mxu0 0.0
      %8554 = vmatpush1.msra.mxu0 0.0
      %8555 = vmatprep.subr.mxu0 0.0
      %8556 = vmatpush1.msra.mxu0 0.0
      %8557 = vmatprep.subr.mxu0 0.0
      %8558 = vmatpush1.msra.mxu0 0.0
      %8559 = vmatprep.subr.mxu0 0.0
      %8560 = vmatpush1.msra.mxu0 0.0
      %8561 = vmatprep.mubr.f32.mxu0 0.0
      %8562 = vmatmul.mubr.f32.gmra.mrb[0].mxu0 %v8400
      %v8563 = vpop.f32.mrb[0].mxu0
      %v8564 = vadd.f32 0.0, %v8563
      %v8565 = vpop.f32.mrb[0].mxu0
      %v8566 = vadd.f32 0.0, %v8565
      %8567 = vdwg.mxu0
      %8568 = vmatprep.subr.mxu0 %v8412
      %8569 = vmatpush1.msra.mxu0 %v8410
      %8570 = vmatprep.subr.mxu0 0.0
      %8571 = vmatpush1.msra.mxu0 0.0
      %8572 = vmatprep.subr.mxu0 0.0
      %8573 = vmatpush1.msra.mxu0 0.0
      %8574 = vmatprep.subr.mxu0 0.0
      %8575 = vmatpush1.msra.mxu0 0.0
      %8576 = vmatprep.subr.mxu0 0.0
      %8577 = vmatpush1.msra.mxu0 0.0
      %8578 = vmatprep.subr.mxu0 0.0
      %8579 = vmatpush1.msra.mxu0 0.0
      %8580 = vmatprep.subr.mxu0 0.0
      %8581 = vmatpush1.msra.mxu0 0.0
      %8582 = vmatprep.subr.mxu0 0.0
      %8583 = vmatpush1.msra.mxu0 0.0
      %8584 = vmatprep.subr.mxu0 0.0
      %8585 = vmatpush1.msra.mxu0 0.0
      %8586 = vmatprep.subr.mxu0 0.0
      %8587 = vmatpush1.msra.mxu0 0.0
      %8588 = vmatprep.subr.mxu0 0.0
      %8589 = vmatpush1.msra.mxu0 0.0
      %8590 = vmatprep.subr.mxu0 0.0
      %8591 = vmatpush1.msra.mxu0 0.0
      %8592 = vmatprep.subr.mxu0 0.0
      %8593 = vmatpush1.msra.mxu0 0.0
      %8594 = vmatprep.subr.mxu0 0.0
      %8595 = vmatpush1.msra.mxu0 0.0
      %8596 = vmatprep.subr.mxu0 0.0
      %8597 = vmatpush1.msra.mxu0 0.0
      %8598 = vmatprep.subr.mxu0 0.0
      %8599 = vmatpush1.msra.mxu0 0.0
      %8600 = vmatprep.subr.mxu0 0.0
      %8601 = vmatpush1.msra.mxu0 0.0
      %8602 = vmatprep.subr.mxu0 0.0
      %8603 = vmatpush1.msra.mxu0 0.0
      %8604 = vmatprep.subr.mxu0 0.0
      %8605 = vmatpush1.msra.mxu0 0.0
      %8606 = vmatprep.subr.mxu0 0.0
      %8607 = vmatpush1.msra.mxu0 0.0
      %8608 = vmatprep.subr.mxu0 0.0
      %8609 = vmatpush1.msra.mxu0 0.0
      %8610 = vmatprep.subr.mxu0 0.0
      %8611 = vmatpush1.msra.mxu0 0.0
      %8612 = vmatprep.subr.mxu0 0.0
      %8613 = vmatpush1.msra.mxu0 0.0
      %8614 = vmatprep.subr.mxu0 0.0
      %8615 = vmatpush1.msra.mxu0 0.0
      %8616 = vmatprep.subr.mxu0 0.0
      %8617 = vmatpush1.msra.mxu0 0.0
      %8618 = vmatprep.subr.mxu0 0.0
      %8619 = vmatpush1.msra.mxu0 0.0
      %8620 = vmatprep.subr.mxu0 0.0
      %8621 = vmatpush1.msra.mxu0 0.0
      %8622 = vmatprep.subr.mxu0 0.0
      %8623 = vmatpush1.msra.mxu0 0.0
      %8624 = vmatprep.subr.mxu0 0.0
      %8625 = vmatpush1.msra.mxu0 0.0
      %8626 = vmatprep.subr.mxu0 0.0
      %8627 = vmatpush1.msra.mxu0 0.0
      %8628 = vmatprep.subr.mxu0 0.0
      %8629 = vmatpush1.msra.mxu0 0.0
      %8630 = vmatprep.subr.mxu0 0.0
      %8631 = vmatpush1.msra.mxu0 0.0
      %8632 = vmatprep.mubr.f32.mxu0 0.0
      %8633 = vmatmul.mubr.f32.gmra.mrb[0].mxu0 %v8400
      %v8634 = vpop.f32.mrb[0].mxu0
      %v8635 = vadd.f32 0.0, %v8634
      %v8636 = vpop.f32.mrb[0].mxu0
      %v8637 = vadd.f32 0.0, %v8636
      %8638 = vdwg.mxu0
      %8639 = vmatprep.subr.mxu0 %v8416
      %8640 = vmatpush1.msra.mxu0 %v8414
      %8641 = vmatprep.subr.mxu0 0.0
      %8642 = vmatpush1.msra.mxu0 0.0
      %8643 = vmatprep.subr.mxu0 0.0
      %8644 = vmatpush1.msra.mxu0 0.0
      %8645 = vmatprep.subr.mxu0 0.0
      %8646 = vmatpush1.msra.mxu0 0.0
      %8647 = vmatprep.subr.mxu0 0.0
      %8648 = vmatpush1.msra.mxu0 0.0
      %8649 = vmatprep.subr.mxu0 0.0
      %8650 = vmatpush1.msra.mxu0 0.0
      %8651 = vmatprep.subr.mxu0 0.0
      %8652 = vmatpush1.msra.mxu0 0.0
      %8653 = vmatprep.subr.mxu0 0.0
      %8654 = vmatpush1.msra.mxu0 0.0
      %8655 = vmatprep.subr.mxu0 0.0
      %8656 = vmatpush1.msra.mxu0 0.0
      %8657 = vmatprep.subr.mxu0 0.0
      %8658 = vmatpush1.msra.mxu0 0.0
      %8659 = vmatprep.subr.mxu0 0.0
      %8660 = vmatpush1.msra.mxu0 0.0
      %8661 = vmatprep.subr.mxu0 0.0
      %8662 = vmatpush1.msra.mxu0 0.0
      %8663 = vmatprep.subr.mxu0 0.0
      %8664 = vmatpush1.msra.mxu0 0.0
      %8665 = vmatprep.subr.mxu0 0.0
      %8666 = vmatpush1.msra.mxu0 0.0
      %8667 = vmatprep.subr.mxu0 0.0
      %8668 = vmatpush1.msra.mxu0 0.0
      %8669 = vmatprep.subr.mxu0 0.0
      %8670 = vmatpush1.msra.mxu0 0.0
      %8671 = vmatprep.subr.mxu0 0.0
      %8672 = vmatpush1.msra.mxu0 0.0
      %8673 = vmatprep.subr.mxu0 0.0
      %8674 = vmatpush1.msra.mxu0 0.0
      %8675 = vmatprep.subr.mxu0 0.0
      %8676 = vmatpush1.msra.mxu0 0.0
      %8677 = vmatprep.subr.mxu0 0.0
      %8678 = vmatpush1.msra.mxu0 0.0
      %8679 = vmatprep.subr.mxu0 0.0
      %8680 = vmatpush1.msra.mxu0 0.0
      %8681 = vmatprep.subr.mxu0 0.0
      %8682 = vmatpush1.msra.mxu0 0.0
      %8683 = vmatprep.subr.mxu0 0.0
      %8684 = vmatpush1.msra.mxu0 0.0
      %8685 = vmatprep.subr.mxu0 0.0
      %8686 = vmatpush1.msra.mxu0 0.0
      %8687 = vmatprep.subr.mxu0 0.0
      %8688 = vmatpush1.msra.mxu0 0.0
      %8689 = vmatprep.subr.mxu0 0.0
      %8690 = vmatpush1.msra.mxu0 0.0
      %8691 = vmatprep.subr.mxu0 0.0
      %8692 = vmatpush1.msra.mxu0 0.0
      %8693 = vmatprep.subr.mxu0 0.0
      %8694 = vmatpush1.msra.mxu0 0.0
      %8695 = vmatprep.subr.mxu0 0.0
      %8696 = vmatpush1.msra.mxu0 0.0
      %8697 = vmatprep.subr.mxu0 0.0
      %8698 = vmatpush1.msra.mxu0 0.0
      %8699 = vmatprep.subr.mxu0 0.0
      %8700 = vmatpush1.msra.mxu0 0.0
      %8701 = vmatprep.subr.mxu0 0.0
      %8702 = vmatpush1.msra.mxu0 0.0
      %8703 = vmatprep.mubr.f32.mxu0 0.0
      %8704 = vmatmul.mubr.f32.gmra.mrb[0].mxu0 %v8400
      %v8705 = vpop.f32.mrb[0].mxu0
      %v8706 = vadd.f32 0.0, %v8705
      %v8707 = vpop.f32.mrb[0].mxu0
      %v8708 = vadd.f32 0.0, %v8707
      %8709 = vdwg.mxu0
      %8710 = vmatprep.subr.mxu0 %v8420
      %8711 = vmatpush1.msra.mxu0 %v8418
      %8712 = vmatprep.subr.mxu0 0.0
      %8713 = vmatpush1.msra.mxu0 0.0
      %8714 = vmatprep.subr.mxu0 0.0
      %8715 = vmatpush1.msra.mxu0 0.0
      %8716 = vmatprep.subr.mxu0 0.0
      %8717 = vmatpush1.msra.mxu0 0.0
      %8718 = vmatprep.subr.mxu0 0.0
      %8719 = vmatpush1.msra.mxu0 0.0
      %8720 = vmatprep.subr.mxu0 0.0
      %8721 = vmatpush1.msra.mxu0 0.0
      %8722 = vmatprep.subr.mxu0 0.0
      %8723 = vmatpush1.msra.mxu0 0.0
      %8724 = vmatprep.subr.mxu0 0.0
      %8725 = vmatpush1.msra.mxu0 0.0
      %8726 = vmatprep.subr.mxu0 0.0
      %8727 = vmatpush1.msra.mxu0 0.0
      %8728 = vmatprep.subr.mxu0 0.0
      %8729 = vmatpush1.msra.mxu0 0.0
      %8730 = vmatprep.subr.mxu0 0.0
      %8731 = vmatpush1.msra.mxu0 0.0
      %8732 = vmatprep.subr.mxu0 0.0
      %8733 = vmatpush1.msra.mxu0 0.0
      %8734 = vmatprep.subr.mxu0 0.0
      %8735 = vmatpush1.msra.mxu0 0.0
      %8736 = vmatprep.subr.mxu0 0.0
      %8737 = vmatpush1.msra.mxu0 0.0
      %8738 = vmatprep.subr.mxu0 0.0
      %8739 = vmatpush1.msra.mxu0 0.0
      %8740 = vmatprep.subr.mxu0 0.0
      %8741 = vmatpush1.msra.mxu0 0.0
      %8742 = vmatprep.subr.mxu0 0.0
      %8743 = vmatpush1.msra.mxu0 0.0
      %8744 = vmatprep.subr.mxu0 0.0
      %8745 = vmatpush1.msra.mxu0 0.0
      %8746 = vmatprep.subr.mxu0 0.0
      %8747 = vmatpush1.msra.mxu0 0.0
      %8748 = vmatprep.subr.mxu0 0.0
      %8749 = vmatpush1.msra.mxu0 0.0
      %8750 = vmatprep.subr.mxu0 0.0
      %8751 = vmatpush1.msra.mxu0 0.0
      %8752 = vmatprep.subr.mxu0 0.0
      %8753 = vmatpush1.msra.mxu0 0.0
      %8754 = vmatprep.subr.mxu0 0.0
      %8755 = vmatpush1.msra.mxu0 0.0
      %8756 = vmatprep.subr.mxu0 0.0
      %8757 = vmatpush1.msra.mxu0 0.0
      %8758 = vmatprep.subr.mxu0 0.0
      %8759 = vmatpush1.msra.mxu0 0.0
      %8760 = vmatprep.subr.mxu0 0.0
      %8761 = vmatpush1.msra.mxu0 0.0
      %8762 = vmatprep.subr.mxu0 0.0
      %8763 = vmatpush1.msra.mxu0 0.0
      %8764 = vmatprep.subr.mxu0 0.0
      %8765 = vmatpush1.msra.mxu0 0.0
      %8766 = vmatprep.subr.mxu0 0.0
      %8767 = vmatpush1.msra.mxu0 0.0
      %8768 = vmatprep.subr.mxu0 0.0
      %8769 = vmatpush1.msra.mxu0 0.0
      %8770 = vmatprep.subr.mxu0 0.0
      %8771 = vmatpush1.msra.mxu0 0.0
      %8772 = vmatprep.subr.mxu0 0.0
      %8773 = vmatpush1.msra.mxu0 0.0
      %8774 = vmatprep.mubr.f32.mxu0 0.0
      %8775 = vmatmul.mubr.f32.gmra.mrb[0].mxu0 %v8400
      %v8776 = vpop.f32.mrb[0].mxu0
      %v8777 = vadd.f32 0.0, %v8776
      %v8778 = vpop.f32.mrb[0].mxu0
      %v8779 = vadd.f32 0.0, %v8778
      %8780 = vdwg.mxu0
      %8781 = vmatprep.subr.mxu0 %v8424
      %8782 = vmatpush1.msra.mxu0 %v8422
      %8783 = vmatprep.subr.mxu0 0.0
      %8784 = vmatpush1.msra.mxu0 0.0
      %8785 = vmatprep.subr.mxu0 0.0
      %8786 = vmatpush1.msra.mxu0 0.0
      %8787 = vmatprep.subr.mxu0 0.0
      %8788 = vmatpush1.msra.mxu0 0.0
      %8789 = vmatprep.subr.mxu0 0.0
      %8790 = vmatpush1.msra.mxu0 0.0
      %8791 = vmatprep.subr.mxu0 0.0
      %8792 = vmatpush1.msra.mxu0 0.0
      %8793 = vmatprep.subr.mxu0 0.0
      %8794 = vmatpush1.msra.mxu0 0.0
      %8795 = vmatprep.subr.mxu0 0.0
      %8796 = vmatpush1.msra.mxu0 0.0
      %8797 = vmatprep.subr.mxu0 0.0
      %8798 = vmatpush1.msra.mxu0 0.0
      %8799 = vmatprep.subr.mxu0 0.0
      %8800 = vmatpush1.msra.mxu0 0.0
      %8801 = vmatprep.subr.mxu0 0.0
      %8802 = vmatpush1.msra.mxu0 0.0
      %8803 = vmatprep.subr.mxu0 0.0
      %8804 = vmatpush1.msra.mxu0 0.0
      %8805 = vmatprep.subr.mxu0 0.0
      %8806 = vmatpush1.msra.mxu0 0.0
      %8807 = vmatprep.subr.mxu0 0.0
      %8808 = vmatpush1.msra.mxu0 0.0
      %8809 = vmatprep.subr.mxu0 0.0
      %8810 = vmatpush1.msra.mxu0 0.0
      %8811 = vmatprep.subr.mxu0 0.0
      %8812 = vmatpush1.msra.mxu0 0.0
      %8813 = vmatprep.subr.mxu0 0.0
      %8814 = vmatpush1.msra.mxu0 0.0
      %8815 = vmatprep.subr.mxu0 0.0
      %8816 = vmatpush1.msra.mxu0 0.0
      %8817 = vmatprep.subr.mxu0 0.0
      %8818 = vmatpush1.msra.mxu0 0.0
      %8819 = vmatprep.subr.mxu0 0.0
      %8820 = vmatpush1.msra.mxu0 0.0
      %8821 = vmatprep.subr.mxu0 0.0
      %8822 = vmatpush1.msra.mxu0 0.0
      %8823 = vmatprep.subr.mxu0 0.0
      %8824 = vmatpush1.msra.mxu0 0.0
      %8825 = vmatprep.subr.mxu0 0.0
      %8826 = vmatpush1.msra.mxu0 0.0
      %8827 = vmatprep.subr.mxu0 0.0
      %8828 = vmatpush1.msra.mxu0 0.0
      %8829 = vmatprep.subr.mxu0 0.0
      %8830 = vmatpush1.msra.mxu0 0.0
      %8831 = vmatprep.subr.mxu0 0.0
      %8832 = vmatpush1.msra.mxu0 0.0
      %8833 = vmatprep.subr.mxu0 0.0
      %8834 = vmatpush1.msra.mxu0 0.0
      %8835 = vmatprep.subr.mxu0 0.0
      %8836 = vmatpush1.msra.mxu0 0.0
      %8837 = vmatprep.subr.mxu0 0.0
      %8838 = vmatpush1.msra.mxu0 0.0
      %8839 = vmatprep.subr.mxu0 0.0
      %8840 = vmatpush1.msra.mxu0 0.0
      %8841 = vmatprep.subr.mxu0 0.0
      %8842 = vmatpush1.msra.mxu0 0.0
      %8843 = vmatprep.subr.mxu0 0.0
      %8844 = vmatpush1.msra.mxu0 0.0
      %8845 = vmatprep.mubr.f32.mxu0 0.0
      %8846 = vmatmul.mubr.f32.gmra.mrb[0].mxu0 %v8400
      %v8847 = vpop.f32.mrb[0].mxu0
      %v8848 = vadd.f32 0.0, %v8847
      %v8849 = vpop.f32.mrb[0].mxu0
      %v8850 = vadd.f32 0.0, %v8849
      %8851 = vdwg.mxu0
      %v8852 = vadd.f32 %v8332, %v8493
      %v8853 = vadd.f32 %v8333, %v8495
      %v8854 = vadd.f32 %v8334, %v8564
      %v8855 = vadd.f32 %v8335, %v8566
      %v8856 = vadd.f32 %v8336, %v8635
      %v8857 = vadd.f32 %v8337, %v8637
      %v8858 = vadd.f32 %v8338, %v8706
      %v8859 = vadd.f32 %v8339, %v8708
      %v8860 = vadd.f32 %v8340, %v8777
      %v8861 = vadd.f32 %v8341, %v8779
      %v8862 = vadd.f32 %v8342, %v8848
      %v8863 = vadd.f32 %v8343, %v8850
      %v8864 = vld [vmem:[#allocation3 + $0xc] sm:$0xff]
      %v8865 = vld [vmem:[#allocation3 + $0x14] sm:$0xff]
      %v8866 = vld [vmem:[#allocation3 + $0x1c] sm:$0xff]
      %v8867 = vld [vmem:[#allocation3 + $0x24] sm:$0xff]
      %v8868 = vld [vmem:[#allocation3 + $0x2c] sm:$0xff]
      %v8869 = vld [vmem:[#allocation3 + $0x34] sm:$0xff]
      %s8870 = scalar_lea.vmem %s4, 28
      %v8871 = vld [vmem:[%s8870] sm:$0xf]
      %v8878 = vcombine.high %v8864, %v8864
      %v8879 = vcombine.high %v8865, %v8865
      %v8880 = vcombine.high %v8866, %v8866
      %v8881 = vcombine.high %v8867, %v8867
      %v8882 = vcombine.high %v8868, %v8868
      %v8883 = vcombine.high %v8869, %v8869
      %8884 = vrot.lane.b32.xlu0 %v8864, 112
      %v8885 = vpop.permute.xlu0 %8884
      %8886 = vrot.lane.b32.xlu0 %v8878, 112
      %v8887 = vpop.permute.xlu0 %8886
      %8888 = vrot.lane.b32.xlu0 %v8865, 112
      %v8889 = vpop.permute.xlu0 %8888
      %8890 = vrot.lane.b32.xlu0 %v8879, 112
      %v8891 = vpop.permute.xlu0 %8890
      %8892 = vrot.lane.b32.xlu0 %v8866, 112
      %v8893 = vpop.permute.xlu0 %8892
      %8894 = vrot.lane.b32.xlu0 %v8880, 112
      %v8895 = vpop.permute.xlu0 %8894
      %8896 = vrot.lane.b32.xlu0 %v8867, 112
      %v8897 = vpop.permute.xlu0 %8896
      %8898 = vrot.lane.b32.xlu0 %v8881, 112
      %v8899 = vpop.permute.xlu0 %8898
      %8900 = vrot.lane.b32.xlu0 %v8868, 112
      %v8901 = vpop.permute.xlu0 %8900
      %8902 = vrot.lane.b32.xlu0 %v8882, 112
      %v8903 = vpop.permute.xlu0 %8902
      %8904 = vrot.lane.b32.xlu0 %v8869, 112
      %v8905 = vpop.permute.xlu0 %8904
      %8906 = vrot.lane.b32.xlu0 %v8883, 112
      %v8907 = vpop.permute.xlu0 %8906
      %v8908 = vsel %vm4077, %v8885, %v8887
      %v8909 = vsel %vm4077, %v8887, %v8889
      %v8910 = vsel %vm4077, %v8889, %v8891
      %v8911 = vsel %vm4077, %v8891, %v8893
      %v8912 = vsel %vm4077, %v8893, %v8895
      %v8913 = vsel %vm4077, %v8895, %v8897
      %v8914 = vsel %vm4077, %v8897, %v8899
      %v8915 = vsel %vm4077, %v8899, %v8901
      %v8916 = vsel %vm4077, %v8901, %v8903
      %v8917 = vsel %vm4077, %v8903, %v8905
      %v8918 = vsel %vm4077, %v8905, %v8907
      %v8920 = vsel %vm5344, %v8871, 0
      %v8922 = vsel %vm344, %v8908, 0
      %v8924 = vsel %vm344, %v8909, 0
      %v8926 = vsel %vm344, %v8910, 0
      %v8928 = vsel %vm344, %v8911, 0
      %v8930 = vsel %vm344, %v8912, 0
      %v8932 = vsel %vm344, %v8913, 0
      %v8934 = vsel %vm344, %v8914, 0
      %v8936 = vsel %vm344, %v8915, 0
      %v8938 = vsel %vm344, %v8916, 0
      %v8940 = vsel %vm344, %v8917, 0
      %v8942 = vsel %vm344, %v8918, 0
      %v8944 = vsel %vm344, %v8907, 0
      %8946 = vmatprep.subr.mxu0 %v8924
      %8947 = vmatpush1.msra.mxu0 %v8922
      %8948 = vmatprep.subr.mxu0 0.0
      %8949 = vmatpush1.msra.mxu0 0.0
      %8950 = vmatprep.subr.mxu0 0.0
      %8951 = vmatpush1.msra.mxu0 0.0
      %8952 = vmatprep.subr.mxu0 0.0
      %8953 = vmatpush1.msra.mxu0 0.0
      %8954 = vmatprep.subr.mxu0 0.0
      %8955 = vmatpush1.msra.mxu0 0.0
      %8956 = vmatprep.subr.mxu0 0.0
      %8957 = vmatpush1.msra.mxu0 0.0
      %8958 = vmatprep.subr.mxu0 0.0
      %8959 = vmatpush1.msra.mxu0 0.0
      %8960 = vmatprep.subr.mxu0 0.0
      %8961 = vmatpush1.msra.mxu0 0.0
      %8962 = vmatprep.subr.mxu0 0.0
      %8963 = vmatpush1.msra.mxu0 0.0
      %8964 = vmatprep.subr.mxu0 0.0
      %8965 = vmatpush1.msra.mxu0 0.0
      %8966 = vmatprep.subr.mxu0 0.0
      %8967 = vmatpush1.msra.mxu0 0.0
      %8968 = vmatprep.subr.mxu0 0.0
      %8969 = vmatpush1.msra.mxu0 0.0
      %8970 = vmatprep.subr.mxu0 0.0
      %8971 = vmatpush1.msra.mxu0 0.0
      %8972 = vmatprep.subr.mxu0 0.0
      %8973 = vmatpush1.msra.mxu0 0.0
      %8974 = vmatprep.subr.mxu0 0.0
      %8975 = vmatpush1.msra.mxu0 0.0
      %8976 = vmatprep.subr.mxu0 0.0
      %8977 = vmatpush1.msra.mxu0 0.0
      %8978 = vmatprep.subr.mxu0 0.0
      %8979 = vmatpush1.msra.mxu0 0.0
      %8980 = vmatprep.subr.mxu0 0.0
      %8981 = vmatpush1.msra.mxu0 0.0
      %8982 = vmatprep.subr.mxu0 0.0
      %8983 = vmatpush1.msra.mxu0 0.0
      %8984 = vmatprep.subr.mxu0 0.0
      %8985 = vmatpush1.msra.mxu0 0.0
      %8986 = vmatprep.subr.mxu0 0.0
      %8987 = vmatpush1.msra.mxu0 0.0
      %8988 = vmatprep.subr.mxu0 0.0
      %8989 = vmatpush1.msra.mxu0 0.0
      %8990 = vmatprep.subr.mxu0 0.0
      %8991 = vmatpush1.msra.mxu0 0.0
      %8992 = vmatprep.subr.mxu0 0.0
      %8993 = vmatpush1.msra.mxu0 0.0
      %8994 = vmatprep.subr.mxu0 0.0
      %8995 = vmatpush1.msra.mxu0 0.0
      %8996 = vmatprep.subr.mxu0 0.0
      %8997 = vmatpush1.msra.mxu0 0.0
      %8998 = vmatprep.subr.mxu0 0.0
      %8999 = vmatpush1.msra.mxu0 0.0
      %9000 = vmatprep.subr.mxu0 0.0
      %9001 = vmatpush1.msra.mxu0 0.0
      %9002 = vmatprep.subr.mxu0 0.0
      %9003 = vmatpush1.msra.mxu0 0.0
      %9004 = vmatprep.subr.mxu0 0.0
      %9005 = vmatpush1.msra.mxu0 0.0
      %9006 = vmatprep.subr.mxu0 0.0
      %9007 = vmatpush1.msra.mxu0 0.0
      %9008 = vmatprep.subr.mxu0 0.0
      %9009 = vmatpush1.msra.mxu0 0.0
      %9010 = vmatprep.mubr.f32.mxu0 0.0
      %9011 = vmatmul.mubr.f32.gmra.mrb[0].mxu0 %v8920
      %v9012 = vpop.f32.mrb[0].mxu0
      %v9013 = vadd.f32 0.0, %v9012
      %v9014 = vpop.f32.mrb[0].mxu0
      %v9015 = vadd.f32 0.0, %v9014
      %9016 = vdwg.mxu0
      %9017 = vmatprep.subr.mxu0 %v8928
      %9018 = vmatpush1.msra.mxu0 %v8926
      %9019 = vmatprep.subr.mxu0 0.0
      %9020 = vmatpush1.msra.mxu0 0.0
      %9021 = vmatprep.subr.mxu0 0.0
      %9022 = vmatpush1.msra.mxu0 0.0
      %9023 = vmatprep.subr.mxu0 0.0
      %9024 = vmatpush1.msra.mxu0 0.0
      %9025 = vmatprep.subr.mxu0 0.0
      %9026 = vmatpush1.msra.mxu0 0.0
      %9027 = vmatprep.subr.mxu0 0.0
      %9028 = vmatpush1.msra.mxu0 0.0
      %9029 = vmatprep.subr.mxu0 0.0
      %9030 = vmatpush1.msra.mxu0 0.0
      %9031 = vmatprep.subr.mxu0 0.0
      %9032 = vmatpush1.msra.mxu0 0.0
      %9033 = vmatprep.subr.mxu0 0.0
      %9034 = vmatpush1.msra.mxu0 0.0
      %9035 = vmatprep.subr.mxu0 0.0
      %9036 = vmatpush1.msra.mxu0 0.0
      %9037 = vmatprep.subr.mxu0 0.0
      %9038 = vmatpush1.msra.mxu0 0.0
      %9039 = vmatprep.subr.mxu0 0.0
      %9040 = vmatpush1.msra.mxu0 0.0
      %9041 = vmatprep.subr.mxu0 0.0
      %9042 = vmatpush1.msra.mxu0 0.0
      %9043 = vmatprep.subr.mxu0 0.0
      %9044 = vmatpush1.msra.mxu0 0.0
      %9045 = vmatprep.subr.mxu0 0.0
      %9046 = vmatpush1.msra.mxu0 0.0
      %9047 = vmatprep.subr.mxu0 0.0
      %9048 = vmatpush1.msra.mxu0 0.0
      %9049 = vmatprep.subr.mxu0 0.0
      %9050 = vmatpush1.msra.mxu0 0.0
      %9051 = vmatprep.subr.mxu0 0.0
      %9052 = vmatpush1.msra.mxu0 0.0
      %9053 = vmatprep.subr.mxu0 0.0
      %9054 = vmatpush1.msra.mxu0 0.0
      %9055 = vmatprep.subr.mxu0 0.0
      %9056 = vmatpush1.msra.mxu0 0.0
      %9057 = vmatprep.subr.mxu0 0.0
      %9058 = vmatpush1.msra.mxu0 0.0
      %9059 = vmatprep.subr.mxu0 0.0
      %9060 = vmatpush1.msra.mxu0 0.0
      %9061 = vmatprep.subr.mxu0 0.0
      %9062 = vmatpush1.msra.mxu0 0.0
      %9063 = vmatprep.subr.mxu0 0.0
      %9064 = vmatpush1.msra.mxu0 0.0
      %9065 = vmatprep.subr.mxu0 0.0
      %9066 = vmatpush1.msra.mxu0 0.0
      %9067 = vmatprep.subr.mxu0 0.0
      %9068 = vmatpush1.msra.mxu0 0.0
      %9069 = vmatprep.subr.mxu0 0.0
      %9070 = vmatpush1.msra.mxu0 0.0
      %9071 = vmatprep.subr.mxu0 0.0
      %9072 = vmatpush1.msra.mxu0 0.0
      %9073 = vmatprep.subr.mxu0 0.0
      %9074 = vmatpush1.msra.mxu0 0.0
      %9075 = vmatprep.subr.mxu0 0.0
      %9076 = vmatpush1.msra.mxu0 0.0
      %9077 = vmatprep.subr.mxu0 0.0
      %9078 = vmatpush1.msra.mxu0 0.0
      %9079 = vmatprep.subr.mxu0 0.0
      %9080 = vmatpush1.msra.mxu0 0.0
      %9081 = vmatprep.mubr.f32.mxu0 0.0
      %9082 = vmatmul.mubr.f32.gmra.mrb[0].mxu0 %v8920
      %v9083 = vpop.f32.mrb[0].mxu0
      %v9084 = vadd.f32 0.0, %v9083
      %v9085 = vpop.f32.mrb[0].mxu0
      %v9086 = vadd.f32 0.0, %v9085
      %9087 = vdwg.mxu0
      %9088 = vmatprep.subr.mxu0 %v8932
      %9089 = vmatpush1.msra.mxu0 %v8930
      %9090 = vmatprep.subr.mxu0 0.0
      %9091 = vmatpush1.msra.mxu0 0.0
      %9092 = vmatprep.subr.mxu0 0.0
      %9093 = vmatpush1.msra.mxu0 0.0
      %9094 = vmatprep.subr.mxu0 0.0
      %9095 = vmatpush1.msra.mxu0 0.0
      %9096 = vmatprep.subr.mxu0 0.0
      %9097 = vmatpush1.msra.mxu0 0.0
      %9098 = vmatprep.subr.mxu0 0.0
      %9099 = vmatpush1.msra.mxu0 0.0
      %9100 = vmatprep.subr.mxu0 0.0
      %9101 = vmatpush1.msra.mxu0 0.0
      %9102 = vmatprep.subr.mxu0 0.0
      %9103 = vmatpush1.msra.mxu0 0.0
      %9104 = vmatprep.subr.mxu0 0.0
      %9105 = vmatpush1.msra.mxu0 0.0
      %9106 = vmatprep.subr.mxu0 0.0
      %9107 = vmatpush1.msra.mxu0 0.0
      %9108 = vmatprep.subr.mxu0 0.0
      %9109 = vmatpush1.msra.mxu0 0.0
      %9110 = vmatprep.subr.mxu0 0.0
      %9111 = vmatpush1.msra.mxu0 0.0
      %9112 = vmatprep.subr.mxu0 0.0
      %9113 = vmatpush1.msra.mxu0 0.0
      %9114 = vmatprep.subr.mxu0 0.0
      %9115 = vmatpush1.msra.mxu0 0.0
      %9116 = vmatprep.subr.mxu0 0.0
      %9117 = vmatpush1.msra.mxu0 0.0
      %9118 = vmatprep.subr.mxu0 0.0
      %9119 = vmatpush1.msra.mxu0 0.0
      %9120 = vmatprep.subr.mxu0 0.0
      %9121 = vmatpush1.msra.mxu0 0.0
      %9122 = vmatprep.subr.mxu0 0.0
      %9123 = vmatpush1.msra.mxu0 0.0
      %9124 = vmatprep.subr.mxu0 0.0
      %9125 = vmatpush1.msra.mxu0 0.0
      %9126 = vmatprep.subr.mxu0 0.0
      %9127 = vmatpush1.msra.mxu0 0.0
      %9128 = vmatprep.subr.mxu0 0.0
      %9129 = vmatpush1.msra.mxu0 0.0
      %9130 = vmatprep.subr.mxu0 0.0
      %9131 = vmatpush1.msra.mxu0 0.0
      %9132 = vmatprep.subr.mxu0 0.0
      %9133 = vmatpush1.msra.mxu0 0.0
      %9134 = vmatprep.subr.mxu0 0.0
      %9135 = vmatpush1.msra.mxu0 0.0
      %9136 = vmatprep.subr.mxu0 0.0
      %9137 = vmatpush1.msra.mxu0 0.0
      %9138 = vmatprep.subr.mxu0 0.0
      %9139 = vmatpush1.msra.mxu0 0.0
      %9140 = vmatprep.subr.mxu0 0.0
      %9141 = vmatpush1.msra.mxu0 0.0
      %9142 = vmatprep.subr.mxu0 0.0
      %9143 = vmatpush1.msra.mxu0 0.0
      %9144 = vmatprep.subr.mxu0 0.0
      %9145 = vmatpush1.msra.mxu0 0.0
      %9146 = vmatprep.subr.mxu0 0.0
      %9147 = vmatpush1.msra.mxu0 0.0
      %9148 = vmatprep.subr.mxu0 0.0
      %9149 = vmatpush1.msra.mxu0 0.0
      %9150 = vmatprep.subr.mxu0 0.0
      %9151 = vmatpush1.msra.mxu0 0.0
      %9152 = vmatprep.mubr.f32.mxu0 0.0
      %9153 = vmatmul.mubr.f32.gmra.mrb[0].mxu0 %v8920
      %v9154 = vpop.f32.mrb[0].mxu0
      %v9155 = vadd.f32 0.0, %v9154
      %v9156 = vpop.f32.mrb[0].mxu0
      %v9157 = vadd.f32 0.0, %v9156
      %9158 = vdwg.mxu0
      %9159 = vmatprep.subr.mxu0 %v8936
      %9160 = vmatpush1.msra.mxu0 %v8934
      %9161 = vmatprep.subr.mxu0 0.0
      %9162 = vmatpush1.msra.mxu0 0.0
      %9163 = vmatprep.subr.mxu0 0.0
      %9164 = vmatpush1.msra.mxu0 0.0
      %9165 = vmatprep.subr.mxu0 0.0
      %9166 = vmatpush1.msra.mxu0 0.0
      %9167 = vmatprep.subr.mxu0 0.0
      %9168 = vmatpush1.msra.mxu0 0.0
      %9169 = vmatprep.subr.mxu0 0.0
      %9170 = vmatpush1.msra.mxu0 0.0
      %9171 = vmatprep.subr.mxu0 0.0
      %9172 = vmatpush1.msra.mxu0 0.0
      %9173 = vmatprep.subr.mxu0 0.0
      %9174 = vmatpush1.msra.mxu0 0.0
      %9175 = vmatprep.subr.mxu0 0.0
      %9176 = vmatpush1.msra.mxu0 0.0
      %9177 = vmatprep.subr.mxu0 0.0
      %9178 = vmatpush1.msra.mxu0 0.0
      %9179 = vmatprep.subr.mxu0 0.0
      %9180 = vmatpush1.msra.mxu0 0.0
      %9181 = vmatprep.subr.mxu0 0.0
      %9182 = vmatpush1.msra.mxu0 0.0
      %9183 = vmatprep.subr.mxu0 0.0
      %9184 = vmatpush1.msra.mxu0 0.0
      %9185 = vmatprep.subr.mxu0 0.0
      %9186 = vmatpush1.msra.mxu0 0.0
      %9187 = vmatprep.subr.mxu0 0.0
      %9188 = vmatpush1.msra.mxu0 0.0
      %9189 = vmatprep.subr.mxu0 0.0
      %9190 = vmatpush1.msra.mxu0 0.0
      %9191 = vmatprep.subr.mxu0 0.0
      %9192 = vmatpush1.msra.mxu0 0.0
      %9193 = vmatprep.subr.mxu0 0.0
      %9194 = vmatpush1.msra.mxu0 0.0
      %9195 = vmatprep.subr.mxu0 0.0
      %9196 = vmatpush1.msra.mxu0 0.0
      %9197 = vmatprep.subr.mxu0 0.0
      %9198 = vmatpush1.msra.mxu0 0.0
      %9199 = vmatprep.subr.mxu0 0.0
      %9200 = vmatpush1.msra.mxu0 0.0
      %9201 = vmatprep.subr.mxu0 0.0
      %9202 = vmatpush1.msra.mxu0 0.0
      %9203 = vmatprep.subr.mxu0 0.0
      %9204 = vmatpush1.msra.mxu0 0.0
      %9205 = vmatprep.subr.mxu0 0.0
      %9206 = vmatpush1.msra.mxu0 0.0
      %9207 = vmatprep.subr.mxu0 0.0
      %9208 = vmatpush1.msra.mxu0 0.0
      %9209 = vmatprep.subr.mxu0 0.0
      %9210 = vmatpush1.msra.mxu0 0.0
      %9211 = vmatprep.subr.mxu0 0.0
      %9212 = vmatpush1.msra.mxu0 0.0
      %9213 = vmatprep.subr.mxu0 0.0
      %9214 = vmatpush1.msra.mxu0 0.0
      %9215 = vmatprep.subr.mxu0 0.0
      %9216 = vmatpush1.msra.mxu0 0.0
      %9217 = vmatprep.subr.mxu0 0.0
      %9218 = vmatpush1.msra.mxu0 0.0
      %9219 = vmatprep.subr.mxu0 0.0
      %9220 = vmatpush1.msra.mxu0 0.0
      %9221 = vmatprep.subr.mxu0 0.0
      %9222 = vmatpush1.msra.mxu0 0.0
      %9223 = vmatprep.mubr.f32.mxu0 0.0
      %9224 = vmatmul.mubr.f32.gmra.mrb[0].mxu0 %v8920
      %v9225 = vpop.f32.mrb[0].mxu0
      %v9226 = vadd.f32 0.0, %v9225
      %v9227 = vpop.f32.mrb[0].mxu0
      %v9228 = vadd.f32 0.0, %v9227
      %9229 = vdwg.mxu0
      %9230 = vmatprep.subr.mxu0 %v8940
      %9231 = vmatpush1.msra.mxu0 %v8938
      %9232 = vmatprep.subr.mxu0 0.0
      %9233 = vmatpush1.msra.mxu0 0.0
      %9234 = vmatprep.subr.mxu0 0.0
      %9235 = vmatpush1.msra.mxu0 0.0
      %9236 = vmatprep.subr.mxu0 0.0
      %9237 = vmatpush1.msra.mxu0 0.0
      %9238 = vmatprep.subr.mxu0 0.0
      %9239 = vmatpush1.msra.mxu0 0.0
      %9240 = vmatprep.subr.mxu0 0.0
      %9241 = vmatpush1.msra.mxu0 0.0
      %9242 = vmatprep.subr.mxu0 0.0
      %9243 = vmatpush1.msra.mxu0 0.0
      %9244 = vmatprep.subr.mxu0 0.0
      %9245 = vmatpush1.msra.mxu0 0.0
      %9246 = vmatprep.subr.mxu0 0.0
      %9247 = vmatpush1.msra.mxu0 0.0
      %9248 = vmatprep.subr.mxu0 0.0
      %9249 = vmatpush1.msra.mxu0 0.0
      %9250 = vmatprep.subr.mxu0 0.0
      %9251 = vmatpush1.msra.mxu0 0.0
      %9252 = vmatprep.subr.mxu0 0.0
      %9253 = vmatpush1.msra.mxu0 0.0
      %9254 = vmatprep.subr.mxu0 0.0
      %9255 = vmatpush1.msra.mxu0 0.0
      %9256 = vmatprep.subr.mxu0 0.0
      %9257 = vmatpush1.msra.mxu0 0.0
      %9258 = vmatprep.subr.mxu0 0.0
      %9259 = vmatpush1.msra.mxu0 0.0
      %9260 = vmatprep.subr.mxu0 0.0
      %9261 = vmatpush1.msra.mxu0 0.0
      %9262 = vmatprep.subr.mxu0 0.0
      %9263 = vmatpush1.msra.mxu0 0.0
      %9264 = vmatprep.subr.mxu0 0.0
      %9265 = vmatpush1.msra.mxu0 0.0
      %9266 = vmatprep.subr.mxu0 0.0
      %9267 = vmatpush1.msra.mxu0 0.0
      %9268 = vmatprep.subr.mxu0 0.0
      %9269 = vmatpush1.msra.mxu0 0.0
      %9270 = vmatprep.subr.mxu0 0.0
      %9271 = vmatpush1.msra.mxu0 0.0
      %9272 = vmatprep.subr.mxu0 0.0
      %9273 = vmatpush1.msra.mxu0 0.0
      %9274 = vmatprep.subr.mxu0 0.0
      %9275 = vmatpush1.msra.mxu0 0.0
      %9276 = vmatprep.subr.mxu0 0.0
      %9277 = vmatpush1.msra.mxu0 0.0
      %9278 = vmatprep.subr.mxu0 0.0
      %9279 = vmatpush1.msra.mxu0 0.0
      %9280 = vmatprep.subr.mxu0 0.0
      %9281 = vmatpush1.msra.mxu0 0.0
      %9282 = vmatprep.subr.mxu0 0.0
      %9283 = vmatpush1.msra.mxu0 0.0
      %9284 = vmatprep.subr.mxu0 0.0
      %9285 = vmatpush1.msra.mxu0 0.0
      %9286 = vmatprep.subr.mxu0 0.0
      %9287 = vmatpush1.msra.mxu0 0.0
      %9288 = vmatprep.subr.mxu0 0.0
      %9289 = vmatpush1.msra.mxu0 0.0
      %9290 = vmatprep.subr.mxu0 0.0
      %9291 = vmatpush1.msra.mxu0 0.0
      %9292 = vmatprep.subr.mxu0 0.0
      %9293 = vmatpush1.msra.mxu0 0.0
      %9294 = vmatprep.mubr.f32.mxu0 0.0
      %9295 = vmatmul.mubr.f32.gmra.mrb[0].mxu0 %v8920
      %v9296 = vpop.f32.mrb[0].mxu0
      %v9297 = vadd.f32 0.0, %v9296
      %v9298 = vpop.f32.mrb[0].mxu0
      %v9299 = vadd.f32 0.0, %v9298
      %9300 = vdwg.mxu0
      %9301 = vmatprep.subr.mxu0 %v8944
      %9302 = vmatpush1.msra.mxu0 %v8942
      %9303 = vmatprep.subr.mxu0 0.0
      %9304 = vmatpush1.msra.mxu0 0.0
      %9305 = vmatprep.subr.mxu0 0.0
      %9306 = vmatpush1.msra.mxu0 0.0
      %9307 = vmatprep.subr.mxu0 0.0
      %9308 = vmatpush1.msra.mxu0 0.0
      %9309 = vmatprep.subr.mxu0 0.0
      %9310 = vmatpush1.msra.mxu0 0.0
      %9311 = vmatprep.subr.mxu0 0.0
      %9312 = vmatpush1.msra.mxu0 0.0
      %9313 = vmatprep.subr.mxu0 0.0
      %9314 = vmatpush1.msra.mxu0 0.0
      %9315 = vmatprep.subr.mxu0 0.0
      %9316 = vmatpush1.msra.mxu0 0.0
      %9317 = vmatprep.subr.mxu0 0.0
      %9318 = vmatpush1.msra.mxu0 0.0
      %9319 = vmatprep.subr.mxu0 0.0
      %9320 = vmatpush1.msra.mxu0 0.0
      %9321 = vmatprep.subr.mxu0 0.0
      %9322 = vmatpush1.msra.mxu0 0.0
      %9323 = vmatprep.subr.mxu0 0.0
      %9324 = vmatpush1.msra.mxu0 0.0
      %9325 = vmatprep.subr.mxu0 0.0
      %9326 = vmatpush1.msra.mxu0 0.0
      %9327 = vmatprep.subr.mxu0 0.0
      %9328 = vmatpush1.msra.mxu0 0.0
      %9329 = vmatprep.subr.mxu0 0.0
      %9330 = vmatpush1.msra.mxu0 0.0
      %9331 = vmatprep.subr.mxu0 0.0
      %9332 = vmatpush1.msra.mxu0 0.0
      %9333 = vmatprep.subr.mxu0 0.0
      %9334 = vmatpush1.msra.mxu0 0.0
      %9335 = vmatprep.subr.mxu0 0.0
      %9336 = vmatpush1.msra.mxu0 0.0
      %9337 = vmatprep.subr.mxu0 0.0
      %9338 = vmatpush1.msra.mxu0 0.0
      %9339 = vmatprep.subr.mxu0 0.0
      %9340 = vmatpush1.msra.mxu0 0.0
      %9341 = vmatprep.subr.mxu0 0.0
      %9342 = vmatpush1.msra.mxu0 0.0
      %9343 = vmatprep.subr.mxu0 0.0
      %9344 = vmatpush1.msra.mxu0 0.0
      %9345 = vmatprep.subr.mxu0 0.0
      %9346 = vmatpush1.msra.mxu0 0.0
      %9347 = vmatprep.subr.mxu0 0.0
      %9348 = vmatpush1.msra.mxu0 0.0
      %9349 = vmatprep.subr.mxu0 0.0
      %9350 = vmatpush1.msra.mxu0 0.0
      %9351 = vmatprep.subr.mxu0 0.0
      %9352 = vmatpush1.msra.mxu0 0.0
      %9353 = vmatprep.subr.mxu0 0.0
      %9354 = vmatpush1.msra.mxu0 0.0
      %9355 = vmatprep.subr.mxu0 0.0
      %9356 = vmatpush1.msra.mxu0 0.0
      %9357 = vmatprep.subr.mxu0 0.0
      %9358 = vmatpush1.msra.mxu0 0.0
      %9359 = vmatprep.subr.mxu0 0.0
      %9360 = vmatpush1.msra.mxu0 0.0
      %9361 = vmatprep.subr.mxu0 0.0
      %9362 = vmatpush1.msra.mxu0 0.0
      %9363 = vmatprep.subr.mxu0 0.0
      %9364 = vmatpush1.msra.mxu0 0.0
      %9365 = vmatprep.mubr.f32.mxu0 0.0
      %9366 = vmatmul.mubr.f32.gmra.mrb[0].mxu0 %v8920
      %v9367 = vpop.f32.mrb[0].mxu0
      %v9368 = vadd.f32 0.0, %v9367
      %v9369 = vpop.f32.mrb[0].mxu0
      %v9370 = vadd.f32 0.0, %v9369
      %9371 = vdwg.mxu0
      %v9372 = vadd.f32 %v8852, %v9013
      %v9373 = vadd.f32 %v8853, %v9015
      %v9374 = vadd.f32 %v8854, %v9084
      %v9375 = vadd.f32 %v8855, %v9086
      %v9376 = vadd.f32 %v8856, %v9155
      %v9377 = vadd.f32 %v8857, %v9157
      %v9378 = vadd.f32 %v8858, %v9226
      %v9379 = vadd.f32 %v8859, %v9228
      %v9380 = vadd.f32 %v8860, %v9297
      %v9381 = vadd.f32 %v8861, %v9299
      %v9382 = vadd.f32 %v8862, %v9368
      %v9383 = vadd.f32 %v8863, %v9370
      %v9384 = vld [vmem:[#allocation3 + $0xc] sm:$0xff]
      %v9385 = vld [vmem:[#allocation3 + $0x14] sm:$0xff]
      %v9386 = vld [vmem:[#allocation3 + $0x1c] sm:$0xff]
      %v9387 = vld [vmem:[#allocation3 + $0x24] sm:$0xff]
      %v9388 = vld [vmem:[#allocation3 + $0x2c] sm:$0xff]
      %v9389 = vld [vmem:[#allocation3 + $0x34] sm:$0xff]
      %s9390 = scalar_lea.vmem %s4, 32
      %v9391 = vld [vmem:[%s9390] sm:$0xf]
      %v9398 = vcombine.high %v9384, %v9384
      %v9399 = vcombine.high %v9385, %v9385
      %v9400 = vcombine.high %v9386, %v9386
      %v9401 = vcombine.high %v9387, %v9387
      %v9402 = vcombine.high %v9388, %v9388
      %v9403 = vcombine.high %v9389, %v9389
      %9404 = vrot.lane.b32.xlu0 %v9384, 104
      %v9405 = vpop.permute.xlu0 %9404
      %9406 = vrot.lane.b32.xlu0 %v9398, 104
      %v9407 = vpop.permute.xlu0 %9406
      %9408 = vrot.lane.b32.xlu0 %v9385, 104
      %v9409 = vpop.permute.xlu0 %9408
      %9410 = vrot.lane.b32.xlu0 %v9399, 104
      %v9411 = vpop.permute.xlu0 %9410
      %9412 = vrot.lane.b32.xlu0 %v9386, 104
      %v9413 = vpop.permute.xlu0 %9412
      %9414 = vrot.lane.b32.xlu0 %v9400, 104
      %v9415 = vpop.permute.xlu0 %9414
      %9416 = vrot.lane.b32.xlu0 %v9387, 104
      %v9417 = vpop.permute.xlu0 %9416
      %9418 = vrot.lane.b32.xlu0 %v9401, 104
      %v9419 = vpop.permute.xlu0 %9418
      %9420 = vrot.lane.b32.xlu0 %v9388, 104
      %v9421 = vpop.permute.xlu0 %9420
      %9422 = vrot.lane.b32.xlu0 %v9402, 104
      %v9423 = vpop.permute.xlu0 %9422
      %9424 = vrot.lane.b32.xlu0 %v9389, 104
      %v9425 = vpop.permute.xlu0 %9424
      %9426 = vrot.lane.b32.xlu0 %v9403, 104
      %v9427 = vpop.permute.xlu0 %9426
      %v9428 = vsel %vm4568, %v9405, %v9407
      %v9429 = vsel %vm4568, %v9407, %v9409
      %v9430 = vsel %vm4568, %v9409, %v9411
      %v9431 = vsel %vm4568, %v9411, %v9413
      %v9432 = vsel %vm4568, %v9413, %v9415
      %v9433 = vsel %vm4568, %v9415, %v9417
      %v9434 = vsel %vm4568, %v9417, %v9419
      %v9435 = vsel %vm4568, %v9419, %v9421
      %v9436 = vsel %vm4568, %v9421, %v9423
      %v9437 = vsel %vm4568, %v9423, %v9425
      %v9438 = vsel %vm4568, %v9425, %v9427
      %v9440 = vsel %vm5344, %v9391, 0
      %v9442 = vsel %vm344, %v9428, 0
      %v9444 = vsel %vm344, %v9429, 0
      %v9446 = vsel %vm344, %v9430, 0
      %v9448 = vsel %vm344, %v9431, 0
      %v9450 = vsel %vm344, %v9432, 0
      %v9452 = vsel %vm344, %v9433, 0
      %v9454 = vsel %vm344, %v9434, 0
      %v9456 = vsel %vm344, %v9435, 0
      %v9458 = vsel %vm344, %v9436, 0
      %v9460 = vsel %vm344, %v9437, 0
      %v9462 = vsel %vm344, %v9438, 0
      %v9464 = vsel %vm344, %v9427, 0
      %9466 = vmatprep.subr.mxu0 %v9444
      %9467 = vmatpush1.msra.mxu0 %v9442
      %9468 = vmatprep.subr.mxu0 0.0
      %9469 = vmatpush1.msra.mxu0 0.0
      %9470 = vmatprep.subr.mxu0 0.0
      %9471 = vmatpush1.msra.mxu0 0.0
      %9472 = vmatprep.subr.mxu0 0.0
      %9473 = vmatpush1.msra.mxu0 0.0
      %9474 = vmatprep.subr.mxu0 0.0
      %9475 = vmatpush1.msra.mxu0 0.0
      %9476 = vmatprep.subr.mxu0 0.0
      %9477 = vmatpush1.msra.mxu0 0.0
      %9478 = vmatprep.subr.mxu0 0.0
      %9479 = vmatpush1.msra.mxu0 0.0
      %9480 = vmatprep.subr.mxu0 0.0
      %9481 = vmatpush1.msra.mxu0 0.0
      %9482 = vmatprep.subr.mxu0 0.0
      %9483 = vmatpush1.msra.mxu0 0.0
      %9484 = vmatprep.subr.mxu0 0.0
      %9485 = vmatpush1.msra.mxu0 0.0
      %9486 = vmatprep.subr.mxu0 0.0
      %9487 = vmatpush1.msra.mxu0 0.0
      %9488 = vmatprep.subr.mxu0 0.0
      %9489 = vmatpush1.msra.mxu0 0.0
      %9490 = vmatprep.subr.mxu0 0.0
      %9491 = vmatpush1.msra.mxu0 0.0
      %9492 = vmatprep.subr.mxu0 0.0
      %9493 = vmatpush1.msra.mxu0 0.0
      %9494 = vmatprep.subr.mxu0 0.0
      %9495 = vmatpush1.msra.mxu0 0.0
      %9496 = vmatprep.subr.mxu0 0.0
      %9497 = vmatpush1.msra.mxu0 0.0
      %9498 = vmatprep.subr.mxu0 0.0
      %9499 = vmatpush1.msra.mxu0 0.0
      %9500 = vmatprep.subr.mxu0 0.0
      %9501 = vmatpush1.msra.mxu0 0.0
      %9502 = vmatprep.subr.mxu0 0.0
      %9503 = vmatpush1.msra.mxu0 0.0
      %9504 = vmatprep.subr.mxu0 0.0
      %9505 = vmatpush1.msra.mxu0 0.0
      %9506 = vmatprep.subr.mxu0 0.0
      %9507 = vmatpush1.msra.mxu0 0.0
      %9508 = vmatprep.subr.mxu0 0.0
      %9509 = vmatpush1.msra.mxu0 0.0
      %9510 = vmatprep.subr.mxu0 0.0
      %9511 = vmatpush1.msra.mxu0 0.0
      %9512 = vmatprep.subr.mxu0 0.0
      %9513 = vmatpush1.msra.mxu0 0.0
      %9514 = vmatprep.subr.mxu0 0.0
      %9515 = vmatpush1.msra.mxu0 0.0
      %9516 = vmatprep.subr.mxu0 0.0
      %9517 = vmatpush1.msra.mxu0 0.0
      %9518 = vmatprep.subr.mxu0 0.0
      %9519 = vmatpush1.msra.mxu0 0.0
      %9520 = vmatprep.subr.mxu0 0.0
      %9521 = vmatpush1.msra.mxu0 0.0
      %9522 = vmatprep.subr.mxu0 0.0
      %9523 = vmatpush1.msra.mxu0 0.0
      %9524 = vmatprep.subr.mxu0 0.0
      %9525 = vmatpush1.msra.mxu0 0.0
      %9526 = vmatprep.subr.mxu0 0.0
      %9527 = vmatpush1.msra.mxu0 0.0
      %9528 = vmatprep.subr.mxu0 0.0
      %9529 = vmatpush1.msra.mxu0 0.0
      %9530 = vmatprep.mubr.f32.mxu0 0.0
      %9531 = vmatmul.mubr.f32.gmra.mrb[0].mxu0 %v9440
      %v9532 = vpop.f32.mrb[0].mxu0
      %v9533 = vadd.f32 0.0, %v9532
      %v9534 = vpop.f32.mrb[0].mxu0
      %v9535 = vadd.f32 0.0, %v9534
      %9536 = vdwg.mxu0
      %9537 = vmatprep.subr.mxu0 %v9448
      %9538 = vmatpush1.msra.mxu0 %v9446
      %9539 = vmatprep.subr.mxu0 0.0
      %9540 = vmatpush1.msra.mxu0 0.0
      %9541 = vmatprep.subr.mxu0 0.0
      %9542 = vmatpush1.msra.mxu0 0.0
      %9543 = vmatprep.subr.mxu0 0.0
      %9544 = vmatpush1.msra.mxu0 0.0
      %9545 = vmatprep.subr.mxu0 0.0
      %9546 = vmatpush1.msra.mxu0 0.0
      %9547 = vmatprep.subr.mxu0 0.0
      %9548 = vmatpush1.msra.mxu0 0.0
      %9549 = vmatprep.subr.mxu0 0.0
      %9550 = vmatpush1.msra.mxu0 0.0
      %9551 = vmatprep.subr.mxu0 0.0
      %9552 = vmatpush1.msra.mxu0 0.0
      %9553 = vmatprep.subr.mxu0 0.0
      %9554 = vmatpush1.msra.mxu0 0.0
      %9555 = vmatprep.subr.mxu0 0.0
      %9556 = vmatpush1.msra.mxu0 0.0
      %9557 = vmatprep.subr.mxu0 0.0
      %9558 = vmatpush1.msra.mxu0 0.0
      %9559 = vmatprep.subr.mxu0 0.0
      %9560 = vmatpush1.msra.mxu0 0.0
      %9561 = vmatprep.subr.mxu0 0.0
      %9562 = vmatpush1.msra.mxu0 0.0
      %9563 = vmatprep.subr.mxu0 0.0
      %9564 = vmatpush1.msra.mxu0 0.0
      %9565 = vmatprep.subr.mxu0 0.0
      %9566 = vmatpush1.msra.mxu0 0.0
      %9567 = vmatprep.subr.mxu0 0.0
      %9568 = vmatpush1.msra.mxu0 0.0
      %9569 = vmatprep.subr.mxu0 0.0
      %9570 = vmatpush1.msra.mxu0 0.0
      %9571 = vmatprep.subr.mxu0 0.0
      %9572 = vmatpush1.msra.mxu0 0.0
      %9573 = vmatprep.subr.mxu0 0.0
      %9574 = vmatpush1.msra.mxu0 0.0
      %9575 = vmatprep.subr.mxu0 0.0
      %9576 = vmatpush1.msra.mxu0 0.0
      %9577 = vmatprep.subr.mxu0 0.0
      %9578 = vmatpush1.msra.mxu0 0.0
      %9579 = vmatprep.subr.mxu0 0.0
      %9580 = vmatpush1.msra.mxu0 0.0
      %9581 = vmatprep.subr.mxu0 0.0
      %9582 = vmatpush1.msra.mxu0 0.0
      %9583 = vmatprep.subr.mxu0 0.0
      %9584 = vmatpush1.msra.mxu0 0.0
      %9585 = vmatprep.subr.mxu0 0.0
      %9586 = vmatpush1.msra.mxu0 0.0
      %9587 = vmatprep.subr.mxu0 0.0
      %9588 = vmatpush1.msra.mxu0 0.0
      %9589 = vmatprep.subr.mxu0 0.0
      %9590 = vmatpush1.msra.mxu0 0.0
      %9591 = vmatprep.subr.mxu0 0.0
      %9592 = vmatpush1.msra.mxu0 0.0
      %9593 = vmatprep.subr.mxu0 0.0
      %9594 = vmatpush1.msra.mxu0 0.0
      %9595 = vmatprep.subr.mxu0 0.0
      %9596 = vmatpush1.msra.mxu0 0.0
      %9597 = vmatprep.subr.mxu0 0.0
      %9598 = vmatpush1.msra.mxu0 0.0
      %9599 = vmatprep.subr.mxu0 0.0
      %9600 = vmatpush1.msra.mxu0 0.0
      %9601 = vmatprep.mubr.f32.mxu0 0.0
      %9602 = vmatmul.mubr.f32.gmra.mrb[0].mxu0 %v9440
      %v9603 = vpop.f32.mrb[0].mxu0
      %v9604 = vadd.f32 0.0, %v9603
      %v9605 = vpop.f32.mrb[0].mxu0
      %v9606 = vadd.f32 0.0, %v9605
      %9607 = vdwg.mxu0
      %9608 = vmatprep.subr.mxu0 %v9452
      %9609 = vmatpush1.msra.mxu0 %v9450
      %9610 = vmatprep.subr.mxu0 0.0
      %9611 = vmatpush1.msra.mxu0 0.0
      %9612 = vmatprep.subr.mxu0 0.0
      %9613 = vmatpush1.msra.mxu0 0.0
      %9614 = vmatprep.subr.mxu0 0.0
      %9615 = vmatpush1.msra.mxu0 0.0
      %9616 = vmatprep.subr.mxu0 0.0
      %9617 = vmatpush1.msra.mxu0 0.0
      %9618 = vmatprep.subr.mxu0 0.0
      %9619 = vmatpush1.msra.mxu0 0.0
      %9620 = vmatprep.subr.mxu0 0.0
      %9621 = vmatpush1.msra.mxu0 0.0
      %9622 = vmatprep.subr.mxu0 0.0
      %9623 = vmatpush1.msra.mxu0 0.0
      %9624 = vmatprep.subr.mxu0 0.0
      %9625 = vmatpush1.msra.mxu0 0.0
      %9626 = vmatprep.subr.mxu0 0.0
      %9627 = vmatpush1.msra.mxu0 0.0
      %9628 = vmatprep.subr.mxu0 0.0
      %9629 = vmatpush1.msra.mxu0 0.0
      %9630 = vmatprep.subr.mxu0 0.0
      %9631 = vmatpush1.msra.mxu0 0.0
      %9632 = vmatprep.subr.mxu0 0.0
      %9633 = vmatpush1.msra.mxu0 0.0
      %9634 = vmatprep.subr.mxu0 0.0
      %9635 = vmatpush1.msra.mxu0 0.0
      %9636 = vmatprep.subr.mxu0 0.0
      %9637 = vmatpush1.msra.mxu0 0.0
      %9638 = vmatprep.subr.mxu0 0.0
      %9639 = vmatpush1.msra.mxu0 0.0
      %9640 = vmatprep.subr.mxu0 0.0
      %9641 = vmatpush1.msra.mxu0 0.0
      %9642 = vmatprep.subr.mxu0 0.0
      %9643 = vmatpush1.msra.mxu0 0.0
      %9644 = vmatprep.subr.mxu0 0.0
      %9645 = vmatpush1.msra.mxu0 0.0
      %9646 = vmatprep.subr.mxu0 0.0
      %9647 = vmatpush1.msra.mxu0 0.0
      %9648 = vmatprep.subr.mxu0 0.0
      %9649 = vmatpush1.msra.mxu0 0.0
      %9650 = vmatprep.subr.mxu0 0.0
      %9651 = vmatpush1.msra.mxu0 0.0
      %9652 = vmatprep.subr.mxu0 0.0
      %9653 = vmatpush1.msra.mxu0 0.0
      %9654 = vmatprep.subr.mxu0 0.0
      %9655 = vmatpush1.msra.mxu0 0.0
      %9656 = vmatprep.subr.mxu0 0.0
      %9657 = vmatpush1.msra.mxu0 0.0
      %9658 = vmatprep.subr.mxu0 0.0
      %9659 = vmatpush1.msra.mxu0 0.0
      %9660 = vmatprep.subr.mxu0 0.0
      %9661 = vmatpush1.msra.mxu0 0.0
      %9662 = vmatprep.subr.mxu0 0.0
      %9663 = vmatpush1.msra.mxu0 0.0
      %9664 = vmatprep.subr.mxu0 0.0
      %9665 = vmatpush1.msra.mxu0 0.0
      %9666 = vmatprep.subr.mxu0 0.0
      %9667 = vmatpush1.msra.mxu0 0.0
      %9668 = vmatprep.subr.mxu0 0.0
      %9669 = vmatpush1.msra.mxu0 0.0
      %9670 = vmatprep.subr.mxu0 0.0
      %9671 = vmatpush1.msra.mxu0 0.0
      %9672 = vmatprep.mubr.f32.mxu0 0.0
      %9673 = vmatmul.mubr.f32.gmra.mrb[0].mxu0 %v9440
      %v9674 = vpop.f32.mrb[0].mxu0
      %v9675 = vadd.f32 0.0, %v9674
      %v9676 = vpop.f32.mrb[0].mxu0
      %v9677 = vadd.f32 0.0, %v9676
      %9678 = vdwg.mxu0
      %9679 = vmatprep.subr.mxu0 %v9456
      %9680 = vmatpush1.msra.mxu0 %v9454
      %9681 = vmatprep.subr.mxu0 0.0
      %9682 = vmatpush1.msra.mxu0 0.0
      %9683 = vmatprep.subr.mxu0 0.0
      %9684 = vmatpush1.msra.mxu0 0.0
      %9685 = vmatprep.subr.mxu0 0.0
      %9686 = vmatpush1.msra.mxu0 0.0
      %9687 = vmatprep.subr.mxu0 0.0
      %9688 = vmatpush1.msra.mxu0 0.0
      %9689 = vmatprep.subr.mxu0 0.0
      %9690 = vmatpush1.msra.mxu0 0.0
      %9691 = vmatprep.subr.mxu0 0.0
      %9692 = vmatpush1.msra.mxu0 0.0
      %9693 = vmatprep.subr.mxu0 0.0
      %9694 = vmatpush1.msra.mxu0 0.0
      %9695 = vmatprep.subr.mxu0 0.0
      %9696 = vmatpush1.msra.mxu0 0.0
      %9697 = vmatprep.subr.mxu0 0.0
      %9698 = vmatpush1.msra.mxu0 0.0
      %9699 = vmatprep.subr.mxu0 0.0
      %9700 = vmatpush1.msra.mxu0 0.0
      %9701 = vmatprep.subr.mxu0 0.0
      %9702 = vmatpush1.msra.mxu0 0.0
      %9703 = vmatprep.subr.mxu0 0.0
      %9704 = vmatpush1.msra.mxu0 0.0
      %9705 = vmatprep.subr.mxu0 0.0
      %9706 = vmatpush1.msra.mxu0 0.0
      %9707 = vmatprep.subr.mxu0 0.0
      %9708 = vmatpush1.msra.mxu0 0.0
      %9709 = vmatprep.subr.mxu0 0.0
      %9710 = vmatpush1.msra.mxu0 0.0
      %9711 = vmatprep.subr.mxu0 0.0
      %9712 = vmatpush1.msra.mxu0 0.0
      %9713 = vmatprep.subr.mxu0 0.0
      %9714 = vmatpush1.msra.mxu0 0.0
      %9715 = vmatprep.subr.mxu0 0.0
      %9716 = vmatpush1.msra.mxu0 0.0
      %9717 = vmatprep.subr.mxu0 0.0
      %9718 = vmatpush1.msra.mxu0 0.0
      %9719 = vmatprep.subr.mxu0 0.0
      %9720 = vmatpush1.msra.mxu0 0.0
      %9721 = vmatprep.subr.mxu0 0.0
      %9722 = vmatpush1.msra.mxu0 0.0
      %9723 = vmatprep.subr.mxu0 0.0
      %9724 = vmatpush1.msra.mxu0 0.0
      %9725 = vmatprep.subr.mxu0 0.0
      %9726 = vmatpush1.msra.mxu0 0.0
      %9727 = vmatprep.subr.mxu0 0.0
      %9728 = vmatpush1.msra.mxu0 0.0
      %9729 = vmatprep.subr.mxu0 0.0
      %9730 = vmatpush1.msra.mxu0 0.0
      %9731 = vmatprep.subr.mxu0 0.0
      %9732 = vmatpush1.msra.mxu0 0.0
      %9733 = vmatprep.subr.mxu0 0.0
      %9734 = vmatpush1.msra.mxu0 0.0
      %9735 = vmatprep.subr.mxu0 0.0
      %9736 = vmatpush1.msra.mxu0 0.0
      %9737 = vmatprep.subr.mxu0 0.0
      %9738 = vmatpush1.msra.mxu0 0.0
      %9739 = vmatprep.subr.mxu0 0.0
      %9740 = vmatpush1.msra.mxu0 0.0
      %9741 = vmatprep.subr.mxu0 0.0
      %9742 = vmatpush1.msra.mxu0 0.0
      %9743 = vmatprep.mubr.f32.mxu0 0.0
      %9744 = vmatmul.mubr.f32.gmra.mrb[0].mxu0 %v9440
      %v9745 = vpop.f32.mrb[0].mxu0
      %v9746 = vadd.f32 0.0, %v9745
      %v9747 = vpop.f32.mrb[0].mxu0
      %v9748 = vadd.f32 0.0, %v9747
      %9749 = vdwg.mxu0
      %9750 = vmatprep.subr.mxu0 %v9460
      %9751 = vmatpush1.msra.mxu0 %v9458
      %9752 = vmatprep.subr.mxu0 0.0
      %9753 = vmatpush1.msra.mxu0 0.0
      %9754 = vmatprep.subr.mxu0 0.0
      %9755 = vmatpush1.msra.mxu0 0.0
      %9756 = vmatprep.subr.mxu0 0.0
      %9757 = vmatpush1.msra.mxu0 0.0
      %9758 = vmatprep.subr.mxu0 0.0
      %9759 = vmatpush1.msra.mxu0 0.0
      %9760 = vmatprep.subr.mxu0 0.0
      %9761 = vmatpush1.msra.mxu0 0.0
      %9762 = vmatprep.subr.mxu0 0.0
      %9763 = vmatpush1.msra.mxu0 0.0
      %9764 = vmatprep.subr.mxu0 0.0
      %9765 = vmatpush1.msra.mxu0 0.0
      %9766 = vmatprep.subr.mxu0 0.0
      %9767 = vmatpush1.msra.mxu0 0.0
      %9768 = vmatprep.subr.mxu0 0.0
      %9769 = vmatpush1.msra.mxu0 0.0
      %9770 = vmatprep.subr.mxu0 0.0
      %9771 = vmatpush1.msra.mxu0 0.0
      %9772 = vmatprep.subr.mxu0 0.0
      %9773 = vmatpush1.msra.mxu0 0.0
      %9774 = vmatprep.subr.mxu0 0.0
      %9775 = vmatpush1.msra.mxu0 0.0
      %9776 = vmatprep.subr.mxu0 0.0
      %9777 = vmatpush1.msra.mxu0 0.0
      %9778 = vmatprep.subr.mxu0 0.0
      %9779 = vmatpush1.msra.mxu0 0.0
      %9780 = vmatprep.subr.mxu0 0.0
      %9781 = vmatpush1.msra.mxu0 0.0
      %9782 = vmatprep.subr.mxu0 0.0
      %9783 = vmatpush1.msra.mxu0 0.0
      %9784 = vmatprep.subr.mxu0 0.0
      %9785 = vmatpush1.msra.mxu0 0.0
      %9786 = vmatprep.subr.mxu0 0.0
      %9787 = vmatpush1.msra.mxu0 0.0
      %9788 = vmatprep.subr.mxu0 0.0
      %9789 = vmatpush1.msra.mxu0 0.0
      %9790 = vmatprep.subr.mxu0 0.0
      %9791 = vmatpush1.msra.mxu0 0.0
      %9792 = vmatprep.subr.mxu0 0.0
      %9793 = vmatpush1.msra.mxu0 0.0
      %9794 = vmatprep.subr.mxu0 0.0
      %9795 = vmatpush1.msra.mxu0 0.0
      %9796 = vmatprep.subr.mxu0 0.0
      %9797 = vmatpush1.msra.mxu0 0.0
      %9798 = vmatprep.subr.mxu0 0.0
      %9799 = vmatpush1.msra.mxu0 0.0
      %9800 = vmatprep.subr.mxu0 0.0
      %9801 = vmatpush1.msra.mxu0 0.0
      %9802 = vmatprep.subr.mxu0 0.0
      %9803 = vmatpush1.msra.mxu0 0.0
      %9804 = vmatprep.subr.mxu0 0.0
      %9805 = vmatpush1.msra.mxu0 0.0
      %9806 = vmatprep.subr.mxu0 0.0
      %9807 = vmatpush1.msra.mxu0 0.0
      %9808 = vmatprep.subr.mxu0 0.0
      %9809 = vmatpush1.msra.mxu0 0.0
      %9810 = vmatprep.subr.mxu0 0.0
      %9811 = vmatpush1.msra.mxu0 0.0
      %9812 = vmatprep.subr.mxu0 0.0
      %9813 = vmatpush1.msra.mxu0 0.0
      %9814 = vmatprep.mubr.f32.mxu0 0.0
      %9815 = vmatmul.mubr.f32.gmra.mrb[0].mxu0 %v9440
      %v9816 = vpop.f32.mrb[0].mxu0
      %v9817 = vadd.f32 0.0, %v9816
      %v9818 = vpop.f32.mrb[0].mxu0
      %v9819 = vadd.f32 0.0, %v9818
      %9820 = vdwg.mxu0
      %9821 = vmatprep.subr.mxu0 %v9464
      %9822 = vmatpush1.msra.mxu0 %v9462
      %9823 = vmatprep.subr.mxu0 0.0
      %9824 = vmatpush1.msra.mxu0 0.0
      %9825 = vmatprep.subr.mxu0 0.0
      %9826 = vmatpush1.msra.mxu0 0.0
      %9827 = vmatprep.subr.mxu0 0.0
      %9828 = vmatpush1.msra.mxu0 0.0
      %9829 = vmatprep.subr.mxu0 0.0
      %9830 = vmatpush1.msra.mxu0 0.0
      %9831 = vmatprep.subr.mxu0 0.0
      %9832 = vmatpush1.msra.mxu0 0.0
      %9833 = vmatprep.subr.mxu0 0.0
      %9834 = vmatpush1.msra.mxu0 0.0
      %9835 = vmatprep.subr.mxu0 0.0
      %9836 = vmatpush1.msra.mxu0 0.0
      %9837 = vmatprep.subr.mxu0 0.0
      %9838 = vmatpush1.msra.mxu0 0.0
      %9839 = vmatprep.subr.mxu0 0.0
      %9840 = vmatpush1.msra.mxu0 0.0
      %9841 = vmatprep.subr.mxu0 0.0
      %9842 = vmatpush1.msra.mxu0 0.0
      %9843 = vmatprep.subr.mxu0 0.0
      %9844 = vmatpush1.msra.mxu0 0.0
      %9845 = vmatprep.subr.mxu0 0.0
      %9846 = vmatpush1.msra.mxu0 0.0
      %9847 = vmatprep.subr.mxu0 0.0
      %9848 = vmatpush1.msra.mxu0 0.0
      %9849 = vmatprep.subr.mxu0 0.0
      %9850 = vmatpush1.msra.mxu0 0.0
      %9851 = vmatprep.subr.mxu0 0.0
      %9852 = vmatpush1.msra.mxu0 0.0
      %9853 = vmatprep.subr.mxu0 0.0
      %9854 = vmatpush1.msra.mxu0 0.0
      %9855 = vmatprep.subr.mxu0 0.0
      %9856 = vmatpush1.msra.mxu0 0.0
      %9857 = vmatprep.subr.mxu0 0.0
      %9858 = vmatpush1.msra.mxu0 0.0
      %9859 = vmatprep.subr.mxu0 0.0
      %9860 = vmatpush1.msra.mxu0 0.0
      %9861 = vmatprep.subr.mxu0 0.0
      %9862 = vmatpush1.msra.mxu0 0.0
      %9863 = vmatprep.subr.mxu0 0.0
      %9864 = vmatpush1.msra.mxu0 0.0
      %9865 = vmatprep.subr.mxu0 0.0
      %9866 = vmatpush1.msra.mxu0 0.0
      %9867 = vmatprep.subr.mxu0 0.0
      %9868 = vmatpush1.msra.mxu0 0.0
      %9869 = vmatprep.subr.mxu0 0.0
      %9870 = vmatpush1.msra.mxu0 0.0
      %9871 = vmatprep.subr.mxu0 0.0
      %9872 = vmatpush1.msra.mxu0 0.0
      %9873 = vmatprep.subr.mxu0 0.0
      %9874 = vmatpush1.msra.mxu0 0.0
      %9875 = vmatprep.subr.mxu0 0.0
      %9876 = vmatpush1.msra.mxu0 0.0
      %9877 = vmatprep.subr.mxu0 0.0
      %9878 = vmatpush1.msra.mxu0 0.0
      %9879 = vmatprep.subr.mxu0 0.0
      %9880 = vmatpush1.msra.mxu0 0.0
      %9881 = vmatprep.subr.mxu0 0.0
      %9882 = vmatpush1.msra.mxu0 0.0
      %9883 = vmatprep.subr.mxu0 0.0
      %9884 = vmatpush1.msra.mxu0 0.0
      %9885 = vmatprep.mubr.f32.mxu0 0.0
      %9886 = vmatmul.mubr.f32.gmra.mrb[0].mxu0 %v9440
      %v9887 = vpop.f32.mrb[0].mxu0
      %v9888 = vadd.f32 0.0, %v9887
      %v9889 = vpop.f32.mrb[0].mxu0
      %v9890 = vadd.f32 0.0, %v9889
      %9891 = vdwg.mxu0
      %v9892 = vadd.f32 %v9372, %v9533
      %v9893 = vadd.f32 %v9373, %v9535
      %v9894 = vadd.f32 %v9374, %v9604
      %v9895 = vadd.f32 %v9375, %v9606
      %v9896 = vadd.f32 %v9376, %v9675
      %v9897 = vadd.f32 %v9377, %v9677
      %v9898 = vadd.f32 %v9378, %v9746
      %v9899 = vadd.f32 %v9379, %v9748
      %v9900 = vadd.f32 %v9380, %v9817
      %v9901 = vadd.f32 %v9381, %v9819
      %v9902 = vadd.f32 %v9382, %v9888
      %v9903 = vadd.f32 %v9383, %v9890
      %v9904 = vld [vmem:[%s5] sm:$0xf]
      %9906 = vset.pattern.permute.xlu0 0
      %9907 = vperm.xlu0 %9906, %v9904
      %v9908 = vpop.permute.xlu0 %9907
      %v9910 = vadd.f32 %v9892, %v9908
      %v9911 = vadd.f32 %v9893, %v9908
      %v9912 = vadd.f32 %v9894, %v9908
      %v9913 = vadd.f32 %v9895, %v9908
      %v9914 = vadd.f32 %v9896, %v9908
      %v9915 = vadd.f32 %v9897, %v9908
      %v9916 = vadd.f32 %v9898, %v9908
      %v9917 = vadd.f32 %v9899, %v9908
      %v9918 = vadd.f32 %v9900, %v9908
      %v9919 = vadd.f32 %v9901, %v9908
      %v9920 = vadd.f32 %v9902, %v9908
      %v9921 = vadd.f32 %v9903, %v9908
      %v9922 = vld [vmem:[%s6] sm:$0xf]
      %v9923 = vld [vmem:[%s7] sm:$0xf]
      %9925 = vset.pattern.permute.xlu0 0
      %9926 = vperm.xlu0 %9925, %v9923
      %v9927 = vpop.permute.xlu0 %9926
      %v9930 = vsel %vm681, %v9922, 0
      %9932 = vmatprep.subr.mxu0 %v309
      %9933 = vmatpush1.msra.mxu0 %v308
      %9934 = vmatprep.subr.mxu0 0.0
      %9935 = vmatpush1.msra.mxu0 0.0
      %9936 = vmatprep.subr.mxu0 0.0
      %9937 = vmatpush1.msra.mxu0 0.0
      %9938 = vmatprep.subr.mxu0 0.0
      %9939 = vmatpush1.msra.mxu0 0.0
      %9940 = vmatprep.subr.mxu0 0.0
      %9941 = vmatpush1.msra.mxu0 0.0
      %9942 = vmatprep.subr.mxu0 0.0
      %9943 = vmatpush1.msra.mxu0 0.0
      %9944 = vmatprep.subr.mxu0 0.0
      %9945 = vmatpush1.msra.mxu0 0.0
      %9946 = vmatprep.subr.mxu0 0.0
      %9947 = vmatpush1.msra.mxu0 0.0
      %9948 = vmatprep.subr.mxu0 0.0
      %9949 = vmatpush1.msra.mxu0 0.0
      %9950 = vmatprep.subr.mxu0 0.0
      %9951 = vmatpush1.msra.mxu0 0.0
      %9952 = vmatprep.subr.mxu0 0.0
      %9953 = vmatpush1.msra.mxu0 0.0
      %9954 = vmatprep.subr.mxu0 0.0
      %9955 = vmatpush1.msra.mxu0 0.0
      %9956 = vmatprep.subr.mxu0 0.0
      %9957 = vmatpush1.msra.mxu0 0.0
      %9958 = vmatprep.subr.mxu0 0.0
      %9959 = vmatpush1.msra.mxu0 0.0
      %9960 = vmatprep.subr.mxu0 0.0
      %9961 = vmatpush1.msra.mxu0 0.0
      %9962 = vmatprep.subr.mxu0 0.0
      %9963 = vmatpush1.msra.mxu0 0.0
      %9964 = vmatprep.subr.mxu0 0.0
      %9965 = vmatpush1.msra.mxu0 0.0
      %9966 = vmatprep.subr.mxu0 0.0
      %9967 = vmatpush1.msra.mxu0 0.0
      %9968 = vmatprep.subr.mxu0 0.0
      %9969 = vmatpush1.msra.mxu0 0.0
      %9970 = vmatprep.subr.mxu0 0.0
      %9971 = vmatpush1.msra.mxu0 0.0
      %9972 = vmatprep.subr.mxu0 0.0
      %9973 = vmatpush1.msra.mxu0 0.0
      %9974 = vmatprep.subr.mxu0 0.0
      %9975 = vmatpush1.msra.mxu0 0.0
      %9976 = vmatprep.subr.mxu0 0.0
      %9977 = vmatpush1.msra.mxu0 0.0
      %9978 = vmatprep.subr.mxu0 0.0
      %9979 = vmatpush1.msra.mxu0 0.0
      %9980 = vmatprep.subr.mxu0 0.0
      %9981 = vmatpush1.msra.mxu0 0.0
      %9982 = vmatprep.subr.mxu0 0.0
      %9983 = vmatpush1.msra.mxu0 0.0
      %9984 = vmatprep.subr.mxu0 0.0
      %9985 = vmatpush1.msra.mxu0 0.0
      %9986 = vmatprep.subr.mxu0 0.0
      %9987 = vmatpush1.msra.mxu0 0.0
      %9988 = vmatprep.subr.mxu0 0.0
      %9989 = vmatpush1.msra.mxu0 0.0
      %9990 = vmatprep.subr.mxu0 0.0
      %9991 = vmatpush1.msra.mxu0 0.0
      %9992 = vmatprep.subr.mxu0 0.0
      %9993 = vmatpush1.msra.mxu0 0.0
      %9994 = vmatprep.subr.mxu0 0.0
      %9995 = vmatpush1.msra.mxu0 0.0
      %9996 = vmatprep.mubr.f32.mxu0 0.0
      %9997 = vmatmul.mubr.f32.gmra.mrb[0].mxu0 %v9930
      %v9998 = vpop.f32.mrb[0].mxu0
      %v9999 = vadd.f32 %v9927, %v9998
      %v10000 = vpop.f32.mrb[0].mxu0
      %v10001 = vadd.f32 %v9927, %v10000
      %10002 = vdwg.mxu0
      %10003 = vmatprep.subr.mxu0 %v311
      %10004 = vmatpush1.msra.mxu0 %v310
      %10005 = vmatprep.subr.mxu0 0.0
      %10006 = vmatpush1.msra.mxu0 0.0
      %10007 = vmatprep.subr.mxu0 0.0
      %10008 = vmatpush1.msra.mxu0 0.0
      %10009 = vmatprep.subr.mxu0 0.0
      %10010 = vmatpush1.msra.mxu0 0.0
      %10011 = vmatprep.subr.mxu0 0.0
      %10012 = vmatpush1.msra.mxu0 0.0
      %10013 = vmatprep.subr.mxu0 0.0
      %10014 = vmatpush1.msra.mxu0 0.0
      %10015 = vmatprep.subr.mxu0 0.0
      %10016 = vmatpush1.msra.mxu0 0.0
      %10017 = vmatprep.subr.mxu0 0.0
      %10018 = vmatpush1.msra.mxu0 0.0
      %10019 = vmatprep.subr.mxu0 0.0
      %10020 = vmatpush1.msra.mxu0 0.0
      %10021 = vmatprep.subr.mxu0 0.0
      %10022 = vmatpush1.msra.mxu0 0.0
      %10023 = vmatprep.subr.mxu0 0.0
      %10024 = vmatpush1.msra.mxu0 0.0
      %10025 = vmatprep.subr.mxu0 0.0
      %10026 = vmatpush1.msra.mxu0 0.0
      %10027 = vmatprep.subr.mxu0 0.0
      %10028 = vmatpush1.msra.mxu0 0.0
      %10029 = vmatprep.subr.mxu0 0.0
      %10030 = vmatpush1.msra.mxu0 0.0
      %10031 = vmatprep.subr.mxu0 0.0
      %10032 = vmatpush1.msra.mxu0 0.0
      %10033 = vmatprep.subr.mxu0 0.0
      %10034 = vmatpush1.msra.mxu0 0.0
      %10035 = vmatprep.subr.mxu0 0.0
      %10036 = vmatpush1.msra.mxu0 0.0
      %10037 = vmatprep.subr.mxu0 0.0
      %10038 = vmatpush1.msra.mxu0 0.0
      %10039 = vmatprep.subr.mxu0 0.0
      %10040 = vmatpush1.msra.mxu0 0.0
      %10041 = vmatprep.subr.mxu0 0.0
      %10042 = vmatpush1.msra.mxu0 0.0
      %10043 = vmatprep.subr.mxu0 0.0
      %10044 = vmatpush1.msra.mxu0 0.0
      %10045 = vmatprep.subr.mxu0 0.0
      %10046 = vmatpush1.msra.mxu0 0.0
      %10047 = vmatprep.subr.mxu0 0.0
      %10048 = vmatpush1.msra.mxu0 0.0
      %10049 = vmatprep.subr.mxu0 0.0
      %10050 = vmatpush1.msra.mxu0 0.0
      %10051 = vmatprep.subr.mxu0 0.0
      %10052 = vmatpush1.msra.mxu0 0.0
      %10053 = vmatprep.subr.mxu0 0.0
      %10054 = vmatpush1.msra.mxu0 0.0
      %10055 = vmatprep.subr.mxu0 0.0
      %10056 = vmatpush1.msra.mxu0 0.0
      %10057 = vmatprep.subr.mxu0 0.0
      %10058 = vmatpush1.msra.mxu0 0.0
      %10059 = vmatprep.subr.mxu0 0.0
      %10060 = vmatpush1.msra.mxu0 0.0
      %10061 = vmatprep.subr.mxu0 0.0
      %10062 = vmatpush1.msra.mxu0 0.0
      %10063 = vmatprep.subr.mxu0 0.0
      %10064 = vmatpush1.msra.mxu0 0.0
      %10065 = vmatprep.subr.mxu0 0.0
      %10066 = vmatpush1.msra.mxu0 0.0
      %10067 = vmatprep.mubr.f32.mxu0 0.0
      %10068 = vmatmul.mubr.f32.gmra.mrb[0].mxu0 %v9930
      %v10069 = vpop.f32.mrb[0].mxu0
      %v10070 = vadd.f32 %v9927, %v10069
      %v10071 = vpop.f32.mrb[0].mxu0
      %v10072 = vadd.f32 %v9927, %v10071
      %10073 = vdwg.mxu0
      %10074 = vmatprep.subr.mxu0 %v313
      %10075 = vmatpush1.msra.mxu0 %v312
      %10076 = vmatprep.subr.mxu0 0.0
      %10077 = vmatpush1.msra.mxu0 0.0
      %10078 = vmatprep.subr.mxu0 0.0
      %10079 = vmatpush1.msra.mxu0 0.0
      %10080 = vmatprep.subr.mxu0 0.0
      %10081 = vmatpush1.msra.mxu0 0.0
      %10082 = vmatprep.subr.mxu0 0.0
      %10083 = vmatpush1.msra.mxu0 0.0
      %10084 = vmatprep.subr.mxu0 0.0
      %10085 = vmatpush1.msra.mxu0 0.0
      %10086 = vmatprep.subr.mxu0 0.0
      %10087 = vmatpush1.msra.mxu0 0.0
      %10088 = vmatprep.subr.mxu0 0.0
      %10089 = vmatpush1.msra.mxu0 0.0
      %10090 = vmatprep.subr.mxu0 0.0
      %10091 = vmatpush1.msra.mxu0 0.0
      %10092 = vmatprep.subr.mxu0 0.0
      %10093 = vmatpush1.msra.mxu0 0.0
      %10094 = vmatprep.subr.mxu0 0.0
      %10095 = vmatpush1.msra.mxu0 0.0
      %10096 = vmatprep.subr.mxu0 0.0
      %10097 = vmatpush1.msra.mxu0 0.0
      %10098 = vmatprep.subr.mxu0 0.0
      %10099 = vmatpush1.msra.mxu0 0.0
      %10100 = vmatprep.subr.mxu0 0.0
      %10101 = vmatpush1.msra.mxu0 0.0
      %10102 = vmatprep.subr.mxu0 0.0
      %10103 = vmatpush1.msra.mxu0 0.0
      %10104 = vmatprep.subr.mxu0 0.0
      %10105 = vmatpush1.msra.mxu0 0.0
      %10106 = vmatprep.subr.mxu0 0.0
      %10107 = vmatpush1.msra.mxu0 0.0
      %10108 = vmatprep.subr.mxu0 0.0
      %10109 = vmatpush1.msra.mxu0 0.0
      %10110 = vmatprep.subr.mxu0 0.0
      %10111 = vmatpush1.msra.mxu0 0.0
      %10112 = vmatprep.subr.mxu0 0.0
      %10113 = vmatpush1.msra.mxu0 0.0
      %10114 = vmatprep.subr.mxu0 0.0
      %10115 = vmatpush1.msra.mxu0 0.0
      %10116 = vmatprep.subr.mxu0 0.0
      %10117 = vmatpush1.msra.mxu0 0.0
      %10118 = vmatprep.subr.mxu0 0.0
      %10119 = vmatpush1.msra.mxu0 0.0
      %10120 = vmatprep.subr.mxu0 0.0
      %10121 = vmatpush1.msra.mxu0 0.0
      %10122 = vmatprep.subr.mxu0 0.0
      %10123 = vmatpush1.msra.mxu0 0.0
      %10124 = vmatprep.subr.mxu0 0.0
      %10125 = vmatpush1.msra.mxu0 0.0
      %10126 = vmatprep.subr.mxu0 0.0
      %10127 = vmatpush1.msra.mxu0 0.0
      %10128 = vmatprep.subr.mxu0 0.0
      %10129 = vmatpush1.msra.mxu0 0.0
      %10130 = vmatprep.subr.mxu0 0.0
      %10131 = vmatpush1.msra.mxu0 0.0
      %10132 = vmatprep.subr.mxu0 0.0
      %10133 = vmatpush1.msra.mxu0 0.0
      %10134 = vmatprep.subr.mxu0 0.0
      %10135 = vmatpush1.msra.mxu0 0.0
      %10136 = vmatprep.subr.mxu0 0.0
      %10137 = vmatpush1.msra.mxu0 0.0
      %10138 = vmatprep.mubr.f32.mxu0 0.0
      %10139 = vmatmul.mubr.f32.gmra.mrb[0].mxu0 %v9930
      %v10140 = vpop.f32.mrb[0].mxu0
      %v10141 = vadd.f32 %v9927, %v10140
      %v10142 = vpop.f32.mrb[0].mxu0
      %v10143 = vadd.f32 %v9927, %v10142
      %10144 = vdwg.mxu0
      %10145 = vmatprep.subr.mxu0 %v315
      %10146 = vmatpush1.msra.mxu0 %v314
      %10147 = vmatprep.subr.mxu0 0.0
      %10148 = vmatpush1.msra.mxu0 0.0
      %10149 = vmatprep.subr.mxu0 0.0
      %10150 = vmatpush1.msra.mxu0 0.0
      %10151 = vmatprep.subr.mxu0 0.0
      %10152 = vmatpush1.msra.mxu0 0.0
      %10153 = vmatprep.subr.mxu0 0.0
      %10154 = vmatpush1.msra.mxu0 0.0
      %10155 = vmatprep.subr.mxu0 0.0
      %10156 = vmatpush1.msra.mxu0 0.0
      %10157 = vmatprep.subr.mxu0 0.0
      %10158 = vmatpush1.msra.mxu0 0.0
      %10159 = vmatprep.subr.mxu0 0.0
      %10160 = vmatpush1.msra.mxu0 0.0
      %10161 = vmatprep.subr.mxu0 0.0
      %10162 = vmatpush1.msra.mxu0 0.0
      %10163 = vmatprep.subr.mxu0 0.0
      %10164 = vmatpush1.msra.mxu0 0.0
      %10165 = vmatprep.subr.mxu0 0.0
      %10166 = vmatpush1.msra.mxu0 0.0
      %10167 = vmatprep.subr.mxu0 0.0
      %10168 = vmatpush1.msra.mxu0 0.0
      %10169 = vmatprep.subr.mxu0 0.0
      %10170 = vmatpush1.msra.mxu0 0.0
      %10171 = vmatprep.subr.mxu0 0.0
      %10172 = vmatpush1.msra.mxu0 0.0
      %10173 = vmatprep.subr.mxu0 0.0
      %10174 = vmatpush1.msra.mxu0 0.0
      %10175 = vmatprep.subr.mxu0 0.0
      %10176 = vmatpush1.msra.mxu0 0.0
      %10177 = vmatprep.subr.mxu0 0.0
      %10178 = vmatpush1.msra.mxu0 0.0
      %10179 = vmatprep.subr.mxu0 0.0
      %10180 = vmatpush1.msra.mxu0 0.0
      %10181 = vmatprep.subr.mxu0 0.0
      %10182 = vmatpush1.msra.mxu0 0.0
      %10183 = vmatprep.subr.mxu0 0.0
      %10184 = vmatpush1.msra.mxu0 0.0
      %10185 = vmatprep.subr.mxu0 0.0
      %10186 = vmatpush1.msra.mxu0 0.0
      %10187 = vmatprep.subr.mxu0 0.0
      %10188 = vmatpush1.msra.mxu0 0.0
      %10189 = vmatprep.subr.mxu0 0.0
      %10190 = vmatpush1.msra.mxu0 0.0
      %10191 = vmatprep.subr.mxu0 0.0
      %10192 = vmatpush1.msra.mxu0 0.0
      %10193 = vmatprep.subr.mxu0 0.0
      %10194 = vmatpush1.msra.mxu0 0.0
      %10195 = vmatprep.subr.mxu0 0.0
      %10196 = vmatpush1.msra.mxu0 0.0
      %10197 = vmatprep.subr.mxu0 0.0
      %10198 = vmatpush1.msra.mxu0 0.0
      %10199 = vmatprep.subr.mxu0 0.0
      %10200 = vmatpush1.msra.mxu0 0.0
      %10201 = vmatprep.subr.mxu0 0.0
      %10202 = vmatpush1.msra.mxu0 0.0
      %10203 = vmatprep.subr.mxu0 0.0
      %10204 = vmatpush1.msra.mxu0 0.0
      %10205 = vmatprep.subr.mxu0 0.0
      %10206 = vmatpush1.msra.mxu0 0.0
      %10207 = vmatprep.subr.mxu0 0.0
      %10208 = vmatpush1.msra.mxu0 0.0
      %10209 = vmatprep.mubr.f32.mxu0 0.0
      %10210 = vmatmul.mubr.f32.gmra.mrb[0].mxu0 %v9930
      %v10211 = vpop.f32.mrb[0].mxu0
      %v10212 = vadd.f32 %v9927, %v10211
      %v10213 = vpop.f32.mrb[0].mxu0
      %v10214 = vadd.f32 %v9927, %v10213
      %10215 = vdwg.mxu0
      %10216 = vmatprep.subr.mxu0 %v317
      %10217 = vmatpush1.msra.mxu0 %v316
      %10218 = vmatprep.subr.mxu0 0.0
      %10219 = vmatpush1.msra.mxu0 0.0
      %10220 = vmatprep.subr.mxu0 0.0
      %10221 = vmatpush1.msra.mxu0 0.0
      %10222 = vmatprep.subr.mxu0 0.0
      %10223 = vmatpush1.msra.mxu0 0.0
      %10224 = vmatprep.subr.mxu0 0.0
      %10225 = vmatpush1.msra.mxu0 0.0
      %10226 = vmatprep.subr.mxu0 0.0
      %10227 = vmatpush1.msra.mxu0 0.0
      %10228 = vmatprep.subr.mxu0 0.0
      %10229 = vmatpush1.msra.mxu0 0.0
      %10230 = vmatprep.subr.mxu0 0.0
      %10231 = vmatpush1.msra.mxu0 0.0
      %10232 = vmatprep.subr.mxu0 0.0
      %10233 = vmatpush1.msra.mxu0 0.0
      %10234 = vmatprep.subr.mxu0 0.0
      %10235 = vmatpush1.msra.mxu0 0.0
      %10236 = vmatprep.subr.mxu0 0.0
      %10237 = vmatpush1.msra.mxu0 0.0
      %10238 = vmatprep.subr.mxu0 0.0
      %10239 = vmatpush1.msra.mxu0 0.0
      %10240 = vmatprep.subr.mxu0 0.0
      %10241 = vmatpush1.msra.mxu0 0.0
      %10242 = vmatprep.subr.mxu0 0.0
      %10243 = vmatpush1.msra.mxu0 0.0
      %10244 = vmatprep.subr.mxu0 0.0
      %10245 = vmatpush1.msra.mxu0 0.0
      %10246 = vmatprep.subr.mxu0 0.0
      %10247 = vmatpush1.msra.mxu0 0.0
      %10248 = vmatprep.subr.mxu0 0.0
      %10249 = vmatpush1.msra.mxu0 0.0
      %10250 = vmatprep.subr.mxu0 0.0
      %10251 = vmatpush1.msra.mxu0 0.0
      %10252 = vmatprep.subr.mxu0 0.0
      %10253 = vmatpush1.msra.mxu0 0.0
      %10254 = vmatprep.subr.mxu0 0.0
      %10255 = vmatpush1.msra.mxu0 0.0
      %10256 = vmatprep.subr.mxu0 0.0
      %10257 = vmatpush1.msra.mxu0 0.0
      %10258 = vmatprep.subr.mxu0 0.0
      %10259 = vmatpush1.msra.mxu0 0.0
      %10260 = vmatprep.subr.mxu0 0.0
      %10261 = vmatpush1.msra.mxu0 0.0
      %10262 = vmatprep.subr.mxu0 0.0
      %10263 = vmatpush1.msra.mxu0 0.0
      %10264 = vmatprep.subr.mxu0 0.0
      %10265 = vmatpush1.msra.mxu0 0.0
      %10266 = vmatprep.subr.mxu0 0.0
      %10267 = vmatpush1.msra.mxu0 0.0
      %10268 = vmatprep.subr.mxu0 0.0
      %10269 = vmatpush1.msra.mxu0 0.0
      %10270 = vmatprep.subr.mxu0 0.0
      %10271 = vmatpush1.msra.mxu0 0.0
      %10272 = vmatprep.subr.mxu0 0.0
      %10273 = vmatpush1.msra.mxu0 0.0
      %10274 = vmatprep.subr.mxu0 0.0
      %10275 = vmatpush1.msra.mxu0 0.0
      %10276 = vmatprep.subr.mxu0 0.0
      %10277 = vmatpush1.msra.mxu0 0.0
      %10278 = vmatprep.subr.mxu0 0.0
      %10279 = vmatpush1.msra.mxu0 0.0
      %10280 = vmatprep.mubr.f32.mxu0 0.0
      %10281 = vmatmul.mubr.f32.gmra.mrb[0].mxu0 %v9930
      %v10282 = vpop.f32.mrb[0].mxu0
      %v10283 = vadd.f32 %v9927, %v10282
      %v10284 = vpop.f32.mrb[0].mxu0
      %v10285 = vadd.f32 %v9927, %v10284
      %10286 = vdwg.mxu0
      %10287 = vmatprep.subr.mxu0 %v319
      %10288 = vmatpush1.msra.mxu0 %v318
      %10289 = vmatprep.subr.mxu0 0.0
      %10290 = vmatpush1.msra.mxu0 0.0
      %10291 = vmatprep.subr.mxu0 0.0
      %10292 = vmatpush1.msra.mxu0 0.0
      %10293 = vmatprep.subr.mxu0 0.0
      %10294 = vmatpush1.msra.mxu0 0.0
      %10295 = vmatprep.subr.mxu0 0.0
      %10296 = vmatpush1.msra.mxu0 0.0
      %10297 = vmatprep.subr.mxu0 0.0
      %10298 = vmatpush1.msra.mxu0 0.0
      %10299 = vmatprep.subr.mxu0 0.0
      %10300 = vmatpush1.msra.mxu0 0.0
      %10301 = vmatprep.subr.mxu0 0.0
      %10302 = vmatpush1.msra.mxu0 0.0
      %10303 = vmatprep.subr.mxu0 0.0
      %10304 = vmatpush1.msra.mxu0 0.0
      %10305 = vmatprep.subr.mxu0 0.0
      %10306 = vmatpush1.msra.mxu0 0.0
      %10307 = vmatprep.subr.mxu0 0.0
      %10308 = vmatpush1.msra.mxu0 0.0
      %10309 = vmatprep.subr.mxu0 0.0
      %10310 = vmatpush1.msra.mxu0 0.0
      %10311 = vmatprep.subr.mxu0 0.0
      %10312 = vmatpush1.msra.mxu0 0.0
      %10313 = vmatprep.subr.mxu0 0.0
      %10314 = vmatpush1.msra.mxu0 0.0
      %10315 = vmatprep.subr.mxu0 0.0
      %10316 = vmatpush1.msra.mxu0 0.0
      %10317 = vmatprep.subr.mxu0 0.0
      %10318 = vmatpush1.msra.mxu0 0.0
      %10319 = vmatprep.subr.mxu0 0.0
      %10320 = vmatpush1.msra.mxu0 0.0
      %10321 = vmatprep.subr.mxu0 0.0
      %10322 = vmatpush1.msra.mxu0 0.0
      %10323 = vmatprep.subr.mxu0 0.0
      %10324 = vmatpush1.msra.mxu0 0.0
      %10325 = vmatprep.subr.mxu0 0.0
      %10326 = vmatpush1.msra.mxu0 0.0
      %10327 = vmatprep.subr.mxu0 0.0
      %10328 = vmatpush1.msra.mxu0 0.0
      %10329 = vmatprep.subr.mxu0 0.0
      %10330 = vmatpush1.msra.mxu0 0.0
      %10331 = vmatprep.subr.mxu0 0.0
      %10332 = vmatpush1.msra.mxu0 0.0
      %10333 = vmatprep.subr.mxu0 0.0
      %10334 = vmatpush1.msra.mxu0 0.0
      %10335 = vmatprep.subr.mxu0 0.0
      %10336 = vmatpush1.msra.mxu0 0.0
      %10337 = vmatprep.subr.mxu0 0.0
      %10338 = vmatpush1.msra.mxu0 0.0
      %10339 = vmatprep.subr.mxu0 0.0
      %10340 = vmatpush1.msra.mxu0 0.0
      %10341 = vmatprep.subr.mxu0 0.0
      %10342 = vmatpush1.msra.mxu0 0.0
      %10343 = vmatprep.subr.mxu0 0.0
      %10344 = vmatpush1.msra.mxu0 0.0
      %10345 = vmatprep.subr.mxu0 0.0
      %10346 = vmatpush1.msra.mxu0 0.0
      %10347 = vmatprep.subr.mxu0 0.0
      %10348 = vmatpush1.msra.mxu0 0.0
      %10349 = vmatprep.subr.mxu0 0.0
      %10350 = vmatpush1.msra.mxu0 0.0
      %10351 = vmatprep.mubr.f32.mxu0 0.0
      %10352 = vmatmul.mubr.f32.gmra.mrb[0].mxu0 %v9930
      %v10353 = vpop.f32.mrb[0].mxu0
      %v10354 = vadd.f32 %v9927, %v10353
      %v10355 = vpop.f32.mrb[0].mxu0
      %v10356 = vadd.f32 %v9927, %v10355
      %10357 = vdwg.mxu0
      %v10358 = vadd.f32 %v9999, %v9910
      %v10359 = vadd.f32 %v10001, %v9911
      %v10360 = vadd.f32 %v10070, %v9912
      %v10361 = vadd.f32 %v10072, %v9913
      %v10362 = vadd.f32 %v10141, %v9914
      %v10363 = vadd.f32 %v10143, %v9915
      %v10364 = vadd.f32 %v10212, %v9916
      %v10365 = vadd.f32 %v10214, %v9917
      %v10366 = vadd.f32 %v10283, %v9918
      %v10367 = vadd.f32 %v10285, %v9919
      %v10368 = vadd.f32 %v10354, %v9920
      %v10369 = vadd.f32 %v10356, %v9921
      %v10382 = vcombine.low %v10358, %v10359
      %v10383 = vcombine.low %v10360, %v10361
      %v10384 = vcombine.low %v10362, %v10363
      %v10385 = vcombine.low %v10364, %v10365
      %v10386 = vcombine.low %v10366, %v10367
      %v10387 = vcombine.low %v10368, %v10369
      %10394 = vst [vmem:[%s305] sm:$0xff] %v10382
      %10395 = vst [vmem:[%s305 + $0x8] sm:$0xff] %v10383
      %10396 = vst [vmem:[%s305 + $0x10] sm:$0xff] %v10384
      %10397 = vst [vmem:[%s305 + $0x18] sm:$0xff] %v10385
      %10398 = vst [vmem:[%s305 + $0x20] sm:$0xff] %v10386
      %10399 = vst.msk [vmem:[%s305 + $0x28] sm:$0xff] %vm346, %v10387
      %p10400 = scmp.lt.s32.totalorder %s19, 1
      %s10401 = scalar_select %p10400, %s19, 1
      %s10402 = smul.addr %s10401, 12
      %s10403 = smul.addr %s10402, 4
      %s10404 = scalar_lea.vmem %s8, %s10403
      // Predicated region
      $region53: #{resnet_block_h.1} parent=51 // pred_check
        %p10405 = pneg %p210
      $region54: #{resnet_block_h.1} parent=51 // pred_check_branch
        %10407 = sbr.rel (%p10405) target = $region56
      $region55: #{resnet_block_h.1} parent=51 // pred_region
        _
      $region56: #{resnet_block_h.1} parent=51 // pred_fallthru
        _
    $region52: #{resnet_block_h.1} parent=5 // pred_fallthru
      _
    %p10408 = scmp.le.s32.totalorder 2, %s14
    // Predicated region
    $region57: #{resnet_block_h.1} parent=5 // pred_check
      %p10409 = pneg %p10408
    $region58: #{resnet_block_h.1} parent=5 // pred_check_branch
      %10411 = sbr.rel (%p10409) target = $region60
    $region59: #{resnet_block_h.1} parent=5 // pred_region
      %s10412 = ssub.s32 %s14, 2
      // Predicated region
      $region61: #{resnet_block_h.1} parent=59 // pred_check
        %p10413 = pneg %p216
      $region62: #{resnet_block_h.1} parent=59 // pred_check_branch
        %10415 = sbr.rel (%p10413) target = $region64
      $region63: #{resnet_block_h.1} parent=59 // pred_region
        %p10416 = scmp.lt.s32.totalorder %s20, 1
        %s10417 = scalar_select %p10416, %s20, 1
        %s10418 = smul.addr %s10417, 12
        %s10419 = smul.addr %s10418, 4
        %s10420 = scalar_lea.vmem %s8, %s10419
      $region64: #{resnet_block_h.1} parent=59 // pred_fallthru
        _
    $region60: #{resnet_block_h.1} parent=5 // pred_fallthru
      _
  $region6: #{resnet_block_h.1} parent=0 // loop_footer
    %s18 = sadd.s32 1, %s14
  $region7: #{resnet_block_h.1} parent=0 // loop_footer_branch
    %13 = sbr.rel target = $region3
  $region8: #{resnet_block_h.1} parent=0 // loop_exit
    _

</llo_original>
